<compile_context>
chip_gen: v5e
topology: v5e:2x2
jax: 0.10.0
libtpu: 0.0.40
codegen_flags: <defaults>
</compile_context>

<pallas_src>
import functools

import jax
import jax.numpy as jnp
from jax.experimental import pallas as pl
from jax.experimental.pallas import tpu as pltpu


def _round_up(x, m):
    return ((x + m - 1) // m) * m


# --------------------------------------------------------------- tiled matmul (+bias, +ReLU)

def _matmul_kernel(a_ref, b_ref, bias_ref, o_ref, acc_ref, *, relu):
    @pl.when(pl.program_id(2) == 0)
    def _():
        acc_ref[...] = jnp.zeros_like(acc_ref)

    acc_ref[...] += jnp.dot(a_ref[...], b_ref[...],
                            preferred_element_type=jnp.float32)

    @pl.when(pl.program_id(2) == pl.num_programs(2) - 1)
    def _():
        y = acc_ref[...] + bias_ref[...]
        if relu:
            y = jnp.maximum(y, 0.0)
        o_ref[...] = y.astype(o_ref.dtype)


def matmul_bias(a, b, bias, relu=False):
    """a:(M,K) @ b:(K,N) + bias(N,), optional fused ReLU. bf16 MXU, f32 accumulate."""
    M, K = a.shape
    K2, N = b.shape
    assert K == K2
    tm = min(512, _round_up(M, 8))
    tk = min(512, _round_up(K, 128))
    tn = min(512, _round_up(N, 128))
    Mp, Kp, Np = _round_up(M, tm), _round_up(K, tk), _round_up(N, tn)
    a_p = jnp.pad(a.astype(jnp.bfloat16), ((0, Mp - M), (0, Kp - K)))
    b_p = jnp.pad(b.astype(jnp.bfloat16), ((0, Kp - K), (0, Np - N)))
    bias_p = jnp.pad(bias.astype(jnp.float32), (0, Np - N)).reshape(1, Np)
    out = pl.pallas_call(
        functools.partial(_matmul_kernel, relu=relu),
        out_shape=jax.ShapeDtypeStruct((Mp, Np), jnp.float32),
        grid_spec=pltpu.PrefetchScalarGridSpec(
            num_scalar_prefetch=0,
            grid=(Mp // tm, Np // tn, Kp // tk),
            in_specs=[pl.BlockSpec((tm, tk), lambda i, j, k: (i, k)),
                      pl.BlockSpec((tk, tn), lambda i, j, k: (k, j)),
                      pl.BlockSpec((1, tn), lambda i, j, k: (0, j))],
            out_specs=pl.BlockSpec((tm, tn), lambda i, j, k: (i, j)),
            scratch_shapes=[pltpu.VMEM((tm, tn), jnp.float32)]),
        compiler_params=pltpu.CompilerParams(
            dimension_semantics=("parallel", "parallel", "arbitrary"),
            vmem_limit_bytes=64 * 1024 * 1024),
    )(a_p, b_p, bias_p)
    return out[:M, :N]


# --------------------------------------------------------------- LayerNorm (last dim) kernels

def _ln_last_kernel(x_ref, g_ref, b_ref, o_ref, *, relu, eps):
    x = x_ref[...]
    mean = jnp.mean(x, axis=-1, keepdims=True)
    xc = x - mean
    var = jnp.mean(xc * xc, axis=-1, keepdims=True)
    y = xc * jax.lax.rsqrt(var + eps) * g_ref[...] + b_ref[...]
    if relu:
        y = jnp.maximum(y, 0.0)
    o_ref[...] = y


def _ln_last_res_kernel(x_ref, r_ref, g_ref, b_ref, o_ref, *, eps):
    # relu( LayerNorm(x) + residual )   -- fused residual epilogue of a res block
    x = x_ref[...]
    mean = jnp.mean(x, axis=-1, keepdims=True)
    xc = x - mean
    var = jnp.mean(xc * xc, axis=-1, keepdims=True)
    y = xc * jax.lax.rsqrt(var + eps) * g_ref[...] + b_ref[...]
    o_ref[...] = jnp.maximum(y + r_ref[...], 0.0)


def layernorm_lastdim(x2d, gamma, beta, relu=False, residual=None, eps=1e-5):
    """LayerNorm over the last dim of (M, D) rows; optional fused ReLU / residual+ReLU."""
    M, D = x2d.shape
    tr = min(1024, _round_up(M, 8))
    Mp = _round_up(M, tr)
    x_p = jnp.pad(x2d.astype(jnp.float32), ((0, Mp - M), (0, 0)))
    g2 = gamma.reshape(1, D).astype(jnp.float32)
    b2 = beta.reshape(1, D).astype(jnp.float32)
    row_spec = pl.BlockSpec((tr, D), lambda i: (i, 0))
    vec_spec = pl.BlockSpec((1, D), lambda i: (0, 0))
    if residual is None:
        kern = functools.partial(_ln_last_kernel, relu=relu, eps=eps)
        args = (x_p, g2, b2)
        in_specs = [row_spec, vec_spec, vec_spec]
    else:
        r_p = jnp.pad(residual.astype(jnp.float32), ((0, Mp - M), (0, 0)))
        kern = functools.partial(_ln_last_res_kernel, eps=eps)
        args = (x_p, r_p, g2, b2)
        in_specs = [row_spec, row_spec, vec_spec, vec_spec]
    out = pl.pallas_call(
        kern,
        out_shape=jax.ShapeDtypeStruct((Mp, D), jnp.float32),
        grid_spec=pltpu.PrefetchScalarGridSpec(
            num_scalar_prefetch=0, grid=(Mp // tr,),
            in_specs=in_specs, out_specs=row_spec),
        compiler_params=pltpu.CompilerParams(dimension_semantics=("parallel",)),
    )(*args)
    return out[:M]


# --------------------------------------------------------------- fused classifier (L+ReLU+L)

def _classifier_kernel(x_ref, w1_ref, b1_ref, w2_ref, b2_ref, o_ref):
    h = jnp.dot(x_ref[...], w1_ref[...], preferred_element_type=jnp.float32) + b1_ref[...]
    h = jnp.maximum(h, 0.0)
    y = jnp.dot(h.astype(jnp.bfloat16), w2_ref[...],
                preferred_element_type=jnp.float32) + b2_ref[...]
    o_ref[...] = y


def classifier(x2d, w1, b1, w2, b2):
    """relu(x @ w1.T + b1) @ w2.T + b2, hidden kept in VMEM, n_class padded to 128 lanes."""
    M, D = x2d.shape
    H = w1.shape[0]
    NC = w2.shape[0]
    Dp, Hp, Np = _round_up(D, 128), _round_up(H, 128), _round_up(NC, 128)
    tm = min(512, _round_up(M, 8))
    Mp = _round_up(M, tm)
    x_p = jnp.pad(x2d.astype(jnp.bfloat16), ((0, Mp - M), (0, Dp - D)))
    w1_p = jnp.pad(w1.T.astype(jnp.bfloat16), ((0, Dp - D), (0, Hp - H)))
    b1_p = jnp.pad(b1.astype(jnp.float32), (0, Hp - H)).reshape(1, Hp)
    w2_p = jnp.pad(w2.T.astype(jnp.bfloat16), ((0, Hp - H), (0, Np - NC)))
    b2_p = jnp.pad(b2.astype(jnp.float32), (0, Np - NC)).reshape(1, Np)
    out = pl.pallas_call(
        _classifier_kernel,
        out_shape=jax.ShapeDtypeStruct((Mp, Np), jnp.float32),
        grid_spec=pltpu.PrefetchScalarGridSpec(
            num_scalar_prefetch=0, grid=(Mp // tm,),
            in_specs=[pl.BlockSpec((tm, Dp), lambda i: (i, 0)),
                      pl.BlockSpec((Dp, Hp), lambda i: (0, 0)),
                      pl.BlockSpec((1, Hp), lambda i: (0, 0)),
                      pl.BlockSpec((Hp, Np), lambda i: (0, 0)),
                      pl.BlockSpec((1, Np), lambda i: (0, 0))],
            out_specs=pl.BlockSpec((tm, Np), lambda i: (i, 0))),
        compiler_params=pltpu.CompilerParams(
            dimension_semantics=("parallel",),
            vmem_limit_bytes=64 * 1024 * 1024),
    )(x_p, w1_p, b1_p, w2_p, b2_p)
    return out[:M, :NC]


# --------------------------------------------------------------- fused bidirectional LSTM

def _sigmoid(x):
    return 1.0 / (1.0 + jnp.exp(-x))


def _bilstm_kernel(xg_ref, whh_ref, of_ref, ob_ref, hcat_ref, c_ref, *, hidden, bp):
    # xg_ref : (T, Bp, 8H)  precomputed x@W_ih.T + b_ih + b_hh, fwd gates | bwd gates
    # whh_ref: (2H, 4H)     block-diagonal-ready stack [W_hh_f.T ; W_hh_b.T]
    # of_ref/ob_ref: (T, Bp, H) forward / backward hidden states
    # hcat_ref: (2Bp, 2H) "wide" state (fwd rows use cols [0:H], bwd rows cols [H:2H])
    # c_ref   : (2Bp, H)  cell state (fwd rows then bwd rows)
    H = hidden
    G = 4 * H
    T = xg_ref.shape[0]
    hcat_ref[...] = jnp.zeros_like(hcat_ref)
    c_ref[...] = jnp.zeros_like(c_ref)
    zer = jnp.zeros((bp, H), jnp.float32)

    def step(t, carry):
        xg_t = xg_ref[t]                    # (Bp, 8H)  fwd input at time t
        xg_r = xg_ref[T - 1 - t]            # (Bp, 8H)  bwd input at time T-1-t
        # stack both directions on the sublane (batch) axis -> one MXU dot per step
        g_in = jnp.concatenate([xg_t[:, 0:G], xg_r[:, G:2 * G]], axis=0)   # (2Bp, 4H)
        g = g_in + jnp.dot(hcat_ref[...], whh_ref[...],
                           preferred_element_type=jnp.float32)
        # NOTE: gate slices assume the 4H gate axis is contiguous in lanes (PyTorch i,f,g,o).
        i = _sigmoid(g[:, 0 * H:1 * H])
        f = _sigmoid(g[:, 1 * H:2 * H])
        gg = jnp.tanh(g[:, 2 * H:3 * H])
        o = _sigmoid(g[:, 3 * H:4 * H])
        c = f * c_ref[...] + i * gg
        h = o * jnp.tanh(c)
        c_ref[...] = c
        h_f = h[0:bp]
        h_b = h[bp:2 * bp]
        # rebuild the block-diagonal "wide" hidden state for the next step's single dot
        hcat_ref[...] = jnp.concatenate(
            [jnp.concatenate([h_f, zer], axis=1),
             jnp.concatenate([zer, h_b], axis=1)], axis=0)
        of_ref[t] = h_f                      # forward output at time t
        ob_ref[T - 1 - t] = h_b              # backward output belongs to time T-1-t
        return carry

    jax.lax.fori_loop(0, T, step, 0)


def bilstm(x_sbd, p, hidden):
    """x_sbd: (seq, batch, feat) -> (seq, batch, 2*hidden). Zero initial state."""
    T, B, D = x_sbd.shape
    H = hidden
    Bp = _round_up(B, 8)
    # merged fwd+bwd input projection -> lane-dense (.., 8H) output
    w_cat = jnp.concatenate([p['w_ih_f'].T, p['w_ih_b'].T], axis=1)        # (D, 8H)
    b_cat = jnp.concatenate([p['b_ih_f'] + p['b_hh_f'],
                             p['b_ih_b'] + p['b_hh_b']], axis=0)           # (8H,)
    x_p = jnp.pad(x_sbd.astype(jnp.float32), ((0, 0), (0, Bp - B), (0, 0)))
    xg = matmul_bias(x_p.reshape(T * Bp, D), w_cat, b_cat).reshape(T, Bp, 8 * H)
    whh_cat = jnp.concatenate([p['w_hh_f'].T, p['w_hh_b'].T], axis=0)      # (2H, 4H)
    # TODO(synk): for very long sequences, stream xg through VMEM with a manual
    #             double-buffered DMA pipeline instead of keeping it fully resident.
    h_f, h_b = pl.pallas_call(
        functools.partial(_bilstm_kernel, hidden=H, bp=Bp),
        out_shape=(jax.ShapeDtypeStruct((T, Bp, H), jnp.float32),
                   jax.ShapeDtypeStruct((T, Bp, H), jnp.float32)),
        scratch_shapes=[pltpu.VMEM((2 * Bp, 2 * H), jnp.float32),
                        pltpu.VMEM((2 * Bp, H), jnp.float32)],
        compiler_params=pltpu.CompilerParams(vmem_limit_bytes=64 * 1024 * 1024),
    )(xg.astype(jnp.float32), whh_cat.astype(jnp.float32))
    return jnp.concatenate([h_f[:, :B, :], h_b[:, :B, :]], axis=-1)        # (T, B, 2H)


# --------------------------------------------------------------- conv / res-block glue

def conv2d_tf(x, w, b, stride, padding):
    """Conv2d on activations stored as (B, Cin, T, F) (spatially transposed NCHW).

    w, b are the PyTorch parameters (Cout, Cin, kF, kT); output is (B, Cout, T', F'),
    i.e. the PyTorch result with its two spatial axes swapped (consistent layout).
    im2col glue is XLA-side; the FLOPs run in the tiled Pallas matmul.
    """
    # TODO(synk): build the conv patches inside the kernel (strided DMA / tap-decomposed
    #             accumulation) to avoid materializing the 9x im2col tensor in HBM.
    B, Cin, T, F = x.shape
    Cout = w.shape[0]
    kF, kT = w.shape[2], w.shape[3]
    wt = jnp.transpose(w, (0, 1, 3, 2))                       # (Cout, Cin, kT, kF)
    To = (T + 2 * padding - kT) // stride + 1
    Fo = (F + 2 * padding - kF) // stride + 1
    xp = jnp.pad(x, ((0, 0), (0, 0), (padding, padding), (padding, padding)))
    patches = []
    for i in range(kT):
        for j in range(kF):
            patches.append(xp[:, :, i:i + stride * To:stride, j:j + stride * Fo:stride])
    p = jnp.stack(patches, axis=0).reshape(kT, kF, B, Cin, To, Fo)
    p = p.transpose(2, 4, 5, 3, 0, 1).reshape(B * To * Fo, Cin * kT * kF)  # (Cin,kT,kF) order
    wmat = wt.reshape(Cout, Cin * kT * kF).T
    out = matmul_bias(p, wmat, b)                             # (B*To*Fo, Cout)
    return out.reshape(B, To, Fo, Cout).transpose(0, 3, 1, 2)  # (B, Cout, T', F')


def res_forward(x, p):
    """Residual CNN block on (B, C, T, F) activations (LN over F == LN over last dim)."""
    B, C, T, F = x.shape
    out = conv2d_tf(x, p['cnn1_w'], p['cnn1_b'], stride=1, padding=1)
    out = layernorm_lastdim(out.reshape(B * C * T, F), p['ln1_g'], p['ln1_b'],
                            relu=True).reshape(B, C, T, F)
    out = conv2d_tf(out, p['cnn2_w'], p['cnn2_b'], stride=1, padding=1)
    out = layernorm_lastdim(out.reshape(B * C * T, F), p['ln2_g'], p['ln2_b'],
                            residual=x.reshape(B * C * T, F)).reshape(B, C, T, F)
    return out


def lstm_layer_forward(x, p, hidden, batch_first):
    shp = x.shape
    x = layernorm_lastdim(x.reshape(-1, shp[-1]), p['ln_g'], p['ln_b'],
                          relu=True).reshape(shp)
    x_sbd = x.transpose(1, 0, 2) if batch_first else x       # (seq, batch, feat)
    y = bilstm(x_sbd, p, hidden)
    return y.transpose(1, 0, 2) if batch_first else y


# --------------------------------------------------------------- full forward

def stt_forward(x, params, rnn_dim):
    # x: (B, 1, n_feats, time) NCHW, like the PyTorch module.
    x = x.transpose(0, 1, 3, 2)                                            # (B, 1, T, F)
    x = conv2d_tf(x, params['cnn_w'], params['cnn_b'], stride=2, padding=1)  # (B,32,T',F')
    for p in params['res']:
        x = res_forward(x, p)
    B, C, T, F = x.shape
    # PyTorch: view(B, C*F, T).transpose(1,2) -> (B, T, C*F) with (C, F) minor ordering
    x = x.transpose(0, 2, 1, 3).reshape(B * T, C * F)
    x = matmul_bias(x, params['fc_w'].T, params['fc_b']).reshape(B, T, rnn_dim)
    for i, p in enumerate(params['lstm']):
        x = lstm_layer_forward(x, p, rnn_dim, batch_first=(i == 0))
    shp = x.shape
    out = classifier(x.reshape(-1, shp[-1]), params['cls_w1'], params['cls_b1'],
                     params['cls_w2'], params['cls_b2'])
    return out.reshape(shp[:-1] + (params['cls_w2'].shape[0],))


# --------------------------------------------------------------- params

def init_params(key, cnn_layer, rnn_layers, rnn_dim, n_class, n_feats):
    nf = n_feats // 2
    keys = iter(jax.random.split(key, 256))

    def nrm(shape, scale=0.1):
        return (scale * jax.random.normal(next(keys), shape)).astype(jnp.float32)

    params = {
        'cnn_w': nrm((32, 1, 3, 3)), 'cnn_b': nrm((32,)),
        'res': [], 'lstm': [],
        'fc_w': nrm((rnn_dim, 32 * nf)), 'fc_b': nrm((rnn_dim,)),
        'cls_w1': nrm((rnn_dim, rnn_dim * 2)), 'cls_b1': nrm((rnn_dim,)),
        'cls_w2': nrm((n_class, rnn_dim)), 'cls_b2': nrm((n_class,)),
    }
    for _ in range(cnn_layer):
        params['res'].append({
            'cnn1_w': nrm((32, 32, 3, 3)), 'cnn1_b': nrm((32,)),
            'cnn2_w': nrm((32, 32, 3, 3)), 'cnn2_b': nrm((32,)),
            'ln1_g': jnp.ones((nf,), jnp.float32), 'ln1_b': jnp.zeros((nf,), jnp.float32),
            'ln2_g': jnp.ones((nf,), jnp.float32), 'ln2_b': jnp.zeros((nf,), jnp.float32),
        })
    for i in range(rnn_layers):
        in_dim = rnn_dim if i == 0 else rnn_dim * 2
        params['lstm'].append({
            'ln_g': jnp.ones((in_dim,), jnp.float32), 'ln_b': jnp.zeros((in_dim,), jnp.float32),
            'w_ih_f': nrm((4 * rnn_dim, in_dim)), 'w_hh_f': nrm((4 * rnn_dim, rnn_dim)),
            'b_ih_f': nrm((4 * rnn_dim,)), 'b_hh_f': nrm((4 * rnn_dim,)),
            'w_ih_b': nrm((4 * rnn_dim, in_dim)), 'w_hh_b': nrm((4 * rnn_dim, rnn_dim)),
            'b_ih_b': nrm((4 * rnn_dim,)), 'b_hh_b': nrm((4 * rnn_dim,)),
        })
    return params


# --------------------------------------------------------------- main

if __name__ == "__main__":
    # Hyperparameters: cnn_layer=1, rnn_layers=2, rnn_dim=32, n_class=10, n_feats=16, stride=2
    CNN_LAYER, RNN_LAYERS, RNN_DIM, N_CLASS, N_FEATS = 1, 2, 32, 10, 16
    key = jax.random.PRNGKey(0)
    k_in, k_par = jax.random.split(key)

    # Input: (B=2, C=1, n_feats=16, time=16) — same NCHW convention as the PyTorch module.
    x = jax.random.normal(k_in, (2, 1, N_FEATS, 16), jnp.float32)
    params = init_params(k_par, CNN_LAYER, RNN_LAYERS, RNN_DIM, N_CLASS, N_FEATS)

    fwd = jax.jit(stt_forward, static_argnums=2)
    out = fwd(x, params, RNN_DIM)
    out = jax.block_until_ready(out)
    assert out.shape == (2, 8, N_CLASS), out.shape
    assert bool(jnp.all(jnp.isfinite(out)))
    print("KERNEL_OK")
</pallas_src>

<mosaic_0001>
module attributes {stable_mosaic.version = 11 : i64} {
  func.func @_matmul_kernel(%arg0: i32, %arg1: i32, %arg2: i32, %arg3: memref<128x128xbf16, #tpu.memory_space<vmem>>, %arg4: memref<128x128xbf16, #tpu.memory_space<vmem>>, %arg5: memref<1x128xf32, #tpu.memory_space<vmem>>, %arg6: memref<128x128xf32, #tpu.memory_space<vmem>>, %arg7: memref<128x128xf32, #tpu.memory_space<vmem>>) attributes {dimension_semantics = [#tpu.dimension_semantics<parallel>, #tpu.dimension_semantics<parallel>, #tpu.dimension_semantics<arbitrary>], iteration_bounds = array<i64: 1, 1, 1>, scalar_prefetch = 0 : i64, scratch_operands = 1 : i64, tpu.core_type = #tpu.core_type<tc>, window_params = [{transform_indices = @transform_0, window_bounds = array<i64: 128, 128>}, {transform_indices = @transform_1, window_bounds = array<i64: 128, 128>}, {transform_indices = @transform_2, window_bounds = array<i64: 1, 128>}, {transform_indices = @transform_3, window_bounds = array<i64: 128, 128>}]} {
    %c0_i32 = arith.constant 0 : i32
    %0 = arith.cmpi eq, %arg2, %c0_i32 : i32
    %1 = arith.extui %0 : i1 to i32
    %c0_i32_0 = arith.constant 0 : i32
    %2 = arith.cmpi ne, %1, %c0_i32_0 : i32
    scf.if %2 {
      %cst_10 = arith.constant 0.000000e+00 : f32
      %12 = vector.broadcast %cst_10 : f32 to vector<128x128xf32>
      %c0_11 = arith.constant 0 : index
      %c0_12 = arith.constant 0 : index
      %13 = vector.load %arg7[%c0_11, %c0_12] : memref<128x128xf32, #tpu.memory_space<vmem>>, vector<128x128xf32>
      tpu.vector_store %arg7[%c0_11, %c0_12], %12 {strides = array<i32>} : memref<128x128xf32, #tpu.memory_space<vmem>>, vector<128x128xf32>,
    } else {
    }
    %c0 = arith.constant 0 : index
    %c0_1 = arith.constant 0 : index
    %3 = vector.load %arg7[%c0, %c0_1] : memref<128x128xf32, #tpu.memory_space<vmem>>, vector<128x128xf32>
    %c0_2 = arith.constant 0 : index
    %c0_3 = arith.constant 0 : index
    %4 = vector.load %arg3[%c0_2, %c0_3] : memref<128x128xbf16, #tpu.memory_space<vmem>>, vector<128x128xbf16>
    %c0_4 = arith.constant 0 : index
    %c0_5 = arith.constant 0 : index
    %5 = vector.load %arg4[%c0_4, %c0_5] : memref<128x128xbf16, #tpu.memory_space<vmem>>, vector<128x128xbf16>
    %cst = arith.constant dense<0.000000e+00> : vector<128x128xf32>
    %6 = tpu.matmul %4, %5, %cst {dimension_numbers = #tpu.dot_dimension_numbers<[1], [0], [0], [1], [0, 0, 1, 1], [], []>} : vector<128x128xbf16>, vector<128x128xbf16>, vector<128x128xf32> -> vector<128x128xf32>
    %7 = arith.addf %3, %6 : vector<128x128xf32>
    %c0_6 = arith.constant 0 : index
    %c0_7 = arith.constant 0 : index
    %8 = vector.load %arg7[%c0_6, %c0_7] : memref<128x128xf32, #tpu.memory_space<vmem>>, vector<128x128xf32>
    tpu.vector_store %arg7[%c0_6, %c0_7], %7 {strides = array<i32>} : memref<128x128xf32, #tpu.memory_space<vmem>>, vector<128x128xf32>,
    %c0_i32_8 = arith.constant 0 : i32
    %9 = arith.cmpi eq, %arg2, %c0_i32_8 : i32
    %10 = arith.extui %9 : i1 to i32
    %c0_i32_9 = arith.constant 0 : i32
    %11 = arith.cmpi ne, %10, %c0_i32_9 : i32
    scf.if %11 {
      %c0_10 = arith.constant 0 : index
      %c0_11 = arith.constant 0 : index
      %12 = vector.load %arg7[%c0_10, %c0_11] : memref<128x128xf32, #tpu.memory_space<vmem>>, vector<128x128xf32>
      %c0_12 = arith.constant 0 : index
      %c0_13 = arith.constant 0 : index
      %13 = vector.load %arg5[%c0_12, %c0_13] : memref<1x128xf32, #tpu.memory_space<vmem>>, vector<1x128xf32>
      %14 = vector.broadcast %13 : vector<1x128xf32> to vector<128x128xf32>
      %15 = arith.addf %12, %14 : vector<128x128xf32>
      %c0_14 = arith.constant 0 : index
      %c0_15 = arith.constant 0 : index
      %16 = vector.load %arg6[%c0_14, %c0_15] : memref<128x128xf32, #tpu.memory_space<vmem>>, vector<128x128xf32>
      tpu.vector_store %arg6[%c0_14, %c0_15], %15 {strides = array<i32>} : memref<128x128xf32, #tpu.memory_space<vmem>>, vector<128x128xf32>,
    } else {
    }
    return
  }
  func.func @transform_0(%arg0: i32, %arg1: i32, %arg2: i32) -> (i32, i32) {
    %c0_i32 = arith.constant 0 : i32
    return %arg0, %arg2 : i32, i32
  }
  func.func @transform_1(%arg0: i32, %arg1: i32, %arg2: i32) -> (i32, i32) {
    %c0_i32 = arith.constant 0 : i32
    return %arg2, %arg1 : i32, i32
  }
  func.func @transform_2(%arg0: i32, %arg1: i32, %arg2: i32) -> (i32, i32) {
    %c0_i32 = arith.constant 0 : i32
    %c0_i32_0 = arith.constant 0 : i32
    return %c0_i32, %arg1 : i32, i32
  }
  func.func @transform_3(%arg0: i32, %arg1: i32, %arg2: i32) -> (i32, i32) {
    %c0_i32 = arith.constant 0 : i32
    return %arg0, %arg1 : i32, i32
  }
}

module attributes {stable_mosaic.version = 11 : i64} {
  func.func @_matmul_kernel(%arg0: i32, %arg1: i32, %arg2: i32, %arg3: memref<128x384xbf16, #tpu.memory_space<vmem>>, %arg4: memref<384x128xbf16, #tpu.memory_space<vmem>>, %arg5: memref<1x128xf32, #tpu.memory_space<vmem>>, %arg6: memref<128x128xf32, #tpu.memory_space<vmem>>, %arg7: memref<128x128xf32, #tpu.memory_space<vmem>>) attributes {dimension_semantics = [#tpu.dimension_semantics<parallel>, #tpu.dimension_semantics<parallel>, #tpu.dimension_semantics<arbitrary>], iteration_bounds = array<i64: 1, 1, 1>, scalar_prefetch = 0 : i64, scratch_operands = 1 : i64, tpu.core_type = #tpu.core_type<tc>, window_params = [{transform_indices = @transform_0, window_bounds = array<i64: 128, 384>}, {transform_indices = @transform_1, window_bounds = array<i64: 384, 128>}, {transform_indices = @transform_2, window_bounds = array<i64: 1, 128>}, {transform_indices = @transform_3, window_bounds = array<i64: 128, 128>}]} {
    %c0_i32 = arith.constant 0 : i32
    %0 = arith.cmpi eq, %arg2, %c0_i32 : i32
    %1 = arith.extui %0 : i1 to i32
    %c0_i32_0 = arith.constant 0 : i32
    %2 = arith.cmpi ne, %1, %c0_i32_0 : i32
    scf.if %2 {
      %cst_10 = arith.constant 0.000000e+00 : f32
      %12 = vector.broadcast %cst_10 : f32 to vector<128x128xf32>
      %c0_11 = arith.constant 0 : index
      %c0_12 = arith.constant 0 : index
      %13 = vector.load %arg7[%c0_11, %c0_12] : memref<128x128xf32, #tpu.memory_space<vmem>>, vector<128x128xf32>
      tpu.vector_store %arg7[%c0_11, %c0_12], %12 {strides = array<i32>} : memref<128x128xf32, #tpu.memory_space<vmem>>, vector<128x128xf32>,
    } else {
    }
    %c0 = arith.constant 0 : index
    %c0_1 = arith.constant 0 : index
    %3 = vector.load %arg7[%c0, %c0_1] : memref<128x128xf32, #tpu.memory_space<vmem>>, vector<128x128xf32>
    %c0_2 = arith.constant 0 : index
    %c0_3 = arith.constant 0 : index
    %4 = vector.load %arg3[%c0_2, %c0_3] : memref<128x384xbf16, #tpu.memory_space<vmem>>, vector<128x384xbf16>
    %c0_4 = arith.constant 0 : index
    %c0_5 = arith.constant 0 : index
    %5 = vector.load %arg4[%c0_4, %c0_5] : memref<384x128xbf16, #tpu.memory_space<vmem>>, vector<384x128xbf16>
    %cst = arith.constant dense<0.000000e+00> : vector<128x128xf32>
    %6 = tpu.matmul %4, %5, %cst {dimension_numbers = #tpu.dot_dimension_numbers<[1], [0], [0], [1], [0, 0, 1, 1], [], []>} : vector<128x384xbf16>, vector<384x128xbf16>, vector<128x128xf32> -> vector<128x128xf32>
    %7 = arith.addf %3, %6 : vector<128x128xf32>
    %c0_6 = arith.constant 0 : index
    %c0_7 = arith.constant 0 : index
    %8 = vector.load %arg7[%c0_6, %c0_7] : memref<128x128xf32, #tpu.memory_space<vmem>>, vector<128x128xf32>
    tpu.vector_store %arg7[%c0_6, %c0_7], %7 {strides = array<i32>} : memref<128x128xf32, #tpu.memory_space<vmem>>, vector<128x128xf32>,
    %c0_i32_8 = arith.constant 0 : i32
    %9 = arith.cmpi eq, %arg2, %c0_i32_8 : i32
    %10 = arith.extui %9 : i1 to i32
    %c0_i32_9 = arith.constant 0 : i32
    %11 = arith.cmpi ne, %10, %c0_i32_9 : i32
    scf.if %11 {
      %c0_10 = arith.constant 0 : index
      %c0_11 = arith.constant 0 : index
      %12 = vector.load %arg7[%c0_10, %c0_11] : memref<128x128xf32, #tpu.memory_space<vmem>>, vector<128x128xf32>
      %c0_12 = arith.constant 0 : index
      %c0_13 = arith.constant 0 : index
      %13 = vector.load %arg5[%c0_12, %c0_13] : memref<1x128xf32, #tpu.memory_space<vmem>>, vector<1x128xf32>
      %14 = vector.broadcast %13 : vector<1x128xf32> to vector<128x128xf32>
      %15 = arith.addf %12, %14 : vector<128x128xf32>
      %c0_14 = arith.constant 0 : index
      %c0_15 = arith.constant 0 : index
      %16 = vector.load %arg6[%c0_14, %c0_15] : memref<128x128xf32, #tpu.memory_space<vmem>>, vector<128x128xf32>
      tpu.vector_store %arg6[%c0_14, %c0_15], %15 {strides = array<i32>} : memref<128x128xf32, #tpu.memory_space<vmem>>, vector<128x128xf32>,
    } else {
    }
    return
  }
  func.func @transform_0(%arg0: i32, %arg1: i32, %arg2: i32) -> (i32, i32) {
    %c0_i32 = arith.constant 0 : i32
    return %arg0, %arg2 : i32, i32
  }
  func.func @transform_1(%arg0: i32, %arg1: i32, %arg2: i32) -> (i32, i32) {
    %c0_i32 = arith.constant 0 : i32
    return %arg2, %arg1 : i32, i32
  }
  func.func @transform_2(%arg0: i32, %arg1: i32, %arg2: i32) -> (i32, i32) {
    %c0_i32 = arith.constant 0 : i32
    %c0_i32_0 = arith.constant 0 : i32
    return %c0_i32, %arg1 : i32, i32
  }
  func.func @transform_3(%arg0: i32, %arg1: i32, %arg2: i32) -> (i32, i32) {
    %c0_i32 = arith.constant 0 : i32
    return %arg0, %arg1 : i32, i32
  }
}

module attributes {stable_mosaic.version = 11 : i64} {
  func.func @_ln_last_kernel(%arg0: i32, %arg1: memref<512x8xf32, #tpu.memory_space<vmem>>, %arg2: memref<1x8xf32, #tpu.memory_space<vmem>>, %arg3: memref<1x8xf32, #tpu.memory_space<vmem>>, %arg4: memref<512x8xf32, #tpu.memory_space<vmem>>) attributes {dimension_semantics = [#tpu.dimension_semantics<parallel>], iteration_bounds = array<i64: 1>, scalar_prefetch = 0 : i64, scratch_operands = 0 : i64, tpu.core_type = #tpu.core_type<tc>, window_params = [{transform_indices = @transform_0, window_bounds = array<i64: 512, 8>}, {pipeline_mode = #tpu.pipeline_mode<synchronous>, transform_indices = @transform_1, window_bounds = array<i64: 1, 8>}, {pipeline_mode = #tpu.pipeline_mode<synchronous>, transform_indices = @transform_2, window_bounds = array<i64: 1, 8>}, {transform_indices = @transform_3, window_bounds = array<i64: 512, 8>}]} {
    %c0 = arith.constant 0 : index
    %c0_0 = arith.constant 0 : index
    %0 = vector.load %arg1[%c0, %c0_0] : memref<512x8xf32, #tpu.memory_space<vmem>>, vector<512x8xf32>
    %cst = arith.constant dense<0.000000e+00> : vector<512xf32>
    %1 = vector.multi_reduction <add>, %0, %cst [1] : vector<512x8xf32> to vector<512xf32>
    %2 = vector.shape_cast %1 : vector<512xf32> to vector<512x1xf32>
    %cst_1 = arith.constant 8.000000e+00 : f32
    %3 = vector.broadcast %cst_1 : f32 to vector<512x1xf32>
    %4 = arith.divf %2, %3 : vector<512x1xf32>
    %5 = vector.broadcast %4 : vector<512x1xf32> to vector<512x8xf32>
    %6 = arith.subf %0, %5 : vector<512x8xf32>
    %7 = arith.mulf %6, %6 : vector<512x8xf32>
    %cst_2 = arith.constant dense<0.000000e+00> : vector<512xf32>
    %8 = vector.multi_reduction <add>, %7, %cst_2 [1] : vector<512x8xf32> to vector<512xf32>
    %9 = vector.shape_cast %8 : vector<512xf32> to vector<512x1xf32>
    %cst_3 = arith.constant 8.000000e+00 : f32
    %10 = vector.broadcast %cst_3 : f32 to vector<512x1xf32>
    %11 = arith.divf %9, %10 : vector<512x1xf32>
    %cst_4 = arith.constant 9.99999974E-6 : f32
    %12 = vector.broadcast %cst_4 : f32 to vector<512x1xf32>
    %13 = arith.addf %11, %12 : vector<512x1xf32>
    %14 = math.rsqrt %13 : vector<512x1xf32>
    %15 = vector.broadcast %14 : vector<512x1xf32> to vector<512x8xf32>
    %16 = arith.mulf %6, %15 : vector<512x8xf32>
    %c0_5 = arith.constant 0 : index
    %c0_6 = arith.constant 0 : index
    %17 = vector.load %arg2[%c0_5, %c0_6] : memref<1x8xf32, #tpu.memory_space<vmem>>, vector<1x8xf32>
    %18 = vector.broadcast %17 : vector<1x8xf32> to vector<512x8xf32>
    %19 = arith.mulf %16, %18 : vector<512x8xf32>
    %c0_7 = arith.constant 0 : index
    %c0_8 = arith.constant 0 : index
    %20 = vector.load %arg3[%c0_7, %c0_8] : memref<1x8xf32, #tpu.memory_space<vmem>>, vector<1x8xf32>
    %21 = vector.broadcast %20 : vector<1x8xf32> to vector<512x8xf32>
    %22 = arith.addf %19, %21 : vector<512x8xf32>
    %cst_9 = arith.constant 0.000000e+00 : f32
    %23 = vector.broadcast %cst_9 : f32 to vector<512x8xf32>
    %24 = arith.maximumf %22, %23 : vector<512x8xf32>
    %c0_10 = arith.constant 0 : index
    %c0_11 = arith.constant 0 : index
    %25 = vector.load %arg4[%c0_10, %c0_11] : memref<512x8xf32, #tpu.memory_space<vmem>>, vector<512x8xf32>
    tpu.vector_store %arg4[%c0_10, %c0_11], %24 {strides = array<i32>} : memref<512x8xf32, #tpu.memory_space<vmem>>, vector<512x8xf32>,
    return
  }
  func.func @transform_0(%arg0: i32) -> (i32, i32) {
    %c0_i32 = arith.constant 0 : i32
    %c0_i32_0 = arith.constant 0 : i32
    return %arg0, %c0_i32 : i32, i32
  }
  func.func @transform_1(%arg0: i32) -> (i32, i32) {
    %c0_i32 = arith.constant 0 : i32
    %c0_i32_0 = arith.constant 0 : i32
    %c0_i32_1 = arith.constant 0 : i32
    return %c0_i32, %c0_i32_0 : i32, i32
  }
  func.func @transform_2(%arg0: i32) -> (i32, i32) {
    %c0_i32 = arith.constant 0 : i32
    %c0_i32_0 = arith.constant 0 : i32
    %c0_i32_1 = arith.constant 0 : i32
    return %c0_i32, %c0_i32_0 : i32, i32
  }
  func.func @transform_3(%arg0: i32) -> (i32, i32) {
    %c0_i32 = arith.constant 0 : i32
    %c0_i32_0 = arith.constant 0 : i32
    return %arg0, %c0_i32 : i32, i32
  }
}

module attributes {stable_mosaic.version = 11 : i64} {
  func.func @_ln_last_res_kernel(%arg0: i32, %arg1: memref<512x8xf32, #tpu.memory_space<vmem>>, %arg2: memref<512x8xf32, #tpu.memory_space<vmem>>, %arg3: memref<1x8xf32, #tpu.memory_space<vmem>>, %arg4: memref<1x8xf32, #tpu.memory_space<vmem>>, %arg5: memref<512x8xf32, #tpu.memory_space<vmem>>) attributes {dimension_semantics = [#tpu.dimension_semantics<parallel>], iteration_bounds = array<i64: 1>, scalar_prefetch = 0 : i64, scratch_operands = 0 : i64, tpu.core_type = #tpu.core_type<tc>, window_params = [{transform_indices = @transform_0, window_bounds = array<i64: 512, 8>}, {transform_indices = @transform_1, window_bounds = array<i64: 512, 8>}, {pipeline_mode = #tpu.pipeline_mode<synchronous>, transform_indices = @transform_2, window_bounds = array<i64: 1, 8>}, {pipeline_mode = #tpu.pipeline_mode<synchronous>, transform_indices = @transform_3, window_bounds = array<i64: 1, 8>}, {transform_indices = @transform_4, window_bounds = array<i64: 512, 8>}]} {
    %c0 = arith.constant 0 : index
    %c0_0 = arith.constant 0 : index
    %0 = vector.load %arg1[%c0, %c0_0] : memref<512x8xf32, #tpu.memory_space<vmem>>, vector<512x8xf32>
    %cst = arith.constant dense<0.000000e+00> : vector<512xf32>
    %1 = vector.multi_reduction <add>, %0, %cst [1] : vector<512x8xf32> to vector<512xf32>
    %2 = vector.shape_cast %1 : vector<512xf32> to vector<512x1xf32>
    %cst_1 = arith.constant 8.000000e+00 : f32
    %3 = vector.broadcast %cst_1 : f32 to vector<512x1xf32>
    %4 = arith.divf %2, %3 : vector<512x1xf32>
    %5 = vector.broadcast %4 : vector<512x1xf32> to vector<512x8xf32>
    %6 = arith.subf %0, %5 : vector<512x8xf32>
    %7 = arith.mulf %6, %6 : vector<512x8xf32>
    %cst_2 = arith.constant dense<0.000000e+00> : vector<512xf32>
    %8 = vector.multi_reduction <add>, %7, %cst_2 [1] : vector<512x8xf32> to vector<512xf32>
    %9 = vector.shape_cast %8 : vector<512xf32> to vector<512x1xf32>
    %cst_3 = arith.constant 8.000000e+00 : f32
    %10 = vector.broadcast %cst_3 : f32 to vector<512x1xf32>
    %11 = arith.divf %9, %10 : vector<512x1xf32>
    %cst_4 = arith.constant 9.99999974E-6 : f32
    %12 = vector.broadcast %cst_4 : f32 to vector<512x1xf32>
    %13 = arith.addf %11, %12 : vector<512x1xf32>
    %14 = math.rsqrt %13 : vector<512x1xf32>
    %15 = vector.broadcast %14 : vector<512x1xf32> to vector<512x8xf32>
    %16 = arith.mulf %6, %15 : vector<512x8xf32>
    %c0_5 = arith.constant 0 : index
    %c0_6 = arith.constant 0 : index
    %17 = vector.load %arg3[%c0_5, %c0_6] : memref<1x8xf32, #tpu.memory_space<vmem>>, vector<1x8xf32>
    %18 = vector.broadcast %17 : vector<1x8xf32> to vector<512x8xf32>
    %19 = arith.mulf %16, %18 : vector<512x8xf32>
    %c0_7 = arith.constant 0 : index
    %c0_8 = arith.constant 0 : index
    %20 = vector.load %arg4[%c0_7, %c0_8] : memref<1x8xf32, #tpu.memory_space<vmem>>, vector<1x8xf32>
    %21 = vector.broadcast %20 : vector<1x8xf32> to vector<512x8xf32>
    %22 = arith.addf %19, %21 : vector<512x8xf32>
    %c0_9 = arith.constant 0 : index
    %c0_10 = arith.constant 0 : index
    %23 = vector.load %arg2[%c0_9, %c0_10] : memref<512x8xf32, #tpu.memory_space<vmem>>, vector<512x8xf32>
    %24 = arith.addf %22, %23 : vector<512x8xf32>
    %cst_11 = arith.constant 0.000000e+00 : f32
    %25 = vector.broadcast %cst_11 : f32 to vector<512x8xf32>
    %26 = arith.maximumf %24, %25 : vector<512x8xf32>
    %c0_12 = arith.constant 0 : index
    %c0_13 = arith.constant 0 : index
    %27 = vector.load %arg5[%c0_12, %c0_13] : memref<512x8xf32, #tpu.memory_space<vmem>>, vector<512x8xf32>
    tpu.vector_store %arg5[%c0_12, %c0_13], %26 {strides = array<i32>} : memref<512x8xf32, #tpu.memory_space<vmem>>, vector<512x8xf32>,
    return
  }
  func.func @transform_0(%arg0: i32) -> (i32, i32) {
    %c0_i32 = arith.constant 0 : i32
    %c0_i32_0 = arith.constant 0 : i32
    return %arg0, %c0_i32 : i32, i32
  }
  func.func @transform_1(%arg0: i32) -> (i32, i32) {
    %c0_i32 = arith.constant 0 : i32
    %c0_i32_0 = arith.constant 0 : i32
    return %arg0, %c0_i32 : i32, i32
  }
  func.func @transform_2(%arg0: i32) -> (i32, i32) {
    %c0_i32 = arith.constant 0 : i32
    %c0_i32_0 = arith.constant 0 : i32
    %c0_i32_1 = arith.constant 0 : i32
    return %c0_i32, %c0_i32_0 : i32, i32
  }
  func.func @transform_3(%arg0: i32) -> (i32, i32) {
    %c0_i32 = arith.constant 0 : i32
    %c0_i32_0 = arith.constant 0 : i32
    %c0_i32_1 = arith.constant 0 : i32
    return %c0_i32, %c0_i32_0 : i32, i32
  }
  func.func @transform_4(%arg0: i32) -> (i32, i32) {
    %c0_i32 = arith.constant 0 : i32
    %c0_i32_0 = arith.constant 0 : i32
    return %arg0, %c0_i32 : i32, i32
  }
}

module attributes {stable_mosaic.version = 11 : i64} {
  func.func @_matmul_kernel(%arg0: i32, %arg1: i32, %arg2: i32, %arg3: memref<16x256xbf16, #tpu.memory_space<vmem>>, %arg4: memref<256x128xbf16, #tpu.memory_space<vmem>>, %arg5: memref<1x128xf32, #tpu.memory_space<vmem>>, %arg6: memref<16x128xf32, #tpu.memory_space<vmem>>, %arg7: memref<16x128xf32, #tpu.memory_space<vmem>>) attributes {dimension_semantics = [#tpu.dimension_semantics<parallel>, #tpu.dimension_semantics<parallel>, #tpu.dimension_semantics<arbitrary>], iteration_bounds = array<i64: 1, 1, 1>, scalar_prefetch = 0 : i64, scratch_operands = 1 : i64, tpu.core_type = #tpu.core_type<tc>, window_params = [{transform_indices = @transform_0, window_bounds = array<i64: 16, 256>}, {transform_indices = @transform_1, window_bounds = array<i64: 256, 128>}, {transform_indices = @transform_2, window_bounds = array<i64: 1, 128>}, {transform_indices = @transform_3, window_bounds = array<i64: 16, 128>}]} {
    %c0_i32 = arith.constant 0 : i32
    %0 = arith.cmpi eq, %arg2, %c0_i32 : i32
    %1 = arith.extui %0 : i1 to i32
    %c0_i32_0 = arith.constant 0 : i32
    %2 = arith.cmpi ne, %1, %c0_i32_0 : i32
    scf.if %2 {
      %cst_10 = arith.constant 0.000000e+00 : f32
      %12 = vector.broadcast %cst_10 : f32 to vector<16x128xf32>
      %c0_11 = arith.constant 0 : index
      %c0_12 = arith.constant 0 : index
      %13 = vector.load %arg7[%c0_11, %c0_12] : memref<16x128xf32, #tpu.memory_space<vmem>>, vector<16x128xf32>
      tpu.vector_store %arg7[%c0_11, %c0_12], %12 {strides = array<i32>} : memref<16x128xf32, #tpu.memory_space<vmem>>, vector<16x128xf32>,
    } else {
    }
    %c0 = arith.constant 0 : index
    %c0_1 = arith.constant 0 : index
    %3 = vector.load %arg7[%c0, %c0_1] : memref<16x128xf32, #tpu.memory_space<vmem>>, vector<16x128xf32>
    %c0_2 = arith.constant 0 : index
    %c0_3 = arith.constant 0 : index
    %4 = vector.load %arg3[%c0_2, %c0_3] : memref<16x256xbf16, #tpu.memory_space<vmem>>, vector<16x256xbf16>
    %c0_4 = arith.constant 0 : index
    %c0_5 = arith.constant 0 : index
    %5 = vector.load %arg4[%c0_4, %c0_5] : memref<256x128xbf16, #tpu.memory_space<vmem>>, vector<256x128xbf16>
    %cst = arith.constant dense<0.000000e+00> : vector<16x128xf32>
    %6 = tpu.matmul %4, %5, %cst {dimension_numbers = #tpu.dot_dimension_numbers<[1], [0], [0], [1], [0, 0, 1, 1], [], []>} : vector<16x256xbf16>, vector<256x128xbf16>, vector<16x128xf32> -> vector<16x128xf32>
    %7 = arith.addf %3, %6 : vector<16x128xf32>
    %c0_6 = arith.constant 0 : index
    %c0_7 = arith.constant 0 : index
    %8 = vector.load %arg7[%c0_6, %c0_7] : memref<16x128xf32, #tpu.memory_space<vmem>>, vector<16x128xf32>
    tpu.vector_store %arg7[%c0_6, %c0_7], %7 {strides = array<i32>} : memref<16x128xf32, #tpu.memory_space<vmem>>, vector<16x128xf32>,
    %c0_i32_8 = arith.constant 0 : i32
    %9 = arith.cmpi eq, %arg2, %c0_i32_8 : i32
    %10 = arith.extui %9 : i1 to i32
    %c0_i32_9 = arith.constant 0 : i32
    %11 = arith.cmpi ne, %10, %c0_i32_9 : i32
    scf.if %11 {
      %c0_10 = arith.constant 0 : index
      %c0_11 = arith.constant 0 : index
      %12 = vector.load %arg7[%c0_10, %c0_11] : memref<16x128xf32, #tpu.memory_space<vmem>>, vector<16x128xf32>
      %c0_12 = arith.constant 0 : index
      %c0_13 = arith.constant 0 : index
      %13 = vector.load %arg5[%c0_12, %c0_13] : memref<1x128xf32, #tpu.memory_space<vmem>>, vector<1x128xf32>
      %14 = vector.broadcast %13 : vector<1x128xf32> to vector<16x128xf32>
      %15 = arith.addf %12, %14 : vector<16x128xf32>
      %c0_14 = arith.constant 0 : index
      %c0_15 = arith.constant 0 : index
      %16 = vector.load %arg6[%c0_14, %c0_15] : memref<16x128xf32, #tpu.memory_space<vmem>>, vector<16x128xf32>
      tpu.vector_store %arg6[%c0_14, %c0_15], %15 {strides = array<i32>} : memref<16x128xf32, #tpu.memory_space<vmem>>, vector<16x128xf32>,
    } else {
    }
    return
  }
  func.func @transform_0(%arg0: i32, %arg1: i32, %arg2: i32) -> (i32, i32) {
    %c0_i32 = arith.constant 0 : i32
    return %arg0, %arg2 : i32, i32
  }
  func.func @transform_1(%arg0: i32, %arg1: i32, %arg2: i32) -> (i32, i32) {
    %c0_i32 = arith.constant 0 : i32
    return %arg2, %arg1 : i32, i32
  }
  func.func @transform_2(%arg0: i32, %arg1: i32, %arg2: i32) -> (i32, i32) {
    %c0_i32 = arith.constant 0 : i32
    %c0_i32_0 = arith.constant 0 : i32
    return %c0_i32, %arg1 : i32, i32
  }
  func.func @transform_3(%arg0: i32, %arg1: i32, %arg2: i32) -> (i32, i32) {
    %c0_i32 = arith.constant 0 : i32
    return %arg0, %arg1 : i32, i32
  }
}

module attributes {stable_mosaic.version = 11 : i64} {
  func.func @_ln_last_kernel(%arg0: i32, %arg1: memref<16x32xf32, #tpu.memory_space<vmem>>, %arg2: memref<1x32xf32, #tpu.memory_space<vmem>>, %arg3: memref<1x32xf32, #tpu.memory_space<vmem>>, %arg4: memref<16x32xf32, #tpu.memory_space<vmem>>) attributes {dimension_semantics = [#tpu.dimension_semantics<parallel>], iteration_bounds = array<i64: 1>, scalar_prefetch = 0 : i64, scratch_operands = 0 : i64, tpu.core_type = #tpu.core_type<tc>, window_params = [{transform_indices = @transform_0, window_bounds = array<i64: 16, 32>}, {pipeline_mode = #tpu.pipeline_mode<synchronous>, transform_indices = @transform_1, window_bounds = array<i64: 1, 32>}, {pipeline_mode = #tpu.pipeline_mode<synchronous>, transform_indices = @transform_2, window_bounds = array<i64: 1, 32>}, {transform_indices = @transform_3, window_bounds = array<i64: 16, 32>}]} {
    %c0 = arith.constant 0 : index
    %c0_0 = arith.constant 0 : index
    %0 = vector.load %arg1[%c0, %c0_0] : memref<16x32xf32, #tpu.memory_space<vmem>>, vector<16x32xf32>
    %cst = arith.constant dense<0.000000e+00> : vector<16xf32>
    %1 = vector.multi_reduction <add>, %0, %cst [1] : vector<16x32xf32> to vector<16xf32>
    %2 = vector.shape_cast %1 : vector<16xf32> to vector<16x1xf32>
    %cst_1 = arith.constant 3.200000e+01 : f32
    %3 = vector.broadcast %cst_1 : f32 to vector<16x1xf32>
    %4 = arith.divf %2, %3 : vector<16x1xf32>
    %5 = vector.broadcast %4 : vector<16x1xf32> to vector<16x32xf32>
    %6 = arith.subf %0, %5 : vector<16x32xf32>
    %7 = arith.mulf %6, %6 : vector<16x32xf32>
    %cst_2 = arith.constant dense<0.000000e+00> : vector<16xf32>
    %8 = vector.multi_reduction <add>, %7, %cst_2 [1] : vector<16x32xf32> to vector<16xf32>
    %9 = vector.shape_cast %8 : vector<16xf32> to vector<16x1xf32>
    %cst_3 = arith.constant 3.200000e+01 : f32
    %10 = vector.broadcast %cst_3 : f32 to vector<16x1xf32>
    %11 = arith.divf %9, %10 : vector<16x1xf32>
    %cst_4 = arith.constant 9.99999974E-6 : f32
    %12 = vector.broadcast %cst_4 : f32 to vector<16x1xf32>
    %13 = arith.addf %11, %12 : vector<16x1xf32>
    %14 = math.rsqrt %13 : vector<16x1xf32>
    %15 = vector.broadcast %14 : vector<16x1xf32> to vector<16x32xf32>
    %16 = arith.mulf %6, %15 : vector<16x32xf32>
    %c0_5 = arith.constant 0 : index
    %c0_6 = arith.constant 0 : index
    %17 = vector.load %arg2[%c0_5, %c0_6] : memref<1x32xf32, #tpu.memory_space<vmem>>, vector<1x32xf32>
    %18 = vector.broadcast %17 : vector<1x32xf32> to vector<16x32xf32>
    %19 = arith.mulf %16, %18 : vector<16x32xf32>
    %c0_7 = arith.constant 0 : index
    %c0_8 = arith.constant 0 : index
    %20 = vector.load %arg3[%c0_7, %c0_8] : memref<1x32xf32, #tpu.memory_space<vmem>>, vector<1x32xf32>
    %21 = vector.broadcast %20 : vector<1x32xf32> to vector<16x32xf32>
    %22 = arith.addf %19, %21 : vector<16x32xf32>
    %cst_9 = arith.constant 0.000000e+00 : f32
    %23 = vector.broadcast %cst_9 : f32 to vector<16x32xf32>
    %24 = arith.maximumf %22, %23 : vector<16x32xf32>
    %c0_10 = arith.constant 0 : index
    %c0_11 = arith.constant 0 : index
    %25 = vector.load %arg4[%c0_10, %c0_11] : memref<16x32xf32, #tpu.memory_space<vmem>>, vector<16x32xf32>
    tpu.vector_store %arg4[%c0_10, %c0_11], %24 {strides = array<i32>} : memref<16x32xf32, #tpu.memory_space<vmem>>, vector<16x32xf32>,
    return
  }
  func.func @transform_0(%arg0: i32) -> (i32, i32) {
    %c0_i32 = arith.constant 0 : i32
    %c0_i32_0 = arith.constant 0 : i32
    return %arg0, %c0_i32 : i32, i32
  }
  func.func @transform_1(%arg0: i32) -> (i32, i32) {
    %c0_i32 = arith.constant 0 : i32
    %c0_i32_0 = arith.constant 0 : i32
    %c0_i32_1 = arith.constant 0 : i32
    return %c0_i32, %c0_i32_0 : i32, i32
  }
  func.func @transform_2(%arg0: i32) -> (i32, i32) {
    %c0_i32 = arith.constant 0 : i32
    %c0_i32_0 = arith.constant 0 : i32
    %c0_i32_1 = arith.constant 0 : i32
    return %c0_i32, %c0_i32_0 : i32, i32
  }
  func.func @transform_3(%arg0: i32) -> (i32, i32) {
    %c0_i32 = arith.constant 0 : i32
    %c0_i32_0 = arith.constant 0 : i32
    return %arg0, %c0_i32 : i32, i32
  }
}

module attributes {stable_mosaic.version = 11 : i64} {
  func.func @_bilstm_kernel(%arg0: memref<8x8x256xf32, #tpu.memory_space<vmem>>, %arg1: memref<64x128xf32, #tpu.memory_space<vmem>>, %arg2: memref<8x8x32xf32, #tpu.memory_space<vmem>>, %arg3: memref<8x8x32xf32, #tpu.memory_space<vmem>>, %arg4: memref<16x64xf32, #tpu.memory_space<vmem>>, %arg5: memref<16x32xf32, #tpu.memory_space<vmem>>) attributes {dimension_semantics = [], scalar_prefetch = 0 : i64, scratch_operands = 2 : i64, tpu.core_type = #tpu.core_type<tc>} {
    %cst = arith.constant 0.000000e+00 : f32
    %0 = vector.broadcast %cst : f32 to vector<16x64xf32>
    %c0 = arith.constant 0 : index
    %c0_0 = arith.constant 0 : index
    %1 = vector.load %arg4[%c0, %c0_0] : memref<16x64xf32, #tpu.memory_space<vmem>>, vector<16x64xf32>
    tpu.vector_store %arg4[%c0, %c0_0], %0 {strides = array<i32>} : memref<16x64xf32, #tpu.memory_space<vmem>>, vector<16x64xf32>,
    %cst_1 = arith.constant 0.000000e+00 : f32
    %2 = vector.broadcast %cst_1 : f32 to vector<16x32xf32>
    %c0_2 = arith.constant 0 : index
    %c0_3 = arith.constant 0 : index
    %3 = vector.load %arg5[%c0_2, %c0_3] : memref<16x32xf32, #tpu.memory_space<vmem>>, vector<16x32xf32>
    tpu.vector_store %arg5[%c0_2, %c0_3], %2 {strides = array<i32>} : memref<16x32xf32, #tpu.memory_space<vmem>>, vector<16x32xf32>,
    %cst_4 = arith.constant 0.000000e+00 : f32
    %4 = vector.broadcast %cst_4 : f32 to vector<8x32xf32>
    %c0_i32 = arith.constant 0 : i32
    %c8_i32 = arith.constant 8 : i32
    %5 = arith.addi %c0_i32, %c8_i32 : i32
    %c1_i32 = arith.constant 1 : i32
    scf.for %arg6 = %c0_i32 to %5 step %c1_i32  : i32 {
      %6 = arith.index_cast %arg6 : i32 to index
      %c0_6 = arith.constant 0 : index
      %c0_7 = arith.constant 0 : index
      %7 = vector.load %arg0[%6, %c0_6, %c0_7] : memref<8x8x256xf32, #tpu.memory_space<vmem>>, vector<1x8x256xf32>
      %8 = vector.shape_cast %7 : vector<1x8x256xf32> to vector<8x256xf32>
      %c7_i32 = arith.constant 7 : i32
      %9 = arith.subi %c7_i32, %arg6 : i32
      %10 = arith.index_cast %9 : i32 to index
      %c0_8 = arith.constant 0 : index
      %c0_9 = arith.constant 0 : index
      %11 = vector.load %arg0[%10, %c0_8, %c0_9] : memref<8x8x256xf32, #tpu.memory_space<vmem>>, vector<1x8x256xf32>
      %12 = vector.shape_cast %11 : vector<1x8x256xf32> to vector<8x256xf32>
      %13 = vector.extract_strided_slice %8 {offsets = [0, 0], sizes = [8, 128], strides = [1, 1]} : vector<8x256xf32> to vector<8x128xf32>
      %14 = vector.extract_strided_slice %12 {offsets = [0, 128], sizes = [8, 128], strides = [1, 1]} : vector<8x256xf32> to vector<8x128xf32>
      %15 = tpu.concatenate %13, %14 in 0 : vector<8x128xf32>, vector<8x128xf32> -> vector<16x128xf32>
      %c0_10 = arith.constant 0 : index
      %c0_11 = arith.constant 0 : index
      %16 = vector.load %arg4[%c0_10, %c0_11] : memref<16x64xf32, #tpu.memory_space<vmem>>, vector<16x64xf32>
      %c0_12 = arith.constant 0 : index
      %c0_13 = arith.constant 0 : index
      %17 = vector.load %arg1[%c0_12, %c0_13] : memref<64x128xf32, #tpu.memory_space<vmem>>, vector<64x128xf32>
      %cst_14 = arith.constant dense<0.000000e+00> : vector<16x128xf32>
      %18 = tpu.matmul %16, %17, %cst_14 {dimension_numbers = #tpu.dot_dimension_numbers<[1], [0], [0], [1], [0, 0, 1, 1], [], []>} : vector<16x64xf32>, vector<64x128xf32>, vector<16x128xf32> -> vector<16x128xf32>
      %19 = arith.addf %15, %18 : vector<16x128xf32>
      %20 = vector.extract_strided_slice %19 {offsets = [0, 0], sizes = [16, 32], strides = [1, 1]} : vector<16x128xf32> to vector<16x32xf32>
      %cst_15 = arith.constant 0.000000e+00 : f32
      %21 = vector.broadcast %cst_15 : f32 to vector<16x32xf32>
      %22 = arith.subf %21, %20 : vector<16x32xf32>
      %23 = math.exp %22 : vector<16x32xf32>
      %cst_16 = arith.constant 1.000000e+00 : f32
      %24 = vector.broadcast %cst_16 : f32 to vector<16x32xf32>
      %25 = arith.addf %24, %23 : vector<16x32xf32>
      %cst_17 = arith.constant 1.000000e+00 : f32
      %26 = vector.broadcast %cst_17 : f32 to vector<16x32xf32>
      %27 = arith.divf %26, %25 : vector<16x32xf32>
      %28 = vector.extract_strided_slice %19 {offsets = [0, 32], sizes = [16, 32], strides = [1, 1]} : vector<16x128xf32> to vector<16x32xf32>
      %cst_18 = arith.constant 0.000000e+00 : f32
      %29 = vector.broadcast %cst_18 : f32 to vector<16x32xf32>
      %30 = arith.subf %29, %28 : vector<16x32xf32>
      %31 = math.exp %30 : vector<16x32xf32>
      %cst_19 = arith.constant 1.000000e+00 : f32
      %32 = vector.broadcast %cst_19 : f32 to vector<16x32xf32>
      %33 = arith.addf %32, %31 : vector<16x32xf32>
      %cst_20 = arith.constant 1.000000e+00 : f32
      %34 = vector.broadcast %cst_20 : f32 to vector<16x32xf32>
      %35 = arith.divf %34, %33 : vector<16x32xf32>
      %36 = vector.extract_strided_slice %19 {offsets = [0, 64], sizes = [16, 32], strides = [1, 1]} : vector<16x128xf32> to vector<16x32xf32>
      %37 = math.tanh %36 : vector<16x32xf32>
      %38 = vector.extract_strided_slice %19 {offsets = [0, 96], sizes = [16, 32], strides = [1, 1]} : vector<16x128xf32> to vector<16x32xf32>
      %cst_21 = arith.constant 0.000000e+00 : f32
      %39 = vector.broadcast %cst_21 : f32 to vector<16x32xf32>
      %40 = arith.subf %39, %38 : vector<16x32xf32>
      %41 = math.exp %40 : vector<16x32xf32>
      %cst_22 = arith.constant 1.000000e+00 : f32
      %42 = vector.broadcast %cst_22 : f32 to vector<16x32xf32>
      %43 = arith.addf %42, %41 : vector<16x32xf32>
      %cst_23 = arith.constant 1.000000e+00 : f32
      %44 = vector.broadcast %cst_23 : f32 to vector<16x32xf32>
      %45 = arith.divf %44, %43 : vector<16x32xf32>
      %c0_24 = arith.constant 0 : index
      %c0_25 = arith.constant 0 : index
      %46 = vector.load %arg5[%c0_24, %c0_25] : memref<16x32xf32, #tpu.memory_space<vmem>>, vector<16x32xf32>
      %47 = arith.mulf %35, %46 : vector<16x32xf32>
      %48 = arith.mulf %27, %37 : vector<16x32xf32>
      %49 = arith.addf %47, %48 : vector<16x32xf32>
      %50 = math.tanh %49 : vector<16x32xf32>
      %51 = arith.mulf %45, %50 : vector<16x32xf32>
      %c0_26 = arith.constant 0 : index
      %c0_27 = arith.constant 0 : index
      %52 = vector.load %arg5[%c0_26, %c0_27] : memref<16x32xf32, #tpu.memory_space<vmem>>, vector<16x32xf32>
      tpu.vector_store %arg5[%c0_26, %c0_27], %49 {strides = array<i32>} : memref<16x32xf32, #tpu.memory_space<vmem>>, vector<16x32xf32>,
      %53 = vector.extract_strided_slice %51 {offsets = [0, 0], sizes = [8, 32], strides = [1, 1]} : vector<16x32xf32> to vector<8x32xf32>
      %54 = vector.extract_strided_slice %51 {offsets = [8, 0], sizes = [8, 32], strides = [1, 1]} : vector<16x32xf32> to vector<8x32xf32>
      %55 = tpu.concatenate %53, %4 in 1 : vector<8x32xf32>, vector<8x32xf32> -> vector<8x64xf32>
      %56 = tpu.concatenate %4, %54 in 1 : vector<8x32xf32>, vector<8x32xf32> -> vector<8x64xf32>
      %57 = tpu.concatenate %55, %56 in 0 : vector<8x64xf32>, vector<8x64xf32> -> vector<16x64xf32>
      %c0_28 = arith.constant 0 : index
      %c0_29 = arith.constant 0 : index
      %58 = vector.load %arg4[%c0_28, %c0_29] : memref<16x64xf32, #tpu.memory_space<vmem>>, vector<16x64xf32>
      tpu.vector_store %arg4[%c0_28, %c0_29], %57 {strides = array<i32>} : memref<16x64xf32, #tpu.memory_space<vmem>>, vector<16x64xf32>,
      %59 = arith.index_cast %arg6 : i32 to index
      %c0_30 = arith.constant 0 : index
      %c0_31 = arith.constant 0 : index
      %60 = vector.load %arg2[%59, %c0_30, %c0_31] : memref<8x8x32xf32, #tpu.memory_space<vmem>>, vector<1x8x32xf32>
      %61 = vector.shape_cast %60 : vector<1x8x32xf32> to vector<8x32xf32>
      %62 = vector.shape_cast %53 : vector<8x32xf32> to vector<1x8x32xf32>
      tpu.vector_store %arg2[%59, %c0_30, %c0_31], %62 {strides = array<i32>} : memref<8x8x32xf32, #tpu.memory_space<vmem>>, vector<1x8x32xf32>,
      %c7_i32_32 = arith.constant 7 : i32
      %63 = arith.subi %c7_i32_32, %arg6 : i32
      %64 = arith.index_cast %63 : i32 to index
      %c0_33 = arith.constant 0 : index
      %c0_34 = arith.constant 0 : index
      %65 = vector.load %arg3[%64, %c0_33, %c0_34] : memref<8x8x32xf32, #tpu.memory_space<vmem>>, vector<1x8x32xf32>
      %66 = vector.shape_cast %65 : vector<1x8x32xf32> to vector<8x32xf32>
      %67 = vector.shape_cast %54 : vector<8x32xf32> to vector<1x8x32xf32>
      tpu.vector_store %arg3[%64, %c0_33, %c0_34], %67 {strides = array<i32>} : memref<8x8x32xf32, #tpu.memory_space<vmem>>, vector<1x8x32xf32>,
    }
    %c8_i32_5 = arith.constant 8 : i32
    return
  }
}

module attributes {stable_mosaic.version = 11 : i64} {
  func.func @_matmul_kernel(%arg0: i32, %arg1: i32, %arg2: i32, %arg3: memref<64x128xbf16, #tpu.memory_space<vmem>>, %arg4: memref<128x256xbf16, #tpu.memory_space<vmem>>, %arg5: memref<1x256xf32, #tpu.memory_space<vmem>>, %arg6: memref<64x256xf32, #tpu.memory_space<vmem>>, %arg7: memref<64x256xf32, #tpu.memory_space<vmem>>) attributes {dimension_semantics = [#tpu.dimension_semantics<parallel>, #tpu.dimension_semantics<parallel>, #tpu.dimension_semantics<arbitrary>], iteration_bounds = array<i64: 1, 1, 1>, scalar_prefetch = 0 : i64, scratch_operands = 1 : i64, tpu.core_type = #tpu.core_type<tc>, window_params = [{transform_indices = @transform_0, window_bounds = array<i64: 64, 128>}, {transform_indices = @transform_1, window_bounds = array<i64: 128, 256>}, {transform_indices = @transform_2, window_bounds = array<i64: 1, 256>}, {transform_indices = @transform_3, window_bounds = array<i64: 64, 256>}]} {
    %c0_i32 = arith.constant 0 : i32
    %0 = arith.cmpi eq, %arg2, %c0_i32 : i32
    %1 = arith.extui %0 : i1 to i32
    %c0_i32_0 = arith.constant 0 : i32
    %2 = arith.cmpi ne, %1, %c0_i32_0 : i32
    scf.if %2 {
      %cst_10 = arith.constant 0.000000e+00 : f32
      %12 = vector.broadcast %cst_10 : f32 to vector<64x256xf32>
      %c0_11 = arith.constant 0 : index
      %c0_12 = arith.constant 0 : index
      %13 = vector.load %arg7[%c0_11, %c0_12] : memref<64x256xf32, #tpu.memory_space<vmem>>, vector<64x256xf32>
      tpu.vector_store %arg7[%c0_11, %c0_12], %12 {strides = array<i32>} : memref<64x256xf32, #tpu.memory_space<vmem>>, vector<64x256xf32>,
    } else {
    }
    %c0 = arith.constant 0 : index
    %c0_1 = arith.constant 0 : index
    %3 = vector.load %arg7[%c0, %c0_1] : memref<64x256xf32, #tpu.memory_space<vmem>>, vector<64x256xf32>
    %c0_2 = arith.constant 0 : index
    %c0_3 = arith.constant 0 : index
    %4 = vector.load %arg3[%c0_2, %c0_3] : memref<64x128xbf16, #tpu.memory_space<vmem>>, vector<64x128xbf16>
    %c0_4 = arith.constant 0 : index
    %c0_5 = arith.constant 0 : index
    %5 = vector.load %arg4[%c0_4, %c0_5] : memref<128x256xbf16, #tpu.memory_space<vmem>>, vector<128x256xbf16>
    %cst = arith.constant dense<0.000000e+00> : vector<64x256xf32>
    %6 = tpu.matmul %4, %5, %cst {dimension_numbers = #tpu.dot_dimension_numbers<[1], [0], [0], [1], [0, 0, 1, 1], [], []>} : vector<64x128xbf16>, vector<128x256xbf16>, vector<64x256xf32> -> vector<64x256xf32>
    %7 = arith.addf %3, %6 : vector<64x256xf32>
    %c0_6 = arith.constant 0 : index
    %c0_7 = arith.constant 0 : index
    %8 = vector.load %arg7[%c0_6, %c0_7] : memref<64x256xf32, #tpu.memory_space<vmem>>, vector<64x256xf32>
    tpu.vector_store %arg7[%c0_6, %c0_7], %7 {strides = array<i32>} : memref<64x256xf32, #tpu.memory_space<vmem>>, vector<64x256xf32>,
    %c0_i32_8 = arith.constant 0 : i32
    %9 = arith.cmpi eq, %arg2, %c0_i32_8 : i32
    %10 = arith.extui %9 : i1 to i32
    %c0_i32_9 = arith.constant 0 : i32
    %11 = arith.cmpi ne, %10, %c0_i32_9 : i32
    scf.if %11 {
      %c0_10 = arith.constant 0 : index
      %c0_11 = arith.constant 0 : index
      %12 = vector.load %arg7[%c0_10, %c0_11] : memref<64x256xf32, #tpu.memory_space<vmem>>, vector<64x256xf32>
      %c0_12 = arith.constant 0 : index
      %c0_13 = arith.constant 0 : index
      %13 = vector.load %arg5[%c0_12, %c0_13] : memref<1x256xf32, #tpu.memory_space<vmem>>, vector<1x256xf32>
      %14 = vector.broadcast %13 : vector<1x256xf32> to vector<64x256xf32>
      %15 = arith.addf %12, %14 : vector<64x256xf32>
      %c0_14 = arith.constant 0 : index
      %c0_15 = arith.constant 0 : index
      %16 = vector.load %arg6[%c0_14, %c0_15] : memref<64x256xf32, #tpu.memory_space<vmem>>, vector<64x256xf32>
      tpu.vector_store %arg6[%c0_14, %c0_15], %15 {strides = array<i32>} : memref<64x256xf32, #tpu.memory_space<vmem>>, vector<64x256xf32>,
    } else {
    }
    return
  }
  func.func @transform_0(%arg0: i32, %arg1: i32, %arg2: i32) -> (i32, i32) {
    %c0_i32 = arith.constant 0 : i32
    return %arg0, %arg2 : i32, i32
  }
  func.func @transform_1(%arg0: i32, %arg1: i32, %arg2: i32) -> (i32, i32) {
    %c0_i32 = arith.constant 0 : i32
    return %arg2, %arg1 : i32, i32
  }
  func.func @transform_2(%arg0: i32, %arg1: i32, %arg2: i32) -> (i32, i32) {
    %c0_i32 = arith.constant 0 : i32
    %c0_i32_0 = arith.constant 0 : i32
    return %c0_i32, %arg1 : i32, i32
  }
  func.func @transform_3(%arg0: i32, %arg1: i32, %arg2: i32) -> (i32, i32) {
    %c0_i32 = arith.constant 0 : i32
    return %arg0, %arg1 : i32, i32
  }
}

module attributes {stable_mosaic.version = 11 : i64} {
  func.func @_ln_last_kernel(%arg0: i32, %arg1: memref<16x64xf32, #tpu.memory_space<vmem>>, %arg2: memref<1x64xf32, #tpu.memory_space<vmem>>, %arg3: memref<1x64xf32, #tpu.memory_space<vmem>>, %arg4: memref<16x64xf32, #tpu.memory_space<vmem>>) attributes {dimension_semantics = [#tpu.dimension_semantics<parallel>], iteration_bounds = array<i64: 1>, scalar_prefetch = 0 : i64, scratch_operands = 0 : i64, tpu.core_type = #tpu.core_type<tc>, window_params = [{transform_indices = @transform_0, window_bounds = array<i64: 16, 64>}, {pipeline_mode = #tpu.pipeline_mode<synchronous>, transform_indices = @transform_1, window_bounds = array<i64: 1, 64>}, {pipeline_mode = #tpu.pipeline_mode<synchronous>, transform_indices = @transform_2, window_bounds = array<i64: 1, 64>}, {transform_indices = @transform_3, window_bounds = array<i64: 16, 64>}]} {
    %c0 = arith.constant 0 : index
    %c0_0 = arith.constant 0 : index
    %0 = vector.load %arg1[%c0, %c0_0] : memref<16x64xf32, #tpu.memory_space<vmem>>, vector<16x64xf32>
    %cst = arith.constant dense<0.000000e+00> : vector<16xf32>
    %1 = vector.multi_reduction <add>, %0, %cst [1] : vector<16x64xf32> to vector<16xf32>
    %2 = vector.shape_cast %1 : vector<16xf32> to vector<16x1xf32>
    %cst_1 = arith.constant 6.400000e+01 : f32
    %3 = vector.broadcast %cst_1 : f32 to vector<16x1xf32>
    %4 = arith.divf %2, %3 : vector<16x1xf32>
    %5 = vector.broadcast %4 : vector<16x1xf32> to vector<16x64xf32>
    %6 = arith.subf %0, %5 : vector<16x64xf32>
    %7 = arith.mulf %6, %6 : vector<16x64xf32>
    %cst_2 = arith.constant dense<0.000000e+00> : vector<16xf32>
    %8 = vector.multi_reduction <add>, %7, %cst_2 [1] : vector<16x64xf32> to vector<16xf32>
    %9 = vector.shape_cast %8 : vector<16xf32> to vector<16x1xf32>
    %cst_3 = arith.constant 6.400000e+01 : f32
    %10 = vector.broadcast %cst_3 : f32 to vector<16x1xf32>
    %11 = arith.divf %9, %10 : vector<16x1xf32>
    %cst_4 = arith.constant 9.99999974E-6 : f32
    %12 = vector.broadcast %cst_4 : f32 to vector<16x1xf32>
    %13 = arith.addf %11, %12 : vector<16x1xf32>
    %14 = math.rsqrt %13 : vector<16x1xf32>
    %15 = vector.broadcast %14 : vector<16x1xf32> to vector<16x64xf32>
    %16 = arith.mulf %6, %15 : vector<16x64xf32>
    %c0_5 = arith.constant 0 : index
    %c0_6 = arith.constant 0 : index
    %17 = vector.load %arg2[%c0_5, %c0_6] : memref<1x64xf32, #tpu.memory_space<vmem>>, vector<1x64xf32>
    %18 = vector.broadcast %17 : vector<1x64xf32> to vector<16x64xf32>
    %19 = arith.mulf %16, %18 : vector<16x64xf32>
    %c0_7 = arith.constant 0 : index
    %c0_8 = arith.constant 0 : index
    %20 = vector.load %arg3[%c0_7, %c0_8] : memref<1x64xf32, #tpu.memory_space<vmem>>, vector<1x64xf32>
    %21 = vector.broadcast %20 : vector<1x64xf32> to vector<16x64xf32>
    %22 = arith.addf %19, %21 : vector<16x64xf32>
    %cst_9 = arith.constant 0.000000e+00 : f32
    %23 = vector.broadcast %cst_9 : f32 to vector<16x64xf32>
    %24 = arith.maximumf %22, %23 : vector<16x64xf32>
    %c0_10 = arith.constant 0 : index
    %c0_11 = arith.constant 0 : index
    %25 = vector.load %arg4[%c0_10, %c0_11] : memref<16x64xf32, #tpu.memory_space<vmem>>, vector<16x64xf32>
    tpu.vector_store %arg4[%c0_10, %c0_11], %24 {strides = array<i32>} : memref<16x64xf32, #tpu.memory_space<vmem>>, vector<16x64xf32>,
    return
  }
  func.func @transform_0(%arg0: i32) -> (i32, i32) {
    %c0_i32 = arith.constant 0 : i32
    %c0_i32_0 = arith.constant 0 : i32
    return %arg0, %c0_i32 : i32, i32
  }
  func.func @transform_1(%arg0: i32) -> (i32, i32) {
    %c0_i32 = arith.constant 0 : i32
    %c0_i32_0 = arith.constant 0 : i32
    %c0_i32_1 = arith.constant 0 : i32
    return %c0_i32, %c0_i32_0 : i32, i32
  }
  func.func @transform_2(%arg0: i32) -> (i32, i32) {
    %c0_i32 = arith.constant 0 : i32
    %c0_i32_0 = arith.constant 0 : i32
    %c0_i32_1 = arith.constant 0 : i32
    return %c0_i32, %c0_i32_0 : i32, i32
  }
  func.func @transform_3(%arg0: i32) -> (i32, i32) {
    %c0_i32 = arith.constant 0 : i32
    %c0_i32_0 = arith.constant 0 : i32
    return %arg0, %c0_i32 : i32, i32
  }
}

module attributes {stable_mosaic.version = 11 : i64} {
  func.func @_matmul_kernel(%arg0: i32, %arg1: i32, %arg2: i32, %arg3: memref<16x128xbf16, #tpu.memory_space<vmem>>, %arg4: memref<128x256xbf16, #tpu.memory_space<vmem>>, %arg5: memref<1x256xf32, #tpu.memory_space<vmem>>, %arg6: memref<16x256xf32, #tpu.memory_space<vmem>>, %arg7: memref<16x256xf32, #tpu.memory_space<vmem>>) attributes {dimension_semantics = [#tpu.dimension_semantics<parallel>, #tpu.dimension_semantics<parallel>, #tpu.dimension_semantics<arbitrary>], iteration_bounds = array<i64: 1, 1, 1>, scalar_prefetch = 0 : i64, scratch_operands = 1 : i64, tpu.core_type = #tpu.core_type<tc>, window_params = [{transform_indices = @transform_0, window_bounds = array<i64: 16, 128>}, {transform_indices = @transform_1, window_bounds = array<i64: 128, 256>}, {transform_indices = @transform_2, window_bounds = array<i64: 1, 256>}, {transform_indices = @transform_3, window_bounds = array<i64: 16, 256>}]} {
    %c0_i32 = arith.constant 0 : i32
    %0 = arith.cmpi eq, %arg2, %c0_i32 : i32
    %1 = arith.extui %0 : i1 to i32
    %c0_i32_0 = arith.constant 0 : i32
    %2 = arith.cmpi ne, %1, %c0_i32_0 : i32
    scf.if %2 {
      %cst_10 = arith.constant 0.000000e+00 : f32
      %12 = vector.broadcast %cst_10 : f32 to vector<16x256xf32>
      %c0_11 = arith.constant 0 : index
      %c0_12 = arith.constant 0 : index
      %13 = vector.load %arg7[%c0_11, %c0_12] : memref<16x256xf32, #tpu.memory_space<vmem>>, vector<16x256xf32>
      tpu.vector_store %arg7[%c0_11, %c0_12], %12 {strides = array<i32>} : memref<16x256xf32, #tpu.memory_space<vmem>>, vector<16x256xf32>,
    } else {
    }
    %c0 = arith.constant 0 : index
    %c0_1 = arith.constant 0 : index
    %3 = vector.load %arg7[%c0, %c0_1] : memref<16x256xf32, #tpu.memory_space<vmem>>, vector<16x256xf32>
    %c0_2 = arith.constant 0 : index
    %c0_3 = arith.constant 0 : index
    %4 = vector.load %arg3[%c0_2, %c0_3] : memref<16x128xbf16, #tpu.memory_space<vmem>>, vector<16x128xbf16>
    %c0_4 = arith.constant 0 : index
    %c0_5 = arith.constant 0 : index
    %5 = vector.load %arg4[%c0_4, %c0_5] : memref<128x256xbf16, #tpu.memory_space<vmem>>, vector<128x256xbf16>
    %cst = arith.constant dense<0.000000e+00> : vector<16x256xf32>
    %6 = tpu.matmul %4, %5, %cst {dimension_numbers = #tpu.dot_dimension_numbers<[1], [0], [0], [1], [0, 0, 1, 1], [], []>} : vector<16x128xbf16>, vector<128x256xbf16>, vector<16x256xf32> -> vector<16x256xf32>
    %7 = arith.addf %3, %6 : vector<16x256xf32>
    %c0_6 = arith.constant 0 : index
    %c0_7 = arith.constant 0 : index
    %8 = vector.load %arg7[%c0_6, %c0_7] : memref<16x256xf32, #tpu.memory_space<vmem>>, vector<16x256xf32>
    tpu.vector_store %arg7[%c0_6, %c0_7], %7 {strides = array<i32>} : memref<16x256xf32, #tpu.memory_space<vmem>>, vector<16x256xf32>,
    %c0_i32_8 = arith.constant 0 : i32
    %9 = arith.cmpi eq, %arg2, %c0_i32_8 : i32
    %10 = arith.extui %9 : i1 to i32
    %c0_i32_9 = arith.constant 0 : i32
    %11 = arith.cmpi ne, %10, %c0_i32_9 : i32
    scf.if %11 {
      %c0_10 = arith.constant 0 : index
      %c0_11 = arith.constant 0 : index
      %12 = vector.load %arg7[%c0_10, %c0_11] : memref<16x256xf32, #tpu.memory_space<vmem>>, vector<16x256xf32>
      %c0_12 = arith.constant 0 : index
      %c0_13 = arith.constant 0 : index
      %13 = vector.load %arg5[%c0_12, %c0_13] : memref<1x256xf32, #tpu.memory_space<vmem>>, vector<1x256xf32>
      %14 = vector.broadcast %13 : vector<1x256xf32> to vector<16x256xf32>
      %15 = arith.addf %12, %14 : vector<16x256xf32>
      %c0_14 = arith.constant 0 : index
      %c0_15 = arith.constant 0 : index
      %16 = vector.load %arg6[%c0_14, %c0_15] : memref<16x256xf32, #tpu.memory_space<vmem>>, vector<16x256xf32>
      tpu.vector_store %arg6[%c0_14, %c0_15], %15 {strides = array<i32>} : memref<16x256xf32, #tpu.memory_space<vmem>>, vector<16x256xf32>,
    } else {
    }
    return
  }
  func.func @transform_0(%arg0: i32, %arg1: i32, %arg2: i32) -> (i32, i32) {
    %c0_i32 = arith.constant 0 : i32
    return %arg0, %arg2 : i32, i32
  }
  func.func @transform_1(%arg0: i32, %arg1: i32, %arg2: i32) -> (i32, i32) {
    %c0_i32 = arith.constant 0 : i32
    return %arg2, %arg1 : i32, i32
  }
  func.func @transform_2(%arg0: i32, %arg1: i32, %arg2: i32) -> (i32, i32) {
    %c0_i32 = arith.constant 0 : i32
    %c0_i32_0 = arith.constant 0 : i32
    return %c0_i32, %arg1 : i32, i32
  }
  func.func @transform_3(%arg0: i32, %arg1: i32, %arg2: i32) -> (i32, i32) {
    %c0_i32 = arith.constant 0 : i32
    return %arg0, %arg1 : i32, i32
  }
}

module attributes {stable_mosaic.version = 11 : i64} {
  func.func @_bilstm_kernel(%arg0: memref<2x8x256xf32, #tpu.memory_space<vmem>>, %arg1: memref<64x128xf32, #tpu.memory_space<vmem>>, %arg2: memref<2x8x32xf32, #tpu.memory_space<vmem>>, %arg3: memref<2x8x32xf32, #tpu.memory_space<vmem>>, %arg4: memref<16x64xf32, #tpu.memory_space<vmem>>, %arg5: memref<16x32xf32, #tpu.memory_space<vmem>>) attributes {dimension_semantics = [], scalar_prefetch = 0 : i64, scratch_operands = 2 : i64, tpu.core_type = #tpu.core_type<tc>} {
    %cst = arith.constant 0.000000e+00 : f32
    %0 = vector.broadcast %cst : f32 to vector<16x64xf32>
    %c0 = arith.constant 0 : index
    %c0_0 = arith.constant 0 : index
    %1 = vector.load %arg4[%c0, %c0_0] : memref<16x64xf32, #tpu.memory_space<vmem>>, vector<16x64xf32>
    tpu.vector_store %arg4[%c0, %c0_0], %0 {strides = array<i32>} : memref<16x64xf32, #tpu.memory_space<vmem>>, vector<16x64xf32>,
    %cst_1 = arith.constant 0.000000e+00 : f32
    %2 = vector.broadcast %cst_1 : f32 to vector<16x32xf32>
    %c0_2 = arith.constant 0 : index
    %c0_3 = arith.constant 0 : index
    %3 = vector.load %arg5[%c0_2, %c0_3] : memref<16x32xf32, #tpu.memory_space<vmem>>, vector<16x32xf32>
    tpu.vector_store %arg5[%c0_2, %c0_3], %2 {strides = array<i32>} : memref<16x32xf32, #tpu.memory_space<vmem>>, vector<16x32xf32>,
    %cst_4 = arith.constant 0.000000e+00 : f32
    %4 = vector.broadcast %cst_4 : f32 to vector<8x32xf32>
    %c0_i32 = arith.constant 0 : i32
    %c2_i32 = arith.constant 2 : i32
    %5 = arith.addi %c0_i32, %c2_i32 : i32
    %c1_i32 = arith.constant 1 : i32
    scf.for %arg6 = %c0_i32 to %5 step %c1_i32  : i32 {
      %6 = arith.index_cast %arg6 : i32 to index
      %c0_6 = arith.constant 0 : index
      %c0_7 = arith.constant 0 : index
      %7 = vector.load %arg0[%6, %c0_6, %c0_7] : memref<2x8x256xf32, #tpu.memory_space<vmem>>, vector<1x8x256xf32>
      %8 = vector.shape_cast %7 : vector<1x8x256xf32> to vector<8x256xf32>
      %c1_i32_8 = arith.constant 1 : i32
      %9 = arith.subi %c1_i32_8, %arg6 : i32
      %10 = arith.index_cast %9 : i32 to index
      %c0_9 = arith.constant 0 : index
      %c0_10 = arith.constant 0 : index
      %11 = vector.load %arg0[%10, %c0_9, %c0_10] : memref<2x8x256xf32, #tpu.memory_space<vmem>>, vector<1x8x256xf32>
      %12 = vector.shape_cast %11 : vector<1x8x256xf32> to vector<8x256xf32>
      %13 = vector.extract_strided_slice %8 {offsets = [0, 0], sizes = [8, 128], strides = [1, 1]} : vector<8x256xf32> to vector<8x128xf32>
      %14 = vector.extract_strided_slice %12 {offsets = [0, 128], sizes = [8, 128], strides = [1, 1]} : vector<8x256xf32> to vector<8x128xf32>
      %15 = tpu.concatenate %13, %14 in 0 : vector<8x128xf32>, vector<8x128xf32> -> vector<16x128xf32>
      %c0_11 = arith.constant 0 : index
      %c0_12 = arith.constant 0 : index
      %16 = vector.load %arg4[%c0_11, %c0_12] : memref<16x64xf32, #tpu.memory_space<vmem>>, vector<16x64xf32>
      %c0_13 = arith.constant 0 : index
      %c0_14 = arith.constant 0 : index
      %17 = vector.load %arg1[%c0_13, %c0_14] : memref<64x128xf32, #tpu.memory_space<vmem>>, vector<64x128xf32>
      %cst_15 = arith.constant dense<0.000000e+00> : vector<16x128xf32>
      %18 = tpu.matmul %16, %17, %cst_15 {dimension_numbers = #tpu.dot_dimension_numbers<[1], [0], [0], [1], [0, 0, 1, 1], [], []>} : vector<16x64xf32>, vector<64x128xf32>, vector<16x128xf32> -> vector<16x128xf32>
      %19 = arith.addf %15, %18 : vector<16x128xf32>
      %20 = vector.extract_strided_slice %19 {offsets = [0, 0], sizes = [16, 32], strides = [1, 1]} : vector<16x128xf32> to vector<16x32xf32>
      %cst_16 = arith.constant 0.000000e+00 : f32
      %21 = vector.broadcast %cst_16 : f32 to vector<16x32xf32>
      %22 = arith.subf %21, %20 : vector<16x32xf32>
      %23 = math.exp %22 : vector<16x32xf32>
      %cst_17 = arith.constant 1.000000e+00 : f32
      %24 = vector.broadcast %cst_17 : f32 to vector<16x32xf32>
      %25 = arith.addf %24, %23 : vector<16x32xf32>
      %cst_18 = arith.constant 1.000000e+00 : f32
      %26 = vector.broadcast %cst_18 : f32 to vector<16x32xf32>
      %27 = arith.divf %26, %25 : vector<16x32xf32>
      %28 = vector.extract_strided_slice %19 {offsets = [0, 32], sizes = [16, 32], strides = [1, 1]} : vector<16x128xf32> to vector<16x32xf32>
      %cst_19 = arith.constant 0.000000e+00 : f32
      %29 = vector.broadcast %cst_19 : f32 to vector<16x32xf32>
      %30 = arith.subf %29, %28 : vector<16x32xf32>
      %31 = math.exp %30 : vector<16x32xf32>
      %cst_20 = arith.constant 1.000000e+00 : f32
      %32 = vector.broadcast %cst_20 : f32 to vector<16x32xf32>
      %33 = arith.addf %32, %31 : vector<16x32xf32>
      %cst_21 = arith.constant 1.000000e+00 : f32
      %34 = vector.broadcast %cst_21 : f32 to vector<16x32xf32>
      %35 = arith.divf %34, %33 : vector<16x32xf32>
      %36 = vector.extract_strided_slice %19 {offsets = [0, 64], sizes = [16, 32], strides = [1, 1]} : vector<16x128xf32> to vector<16x32xf32>
      %37 = math.tanh %36 : vector<16x32xf32>
      %38 = vector.extract_strided_slice %19 {offsets = [0, 96], sizes = [16, 32], strides = [1, 1]} : vector<16x128xf32> to vector<16x32xf32>
      %cst_22 = arith.constant 0.000000e+00 : f32
      %39 = vector.broadcast %cst_22 : f32 to vector<16x32xf32>
      %40 = arith.subf %39, %38 : vector<16x32xf32>
      %41 = math.exp %40 : vector<16x32xf32>
      %cst_23 = arith.constant 1.000000e+00 : f32
      %42 = vector.broadcast %cst_23 : f32 to vector<16x32xf32>
      %43 = arith.addf %42, %41 : vector<16x32xf32>
      %cst_24 = arith.constant 1.000000e+00 : f32
      %44 = vector.broadcast %cst_24 : f32 to vector<16x32xf32>
      %45 = arith.divf %44, %43 : vector<16x32xf32>
      %c0_25 = arith.constant 0 : index
      %c0_26 = arith.constant 0 : index
      %46 = vector.load %arg5[%c0_25, %c0_26] : memref<16x32xf32, #tpu.memory_space<vmem>>, vector<16x32xf32>
      %47 = arith.mulf %35, %46 : vector<16x32xf32>
      %48 = arith.mulf %27, %37 : vector<16x32xf32>
      %49 = arith.addf %47, %48 : vector<16x32xf32>
      %50 = math.tanh %49 : vector<16x32xf32>
      %51 = arith.mulf %45, %50 : vector<16x32xf32>
      %c0_27 = arith.constant 0 : index
      %c0_28 = arith.constant 0 : index
      %52 = vector.load %arg5[%c0_27, %c0_28] : memref<16x32xf32, #tpu.memory_space<vmem>>, vector<16x32xf32>
      tpu.vector_store %arg5[%c0_27, %c0_28], %49 {strides = array<i32>} : memref<16x32xf32, #tpu.memory_space<vmem>>, vector<16x32xf32>,
      %53 = vector.extract_strided_slice %51 {offsets = [0, 0], sizes = [8, 32], strides = [1, 1]} : vector<16x32xf32> to vector<8x32xf32>
      %54 = vector.extract_strided_slice %51 {offsets = [8, 0], sizes = [8, 32], strides = [1, 1]} : vector<16x32xf32> to vector<8x32xf32>
      %55 = tpu.concatenate %53, %4 in 1 : vector<8x32xf32>, vector<8x32xf32> -> vector<8x64xf32>
      %56 = tpu.concatenate %4, %54 in 1 : vector<8x32xf32>, vector<8x32xf32> -> vector<8x64xf32>
      %57 = tpu.concatenate %55, %56 in 0 : vector<8x64xf32>, vector<8x64xf32> -> vector<16x64xf32>
      %c0_29 = arith.constant 0 : index
      %c0_30 = arith.constant 0 : index
      %58 = vector.load %arg4[%c0_29, %c0_30] : memref<16x64xf32, #tpu.memory_space<vmem>>, vector<16x64xf32>
      tpu.vector_store %arg4[%c0_29, %c0_30], %57 {strides = array<i32>} : memref<16x64xf32, #tpu.memory_space<vmem>>, vector<16x64xf32>,
      %59 = arith.index_cast %arg6 : i32 to index
      %c0_31 = arith.constant 0 : index
      %c0_32 = arith.constant 0 : index
      %60 = vector.load %arg2[%59, %c0_31, %c0_32] : memref<2x8x32xf32, #tpu.memory_space<vmem>>, vector<1x8x32xf32>
      %61 = vector.shape_cast %60 : vector<1x8x32xf32> to vector<8x32xf32>
      %62 = vector.shape_cast %53 : vector<8x32xf32> to vector<1x8x32xf32>
      tpu.vector_store %arg2[%59, %c0_31, %c0_32], %62 {strides = array<i32>} : memref<2x8x32xf32, #tpu.memory_space<vmem>>, vector<1x8x32xf32>,
      %c1_i32_33 = arith.constant 1 : i32
      %63 = arith.subi %c1_i32_33, %arg6 : i32
      %64 = arith.index_cast %63 : i32 to index
      %c0_34 = arith.constant 0 : index
      %c0_35 = arith.constant 0 : index
      %65 = vector.load %arg3[%64, %c0_34, %c0_35] : memref<2x8x32xf32, #tpu.memory_space<vmem>>, vector<1x8x32xf32>
      %66 = vector.shape_cast %65 : vector<1x8x32xf32> to vector<8x32xf32>
      %67 = vector.shape_cast %54 : vector<8x32xf32> to vector<1x8x32xf32>
      tpu.vector_store %arg3[%64, %c0_34, %c0_35], %67 {strides = array<i32>} : memref<2x8x32xf32, #tpu.memory_space<vmem>>, vector<1x8x32xf32>,
    }
    %c2_i32_5 = arith.constant 2 : i32
    return
  }
}

module attributes {stable_mosaic.version = 11 : i64} {
  func.func @_classifier_kernel(%arg0: i32, %arg1: memref<16x128xbf16, #tpu.memory_space<vmem>>, %arg2: memref<128x128xbf16, #tpu.memory_space<vmem>>, %arg3: memref<1x128xf32, #tpu.memory_space<vmem>>, %arg4: memref<128x128xbf16, #tpu.memory_space<vmem>>, %arg5: memref<1x128xf32, #tpu.memory_space<vmem>>, %arg6: memref<16x128xf32, #tpu.memory_space<vmem>>) attributes {dimension_semantics = [#tpu.dimension_semantics<parallel>], iteration_bounds = array<i64: 1>, scalar_prefetch = 0 : i64, scratch_operands = 0 : i64, tpu.core_type = #tpu.core_type<tc>, window_params = [{transform_indices = @transform_0, window_bounds = array<i64: 16, 128>}, {pipeline_mode = #tpu.pipeline_mode<synchronous>, transform_indices = @transform_1, window_bounds = array<i64: 128, 128>}, {pipeline_mode = #tpu.pipeline_mode<synchronous>, transform_indices = @transform_2, window_bounds = array<i64: 1, 128>}, {pipeline_mode = #tpu.pipeline_mode<synchronous>, transform_indices = @transform_3, window_bounds = array<i64: 128, 128>}, {pipeline_mode = #tpu.pipeline_mode<synchronous>, transform_indices = @transform_4, window_bounds = array<i64: 1, 128>}, {transform_indices = @transform_5, window_bounds = array<i64: 16, 128>}]} {
    %c0 = arith.constant 0 : index
    %c0_0 = arith.constant 0 : index
    %0 = vector.load %arg1[%c0, %c0_0] : memref<16x128xbf16, #tpu.memory_space<vmem>>, vector<16x128xbf16>
    %c0_1 = arith.constant 0 : index
    %c0_2 = arith.constant 0 : index
    %1 = vector.load %arg2[%c0_1, %c0_2] : memref<128x128xbf16, #tpu.memory_space<vmem>>, vector<128x128xbf16>
    %cst = arith.constant dense<0.000000e+00> : vector<16x128xf32>
    %2 = tpu.matmul %0, %1, %cst {dimension_numbers = #tpu.dot_dimension_numbers<[1], [0], [0], [1], [0, 0, 1, 1], [], []>} : vector<16x128xbf16>, vector<128x128xbf16>, vector<16x128xf32> -> vector<16x128xf32>
    %c0_3 = arith.constant 0 : index
    %c0_4 = arith.constant 0 : index
    %3 = vector.load %arg3[%c0_3, %c0_4] : memref<1x128xf32, #tpu.memory_space<vmem>>, vector<1x128xf32>
    %4 = vector.broadcast %3 : vector<1x128xf32> to vector<16x128xf32>
    %5 = arith.addf %2, %4 : vector<16x128xf32>
    %cst_5 = arith.constant 0.000000e+00 : f32
    %6 = vector.broadcast %cst_5 : f32 to vector<16x128xf32>
    %7 = arith.maximumf %5, %6 : vector<16x128xf32>
    %8 = arith.truncf %7 : vector<16x128xf32> to vector<16x128xbf16>
    %c0_6 = arith.constant 0 : index
    %c0_7 = arith.constant 0 : index
    %9 = vector.load %arg4[%c0_6, %c0_7] : memref<128x128xbf16, #tpu.memory_space<vmem>>, vector<128x128xbf16>
    %cst_8 = arith.constant dense<0.000000e+00> : vector<16x128xf32>
    %10 = tpu.matmul %8, %9, %cst_8 {dimension_numbers = #tpu.dot_dimension_numbers<[1], [0], [0], [1], [0, 0, 1, 1], [], []>} : vector<16x128xbf16>, vector<128x128xbf16>, vector<16x128xf32> -> vector<16x128xf32>
    %c0_9 = arith.constant 0 : index
    %c0_10 = arith.constant 0 : index
    %11 = vector.load %arg5[%c0_9, %c0_10] : memref<1x128xf32, #tpu.memory_space<vmem>>, vector<1x128xf32>
    %12 = vector.broadcast %11 : vector<1x128xf32> to vector<16x128xf32>
    %13 = arith.addf %10, %12 : vector<16x128xf32>
    %c0_11 = arith.constant 0 : index
    %c0_12 = arith.constant 0 : index
    %14 = vector.load %arg6[%c0_11, %c0_12] : memref<16x128xf32, #tpu.memory_space<vmem>>, vector<16x128xf32>
    tpu.vector_store %arg6[%c0_11, %c0_12], %13 {strides = array<i32>} : memref<16x128xf32, #tpu.memory_space<vmem>>, vector<16x128xf32>,
    return
  }
  func.func @transform_0(%arg0: i32) -> (i32, i32) {
    %c0_i32 = arith.constant 0 : i32
    %c0_i32_0 = arith.constant 0 : i32
    return %arg0, %c0_i32 : i32, i32
  }
  func.func @transform_1(%arg0: i32) -> (i32, i32) {
    %c0_i32 = arith.constant 0 : i32
    %c0_i32_0 = arith.constant 0 : i32
    %c0_i32_1 = arith.constant 0 : i32
    return %c0_i32, %c0_i32_0 : i32, i32
  }
  func.func @transform_2(%arg0: i32) -> (i32, i32) {
    %c0_i32 = arith.constant 0 : i32
    %c0_i32_0 = arith.constant 0 : i32
    %c0_i32_1 = arith.constant 0 : i32
    return %c0_i32, %c0_i32_0 : i32, i32
  }
  func.func @transform_3(%arg0: i32) -> (i32, i32) {
    %c0_i32 = arith.constant 0 : i32
    %c0_i32_0 = arith.constant 0 : i32
    %c0_i32_1 = arith.constant 0 : i32
    return %c0_i32, %c0_i32_0 : i32, i32
  }
  func.func @transform_4(%arg0: i32) -> (i32, i32) {
    %c0_i32 = arith.constant 0 : i32
    %c0_i32_0 = arith.constant 0 : i32
    %c0_i32_1 = arith.constant 0 : i32
    return %c0_i32, %c0_i32_0 : i32, i32
  }
  func.func @transform_5(%arg0: i32) -> (i32, i32) {
    %c0_i32 = arith.constant 0 : i32
    %c0_i32_0 = arith.constant 0 : i32
    return %arg0, %c0_i32 : i32, i32
  }
}

</mosaic_0001>

<llo_original>
// kernel: stt_forward.13
$region0: #{stt_forward.13}
  #allocation0 [shape = 'u32[]', space=smem, size = 0x4, offset = 0x4, fixed_abs, tag = 'smem constant byte address 0x4 - core index']
  #allocation1 [shape = 'u32[72,128]{1,0:T(1,128)}', space=vmem, size = 0x9000, scoped, tag = 'internal scratch']
  #allocation2 [shape = 'f32[128,128]{1,0:T(8,128)}', space=vmem, size = 0x10000, scoped, tag = 'scratch operand']
  %s0 = inlined_call_operand.vmem [shape: bf16[128,128], index: 0, kind: input, shape index: {}]
  %s1 = inlined_call_operand.vmem [shape: bf16[128,128], index: 1, kind: input, shape index: {}]
  %s2 = inlined_call_operand.vmem [shape: f32[1,128], index: 2, kind: input, shape index: {}]
  %s3 = inlined_call_operand.vmem [shape: f32[128,128], index: 3, kind: output, shape index: {}]
  %s4 = sld [smem:[#allocation0]]
  $region30: #{stt_forward.13} parent=0
    _
  %s6 = ssub.s32 1, %s4
  %s7 = scalar_select 0, %s6, %s4
  // Predicated region
  $region2: #{stt_forward.13} parent=0 // pred_check
    _
  $region3: #{stt_forward.13} parent=0 // pred_check_branch
    %9 = sbr.rel (0) target = $region5
  $region4: #{stt_forward.13} parent=0 // pred_region
    _
  $region5: #{stt_forward.13} parent=0 // pred_fallthru
    _
  // Predicated region
  $region6: #{stt_forward.13} parent=0 // pred_check
    _
  $region7: #{stt_forward.13} parent=0 // pred_check_branch
    %11 = sbr.rel (0) target = $region9
  $region8: #{stt_forward.13} parent=0 // pred_region
    _
  $region9: #{stt_forward.13} parent=0 // pred_fallthru
    _
  // Predicated region
  $region10: #{stt_forward.13} parent=0 // pred_check
    _
  $region11: #{stt_forward.13} parent=0 // pred_check_branch
    %13 = sbr.rel (0) target = $region13
  $region12: #{stt_forward.13} parent=0 // pred_region
    _
  $region13: #{stt_forward.13} parent=0 // pred_fallthru
    _
  %p14 = scmp.eq.s32.totalorder 0, 0
  // Predicated region
  $region14: #{stt_forward.13} parent=0 // pred_check
    %p15 = pneg %p14
  $region15: #{stt_forward.13} parent=0 // pred_check_branch
    %17 = sbr.rel (%p15) target = $region17
  $region16: #{stt_forward.13} parent=0 // pred_region
    %18 = vst [vmem:[#allocation2] sm:$0xff] 0.0
    %19 = vst [vmem:[#allocation2 + $0x8] sm:$0xff] 0.0
    %20 = vst [vmem:[#allocation2 + $0x10] sm:$0xff] 0.0
    %21 = vst [vmem:[#allocation2 + $0x18] sm:$0xff] 0.0
    %22 = vst [vmem:[#allocation2 + $0x20] sm:$0xff] 0.0
    %23 = vst [vmem:[#allocation2 + $0x28] sm:$0xff] 0.0
    %24 = vst [vmem:[#allocation2 + $0x30] sm:$0xff] 0.0
    %25 = vst [vmem:[#allocation2 + $0x38] sm:$0xff] 0.0
    %26 = vst [vmem:[#allocation2 + $0x40] sm:$0xff] 0.0
    %27 = vst [vmem:[#allocation2 + $0x48] sm:$0xff] 0.0
    %28 = vst [vmem:[#allocation2 + $0x50] sm:$0xff] 0.0
    %29 = vst [vmem:[#allocation2 + $0x58] sm:$0xff] 0.0
    %30 = vst [vmem:[#allocation2 + $0x60] sm:$0xff] 0.0
    %31 = vst [vmem:[#allocation2 + $0x68] sm:$0xff] 0.0
    %32 = vst [vmem:[#allocation2 + $0x70] sm:$0xff] 0.0
    %33 = vst [vmem:[#allocation2 + $0x78] sm:$0xff] 0.0
  $region17: #{stt_forward.13} parent=0 // pred_fallthru
    _
  %v34 = vld [vmem:[#allocation2] sm:$0xff]
  %v35 = vld [vmem:[#allocation2 + $0x8] sm:$0xff]
  %v36 = vld [vmem:[#allocation2 + $0x10] sm:$0xff]
  %v37 = vld [vmem:[#allocation2 + $0x18] sm:$0xff]
  %v38 = vld [vmem:[#allocation2 + $0x20] sm:$0xff]
  %v39 = vld [vmem:[#allocation2 + $0x28] sm:$0xff]
  %v40 = vld [vmem:[#allocation2 + $0x30] sm:$0xff]
  %v41 = vld [vmem:[#allocation2 + $0x38] sm:$0xff]
  %v42 = vld [vmem:[#allocation2 + $0x40] sm:$0xff]
  %v43 = vld [vmem:[#allocation2 + $0x48] sm:$0xff]
  %v44 = vld [vmem:[#allocation2 + $0x50] sm:$0xff]
  %v45 = vld [vmem:[#allocation2 + $0x58] sm:$0xff]
  %v46 = vld [vmem:[#allocation2 + $0x60] sm:$0xff]
  %v47 = vld [vmem:[#allocation2 + $0x68] sm:$0xff]
  %v48 = vld [vmem:[#allocation2 + $0x70] sm:$0xff]
  %v49 = vld [vmem:[#allocation2 + $0x78] sm:$0xff]
  %v50 = vld [vmem:[%s0] sm:$0xf]
  %v51 = vld [vmem:[%s0 + $0x4] sm:$0xf]
  %v52 = vld [vmem:[%s0 + $0x8] sm:$0xf]
  %v53 = vld [vmem:[%s0 + $0xc] sm:$0xf]
  %v54 = vld [vmem:[%s0 + $0x10] sm:$0xf]
  %v55 = vld [vmem:[%s0 + $0x14] sm:$0xf]
  %v56 = vld [vmem:[%s0 + $0x18] sm:$0xf]
  %v57 = vld [vmem:[%s0 + $0x1c] sm:$0xf]
  %v58 = vld [vmem:[%s0 + $0x20] sm:$0xf]
  %v59 = vld [vmem:[%s0 + $0x24] sm:$0xf]
  %v60 = vld [vmem:[%s0 + $0x28] sm:$0xf]
  %v61 = vld [vmem:[%s0 + $0x2c] sm:$0xf]
  %v62 = vld [vmem:[%s0 + $0x30] sm:$0xf]
  %v63 = vld [vmem:[%s0 + $0x34] sm:$0xf]
  %v64 = vld [vmem:[%s0 + $0x38] sm:$0xf]
  %v65 = vld [vmem:[%s0 + $0x3c] sm:$0xf]
  %v66 = vld [vmem:[%s1] sm:$0xf]
  %v67 = vld [vmem:[%s1 + $0x4] sm:$0xf]
  %v68 = vld [vmem:[%s1 + $0x8] sm:$0xf]
  %v69 = vld [vmem:[%s1 + $0xc] sm:$0xf]
  %v70 = vld [vmem:[%s1 + $0x10] sm:$0xf]
  %v71 = vld [vmem:[%s1 + $0x14] sm:$0xf]
  %v72 = vld [vmem:[%s1 + $0x18] sm:$0xf]
  %v73 = vld [vmem:[%s1 + $0x1c] sm:$0xf]
  %v74 = vld [vmem:[%s1 + $0x20] sm:$0xf]
  %v75 = vld [vmem:[%s1 + $0x24] sm:$0xf]
  %v76 = vld [vmem:[%s1 + $0x28] sm:$0xf]
  %v77 = vld [vmem:[%s1 + $0x2c] sm:$0xf]
  %v78 = vld [vmem:[%s1 + $0x30] sm:$0xf]
  %v79 = vld [vmem:[%s1 + $0x34] sm:$0xf]
  %v80 = vld [vmem:[%s1 + $0x38] sm:$0xf]
  %v81 = vld [vmem:[%s1 + $0x3c] sm:$0xf]
  %v98 = vunpack.c.l.b16 %v50
  %v99 = vunpack.c.l.b16 %v51
  %v100 = vunpack.c.l.b16 %v52
  %v101 = vunpack.c.l.b16 %v53
  %v102 = vunpack.c.l.b16 %v54
  %v103 = vunpack.c.l.b16 %v55
  %v104 = vunpack.c.l.b16 %v56
  %v105 = vunpack.c.l.b16 %v57
  %v106 = vunpack.c.l.b16 %v58
  %v107 = vunpack.c.l.b16 %v59
  %v108 = vunpack.c.l.b16 %v60
  %v109 = vunpack.c.l.b16 %v61
  %v110 = vunpack.c.l.b16 %v62
  %v111 = vunpack.c.l.b16 %v63
  %v112 = vunpack.c.l.b16 %v64
  %v113 = vunpack.c.l.b16 %v65
  %v114 = vpack.c.b16 %v99, %v98
  %v115 = vpack.c.b16 %v101, %v100
  %v116 = vpack.c.b16 %v103, %v102
  %v117 = vpack.c.b16 %v105, %v104
  %v118 = vpack.c.b16 %v107, %v106
  %v119 = vpack.c.b16 %v109, %v108
  %v120 = vpack.c.b16 %v111, %v110
  %v121 = vpack.c.b16 %v113, %v112
  %v146 = vunpack.c.l.b16 %v66
  %v147 = vunpack.c.l.b16 %v67
  %v148 = vunpack.c.l.b16 %v68
  %v149 = vunpack.c.l.b16 %v69
  %v150 = vunpack.c.l.b16 %v70
  %v151 = vunpack.c.l.b16 %v71
  %v152 = vunpack.c.l.b16 %v72
  %v153 = vunpack.c.l.b16 %v73
  %v154 = vunpack.c.l.b16 %v74
  %v155 = vunpack.c.l.b16 %v75
  %v156 = vunpack.c.l.b16 %v76
  %v157 = vunpack.c.l.b16 %v77
  %v158 = vunpack.c.l.b16 %v78
  %v159 = vunpack.c.l.b16 %v79
  %v160 = vunpack.c.l.b16 %v80
  %v161 = vunpack.c.l.b16 %v81
  %v162 = vpack.c.b16 %v147, %v146
  %v163 = vpack.c.b16 %v149, %v148
  %v164 = vpack.c.b16 %v151, %v150
  %v165 = vpack.c.b16 %v153, %v152
  %v166 = vpack.c.b16 %v155, %v154
  %v167 = vpack.c.b16 %v157, %v156
  %v168 = vpack.c.b16 %v159, %v158
  %v169 = vpack.c.b16 %v161, %v160
  %178 = vmatpush.bf16.msra.mxu0 %v169
  %179 = vmatpush.bf16.msra.mxu0 %v168
  %180 = vmatpush.bf16.msra.mxu0 %v167
  %181 = vmatpush.bf16.msra.mxu0 %v166
  %182 = vmatpush.bf16.msra.mxu0 %v165
  %183 = vmatpush.bf16.msra.mxu0 %v164
  %184 = vmatpush.bf16.msra.mxu0 %v163
  %185 = vmatpush.bf16.msra.mxu0 %v162
  %186 = vmatmul.bf16.gmra.mxu0 %v114
  %v187 = vpop.f32.mrf.mxu0
  %v188 = vadd.f32 0.0, %v187
  %v189 = vpop.f32.mrf.mxu0
  %v190 = vadd.f32 0.0, %v189
  %191 = vmatmul.bf16.gmra.mxu0 %v115
  %v192 = vpop.f32.mrf.mxu0
  %v193 = vadd.f32 0.0, %v192
  %v194 = vpop.f32.mrf.mxu0
  %v195 = vadd.f32 0.0, %v194
  %196 = vmatmul.bf16.gmra.mxu0 %v116
  %v197 = vpop.f32.mrf.mxu0
  %v198 = vadd.f32 0.0, %v197
  %v199 = vpop.f32.mrf.mxu0
  %v200 = vadd.f32 0.0, %v199
  %201 = vmatmul.bf16.gmra.mxu0 %v117
  %v202 = vpop.f32.mrf.mxu0
  %v203 = vadd.f32 0.0, %v202
  %v204 = vpop.f32.mrf.mxu0
  %v205 = vadd.f32 0.0, %v204
  %206 = vmatmul.bf16.gmra.mxu0 %v118
  %v207 = vpop.f32.mrf.mxu0
  %v208 = vadd.f32 0.0, %v207
  %v209 = vpop.f32.mrf.mxu0
  %v210 = vadd.f32 0.0, %v209
  %211 = vmatmul.bf16.gmra.mxu0 %v119
  %v212 = vpop.f32.mrf.mxu0
  %v213 = vadd.f32 0.0, %v212
  %v214 = vpop.f32.mrf.mxu0
  %v215 = vadd.f32 0.0, %v214
  %216 = vmatmul.bf16.gmra.mxu0 %v120
  %v217 = vpop.f32.mrf.mxu0
  %v218 = vadd.f32 0.0, %v217
  %v219 = vpop.f32.mrf.mxu0
  %v220 = vadd.f32 0.0, %v219
  %221 = vmatmul.bf16.gmra.mxu0 %v121
  %v222 = vpop.f32.mrf.mxu0
  %v223 = vadd.f32 0.0, %v222
  %v224 = vpop.f32.mrf.mxu0
  %v225 = vadd.f32 0.0, %v224
  %226 = vdwg.mxu0
  %v227 = vadd.f32 %v34, %v188
  %v228 = vadd.f32 %v35, %v190
  %v229 = vadd.f32 %v36, %v193
  %v230 = vadd.f32 %v37, %v195
  %v231 = vadd.f32 %v38, %v198
  %v232 = vadd.f32 %v39, %v200
  %v233 = vadd.f32 %v40, %v203
  %v234 = vadd.f32 %v41, %v205
  %v235 = vadd.f32 %v42, %v208
  %v236 = vadd.f32 %v43, %v210
  %v237 = vadd.f32 %v44, %v213
  %v238 = vadd.f32 %v45, %v215
  %v239 = vadd.f32 %v46, %v218
  %v240 = vadd.f32 %v47, %v220
  %v241 = vadd.f32 %v48, %v223
  %v242 = vadd.f32 %v49, %v225
  %243 = vst [vmem:[#allocation2] sm:$0xff] %v227
  %244 = vst [vmem:[#allocation2 + $0x8] sm:$0xff] %v228
  %245 = vst [vmem:[#allocation2 + $0x10] sm:$0xff] %v229
  %246 = vst [vmem:[#allocation2 + $0x18] sm:$0xff] %v230
  %247 = vst [vmem:[#allocation2 + $0x20] sm:$0xff] %v231
  %248 = vst [vmem:[#allocation2 + $0x28] sm:$0xff] %v232
  %249 = vst [vmem:[#allocation2 + $0x30] sm:$0xff] %v233
  %250 = vst [vmem:[#allocation2 + $0x38] sm:$0xff] %v234
  %251 = vst [vmem:[#allocation2 + $0x40] sm:$0xff] %v235
  %252 = vst [vmem:[#allocation2 + $0x48] sm:$0xff] %v236
  %253 = vst [vmem:[#allocation2 + $0x50] sm:$0xff] %v237
  %254 = vst [vmem:[#allocation2 + $0x58] sm:$0xff] %v238
  %255 = vst [vmem:[#allocation2 + $0x60] sm:$0xff] %v239
  %256 = vst [vmem:[#allocation2 + $0x68] sm:$0xff] %v240
  %257 = vst [vmem:[#allocation2 + $0x70] sm:$0xff] %v241
  %258 = vst [vmem:[#allocation2 + $0x78] sm:$0xff] %v242
  // Predicated region
  $region18: #{stt_forward.13} parent=0 // pred_check
    %p259 = pneg %p14
  $region19: #{stt_forward.13} parent=0 // pred_check_branch
    %261 = sbr.rel (%p259) target = $region21
  $region20: #{stt_forward.13} parent=0 // pred_region
    %v262 = vld [vmem:[#allocation2] sm:$0xff]
    %v263 = vld [vmem:[#allocation2 + $0x8] sm:$0xff]
    %v264 = vld [vmem:[#allocation2 + $0x10] sm:$0xff]
    %v265 = vld [vmem:[#allocation2 + $0x18] sm:$0xff]
    %v266 = vld [vmem:[#allocation2 + $0x20] sm:$0xff]
    %v267 = vld [vmem:[#allocation2 + $0x28] sm:$0xff]
    %v268 = vld [vmem:[#allocation2 + $0x30] sm:$0xff]
    %v269 = vld [vmem:[#allocation2 + $0x38] sm:$0xff]
    %v270 = vld [vmem:[#allocation2 + $0x40] sm:$0xff]
    %v271 = vld [vmem:[#allocation2 + $0x48] sm:$0xff]
    %v272 = vld [vmem:[#allocation2 + $0x50] sm:$0xff]
    %v273 = vld [vmem:[#allocation2 + $0x58] sm:$0xff]
    %v274 = vld [vmem:[#allocation2 + $0x60] sm:$0xff]
    %v275 = vld [vmem:[#allocation2 + $0x68] sm:$0xff]
    %v276 = vld [vmem:[#allocation2 + $0x70] sm:$0xff]
    %v277 = vld [vmem:[#allocation2 + $0x78] sm:$0xff]
    %v278 = vld [vmem:[%s2] sm:$0x1]
    %v280 = vperm.slane %v278, 0
    %v282 = vadd.f32 %v262, %v280
    %v283 = vadd.f32 %v263, %v280
    %v284 = vadd.f32 %v264, %v280
    %v285 = vadd.f32 %v265, %v280
    %v286 = vadd.f32 %v266, %v280
    %v287 = vadd.f32 %v267, %v280
    %v288 = vadd.f32 %v268, %v280
    %v289 = vadd.f32 %v269, %v280
    %v290 = vadd.f32 %v270, %v280
    %v291 = vadd.f32 %v271, %v280
    %v292 = vadd.f32 %v272, %v280
    %v293 = vadd.f32 %v273, %v280
    %v294 = vadd.f32 %v274, %v280
    %v295 = vadd.f32 %v275, %v280
    %v296 = vadd.f32 %v276, %v280
    %v297 = vadd.f32 %v277, %v280
    %298 = vst [vmem:[%s3] sm:$0xff] %v282
    %299 = vst [vmem:[%s3 + $0x8] sm:$0xff] %v283
    %300 = vst [vmem:[%s3 + $0x10] sm:$0xff] %v284
    %301 = vst [vmem:[%s3 + $0x18] sm:$0xff] %v285
    %302 = vst [vmem:[%s3 + $0x20] sm:$0xff] %v286
    %303 = vst [vmem:[%s3 + $0x28] sm:$0xff] %v287
    %304 = vst [vmem:[%s3 + $0x30] sm:$0xff] %v288
    %305 = vst [vmem:[%s3 + $0x38] sm:$0xff] %v289
    %306 = vst [vmem:[%s3 + $0x40] sm:$0xff] %v290
    %307 = vst [vmem:[%s3 + $0x48] sm:$0xff] %v291
    %308 = vst [vmem:[%s3 + $0x50] sm:$0xff] %v292
    %309 = vst [vmem:[%s3 + $0x58] sm:$0xff] %v293
    %310 = vst [vmem:[%s3 + $0x60] sm:$0xff] %v294
    %311 = vst [vmem:[%s3 + $0x68] sm:$0xff] %v295
    %312 = vst [vmem:[%s3 + $0x70] sm:$0xff] %v296
    %313 = vst [vmem:[%s3 + $0x78] sm:$0xff] %v297
  $region21: #{stt_forward.13} parent=0 // pred_fallthru
    _
  // Predicated region
  $region22: #{stt_forward.13} parent=0 // pred_check
    _
  $region23: #{stt_forward.13} parent=0 // pred_check_branch
    %315 = sbr.rel (0) target = $region25
  $region24: #{stt_forward.13} parent=0 // pred_region
    _
  $region25: #{stt_forward.13} parent=0 // pred_fallthru
    _
  // Predicated region
  $region26: #{stt_forward.13} parent=0 // pred_check
    _
  $region27: #{stt_forward.13} parent=0 // pred_check_branch
    %317 = sbr.rel (0) target = $region29
  $region28: #{stt_forward.13} parent=0 // pred_region
    _
  $region29: #{stt_forward.13} parent=0 // pred_fallthru
    _

// kernel: stt_forward.14
$region0: #{stt_forward.14}
  #allocation0 [shape = 'u32[]', space=smem, size = 0x4, offset = 0x4, fixed_abs, tag = 'smem constant byte address 0x4 - core index']
  #allocation1 [shape = 'u32[72,128]{1,0:T(1,128)}', space=vmem, size = 0x9000, scoped, tag = 'internal scratch']
  #allocation2 [shape = 'f32[128,128]{1,0:T(8,128)}', space=vmem, size = 0x10000, scoped, tag = 'scratch operand']
  %s0 = inlined_call_operand.vmem [shape: bf16[128,384], index: 0, kind: input, shape index: {}]
  %s1 = inlined_call_operand.vmem [shape: bf16[384,128], index: 1, kind: input, shape index: {}]
  %s2 = inlined_call_operand.vmem [shape: f32[1,128], index: 2, kind: input, shape index: {}]
  %s3 = inlined_call_operand.vmem [shape: f32[128,128], index: 3, kind: output, shape index: {}]
  %s4 = sld [smem:[#allocation0]]
  $region30: #{stt_forward.14} parent=0
    _
  %s6 = ssub.s32 1, %s4
  %s7 = scalar_select 0, %s6, %s4
  // Predicated region
  $region2: #{stt_forward.14} parent=0 // pred_check
    _
  $region3: #{stt_forward.14} parent=0 // pred_check_branch
    %9 = sbr.rel (0) target = $region5
  $region4: #{stt_forward.14} parent=0 // pred_region
    _
  $region5: #{stt_forward.14} parent=0 // pred_fallthru
    _
  // Predicated region
  $region6: #{stt_forward.14} parent=0 // pred_check
    _
  $region7: #{stt_forward.14} parent=0 // pred_check_branch
    %11 = sbr.rel (0) target = $region9
  $region8: #{stt_forward.14} parent=0 // pred_region
    _
  $region9: #{stt_forward.14} parent=0 // pred_fallthru
    _
  // Predicated region
  $region10: #{stt_forward.14} parent=0 // pred_check
    _
  $region11: #{stt_forward.14} parent=0 // pred_check_branch
    %13 = sbr.rel (0) target = $region13
  $region12: #{stt_forward.14} parent=0 // pred_region
    _
  $region13: #{stt_forward.14} parent=0 // pred_fallthru
    _
  %p14 = scmp.eq.s32.totalorder 0, 0
  // Predicated region
  $region14: #{stt_forward.14} parent=0 // pred_check
    %p15 = pneg %p14
  $region15: #{stt_forward.14} parent=0 // pred_check_branch
    %17 = sbr.rel (%p15) target = $region17
  $region16: #{stt_forward.14} parent=0 // pred_region
    %18 = vst [vmem:[#allocation2] sm:$0xff] 0.0
    %19 = vst [vmem:[#allocation2 + $0x8] sm:$0xff] 0.0
    %20 = vst [vmem:[#allocation2 + $0x10] sm:$0xff] 0.0
    %21 = vst [vmem:[#allocation2 + $0x18] sm:$0xff] 0.0
    %22 = vst [vmem:[#allocation2 + $0x20] sm:$0xff] 0.0
    %23 = vst [vmem:[#allocation2 + $0x28] sm:$0xff] 0.0
    %24 = vst [vmem:[#allocation2 + $0x30] sm:$0xff] 0.0
    %25 = vst [vmem:[#allocation2 + $0x38] sm:$0xff] 0.0
    %26 = vst [vmem:[#allocation2 + $0x40] sm:$0xff] 0.0
    %27 = vst [vmem:[#allocation2 + $0x48] sm:$0xff] 0.0
    %28 = vst [vmem:[#allocation2 + $0x50] sm:$0xff] 0.0
    %29 = vst [vmem:[#allocation2 + $0x58] sm:$0xff] 0.0
    %30 = vst [vmem:[#allocation2 + $0x60] sm:$0xff] 0.0
    %31 = vst [vmem:[#allocation2 + $0x68] sm:$0xff] 0.0
    %32 = vst [vmem:[#allocation2 + $0x70] sm:$0xff] 0.0
    %33 = vst [vmem:[#allocation2 + $0x78] sm:$0xff] 0.0
  $region17: #{stt_forward.14} parent=0 // pred_fallthru
    _
  %v34 = vld [vmem:[#allocation2] sm:$0xff]
  %v35 = vld [vmem:[#allocation2 + $0x8] sm:$0xff]
  %v36 = vld [vmem:[#allocation2 + $0x10] sm:$0xff]
  %v37 = vld [vmem:[#allocation2 + $0x18] sm:$0xff]
  %v38 = vld [vmem:[#allocation2 + $0x20] sm:$0xff]
  %v39 = vld [vmem:[#allocation2 + $0x28] sm:$0xff]
  %v40 = vld [vmem:[#allocation2 + $0x30] sm:$0xff]
  %v41 = vld [vmem:[#allocation2 + $0x38] sm:$0xff]
  %v42 = vld [vmem:[#allocation2 + $0x40] sm:$0xff]
  %v43 = vld [vmem:[#allocation2 + $0x48] sm:$0xff]
  %v44 = vld [vmem:[#allocation2 + $0x50] sm:$0xff]
  %v45 = vld [vmem:[#allocation2 + $0x58] sm:$0xff]
  %v46 = vld [vmem:[#allocation2 + $0x60] sm:$0xff]
  %v47 = vld [vmem:[#allocation2 + $0x68] sm:$0xff]
  %v48 = vld [vmem:[#allocation2 + $0x70] sm:$0xff]
  %v49 = vld [vmem:[#allocation2 + $0x78] sm:$0xff]
  %v50 = vld [vmem:[%s0] sm:$0xff]
  %v51 = vld [vmem:[%s0 + $0x8] sm:$0xf]
  %v52 = vld [vmem:[%s0 + $0xc] sm:$0xff]
  %v53 = vld [vmem:[%s0 + $0x14] sm:$0xf]
  %v54 = vld [vmem:[%s0 + $0x18] sm:$0xff]
  %v55 = vld [vmem:[%s0 + $0x20] sm:$0xf]
  %v56 = vld [vmem:[%s0 + $0x24] sm:$0xff]
  %v57 = vld [vmem:[%s0 + $0x2c] sm:$0xf]
  %v58 = vld [vmem:[%s0 + $0x30] sm:$0xff]
  %v59 = vld [vmem:[%s0 + $0x38] sm:$0xf]
  %v60 = vld [vmem:[%s0 + $0x3c] sm:$0xff]
  %v61 = vld [vmem:[%s0 + $0x44] sm:$0xf]
  %v62 = vld [vmem:[%s0 + $0x48] sm:$0xff]
  %v63 = vld [vmem:[%s0 + $0x50] sm:$0xf]
  %v64 = vld [vmem:[%s0 + $0x54] sm:$0xff]
  %v65 = vld [vmem:[%s0 + $0x5c] sm:$0xf]
  %v66 = vld [vmem:[%s0 + $0x60] sm:$0xff]
  %v67 = vld [vmem:[%s0 + $0x68] sm:$0xf]
  %v68 = vld [vmem:[%s0 + $0x6c] sm:$0xff]
  %v69 = vld [vmem:[%s0 + $0x74] sm:$0xf]
  %v70 = vld [vmem:[%s0 + $0x78] sm:$0xff]
  %v71 = vld [vmem:[%s0 + $0x80] sm:$0xf]
  %v72 = vld [vmem:[%s0 + $0x84] sm:$0xff]
  %v73 = vld [vmem:[%s0 + $0x8c] sm:$0xf]
  %v74 = vld [vmem:[%s0 + $0x90] sm:$0xff]
  %v75 = vld [vmem:[%s0 + $0x98] sm:$0xf]
  %v76 = vld [vmem:[%s0 + $0x9c] sm:$0xff]
  %v77 = vld [vmem:[%s0 + $0xa4] sm:$0xf]
  %v78 = vld [vmem:[%s0 + $0xa8] sm:$0xff]
  %v79 = vld [vmem:[%s0 + $0xb0] sm:$0xf]
  %v80 = vld [vmem:[%s0 + $0xb4] sm:$0xff]
  %v81 = vld [vmem:[%s0 + $0xbc] sm:$0xf]
  %v82 = vld [vmem:[%s1] sm:$0xf]
  %v83 = vld [vmem:[%s1 + $0x4] sm:$0xf]
  %v84 = vld [vmem:[%s1 + $0x8] sm:$0xf]
  %v85 = vld [vmem:[%s1 + $0xc] sm:$0xf]
  %v86 = vld [vmem:[%s1 + $0x10] sm:$0xf]
  %v87 = vld [vmem:[%s1 + $0x14] sm:$0xf]
  %v88 = vld [vmem:[%s1 + $0x18] sm:$0xf]
  %v89 = vld [vmem:[%s1 + $0x1c] sm:$0xf]
  %v90 = vld [vmem:[%s1 + $0x20] sm:$0xf]
  %v91 = vld [vmem:[%s1 + $0x24] sm:$0xf]
  %v92 = vld [vmem:[%s1 + $0x28] sm:$0xf]
  %v93 = vld [vmem:[%s1 + $0x2c] sm:$0xf]
  %v94 = vld [vmem:[%s1 + $0x30] sm:$0xf]
  %v95 = vld [vmem:[%s1 + $0x34] sm:$0xf]
  %v96 = vld [vmem:[%s1 + $0x38] sm:$0xf]
  %v97 = vld [vmem:[%s1 + $0x3c] sm:$0xf]
  %v98 = vld [vmem:[%s1 + $0x40] sm:$0xf]
  %v99 = vld [vmem:[%s1 + $0x44] sm:$0xf]
  %v100 = vld [vmem:[%s1 + $0x48] sm:$0xf]
  %v101 = vld [vmem:[%s1 + $0x4c] sm:$0xf]
  %v102 = vld [vmem:[%s1 + $0x50] sm:$0xf]
  %v103 = vld [vmem:[%s1 + $0x54] sm:$0xf]
  %v104 = vld [vmem:[%s1 + $0x58] sm:$0xf]
  %v105 = vld [vmem:[%s1 + $0x5c] sm:$0xf]
  %v106 = vld [vmem:[%s1 + $0x60] sm:$0xf]
  %v107 = vld [vmem:[%s1 + $0x64] sm:$0xf]
  %v108 = vld [vmem:[%s1 + $0x68] sm:$0xf]
  %v109 = vld [vmem:[%s1 + $0x6c] sm:$0xf]
  %v110 = vld [vmem:[%s1 + $0x70] sm:$0xf]
  %v111 = vld [vmem:[%s1 + $0x74] sm:$0xf]
  %v112 = vld [vmem:[%s1 + $0x78] sm:$0xf]
  %v113 = vld [vmem:[%s1 + $0x7c] sm:$0xf]
  %v114 = vld [vmem:[%s1 + $0x80] sm:$0xf]
  %v115 = vld [vmem:[%s1 + $0x84] sm:$0xf]
  %v116 = vld [vmem:[%s1 + $0x88] sm:$0xf]
  %v117 = vld [vmem:[%s1 + $0x8c] sm:$0xf]
  %v118 = vld [vmem:[%s1 + $0x90] sm:$0xf]
  %v119 = vld [vmem:[%s1 + $0x94] sm:$0xf]
  %v120 = vld [vmem:[%s1 + $0x98] sm:$0xf]
  %v121 = vld [vmem:[%s1 + $0x9c] sm:$0xf]
  %v122 = vld [vmem:[%s1 + $0xa0] sm:$0xf]
  %v123 = vld [vmem:[%s1 + $0xa4] sm:$0xf]
  %v124 = vld [vmem:[%s1 + $0xa8] sm:$0xf]
  %v125 = vld [vmem:[%s1 + $0xac] sm:$0xf]
  %v126 = vld [vmem:[%s1 + $0xb0] sm:$0xf]
  %v127 = vld [vmem:[%s1 + $0xb4] sm:$0xf]
  %v128 = vld [vmem:[%s1 + $0xb8] sm:$0xf]
  %v129 = vld [vmem:[%s1 + $0xbc] sm:$0xf]
  %v162 = vunpack.c.l.b16 %v50
  %v163 = vunpack.c.h.b16 %v50
  %v164 = vunpack.c.l.b16 %v51
  %v165 = vunpack.c.l.b16 %v52
  %v166 = vunpack.c.h.b16 %v52
  %v167 = vunpack.c.l.b16 %v53
  %v168 = vunpack.c.l.b16 %v54
  %v169 = vunpack.c.h.b16 %v54
  %v170 = vunpack.c.l.b16 %v55
  %v171 = vunpack.c.l.b16 %v56
  %v172 = vunpack.c.h.b16 %v56
  %v173 = vunpack.c.l.b16 %v57
  %v174 = vunpack.c.l.b16 %v58
  %v175 = vunpack.c.h.b16 %v58
  %v176 = vunpack.c.l.b16 %v59
  %v177 = vunpack.c.l.b16 %v60
  %v178 = vunpack.c.h.b16 %v60
  %v179 = vunpack.c.l.b16 %v61
  %v180 = vunpack.c.l.b16 %v62
  %v181 = vunpack.c.h.b16 %v62
  %v182 = vunpack.c.l.b16 %v63
  %v183 = vunpack.c.l.b16 %v64
  %v184 = vunpack.c.h.b16 %v64
  %v185 = vunpack.c.l.b16 %v65
  %v186 = vunpack.c.l.b16 %v66
  %v187 = vunpack.c.h.b16 %v66
  %v188 = vunpack.c.l.b16 %v67
  %v189 = vunpack.c.l.b16 %v68
  %v190 = vunpack.c.h.b16 %v68
  %v191 = vunpack.c.l.b16 %v69
  %v192 = vunpack.c.l.b16 %v70
  %v193 = vunpack.c.h.b16 %v70
  %v194 = vunpack.c.l.b16 %v71
  %v195 = vunpack.c.l.b16 %v72
  %v196 = vunpack.c.h.b16 %v72
  %v197 = vunpack.c.l.b16 %v73
  %v198 = vunpack.c.l.b16 %v74
  %v199 = vunpack.c.h.b16 %v74
  %v200 = vunpack.c.l.b16 %v75
  %v201 = vunpack.c.l.b16 %v76
  %v202 = vunpack.c.h.b16 %v76
  %v203 = vunpack.c.l.b16 %v77
  %v204 = vunpack.c.l.b16 %v78
  %v205 = vunpack.c.h.b16 %v78
  %v206 = vunpack.c.l.b16 %v79
  %v207 = vunpack.c.l.b16 %v80
  %v208 = vunpack.c.h.b16 %v80
  %v209 = vunpack.c.l.b16 %v81
  %v210 = vpack.c.b16 %v165, %v162
  %v211 = vpack.c.b16 %v166, %v163
  %v212 = vpack.c.b16 %v167, %v164
  %v213 = vpack.c.b16 %v171, %v168
  %v214 = vpack.c.b16 %v172, %v169
  %v215 = vpack.c.b16 %v173, %v170
  %v216 = vpack.c.b16 %v177, %v174
  %v217 = vpack.c.b16 %v178, %v175
  %v218 = vpack.c.b16 %v179, %v176
  %v219 = vpack.c.b16 %v183, %v180
  %v220 = vpack.c.b16 %v184, %v181
  %v221 = vpack.c.b16 %v185, %v182
  %v222 = vpack.c.b16 %v189, %v186
  %v223 = vpack.c.b16 %v190, %v187
  %v224 = vpack.c.b16 %v191, %v188
  %v225 = vpack.c.b16 %v195, %v192
  %v226 = vpack.c.b16 %v196, %v193
  %v227 = vpack.c.b16 %v197, %v194
  %v228 = vpack.c.b16 %v201, %v198
  %v229 = vpack.c.b16 %v202, %v199
  %v230 = vpack.c.b16 %v203, %v200
  %v231 = vpack.c.b16 %v207, %v204
  %v232 = vpack.c.b16 %v208, %v205
  %v233 = vpack.c.b16 %v209, %v206
  %v306 = vunpack.c.l.b16 %v82
  %v307 = vunpack.c.l.b16 %v83
  %v308 = vunpack.c.l.b16 %v84
  %v309 = vunpack.c.l.b16 %v85
  %v310 = vunpack.c.l.b16 %v86
  %v311 = vunpack.c.l.b16 %v87
  %v312 = vunpack.c.l.b16 %v88
  %v313 = vunpack.c.l.b16 %v89
  %v314 = vunpack.c.l.b16 %v90
  %v315 = vunpack.c.l.b16 %v91
  %v316 = vunpack.c.l.b16 %v92
  %v317 = vunpack.c.l.b16 %v93
  %v318 = vunpack.c.l.b16 %v94
  %v319 = vunpack.c.l.b16 %v95
  %v320 = vunpack.c.l.b16 %v96
  %v321 = vunpack.c.l.b16 %v97
  %v322 = vunpack.c.l.b16 %v98
  %v323 = vunpack.c.l.b16 %v99
  %v324 = vunpack.c.l.b16 %v100
  %v325 = vunpack.c.l.b16 %v101
  %v326 = vunpack.c.l.b16 %v102
  %v327 = vunpack.c.l.b16 %v103
  %v328 = vunpack.c.l.b16 %v104
  %v329 = vunpack.c.l.b16 %v105
  %v330 = vunpack.c.l.b16 %v106
  %v331 = vunpack.c.l.b16 %v107
  %v332 = vunpack.c.l.b16 %v108
  %v333 = vunpack.c.l.b16 %v109
  %v334 = vunpack.c.l.b16 %v110
  %v335 = vunpack.c.l.b16 %v111
  %v336 = vunpack.c.l.b16 %v112
  %v337 = vunpack.c.l.b16 %v113
  %v338 = vunpack.c.l.b16 %v114
  %v339 = vunpack.c.l.b16 %v115
  %v340 = vunpack.c.l.b16 %v116
  %v341 = vunpack.c.l.b16 %v117
  %v342 = vunpack.c.l.b16 %v118
  %v343 = vunpack.c.l.b16 %v119
  %v344 = vunpack.c.l.b16 %v120
  %v345 = vunpack.c.l.b16 %v121
  %v346 = vunpack.c.l.b16 %v122
  %v347 = vunpack.c.l.b16 %v123
  %v348 = vunpack.c.l.b16 %v124
  %v349 = vunpack.c.l.b16 %v125
  %v350 = vunpack.c.l.b16 %v126
  %v351 = vunpack.c.l.b16 %v127
  %v352 = vunpack.c.l.b16 %v128
  %v353 = vunpack.c.l.b16 %v129
  %v354 = vpack.c.b16 %v307, %v306
  %v355 = vpack.c.b16 %v309, %v308
  %v356 = vpack.c.b16 %v311, %v310
  %v357 = vpack.c.b16 %v313, %v312
  %v358 = vpack.c.b16 %v315, %v314
  %v359 = vpack.c.b16 %v317, %v316
  %v360 = vpack.c.b16 %v319, %v318
  %v361 = vpack.c.b16 %v321, %v320
  %v362 = vpack.c.b16 %v323, %v322
  %v363 = vpack.c.b16 %v325, %v324
  %v364 = vpack.c.b16 %v327, %v326
  %v365 = vpack.c.b16 %v329, %v328
  %v366 = vpack.c.b16 %v331, %v330
  %v367 = vpack.c.b16 %v333, %v332
  %v368 = vpack.c.b16 %v335, %v334
  %v369 = vpack.c.b16 %v337, %v336
  %v370 = vpack.c.b16 %v339, %v338
  %v371 = vpack.c.b16 %v341, %v340
  %v372 = vpack.c.b16 %v343, %v342
  %v373 = vpack.c.b16 %v345, %v344
  %v374 = vpack.c.b16 %v347, %v346
  %v375 = vpack.c.b16 %v349, %v348
  %v376 = vpack.c.b16 %v351, %v350
  %v377 = vpack.c.b16 %v353, %v352
  %402 = vmatpush.bf16.msra.mxu0 %v361
  %403 = vmatpush.bf16.msra.mxu0 %v360
  %404 = vmatpush.bf16.msra.mxu0 %v359
  %405 = vmatpush.bf16.msra.mxu0 %v358
  %406 = vmatpush.bf16.msra.mxu0 %v357
  %407 = vmatpush.bf16.msra.mxu0 %v356
  %408 = vmatpush.bf16.msra.mxu0 %v355
  %409 = vmatpush.bf16.msra.mxu0 %v354
  %410 = vmatmul.bf16.gmra.mxu0 %v210
  %v411 = vpop.f32.mrf.mxu0
  %v412 = vadd.f32 0.0, %v411
  %v413 = vpop.f32.mrf.mxu0
  %v414 = vadd.f32 0.0, %v413
  %415 = vmatmul.bf16.gmra.mxu0 %v213
  %v416 = vpop.f32.mrf.mxu0
  %v417 = vadd.f32 0.0, %v416
  %v418 = vpop.f32.mrf.mxu0
  %v419 = vadd.f32 0.0, %v418
  %420 = vmatmul.bf16.gmra.mxu0 %v216
  %v421 = vpop.f32.mrf.mxu0
  %v422 = vadd.f32 0.0, %v421
  %v423 = vpop.f32.mrf.mxu0
  %v424 = vadd.f32 0.0, %v423
  %425 = vmatmul.bf16.gmra.mxu0 %v219
  %v426 = vpop.f32.mrf.mxu0
  %v427 = vadd.f32 0.0, %v426
  %v428 = vpop.f32.mrf.mxu0
  %v429 = vadd.f32 0.0, %v428
  %430 = vmatmul.bf16.gmra.mxu0 %v222
  %v431 = vpop.f32.mrf.mxu0
  %v432 = vadd.f32 0.0, %v431
  %v433 = vpop.f32.mrf.mxu0
  %v434 = vadd.f32 0.0, %v433
  %435 = vmatmul.bf16.gmra.mxu0 %v225
  %v436 = vpop.f32.mrf.mxu0
  %v437 = vadd.f32 0.0, %v436
  %v438 = vpop.f32.mrf.mxu0
  %v439 = vadd.f32 0.0, %v438
  %440 = vmatmul.bf16.gmra.mxu0 %v228
  %v441 = vpop.f32.mrf.mxu0
  %v442 = vadd.f32 0.0, %v441
  %v443 = vpop.f32.mrf.mxu0
  %v444 = vadd.f32 0.0, %v443
  %445 = vmatmul.bf16.gmra.mxu0 %v231
  %v446 = vpop.f32.mrf.mxu0
  %v447 = vadd.f32 0.0, %v446
  %v448 = vpop.f32.mrf.mxu0
  %v449 = vadd.f32 0.0, %v448
  %450 = vdwg.mxu0
  %451 = vmatpush.bf16.msra.mxu0 %v369
  %452 = vmatpush.bf16.msra.mxu0 %v368
  %453 = vmatpush.bf16.msra.mxu0 %v367
  %454 = vmatpush.bf16.msra.mxu0 %v366
  %455 = vmatpush.bf16.msra.mxu0 %v365
  %456 = vmatpush.bf16.msra.mxu0 %v364
  %457 = vmatpush.bf16.msra.mxu0 %v363
  %458 = vmatpush.bf16.msra.mxu0 %v362
  %459 = vmatmul.bf16.gmra.mxu0 %v211
  %v460 = vpop.f32.mrf.mxu0
  %v461 = vadd.f32 %v412, %v460
  %v462 = vpop.f32.mrf.mxu0
  %v463 = vadd.f32 %v414, %v462
  %464 = vmatmul.bf16.gmra.mxu0 %v214
  %v465 = vpop.f32.mrf.mxu0
  %v466 = vadd.f32 %v417, %v465
  %v467 = vpop.f32.mrf.mxu0
  %v468 = vadd.f32 %v419, %v467
  %469 = vmatmul.bf16.gmra.mxu0 %v217
  %v470 = vpop.f32.mrf.mxu0
  %v471 = vadd.f32 %v422, %v470
  %v472 = vpop.f32.mrf.mxu0
  %v473 = vadd.f32 %v424, %v472
  %474 = vmatmul.bf16.gmra.mxu0 %v220
  %v475 = vpop.f32.mrf.mxu0
  %v476 = vadd.f32 %v427, %v475
  %v477 = vpop.f32.mrf.mxu0
  %v478 = vadd.f32 %v429, %v477
  %479 = vmatmul.bf16.gmra.mxu0 %v223
  %v480 = vpop.f32.mrf.mxu0
  %v481 = vadd.f32 %v432, %v480
  %v482 = vpop.f32.mrf.mxu0
  %v483 = vadd.f32 %v434, %v482
  %484 = vmatmul.bf16.gmra.mxu0 %v226
  %v485 = vpop.f32.mrf.mxu0
  %v486 = vadd.f32 %v437, %v485
  %v487 = vpop.f32.mrf.mxu0
  %v488 = vadd.f32 %v439, %v487
  %489 = vmatmul.bf16.gmra.mxu0 %v229
  %v490 = vpop.f32.mrf.mxu0
  %v491 = vadd.f32 %v442, %v490
  %v492 = vpop.f32.mrf.mxu0
  %v493 = vadd.f32 %v444, %v492
  %494 = vmatmul.bf16.gmra.mxu0 %v232
  %v495 = vpop.f32.mrf.mxu0
  %v496 = vadd.f32 %v447, %v495
  %v497 = vpop.f32.mrf.mxu0
  %v498 = vadd.f32 %v449, %v497
  %499 = vdwg.mxu0
  %500 = vmatpush.bf16.msra.mxu0 %v377
  %501 = vmatpush.bf16.msra.mxu0 %v376
  %502 = vmatpush.bf16.msra.mxu0 %v375
  %503 = vmatpush.bf16.msra.mxu0 %v374
  %504 = vmatpush.bf16.msra.mxu0 %v373
  %505 = vmatpush.bf16.msra.mxu0 %v372
  %506 = vmatpush.bf16.msra.mxu0 %v371
  %507 = vmatpush.bf16.msra.mxu0 %v370
  %508 = vmatmul.bf16.gmra.mxu0 %v212
  %v509 = vpop.f32.mrf.mxu0
  %v510 = vadd.f32 %v461, %v509
  %v511 = vpop.f32.mrf.mxu0
  %v512 = vadd.f32 %v463, %v511
  %513 = vmatmul.bf16.gmra.mxu0 %v215
  %v514 = vpop.f32.mrf.mxu0
  %v515 = vadd.f32 %v466, %v514
  %v516 = vpop.f32.mrf.mxu0
  %v517 = vadd.f32 %v468, %v516
  %518 = vmatmul.bf16.gmra.mxu0 %v218
  %v519 = vpop.f32.mrf.mxu0
  %v520 = vadd.f32 %v471, %v519
  %v521 = vpop.f32.mrf.mxu0
  %v522 = vadd.f32 %v473, %v521
  %523 = vmatmul.bf16.gmra.mxu0 %v221
  %v524 = vpop.f32.mrf.mxu0
  %v525 = vadd.f32 %v476, %v524
  %v526 = vpop.f32.mrf.mxu0
  %v527 = vadd.f32 %v478, %v526
  %528 = vmatmul.bf16.gmra.mxu0 %v224
  %v529 = vpop.f32.mrf.mxu0
  %v530 = vadd.f32 %v481, %v529
  %v531 = vpop.f32.mrf.mxu0
  %v532 = vadd.f32 %v483, %v531
  %533 = vmatmul.bf16.gmra.mxu0 %v227
  %v534 = vpop.f32.mrf.mxu0
  %v535 = vadd.f32 %v486, %v534
  %v536 = vpop.f32.mrf.mxu0
  %v537 = vadd.f32 %v488, %v536
  %538 = vmatmul.bf16.gmra.mxu0 %v230
  %v539 = vpop.f32.mrf.mxu0
  %v540 = vadd.f32 %v491, %v539
  %v541 = vpop.f32.mrf.mxu0
  %v542 = vadd.f32 %v493, %v541
  %543 = vmatmul.bf16.gmra.mxu0 %v233
  %v544 = vpop.f32.mrf.mxu0
  %v545 = vadd.f32 %v496, %v544
  %v546 = vpop.f32.mrf.mxu0
  %v547 = vadd.f32 %v498, %v546
  %548 = vdwg.mxu0
  %v549 = vadd.f32 %v34, %v510
  %v550 = vadd.f32 %v35, %v512
  %v551 = vadd.f32 %v36, %v515
  %v552 = vadd.f32 %v37, %v517
  %v553 = vadd.f32 %v38, %v520
  %v554 = vadd.f32 %v39, %v522
  %v555 = vadd.f32 %v40, %v525
  %v556 = vadd.f32 %v41, %v527
  %v557 = vadd.f32 %v42, %v530
  %v558 = vadd.f32 %v43, %v532
  %v559 = vadd.f32 %v44, %v535
  %v560 = vadd.f32 %v45, %v537
  %v561 = vadd.f32 %v46, %v540
  %v562 = vadd.f32 %v47, %v542
  %v563 = vadd.f32 %v48, %v545
  %v564 = vadd.f32 %v49, %v547
  %565 = vst [vmem:[#allocation2] sm:$0xff] %v549
  %566 = vst [vmem:[#allocation2 + $0x8] sm:$0xff] %v550
  %567 = vst [vmem:[#allocation2 + $0x10] sm:$0xff] %v551
  %568 = vst [vmem:[#allocation2 + $0x18] sm:$0xff] %v552
  %569 = vst [vmem:[#allocation2 + $0x20] sm:$0xff] %v553
  %570 = vst [vmem:[#allocation2 + $0x28] sm:$0xff] %v554
  %571 = vst [vmem:[#allocation2 + $0x30] sm:$0xff] %v555
  %572 = vst [vmem:[#allocation2 + $0x38] sm:$0xff] %v556
  %573 = vst [vmem:[#allocation2 + $0x40] sm:$0xff] %v557
  %574 = vst [vmem:[#allocation2 + $0x48] sm:$0xff] %v558
  %575 = vst [vmem:[#allocation2 + $0x50] sm:$0xff] %v559
  %576 = vst [vmem:[#allocation2 + $0x58] sm:$0xff] %v560
  %577 = vst [vmem:[#allocation2 + $0x60] sm:$0xff] %v561
  %578 = vst [vmem:[#allocation2 + $0x68] sm:$0xff] %v562
  %579 = vst [vmem:[#allocation2 + $0x70] sm:$0xff] %v563
  %580 = vst [vmem:[#allocation2 + $0x78] sm:$0xff] %v564
  // Predicated region
  $region18: #{stt_forward.14} parent=0 // pred_check
    %p581 = pneg %p14
  $region19: #{stt_forward.14} parent=0 // pred_check_branch
    %583 = sbr.rel (%p581) target = $region21
  $region20: #{stt_forward.14} parent=0 // pred_region
    %v584 = vld [vmem:[#allocation2] sm:$0xff]
    %v585 = vld [vmem:[#allocation2 + $0x8] sm:$0xff]
    %v586 = vld [vmem:[#allocation2 + $0x10] sm:$0xff]
    %v587 = vld [vmem:[#allocation2 + $0x18] sm:$0xff]
    %v588 = vld [vmem:[#allocation2 + $0x20] sm:$0xff]
    %v589 = vld [vmem:[#allocation2 + $0x28] sm:$0xff]
    %v590 = vld [vmem:[#allocation2 + $0x30] sm:$0xff]
    %v591 = vld [vmem:[#allocation2 + $0x38] sm:$0xff]
    %v592 = vld [vmem:[#allocation2 + $0x40] sm:$0xff]
    %v593 = vld [vmem:[#allocation2 + $0x48] sm:$0xff]
    %v594 = vld [vmem:[#allocation2 + $0x50] sm:$0xff]
    %v595 = vld [vmem:[#allocation2 + $0x58] sm:$0xff]
    %v596 = vld [vmem:[#allocation2 + $0x60] sm:$0xff]
    %v597 = vld [vmem:[#allocation2 + $0x68] sm:$0xff]
    %v598 = vld [vmem:[#allocation2 + $0x70] sm:$0xff]
    %v599 = vld [vmem:[#allocation2 + $0x78] sm:$0xff]
    %v600 = vld [vmem:[%s2] sm:$0x1]
    %v602 = vperm.slane %v600, 0
    %v604 = vadd.f32 %v584, %v602
    %v605 = vadd.f32 %v585, %v602
    %v606 = vadd.f32 %v586, %v602
    %v607 = vadd.f32 %v587, %v602
    %v608 = vadd.f32 %v588, %v602
    %v609 = vadd.f32 %v589, %v602
    %v610 = vadd.f32 %v590, %v602
    %v611 = vadd.f32 %v591, %v602
    %v612 = vadd.f32 %v592, %v602
    %v613 = vadd.f32 %v593, %v602
    %v614 = vadd.f32 %v594, %v602
    %v615 = vadd.f32 %v595, %v602
    %v616 = vadd.f32 %v596, %v602
    %v617 = vadd.f32 %v597, %v602
    %v618 = vadd.f32 %v598, %v602
    %v619 = vadd.f32 %v599, %v602
    %620 = vst [vmem:[%s3] sm:$0xff] %v604
    %621 = vst [vmem:[%s3 + $0x8] sm:$0xff] %v605
    %622 = vst [vmem:[%s3 + $0x10] sm:$0xff] %v606
    %623 = vst [vmem:[%s3 + $0x18] sm:$0xff] %v607
    %624 = vst [vmem:[%s3 + $0x20] sm:$0xff] %v608
    %625 = vst [vmem:[%s3 + $0x28] sm:$0xff] %v609
    %626 = vst [vmem:[%s3 + $0x30] sm:$0xff] %v610
    %627 = vst [vmem:[%s3 + $0x38] sm:$0xff] %v611
    %628 = vst [vmem:[%s3 + $0x40] sm:$0xff] %v612
    %629 = vst [vmem:[%s3 + $0x48] sm:$0xff] %v613
    %630 = vst [vmem:[%s3 + $0x50] sm:$0xff] %v614
    %631 = vst [vmem:[%s3 + $0x58] sm:$0xff] %v615
    %632 = vst [vmem:[%s3 + $0x60] sm:$0xff] %v616
    %633 = vst [vmem:[%s3 + $0x68] sm:$0xff] %v617
    %634 = vst [vmem:[%s3 + $0x70] sm:$0xff] %v618
    %635 = vst [vmem:[%s3 + $0x78] sm:$0xff] %v619
  $region21: #{stt_forward.14} parent=0 // pred_fallthru
    _
  // Predicated region
  $region22: #{stt_forward.14} parent=0 // pred_check
    _
  $region23: #{stt_forward.14} parent=0 // pred_check_branch
    %637 = sbr.rel (0) target = $region25
  $region24: #{stt_forward.14} parent=0 // pred_region
    _
  $region25: #{stt_forward.14} parent=0 // pred_fallthru
    _
  // Predicated region
  $region26: #{stt_forward.14} parent=0 // pred_check
    _
  $region27: #{stt_forward.14} parent=0 // pred_check_branch
    %639 = sbr.rel (0) target = $region29
  $region28: #{stt_forward.14} parent=0 // pred_region
    _
  $region29: #{stt_forward.14} parent=0 // pred_fallthru
    _

// kernel: stt_forward.15
$region0: #{stt_forward.15}
  #allocation0 [shape = 'u32[]', space=smem, size = 0x4, offset = 0x4, fixed_abs, tag = 'smem constant byte address 0x4 - core index']
  #allocation1 [shape = 'u32[72,128]{1,0:T(1,128)}', space=vmem, size = 0x9000, scoped, tag = 'internal scratch']
  %s0 = inlined_call_operand.vmem [shape: f32[512,8], index: 0, kind: input, shape index: {}]
  %s1 = inlined_call_operand.vmem [shape: f32[1,8], index: 1, kind: input, shape index: {}]
  %s2 = inlined_call_operand.vmem [shape: f32[1,8], index: 2, kind: input, shape index: {}]
  %s3 = inlined_call_operand.vmem [shape: f32[512,8], index: 3, kind: output, shape index: {}]
  %s4 = sld [smem:[#allocation0]]
  $region22: #{stt_forward.15} parent=0
    _
  %s6 = ssub.s32 1, %s4
  %s7 = scalar_select 0, %s6, %s4
  // Predicated region
  $region2: #{stt_forward.15} parent=0 // pred_check
    _
  $region3: #{stt_forward.15} parent=0 // pred_check_branch
    %9 = sbr.rel (0) target = $region5
  $region4: #{stt_forward.15} parent=0 // pred_region
    _
  $region5: #{stt_forward.15} parent=0 // pred_fallthru
    _
  // Predicated region
  $region6: #{stt_forward.15} parent=0 // pred_check
    _
  $region7: #{stt_forward.15} parent=0 // pred_check_branch
    %11 = sbr.rel (0) target = $region9
  $region8: #{stt_forward.15} parent=0 // pred_region
    _
  $region9: #{stt_forward.15} parent=0 // pred_fallthru
    _
  // Predicated region
  $region10: #{stt_forward.15} parent=0 // pred_check
    _
  $region11: #{stt_forward.15} parent=0 // pred_check_branch
    %13 = sbr.rel (0) target = $region13
  $region12: #{stt_forward.15} parent=0 // pred_region
    _
  $region13: #{stt_forward.15} parent=0 // pred_fallthru
    _
  %v14 = vld [vmem:[%s0] sm:$0xff]
  %v15 = vld [vmem:[%s0 + $0x8] sm:$0xff]
  %v16 = vld [vmem:[%s0 + $0x10] sm:$0xff]
  %v17 = vld [vmem:[%s0 + $0x18] sm:$0xff]
  %v18 = vld [vmem:[%s0 + $0x20] sm:$0xff]
  %v19 = vld [vmem:[%s0 + $0x28] sm:$0xff]
  %v20 = vld [vmem:[%s0 + $0x30] sm:$0xff]
  %v21 = vld [vmem:[%s0 + $0x38] sm:$0xff]
  %v22 = vld [vmem:[%s0 + $0x40] sm:$0xff]
  %v23 = vld [vmem:[%s0 + $0x48] sm:$0xff]
  %v24 = vld [vmem:[%s0 + $0x50] sm:$0xff]
  %v25 = vld [vmem:[%s0 + $0x58] sm:$0xff]
  %v26 = vld [vmem:[%s0 + $0x60] sm:$0xff]
  %v27 = vld [vmem:[%s0 + $0x68] sm:$0xff]
  %v28 = vld [vmem:[%s0 + $0x70] sm:$0xff]
  %v29 = vld [vmem:[%s0 + $0x78] sm:$0xff]
  %v30 = vld [vmem:[%s0 + $0x80] sm:$0xff]
  %v31 = vld [vmem:[%s0 + $0x88] sm:$0xff]
  %v32 = vld [vmem:[%s0 + $0x90] sm:$0xff]
  %v33 = vld [vmem:[%s0 + $0x98] sm:$0xff]
  %v34 = vld [vmem:[%s0 + $0xa0] sm:$0xff]
  %v35 = vld [vmem:[%s0 + $0xa8] sm:$0xff]
  %v36 = vld [vmem:[%s0 + $0xb0] sm:$0xff]
  %v37 = vld [vmem:[%s0 + $0xb8] sm:$0xff]
  %v38 = vld [vmem:[%s0 + $0xc0] sm:$0xff]
  %v39 = vld [vmem:[%s0 + $0xc8] sm:$0xff]
  %v40 = vld [vmem:[%s0 + $0xd0] sm:$0xff]
  %v41 = vld [vmem:[%s0 + $0xd8] sm:$0xff]
  %v42 = vld [vmem:[%s0 + $0xe0] sm:$0xff]
  %v43 = vld [vmem:[%s0 + $0xe8] sm:$0xff]
  %v44 = vld [vmem:[%s0 + $0xf0] sm:$0xff]
  %v45 = vld [vmem:[%s0 + $0xf8] sm:$0xff]
  %v46 = vld [vmem:[%s0 + $0x100] sm:$0xff]
  %v47 = vld [vmem:[%s0 + $0x108] sm:$0xff]
  %v48 = vld [vmem:[%s0 + $0x110] sm:$0xff]
  %v49 = vld [vmem:[%s0 + $0x118] sm:$0xff]
  %v50 = vld [vmem:[%s0 + $0x120] sm:$0xff]
  %v51 = vld [vmem:[%s0 + $0x128] sm:$0xff]
  %v52 = vld [vmem:[%s0 + $0x130] sm:$0xff]
  %v53 = vld [vmem:[%s0 + $0x138] sm:$0xff]
  %v54 = vld [vmem:[%s0 + $0x140] sm:$0xff]
  %v55 = vld [vmem:[%s0 + $0x148] sm:$0xff]
  %v56 = vld [vmem:[%s0 + $0x150] sm:$0xff]
  %v57 = vld [vmem:[%s0 + $0x158] sm:$0xff]
  %v58 = vld [vmem:[%s0 + $0x160] sm:$0xff]
  %v59 = vld [vmem:[%s0 + $0x168] sm:$0xff]
  %v60 = vld [vmem:[%s0 + $0x170] sm:$0xff]
  %v61 = vld [vmem:[%s0 + $0x178] sm:$0xff]
  %v62 = vld [vmem:[%s0 + $0x180] sm:$0xff]
  %v63 = vld [vmem:[%s0 + $0x188] sm:$0xff]
  %v64 = vld [vmem:[%s0 + $0x190] sm:$0xff]
  %v65 = vld [vmem:[%s0 + $0x198] sm:$0xff]
  %v66 = vld [vmem:[%s0 + $0x1a0] sm:$0xff]
  %v67 = vld [vmem:[%s0 + $0x1a8] sm:$0xff]
  %v68 = vld [vmem:[%s0 + $0x1b0] sm:$0xff]
  %v69 = vld [vmem:[%s0 + $0x1b8] sm:$0xff]
  %v70 = vld [vmem:[%s0 + $0x1c0] sm:$0xff]
  %v71 = vld [vmem:[%s0 + $0x1c8] sm:$0xff]
  %v72 = vld [vmem:[%s0 + $0x1d0] sm:$0xff]
  %v73 = vld [vmem:[%s0 + $0x1d8] sm:$0xff]
  %v74 = vld [vmem:[%s0 + $0x1e0] sm:$0xff]
  %v75 = vld [vmem:[%s0 + $0x1e8] sm:$0xff]
  %v76 = vld [vmem:[%s0 + $0x1f0] sm:$0xff]
  %v77 = vld [vmem:[%s0 + $0x1f8] sm:$0xff]
  %vm78 = vcmask 64512
  %v79 = vsel %vm78, %v14, 0.0
  %80 = vadd.xlane.f32.xlu0 %v79
  %v81 = vpop.xlane.xlu0 %80
  %v82 = vsel %vm78, %v15, 0.0
  %83 = vadd.xlane.f32.xlu0 %v82
  %v84 = vpop.xlane.xlu0 %83
  %v85 = vsel %vm78, %v16, 0.0
  %86 = vadd.xlane.f32.xlu0 %v85
  %v87 = vpop.xlane.xlu0 %86
  %v88 = vsel %vm78, %v17, 0.0
  %89 = vadd.xlane.f32.xlu0 %v88
  %v90 = vpop.xlane.xlu0 %89
  %v91 = vsel %vm78, %v18, 0.0
  %92 = vadd.xlane.f32.xlu0 %v91
  %v93 = vpop.xlane.xlu0 %92
  %v94 = vsel %vm78, %v19, 0.0
  %95 = vadd.xlane.f32.xlu0 %v94
  %v96 = vpop.xlane.xlu0 %95
  %v97 = vsel %vm78, %v20, 0.0
  %98 = vadd.xlane.f32.xlu0 %v97
  %v99 = vpop.xlane.xlu0 %98
  %v100 = vsel %vm78, %v21, 0.0
  %101 = vadd.xlane.f32.xlu0 %v100
  %v102 = vpop.xlane.xlu0 %101
  %v103 = vsel %vm78, %v22, 0.0
  %104 = vadd.xlane.f32.xlu0 %v103
  %v105 = vpop.xlane.xlu0 %104
  %v106 = vsel %vm78, %v23, 0.0
  %107 = vadd.xlane.f32.xlu0 %v106
  %v108 = vpop.xlane.xlu0 %107
  %v109 = vsel %vm78, %v24, 0.0
  %110 = vadd.xlane.f32.xlu0 %v109
  %v111 = vpop.xlane.xlu0 %110
  %v112 = vsel %vm78, %v25, 0.0
  %113 = vadd.xlane.f32.xlu0 %v112
  %v114 = vpop.xlane.xlu0 %113
  %v115 = vsel %vm78, %v26, 0.0
  %116 = vadd.xlane.f32.xlu0 %v115
  %v117 = vpop.xlane.xlu0 %116
  %v118 = vsel %vm78, %v27, 0.0
  %119 = vadd.xlane.f32.xlu0 %v118
  %v120 = vpop.xlane.xlu0 %119
  %v121 = vsel %vm78, %v28, 0.0
  %122 = vadd.xlane.f32.xlu0 %v121
  %v123 = vpop.xlane.xlu0 %122
  %v124 = vsel %vm78, %v29, 0.0
  %125 = vadd.xlane.f32.xlu0 %v124
  %v126 = vpop.xlane.xlu0 %125
  %v127 = vsel %vm78, %v30, 0.0
  %128 = vadd.xlane.f32.xlu0 %v127
  %v129 = vpop.xlane.xlu0 %128
  %v130 = vsel %vm78, %v31, 0.0
  %131 = vadd.xlane.f32.xlu0 %v130
  %v132 = vpop.xlane.xlu0 %131
  %v133 = vsel %vm78, %v32, 0.0
  %134 = vadd.xlane.f32.xlu0 %v133
  %v135 = vpop.xlane.xlu0 %134
  %v136 = vsel %vm78, %v33, 0.0
  %137 = vadd.xlane.f32.xlu0 %v136
  %v138 = vpop.xlane.xlu0 %137
  %v139 = vsel %vm78, %v34, 0.0
  %140 = vadd.xlane.f32.xlu0 %v139
  %v141 = vpop.xlane.xlu0 %140
  %v142 = vsel %vm78, %v35, 0.0
  %143 = vadd.xlane.f32.xlu0 %v142
  %v144 = vpop.xlane.xlu0 %143
  %v145 = vsel %vm78, %v36, 0.0
  %146 = vadd.xlane.f32.xlu0 %v145
  %v147 = vpop.xlane.xlu0 %146
  %v148 = vsel %vm78, %v37, 0.0
  %149 = vadd.xlane.f32.xlu0 %v148
  %v150 = vpop.xlane.xlu0 %149
  %v151 = vsel %vm78, %v38, 0.0
  %152 = vadd.xlane.f32.xlu0 %v151
  %v153 = vpop.xlane.xlu0 %152
  %v154 = vsel %vm78, %v39, 0.0
  %155 = vadd.xlane.f32.xlu0 %v154
  %v156 = vpop.xlane.xlu0 %155
  %v157 = vsel %vm78, %v40, 0.0
  %158 = vadd.xlane.f32.xlu0 %v157
  %v159 = vpop.xlane.xlu0 %158
  %v160 = vsel %vm78, %v41, 0.0
  %161 = vadd.xlane.f32.xlu0 %v160
  %v162 = vpop.xlane.xlu0 %161
  %v163 = vsel %vm78, %v42, 0.0
  %164 = vadd.xlane.f32.xlu0 %v163
  %v165 = vpop.xlane.xlu0 %164
  %v166 = vsel %vm78, %v43, 0.0
  %167 = vadd.xlane.f32.xlu0 %v166
  %v168 = vpop.xlane.xlu0 %167
  %v169 = vsel %vm78, %v44, 0.0
  %170 = vadd.xlane.f32.xlu0 %v169
  %v171 = vpop.xlane.xlu0 %170
  %v172 = vsel %vm78, %v45, 0.0
  %173 = vadd.xlane.f32.xlu0 %v172
  %v174 = vpop.xlane.xlu0 %173
  %v175 = vsel %vm78, %v46, 0.0
  %176 = vadd.xlane.f32.xlu0 %v175
  %v177 = vpop.xlane.xlu0 %176
  %v178 = vsel %vm78, %v47, 0.0
  %179 = vadd.xlane.f32.xlu0 %v178
  %v180 = vpop.xlane.xlu0 %179
  %v181 = vsel %vm78, %v48, 0.0
  %182 = vadd.xlane.f32.xlu0 %v181
  %v183 = vpop.xlane.xlu0 %182
  %v184 = vsel %vm78, %v49, 0.0
  %185 = vadd.xlane.f32.xlu0 %v184
  %v186 = vpop.xlane.xlu0 %185
  %v187 = vsel %vm78, %v50, 0.0
  %188 = vadd.xlane.f32.xlu0 %v187
  %v189 = vpop.xlane.xlu0 %188
  %v190 = vsel %vm78, %v51, 0.0
  %191 = vadd.xlane.f32.xlu0 %v190
  %v192 = vpop.xlane.xlu0 %191
  %v193 = vsel %vm78, %v52, 0.0
  %194 = vadd.xlane.f32.xlu0 %v193
  %v195 = vpop.xlane.xlu0 %194
  %v196 = vsel %vm78, %v53, 0.0
  %197 = vadd.xlane.f32.xlu0 %v196
  %v198 = vpop.xlane.xlu0 %197
  %v199 = vsel %vm78, %v54, 0.0
  %200 = vadd.xlane.f32.xlu0 %v199
  %v201 = vpop.xlane.xlu0 %200
  %v202 = vsel %vm78, %v55, 0.0
  %203 = vadd.xlane.f32.xlu0 %v202
  %v204 = vpop.xlane.xlu0 %203
  %v205 = vsel %vm78, %v56, 0.0
  %206 = vadd.xlane.f32.xlu0 %v205
  %v207 = vpop.xlane.xlu0 %206
  %v208 = vsel %vm78, %v57, 0.0
  %209 = vadd.xlane.f32.xlu0 %v208
  %v210 = vpop.xlane.xlu0 %209
  %v211 = vsel %vm78, %v58, 0.0
  %212 = vadd.xlane.f32.xlu0 %v211
  %v213 = vpop.xlane.xlu0 %212
  %v214 = vsel %vm78, %v59, 0.0
  %215 = vadd.xlane.f32.xlu0 %v214
  %v216 = vpop.xlane.xlu0 %215
  %v217 = vsel %vm78, %v60, 0.0
  %218 = vadd.xlane.f32.xlu0 %v217
  %v219 = vpop.xlane.xlu0 %218
  %v220 = vsel %vm78, %v61, 0.0
  %221 = vadd.xlane.f32.xlu0 %v220
  %v222 = vpop.xlane.xlu0 %221
  %v223 = vsel %vm78, %v62, 0.0
  %224 = vadd.xlane.f32.xlu0 %v223
  %v225 = vpop.xlane.xlu0 %224
  %v226 = vsel %vm78, %v63, 0.0
  %227 = vadd.xlane.f32.xlu0 %v226
  %v228 = vpop.xlane.xlu0 %227
  %v229 = vsel %vm78, %v64, 0.0
  %230 = vadd.xlane.f32.xlu0 %v229
  %v231 = vpop.xlane.xlu0 %230
  %v232 = vsel %vm78, %v65, 0.0
  %233 = vadd.xlane.f32.xlu0 %v232
  %v234 = vpop.xlane.xlu0 %233
  %v235 = vsel %vm78, %v66, 0.0
  %236 = vadd.xlane.f32.xlu0 %v235
  %v237 = vpop.xlane.xlu0 %236
  %v238 = vsel %vm78, %v67, 0.0
  %239 = vadd.xlane.f32.xlu0 %v238
  %v240 = vpop.xlane.xlu0 %239
  %v241 = vsel %vm78, %v68, 0.0
  %242 = vadd.xlane.f32.xlu0 %v241
  %v243 = vpop.xlane.xlu0 %242
  %v244 = vsel %vm78, %v69, 0.0
  %245 = vadd.xlane.f32.xlu0 %v244
  %v246 = vpop.xlane.xlu0 %245
  %v247 = vsel %vm78, %v70, 0.0
  %248 = vadd.xlane.f32.xlu0 %v247
  %v249 = vpop.xlane.xlu0 %248
  %v250 = vsel %vm78, %v71, 0.0
  %251 = vadd.xlane.f32.xlu0 %v250
  %v252 = vpop.xlane.xlu0 %251
  %v253 = vsel %vm78, %v72, 0.0
  %254 = vadd.xlane.f32.xlu0 %v253
  %v255 = vpop.xlane.xlu0 %254
  %v256 = vsel %vm78, %v73, 0.0
  %257 = vadd.xlane.f32.xlu0 %v256
  %v258 = vpop.xlane.xlu0 %257
  %v259 = vsel %vm78, %v74, 0.0
  %260 = vadd.xlane.f32.xlu0 %v259
  %v261 = vpop.xlane.xlu0 %260
  %v262 = vsel %vm78, %v75, 0.0
  %263 = vadd.xlane.f32.xlu0 %v262
  %v264 = vpop.xlane.xlu0 %263
  %v265 = vsel %vm78, %v76, 0.0
  %266 = vadd.xlane.f32.xlu0 %v265
  %v267 = vpop.xlane.xlu0 %266
  %v268 = vsel %vm78, %v77, 0.0
  %269 = vadd.xlane.f32.xlu0 %v268
  %v270 = vpop.xlane.xlu0 %269
  %v271 = vrcp.pop 8.0
  %v272 = vmul.f32 8.0, %v271
  %v273 = vsub.f32 1.0, %v272
  %v274 = vmul.f32 %v271, %v273
  %v275 = vadd.f32 %v271, %v274
  %vm276 = vweird.f32 %v271
  %v277 = vsel %vm276, %v271, %v275
  %v278 = vmul.f32 %v81, %v277
  %v279 = vmul.f32 %v84, %v277
  %v280 = vmul.f32 %v87, %v277
  %v281 = vmul.f32 %v90, %v277
  %v282 = vmul.f32 %v93, %v277
  %v283 = vmul.f32 %v96, %v277
  %v284 = vmul.f32 %v99, %v277
  %v285 = vmul.f32 %v102, %v277
  %v286 = vmul.f32 %v105, %v277
  %v287 = vmul.f32 %v108, %v277
  %v288 = vmul.f32 %v111, %v277
  %v289 = vmul.f32 %v114, %v277
  %v290 = vmul.f32 %v117, %v277
  %v291 = vmul.f32 %v120, %v277
  %v292 = vmul.f32 %v123, %v277
  %v293 = vmul.f32 %v126, %v277
  %v294 = vmul.f32 %v129, %v277
  %v295 = vmul.f32 %v132, %v277
  %v296 = vmul.f32 %v135, %v277
  %v297 = vmul.f32 %v138, %v277
  %v298 = vmul.f32 %v141, %v277
  %v299 = vmul.f32 %v144, %v277
  %v300 = vmul.f32 %v147, %v277
  %v301 = vmul.f32 %v150, %v277
  %v302 = vmul.f32 %v153, %v277
  %v303 = vmul.f32 %v156, %v277
  %v304 = vmul.f32 %v159, %v277
  %v305 = vmul.f32 %v162, %v277
  %v306 = vmul.f32 %v165, %v277
  %v307 = vmul.f32 %v168, %v277
  %v308 = vmul.f32 %v171, %v277
  %v309 = vmul.f32 %v174, %v277
  %v310 = vmul.f32 %v177, %v277
  %v311 = vmul.f32 %v180, %v277
  %v312 = vmul.f32 %v183, %v277
  %v313 = vmul.f32 %v186, %v277
  %v314 = vmul.f32 %v189, %v277
  %v315 = vmul.f32 %v192, %v277
  %v316 = vmul.f32 %v195, %v277
  %v317 = vmul.f32 %v198, %v277
  %v318 = vmul.f32 %v201, %v277
  %v319 = vmul.f32 %v204, %v277
  %v320 = vmul.f32 %v207, %v277
  %v321 = vmul.f32 %v210, %v277
  %v322 = vmul.f32 %v213, %v277
  %v323 = vmul.f32 %v216, %v277
  %v324 = vmul.f32 %v219, %v277
  %v325 = vmul.f32 %v222, %v277
  %v326 = vmul.f32 %v225, %v277
  %v327 = vmul.f32 %v228, %v277
  %v328 = vmul.f32 %v231, %v277
  %v329 = vmul.f32 %v234, %v277
  %v330 = vmul.f32 %v237, %v277
  %v331 = vmul.f32 %v240, %v277
  %v332 = vmul.f32 %v243, %v277
  %v333 = vmul.f32 %v246, %v277
  %v334 = vmul.f32 %v249, %v277
  %v335 = vmul.f32 %v252, %v277
  %v336 = vmul.f32 %v255, %v277
  %v337 = vmul.f32 %v258, %v277
  %v338 = vmul.f32 %v261, %v277
  %v339 = vmul.f32 %v264, %v277
  %v340 = vmul.f32 %v267, %v277
  %v341 = vmul.f32 %v270, %v277
  %v342 = vsub.f32 %v14, %v278
  %v343 = vsub.f32 %v15, %v279
  %v344 = vsub.f32 %v16, %v280
  %v345 = vsub.f32 %v17, %v281
  %v346 = vsub.f32 %v18, %v282
  %v347 = vsub.f32 %v19, %v283
  %v348 = vsub.f32 %v20, %v284
  %v349 = vsub.f32 %v21, %v285
  %v350 = vsub.f32 %v22, %v286
  %v351 = vsub.f32 %v23, %v287
  %v352 = vsub.f32 %v24, %v288
  %v353 = vsub.f32 %v25, %v289
  %v354 = vsub.f32 %v26, %v290
  %v355 = vsub.f32 %v27, %v291
  %v356 = vsub.f32 %v28, %v292
  %v357 = vsub.f32 %v29, %v293
  %v358 = vsub.f32 %v30, %v294
  %v359 = vsub.f32 %v31, %v295
  %v360 = vsub.f32 %v32, %v296
  %v361 = vsub.f32 %v33, %v297
  %v362 = vsub.f32 %v34, %v298
  %v363 = vsub.f32 %v35, %v299
  %v364 = vsub.f32 %v36, %v300
  %v365 = vsub.f32 %v37, %v301
  %v366 = vsub.f32 %v38, %v302
  %v367 = vsub.f32 %v39, %v303
  %v368 = vsub.f32 %v40, %v304
  %v369 = vsub.f32 %v41, %v305
  %v370 = vsub.f32 %v42, %v306
  %v371 = vsub.f32 %v43, %v307
  %v372 = vsub.f32 %v44, %v308
  %v373 = vsub.f32 %v45, %v309
  %v374 = vsub.f32 %v46, %v310
  %v375 = vsub.f32 %v47, %v311
  %v376 = vsub.f32 %v48, %v312
  %v377 = vsub.f32 %v49, %v313
  %v378 = vsub.f32 %v50, %v314
  %v379 = vsub.f32 %v51, %v315
  %v380 = vsub.f32 %v52, %v316
  %v381 = vsub.f32 %v53, %v317
  %v382 = vsub.f32 %v54, %v318
  %v383 = vsub.f32 %v55, %v319
  %v384 = vsub.f32 %v56, %v320
  %v385 = vsub.f32 %v57, %v321
  %v386 = vsub.f32 %v58, %v322
  %v387 = vsub.f32 %v59, %v323
  %v388 = vsub.f32 %v60, %v324
  %v389 = vsub.f32 %v61, %v325
  %v390 = vsub.f32 %v62, %v326
  %v391 = vsub.f32 %v63, %v327
  %v392 = vsub.f32 %v64, %v328
  %v393 = vsub.f32 %v65, %v329
  %v394 = vsub.f32 %v66, %v330
  %v395 = vsub.f32 %v67, %v331
  %v396 = vsub.f32 %v68, %v332
  %v397 = vsub.f32 %v69, %v333
  %v398 = vsub.f32 %v70, %v334
  %v399 = vsub.f32 %v71, %v335
  %v400 = vsub.f32 %v72, %v336
  %v401 = vsub.f32 %v73, %v337
  %v402 = vsub.f32 %v74, %v338
  %v403 = vsub.f32 %v75, %v339
  %v404 = vsub.f32 %v76, %v340
  %v405 = vsub.f32 %v77, %v341
  %v406 = vmul.f32 %v342, %v342
  %v407 = vmul.f32 %v343, %v343
  %v408 = vmul.f32 %v344, %v344
  %v409 = vmul.f32 %v345, %v345
  %v410 = vmul.f32 %v346, %v346
  %v411 = vmul.f32 %v347, %v347
  %v412 = vmul.f32 %v348, %v348
  %v413 = vmul.f32 %v349, %v349
  %v414 = vmul.f32 %v350, %v350
  %v415 = vmul.f32 %v351, %v351
  %v416 = vmul.f32 %v352, %v352
  %v417 = vmul.f32 %v353, %v353
  %v418 = vmul.f32 %v354, %v354
  %v419 = vmul.f32 %v355, %v355
  %v420 = vmul.f32 %v356, %v356
  %v421 = vmul.f32 %v357, %v357
  %v422 = vmul.f32 %v358, %v358
  %v423 = vmul.f32 %v359, %v359
  %v424 = vmul.f32 %v360, %v360
  %v425 = vmul.f32 %v361, %v361
  %v426 = vmul.f32 %v362, %v362
  %v427 = vmul.f32 %v363, %v363
  %v428 = vmul.f32 %v364, %v364
  %v429 = vmul.f32 %v365, %v365
  %v430 = vmul.f32 %v366, %v366
  %v431 = vmul.f32 %v367, %v367
  %v432 = vmul.f32 %v368, %v368
  %v433 = vmul.f32 %v369, %v369
  %v434 = vmul.f32 %v370, %v370
  %v435 = vmul.f32 %v371, %v371
  %v436 = vmul.f32 %v372, %v372
  %v437 = vmul.f32 %v373, %v373
  %v438 = vmul.f32 %v374, %v374
  %v439 = vmul.f32 %v375, %v375
  %v440 = vmul.f32 %v376, %v376
  %v441 = vmul.f32 %v377, %v377
  %v442 = vmul.f32 %v378, %v378
  %v443 = vmul.f32 %v379, %v379
  %v444 = vmul.f32 %v380, %v380
  %v445 = vmul.f32 %v381, %v381
  %v446 = vmul.f32 %v382, %v382
  %v447 = vmul.f32 %v383, %v383
  %v448 = vmul.f32 %v384, %v384
  %v449 = vmul.f32 %v385, %v385
  %v450 = vmul.f32 %v386, %v386
  %v451 = vmul.f32 %v387, %v387
  %v452 = vmul.f32 %v388, %v388
  %v453 = vmul.f32 %v389, %v389
  %v454 = vmul.f32 %v390, %v390
  %v455 = vmul.f32 %v391, %v391
  %v456 = vmul.f32 %v392, %v392
  %v457 = vmul.f32 %v393, %v393
  %v458 = vmul.f32 %v394, %v394
  %v459 = vmul.f32 %v395, %v395
  %v460 = vmul.f32 %v396, %v396
  %v461 = vmul.f32 %v397, %v397
  %v462 = vmul.f32 %v398, %v398
  %v463 = vmul.f32 %v399, %v399
  %v464 = vmul.f32 %v400, %v400
  %v465 = vmul.f32 %v401, %v401
  %v466 = vmul.f32 %v402, %v402
  %v467 = vmul.f32 %v403, %v403
  %v468 = vmul.f32 %v404, %v404
  %v469 = vmul.f32 %v405, %v405
  %v470 = vsel %vm78, %v406, 0.0
  %471 = vadd.xlane.f32.xlu0 %v470
  %v472 = vpop.xlane.xlu0 %471
  %v473 = vsel %vm78, %v407, 0.0
  %474 = vadd.xlane.f32.xlu0 %v473
  %v475 = vpop.xlane.xlu0 %474
  %v476 = vsel %vm78, %v408, 0.0
  %477 = vadd.xlane.f32.xlu0 %v476
  %v478 = vpop.xlane.xlu0 %477
  %v479 = vsel %vm78, %v409, 0.0
  %480 = vadd.xlane.f32.xlu0 %v479
  %v481 = vpop.xlane.xlu0 %480
  %v482 = vsel %vm78, %v410, 0.0
  %483 = vadd.xlane.f32.xlu0 %v482
  %v484 = vpop.xlane.xlu0 %483
  %v485 = vsel %vm78, %v411, 0.0
  %486 = vadd.xlane.f32.xlu0 %v485
  %v487 = vpop.xlane.xlu0 %486
  %v488 = vsel %vm78, %v412, 0.0
  %489 = vadd.xlane.f32.xlu0 %v488
  %v490 = vpop.xlane.xlu0 %489
  %v491 = vsel %vm78, %v413, 0.0
  %492 = vadd.xlane.f32.xlu0 %v491
  %v493 = vpop.xlane.xlu0 %492
  %v494 = vsel %vm78, %v414, 0.0
  %495 = vadd.xlane.f32.xlu0 %v494
  %v496 = vpop.xlane.xlu0 %495
  %v497 = vsel %vm78, %v415, 0.0
  %498 = vadd.xlane.f32.xlu0 %v497
  %v499 = vpop.xlane.xlu0 %498
  %v500 = vsel %vm78, %v416, 0.0
  %501 = vadd.xlane.f32.xlu0 %v500
  %v502 = vpop.xlane.xlu0 %501
  %v503 = vsel %vm78, %v417, 0.0
  %504 = vadd.xlane.f32.xlu0 %v503
  %v505 = vpop.xlane.xlu0 %504
  %v506 = vsel %vm78, %v418, 0.0
  %507 = vadd.xlane.f32.xlu0 %v506
  %v508 = vpop.xlane.xlu0 %507
  %v509 = vsel %vm78, %v419, 0.0
  %510 = vadd.xlane.f32.xlu0 %v509
  %v511 = vpop.xlane.xlu0 %510
  %v512 = vsel %vm78, %v420, 0.0
  %513 = vadd.xlane.f32.xlu0 %v512
  %v514 = vpop.xlane.xlu0 %513
  %v515 = vsel %vm78, %v421, 0.0
  %516 = vadd.xlane.f32.xlu0 %v515
  %v517 = vpop.xlane.xlu0 %516
  %v518 = vsel %vm78, %v422, 0.0
  %519 = vadd.xlane.f32.xlu0 %v518
  %v520 = vpop.xlane.xlu0 %519
  %v521 = vsel %vm78, %v423, 0.0
  %522 = vadd.xlane.f32.xlu0 %v521
  %v523 = vpop.xlane.xlu0 %522
  %v524 = vsel %vm78, %v424, 0.0
  %525 = vadd.xlane.f32.xlu0 %v524
  %v526 = vpop.xlane.xlu0 %525
  %v527 = vsel %vm78, %v425, 0.0
  %528 = vadd.xlane.f32.xlu0 %v527
  %v529 = vpop.xlane.xlu0 %528
  %v530 = vsel %vm78, %v426, 0.0
  %531 = vadd.xlane.f32.xlu0 %v530
  %v532 = vpop.xlane.xlu0 %531
  %v533 = vsel %vm78, %v427, 0.0
  %534 = vadd.xlane.f32.xlu0 %v533
  %v535 = vpop.xlane.xlu0 %534
  %v536 = vsel %vm78, %v428, 0.0
  %537 = vadd.xlane.f32.xlu0 %v536
  %v538 = vpop.xlane.xlu0 %537
  %v539 = vsel %vm78, %v429, 0.0
  %540 = vadd.xlane.f32.xlu0 %v539
  %v541 = vpop.xlane.xlu0 %540
  %v542 = vsel %vm78, %v430, 0.0
  %543 = vadd.xlane.f32.xlu0 %v542
  %v544 = vpop.xlane.xlu0 %543
  %v545 = vsel %vm78, %v431, 0.0
  %546 = vadd.xlane.f32.xlu0 %v545
  %v547 = vpop.xlane.xlu0 %546
  %v548 = vsel %vm78, %v432, 0.0
  %549 = vadd.xlane.f32.xlu0 %v548
  %v550 = vpop.xlane.xlu0 %549
  %v551 = vsel %vm78, %v433, 0.0
  %552 = vadd.xlane.f32.xlu0 %v551
  %v553 = vpop.xlane.xlu0 %552
  %v554 = vsel %vm78, %v434, 0.0
  %555 = vadd.xlane.f32.xlu0 %v554
  %v556 = vpop.xlane.xlu0 %555
  %v557 = vsel %vm78, %v435, 0.0
  %558 = vadd.xlane.f32.xlu0 %v557
  %v559 = vpop.xlane.xlu0 %558
  %v560 = vsel %vm78, %v436, 0.0
  %561 = vadd.xlane.f32.xlu0 %v560
  %v562 = vpop.xlane.xlu0 %561
  %v563 = vsel %vm78, %v437, 0.0
  %564 = vadd.xlane.f32.xlu0 %v563
  %v565 = vpop.xlane.xlu0 %564
  %v566 = vsel %vm78, %v438, 0.0
  %567 = vadd.xlane.f32.xlu0 %v566
  %v568 = vpop.xlane.xlu0 %567
  %v569 = vsel %vm78, %v439, 0.0
  %570 = vadd.xlane.f32.xlu0 %v569
  %v571 = vpop.xlane.xlu0 %570
  %v572 = vsel %vm78, %v440, 0.0
  %573 = vadd.xlane.f32.xlu0 %v572
  %v574 = vpop.xlane.xlu0 %573
  %v575 = vsel %vm78, %v441, 0.0
  %576 = vadd.xlane.f32.xlu0 %v575
  %v577 = vpop.xlane.xlu0 %576
  %v578 = vsel %vm78, %v442, 0.0
  %579 = vadd.xlane.f32.xlu0 %v578
  %v580 = vpop.xlane.xlu0 %579
  %v581 = vsel %vm78, %v443, 0.0
  %582 = vadd.xlane.f32.xlu0 %v581
  %v583 = vpop.xlane.xlu0 %582
  %v584 = vsel %vm78, %v444, 0.0
  %585 = vadd.xlane.f32.xlu0 %v584
  %v586 = vpop.xlane.xlu0 %585
  %v587 = vsel %vm78, %v445, 0.0
  %588 = vadd.xlane.f32.xlu0 %v587
  %v589 = vpop.xlane.xlu0 %588
  %v590 = vsel %vm78, %v446, 0.0
  %591 = vadd.xlane.f32.xlu0 %v590
  %v592 = vpop.xlane.xlu0 %591
  %v593 = vsel %vm78, %v447, 0.0
  %594 = vadd.xlane.f32.xlu0 %v593
  %v595 = vpop.xlane.xlu0 %594
  %v596 = vsel %vm78, %v448, 0.0
  %597 = vadd.xlane.f32.xlu0 %v596
  %v598 = vpop.xlane.xlu0 %597
  %v599 = vsel %vm78, %v449, 0.0
  %600 = vadd.xlane.f32.xlu0 %v599
  %v601 = vpop.xlane.xlu0 %600
  %v602 = vsel %vm78, %v450, 0.0
  %603 = vadd.xlane.f32.xlu0 %v602
  %v604 = vpop.xlane.xlu0 %603
  %v605 = vsel %vm78, %v451, 0.0
  %606 = vadd.xlane.f32.xlu0 %v605
  %v607 = vpop.xlane.xlu0 %606
  %v608 = vsel %vm78, %v452, 0.0
  %609 = vadd.xlane.f32.xlu0 %v608
  %v610 = vpop.xlane.xlu0 %609
  %v611 = vsel %vm78, %v453, 0.0
  %612 = vadd.xlane.f32.xlu0 %v611
  %v613 = vpop.xlane.xlu0 %612
  %v614 = vsel %vm78, %v454, 0.0
  %615 = vadd.xlane.f32.xlu0 %v614
  %v616 = vpop.xlane.xlu0 %615
  %v617 = vsel %vm78, %v455, 0.0
  %618 = vadd.xlane.f32.xlu0 %v617
  %v619 = vpop.xlane.xlu0 %618
  %v620 = vsel %vm78, %v456, 0.0
  %621 = vadd.xlane.f32.xlu0 %v620
  %v622 = vpop.xlane.xlu0 %621
  %v623 = vsel %vm78, %v457, 0.0
  %624 = vadd.xlane.f32.xlu0 %v623
  %v625 = vpop.xlane.xlu0 %624
  %v626 = vsel %vm78, %v458, 0.0
  %627 = vadd.xlane.f32.xlu0 %v626
  %v628 = vpop.xlane.xlu0 %627
  %v629 = vsel %vm78, %v459, 0.0
  %630 = vadd.xlane.f32.xlu0 %v629
  %v631 = vpop.xlane.xlu0 %630
  %v632 = vsel %vm78, %v460, 0.0
  %633 = vadd.xlane.f32.xlu0 %v632
  %v634 = vpop.xlane.xlu0 %633
  %v635 = vsel %vm78, %v461, 0.0
  %636 = vadd.xlane.f32.xlu0 %v635
  %v637 = vpop.xlane.xlu0 %636
  %v638 = vsel %vm78, %v462, 0.0
  %639 = vadd.xlane.f32.xlu0 %v638
  %v640 = vpop.xlane.xlu0 %639
  %v641 = vsel %vm78, %v463, 0.0
  %642 = vadd.xlane.f32.xlu0 %v641
  %v643 = vpop.xlane.xlu0 %642
  %v644 = vsel %vm78, %v464, 0.0
  %645 = vadd.xlane.f32.xlu0 %v644
  %v646 = vpop.xlane.xlu0 %645
  %v647 = vsel %vm78, %v465, 0.0
  %648 = vadd.xlane.f32.xlu0 %v647
  %v649 = vpop.xlane.xlu0 %648
  %v650 = vsel %vm78, %v466, 0.0
  %651 = vadd.xlane.f32.xlu0 %v650
  %v652 = vpop.xlane.xlu0 %651
  %v653 = vsel %vm78, %v467, 0.0
  %654 = vadd.xlane.f32.xlu0 %v653
  %v655 = vpop.xlane.xlu0 %654
  %v656 = vsel %vm78, %v468, 0.0
  %657 = vadd.xlane.f32.xlu0 %v656
  %v658 = vpop.xlane.xlu0 %657
  %v659 = vsel %vm78, %v469, 0.0
  %660 = vadd.xlane.f32.xlu0 %v659
  %v661 = vpop.xlane.xlu0 %660
  %v662 = vmul.f32 %v472, %v277
  %v663 = vmul.f32 %v475, %v277
  %v664 = vmul.f32 %v478, %v277
  %v665 = vmul.f32 %v481, %v277
  %v666 = vmul.f32 %v484, %v277
  %v667 = vmul.f32 %v487, %v277
  %v668 = vmul.f32 %v490, %v277
  %v669 = vmul.f32 %v493, %v277
  %v670 = vmul.f32 %v496, %v277
  %v671 = vmul.f32 %v499, %v277
  %v672 = vmul.f32 %v502, %v277
  %v673 = vmul.f32 %v505, %v277
  %v674 = vmul.f32 %v508, %v277
  %v675 = vmul.f32 %v511, %v277
  %v676 = vmul.f32 %v514, %v277
  %v677 = vmul.f32 %v517, %v277
  %v678 = vmul.f32 %v520, %v277
  %v679 = vmul.f32 %v523, %v277
  %v680 = vmul.f32 %v526, %v277
  %v681 = vmul.f32 %v529, %v277
  %v682 = vmul.f32 %v532, %v277
  %v683 = vmul.f32 %v535, %v277
  %v684 = vmul.f32 %v538, %v277
  %v685 = vmul.f32 %v541, %v277
  %v686 = vmul.f32 %v544, %v277
  %v687 = vmul.f32 %v547, %v277
  %v688 = vmul.f32 %v550, %v277
  %v689 = vmul.f32 %v553, %v277
  %v690 = vmul.f32 %v556, %v277
  %v691 = vmul.f32 %v559, %v277
  %v692 = vmul.f32 %v562, %v277
  %v693 = vmul.f32 %v565, %v277
  %v694 = vmul.f32 %v568, %v277
  %v695 = vmul.f32 %v571, %v277
  %v696 = vmul.f32 %v574, %v277
  %v697 = vmul.f32 %v577, %v277
  %v698 = vmul.f32 %v580, %v277
  %v699 = vmul.f32 %v583, %v277
  %v700 = vmul.f32 %v586, %v277
  %v701 = vmul.f32 %v589, %v277
  %v702 = vmul.f32 %v592, %v277
  %v703 = vmul.f32 %v595, %v277
  %v704 = vmul.f32 %v598, %v277
  %v705 = vmul.f32 %v601, %v277
  %v706 = vmul.f32 %v604, %v277
  %v707 = vmul.f32 %v607, %v277
  %v708 = vmul.f32 %v610, %v277
  %v709 = vmul.f32 %v613, %v277
  %v710 = vmul.f32 %v616, %v277
  %v711 = vmul.f32 %v619, %v277
  %v712 = vmul.f32 %v622, %v277
  %v713 = vmul.f32 %v625, %v277
  %v714 = vmul.f32 %v628, %v277
  %v715 = vmul.f32 %v631, %v277
  %v716 = vmul.f32 %v634, %v277
  %v717 = vmul.f32 %v637, %v277
  %v718 = vmul.f32 %v640, %v277
  %v719 = vmul.f32 %v643, %v277
  %v720 = vmul.f32 %v646, %v277
  %v721 = vmul.f32 %v649, %v277
  %v722 = vmul.f32 %v652, %v277
  %v723 = vmul.f32 %v655, %v277
  %v724 = vmul.f32 %v658, %v277
  %v725 = vmul.f32 %v661, %v277
  %v726 = vadd.f32 %v662, 1e-05
  %v727 = vadd.f32 %v663, 1e-05
  %v728 = vadd.f32 %v664, 1e-05
  %v729 = vadd.f32 %v665, 1e-05
  %v730 = vadd.f32 %v666, 1e-05
  %v731 = vadd.f32 %v667, 1e-05
  %v732 = vadd.f32 %v668, 1e-05
  %v733 = vadd.f32 %v669, 1e-05
  %v734 = vadd.f32 %v670, 1e-05
  %v735 = vadd.f32 %v671, 1e-05
  %v736 = vadd.f32 %v672, 1e-05
  %v737 = vadd.f32 %v673, 1e-05
  %v738 = vadd.f32 %v674, 1e-05
  %v739 = vadd.f32 %v675, 1e-05
  %v740 = vadd.f32 %v676, 1e-05
  %v741 = vadd.f32 %v677, 1e-05
  %v742 = vadd.f32 %v678, 1e-05
  %v743 = vadd.f32 %v679, 1e-05
  %v744 = vadd.f32 %v680, 1e-05
  %v745 = vadd.f32 %v681, 1e-05
  %v746 = vadd.f32 %v682, 1e-05
  %v747 = vadd.f32 %v683, 1e-05
  %v748 = vadd.f32 %v684, 1e-05
  %v749 = vadd.f32 %v685, 1e-05
  %v750 = vadd.f32 %v686, 1e-05
  %v751 = vadd.f32 %v687, 1e-05
  %v752 = vadd.f32 %v688, 1e-05
  %v753 = vadd.f32 %v689, 1e-05
  %v754 = vadd.f32 %v690, 1e-05
  %v755 = vadd.f32 %v691, 1e-05
  %v756 = vadd.f32 %v692, 1e-05
  %v757 = vadd.f32 %v693, 1e-05
  %v758 = vadd.f32 %v694, 1e-05
  %v759 = vadd.f32 %v695, 1e-05
  %v760 = vadd.f32 %v696, 1e-05
  %v761 = vadd.f32 %v697, 1e-05
  %v762 = vadd.f32 %v698, 1e-05
  %v763 = vadd.f32 %v699, 1e-05
  %v764 = vadd.f32 %v700, 1e-05
  %v765 = vadd.f32 %v701, 1e-05
  %v766 = vadd.f32 %v702, 1e-05
  %v767 = vadd.f32 %v703, 1e-05
  %v768 = vadd.f32 %v704, 1e-05
  %v769 = vadd.f32 %v705, 1e-05
  %v770 = vadd.f32 %v706, 1e-05
  %v771 = vadd.f32 %v707, 1e-05
  %v772 = vadd.f32 %v708, 1e-05
  %v773 = vadd.f32 %v709, 1e-05
  %v774 = vadd.f32 %v710, 1e-05
  %v775 = vadd.f32 %v711, 1e-05
  %v776 = vadd.f32 %v712, 1e-05
  %v777 = vadd.f32 %v713, 1e-05
  %v778 = vadd.f32 %v714, 1e-05
  %v779 = vadd.f32 %v715, 1e-05
  %v780 = vadd.f32 %v716, 1e-05
  %v781 = vadd.f32 %v717, 1e-05
  %v782 = vadd.f32 %v718, 1e-05
  %v783 = vadd.f32 %v719, 1e-05
  %v784 = vadd.f32 %v720, 1e-05
  %v785 = vadd.f32 %v721, 1e-05
  %v786 = vadd.f32 %v722, 1e-05
  %v787 = vadd.f32 %v723, 1e-05
  %v788 = vadd.f32 %v724, 1e-05
  %v789 = vadd.f32 %v725, 1e-05
  %v790 = vrsqrt.pop %v726
  %v791 = vmul.f32 %v790, %v726
  %v792 = vmul.f32 %v791, %v790
  %v793 = vmul.f32 0.5, %v792
  %v794 = vsub.f32 1.5, %v793
  %v795 = vmul.f32 %v790, %v794
  %vm796 = vweird.f32 %v726
  %vm797 = vweird.f32 %v790
  %vm798 = vmor %vm796, %vm797
  %v799 = vsel %vm798, %v790, %v795
  %v800 = vrsqrt.pop %v727
  %v801 = vmul.f32 %v800, %v727
  %v802 = vmul.f32 %v801, %v800
  %v803 = vmul.f32 0.5, %v802
  %v804 = vsub.f32 1.5, %v803
  %v805 = vmul.f32 %v800, %v804
  %vm806 = vweird.f32 %v727
  %vm807 = vweird.f32 %v800
  %vm808 = vmor %vm806, %vm807
  %v809 = vsel %vm808, %v800, %v805
  %v810 = vrsqrt.pop %v728
  %v811 = vmul.f32 %v810, %v728
  %v812 = vmul.f32 %v811, %v810
  %v813 = vmul.f32 0.5, %v812
  %v814 = vsub.f32 1.5, %v813
  %v815 = vmul.f32 %v810, %v814
  %vm816 = vweird.f32 %v728
  %vm817 = vweird.f32 %v810
  %vm818 = vmor %vm816, %vm817
  %v819 = vsel %vm818, %v810, %v815
  %v820 = vrsqrt.pop %v729
  %v821 = vmul.f32 %v820, %v729
  %v822 = vmul.f32 %v821, %v820
  %v823 = vmul.f32 0.5, %v822
  %v824 = vsub.f32 1.5, %v823
  %v825 = vmul.f32 %v820, %v824
  %vm826 = vweird.f32 %v729
  %vm827 = vweird.f32 %v820
  %vm828 = vmor %vm826, %vm827
  %v829 = vsel %vm828, %v820, %v825
  %v830 = vrsqrt.pop %v730
  %v831 = vmul.f32 %v830, %v730
  %v832 = vmul.f32 %v831, %v830
  %v833 = vmul.f32 0.5, %v832
  %v834 = vsub.f32 1.5, %v833
  %v835 = vmul.f32 %v830, %v834
  %vm836 = vweird.f32 %v730
  %vm837 = vweird.f32 %v830
  %vm838 = vmor %vm836, %vm837
  %v839 = vsel %vm838, %v830, %v835
  %v840 = vrsqrt.pop %v731
  %v841 = vmul.f32 %v840, %v731
  %v842 = vmul.f32 %v841, %v840
  %v843 = vmul.f32 0.5, %v842
  %v844 = vsub.f32 1.5, %v843
  %v845 = vmul.f32 %v840, %v844
  %vm846 = vweird.f32 %v731
  %vm847 = vweird.f32 %v840
  %vm848 = vmor %vm846, %vm847
  %v849 = vsel %vm848, %v840, %v845
  %v850 = vrsqrt.pop %v732
  %v851 = vmul.f32 %v850, %v732
  %v852 = vmul.f32 %v851, %v850
  %v853 = vmul.f32 0.5, %v852
  %v854 = vsub.f32 1.5, %v853
  %v855 = vmul.f32 %v850, %v854
  %vm856 = vweird.f32 %v732
  %vm857 = vweird.f32 %v850
  %vm858 = vmor %vm856, %vm857
  %v859 = vsel %vm858, %v850, %v855
  %v860 = vrsqrt.pop %v733
  %v861 = vmul.f32 %v860, %v733
  %v862 = vmul.f32 %v861, %v860
  %v863 = vmul.f32 0.5, %v862
  %v864 = vsub.f32 1.5, %v863
  %v865 = vmul.f32 %v860, %v864
  %vm866 = vweird.f32 %v733
  %vm867 = vweird.f32 %v860
  %vm868 = vmor %vm866, %vm867
  %v869 = vsel %vm868, %v860, %v865
  %v870 = vrsqrt.pop %v734
  %v871 = vmul.f32 %v870, %v734
  %v872 = vmul.f32 %v871, %v870
  %v873 = vmul.f32 0.5, %v872
  %v874 = vsub.f32 1.5, %v873
  %v875 = vmul.f32 %v870, %v874
  %vm876 = vweird.f32 %v734
  %vm877 = vweird.f32 %v870
  %vm878 = vmor %vm876, %vm877
  %v879 = vsel %vm878, %v870, %v875
  %v880 = vrsqrt.pop %v735
  %v881 = vmul.f32 %v880, %v735
  %v882 = vmul.f32 %v881, %v880
  %v883 = vmul.f32 0.5, %v882
  %v884 = vsub.f32 1.5, %v883
  %v885 = vmul.f32 %v880, %v884
  %vm886 = vweird.f32 %v735
  %vm887 = vweird.f32 %v880
  %vm888 = vmor %vm886, %vm887
  %v889 = vsel %vm888, %v880, %v885
  %v890 = vrsqrt.pop %v736
  %v891 = vmul.f32 %v890, %v736
  %v892 = vmul.f32 %v891, %v890
  %v893 = vmul.f32 0.5, %v892
  %v894 = vsub.f32 1.5, %v893
  %v895 = vmul.f32 %v890, %v894
  %vm896 = vweird.f32 %v736
  %vm897 = vweird.f32 %v890
  %vm898 = vmor %vm896, %vm897
  %v899 = vsel %vm898, %v890, %v895
  %v900 = vrsqrt.pop %v737
  %v901 = vmul.f32 %v900, %v737
  %v902 = vmul.f32 %v901, %v900
  %v903 = vmul.f32 0.5, %v902
  %v904 = vsub.f32 1.5, %v903
  %v905 = vmul.f32 %v900, %v904
  %vm906 = vweird.f32 %v737
  %vm907 = vweird.f32 %v900
  %vm908 = vmor %vm906, %vm907
  %v909 = vsel %vm908, %v900, %v905
  %v910 = vrsqrt.pop %v738
  %v911 = vmul.f32 %v910, %v738
  %v912 = vmul.f32 %v911, %v910
  %v913 = vmul.f32 0.5, %v912
  %v914 = vsub.f32 1.5, %v913
  %v915 = vmul.f32 %v910, %v914
  %vm916 = vweird.f32 %v738
  %vm917 = vweird.f32 %v910
  %vm918 = vmor %vm916, %vm917
  %v919 = vsel %vm918, %v910, %v915
  %v920 = vrsqrt.pop %v739
  %v921 = vmul.f32 %v920, %v739
  %v922 = vmul.f32 %v921, %v920
  %v923 = vmul.f32 0.5, %v922
  %v924 = vsub.f32 1.5, %v923
  %v925 = vmul.f32 %v920, %v924
  %vm926 = vweird.f32 %v739
  %vm927 = vweird.f32 %v920
  %vm928 = vmor %vm926, %vm927
  %v929 = vsel %vm928, %v920, %v925
  %v930 = vrsqrt.pop %v740
  %v931 = vmul.f32 %v930, %v740
  %v932 = vmul.f32 %v931, %v930
  %v933 = vmul.f32 0.5, %v932
  %v934 = vsub.f32 1.5, %v933
  %v935 = vmul.f32 %v930, %v934
  %vm936 = vweird.f32 %v740
  %vm937 = vweird.f32 %v930
  %vm938 = vmor %vm936, %vm937
  %v939 = vsel %vm938, %v930, %v935
  %v940 = vrsqrt.pop %v741
  %v941 = vmul.f32 %v940, %v741
  %v942 = vmul.f32 %v941, %v940
  %v943 = vmul.f32 0.5, %v942
  %v944 = vsub.f32 1.5, %v943
  %v945 = vmul.f32 %v940, %v944
  %vm946 = vweird.f32 %v741
  %vm947 = vweird.f32 %v940
  %vm948 = vmor %vm946, %vm947
  %v949 = vsel %vm948, %v940, %v945
  %v950 = vrsqrt.pop %v742
  %v951 = vmul.f32 %v950, %v742
  %v952 = vmul.f32 %v951, %v950
  %v953 = vmul.f32 0.5, %v952
  %v954 = vsub.f32 1.5, %v953
  %v955 = vmul.f32 %v950, %v954
  %vm956 = vweird.f32 %v742
  %vm957 = vweird.f32 %v950
  %vm958 = vmor %vm956, %vm957
  %v959 = vsel %vm958, %v950, %v955
  %v960 = vrsqrt.pop %v743
  %v961 = vmul.f32 %v960, %v743
  %v962 = vmul.f32 %v961, %v960
  %v963 = vmul.f32 0.5, %v962
  %v964 = vsub.f32 1.5, %v963
  %v965 = vmul.f32 %v960, %v964
  %vm966 = vweird.f32 %v743
  %vm967 = vweird.f32 %v960
  %vm968 = vmor %vm966, %vm967
  %v969 = vsel %vm968, %v960, %v965
  %v970 = vrsqrt.pop %v744
  %v971 = vmul.f32 %v970, %v744
  %v972 = vmul.f32 %v971, %v970
  %v973 = vmul.f32 0.5, %v972
  %v974 = vsub.f32 1.5, %v973
  %v975 = vmul.f32 %v970, %v974
  %vm976 = vweird.f32 %v744
  %vm977 = vweird.f32 %v970
  %vm978 = vmor %vm976, %vm977
  %v979 = vsel %vm978, %v970, %v975
  %v980 = vrsqrt.pop %v745
  %v981 = vmul.f32 %v980, %v745
  %v982 = vmul.f32 %v981, %v980
  %v983 = vmul.f32 0.5, %v982
  %v984 = vsub.f32 1.5, %v983
  %v985 = vmul.f32 %v980, %v984
  %vm986 = vweird.f32 %v745
  %vm987 = vweird.f32 %v980
  %vm988 = vmor %vm986, %vm987
  %v989 = vsel %vm988, %v980, %v985
  %v990 = vrsqrt.pop %v746
  %v991 = vmul.f32 %v990, %v746
  %v992 = vmul.f32 %v991, %v990
  %v993 = vmul.f32 0.5, %v992
  %v994 = vsub.f32 1.5, %v993
  %v995 = vmul.f32 %v990, %v994
  %vm996 = vweird.f32 %v746
  %vm997 = vweird.f32 %v990
  %vm998 = vmor %vm996, %vm997
  %v999 = vsel %vm998, %v990, %v995
  %v1000 = vrsqrt.pop %v747
  %v1001 = vmul.f32 %v1000, %v747
  %v1002 = vmul.f32 %v1001, %v1000
  %v1003 = vmul.f32 0.5, %v1002
  %v1004 = vsub.f32 1.5, %v1003
  %v1005 = vmul.f32 %v1000, %v1004
  %vm1006 = vweird.f32 %v747
  %vm1007 = vweird.f32 %v1000
  %vm1008 = vmor %vm1006, %vm1007
  %v1009 = vsel %vm1008, %v1000, %v1005
  %v1010 = vrsqrt.pop %v748
  %v1011 = vmul.f32 %v1010, %v748
  %v1012 = vmul.f32 %v1011, %v1010
  %v1013 = vmul.f32 0.5, %v1012
  %v1014 = vsub.f32 1.5, %v1013
  %v1015 = vmul.f32 %v1010, %v1014
  %vm1016 = vweird.f32 %v748
  %vm1017 = vweird.f32 %v1010
  %vm1018 = vmor %vm1016, %vm1017
  %v1019 = vsel %vm1018, %v1010, %v1015
  %v1020 = vrsqrt.pop %v749
  %v1021 = vmul.f32 %v1020, %v749
  %v1022 = vmul.f32 %v1021, %v1020
  %v1023 = vmul.f32 0.5, %v1022
  %v1024 = vsub.f32 1.5, %v1023
  %v1025 = vmul.f32 %v1020, %v1024
  %vm1026 = vweird.f32 %v749
  %vm1027 = vweird.f32 %v1020
  %vm1028 = vmor %vm1026, %vm1027
  %v1029 = vsel %vm1028, %v1020, %v1025
  %v1030 = vrsqrt.pop %v750
  %v1031 = vmul.f32 %v1030, %v750
  %v1032 = vmul.f32 %v1031, %v1030
  %v1033 = vmul.f32 0.5, %v1032
  %v1034 = vsub.f32 1.5, %v1033
  %v1035 = vmul.f32 %v1030, %v1034
  %vm1036 = vweird.f32 %v750
  %vm1037 = vweird.f32 %v1030
  %vm1038 = vmor %vm1036, %vm1037
  %v1039 = vsel %vm1038, %v1030, %v1035
  %v1040 = vrsqrt.pop %v751
  %v1041 = vmul.f32 %v1040, %v751
  %v1042 = vmul.f32 %v1041, %v1040
  %v1043 = vmul.f32 0.5, %v1042
  %v1044 = vsub.f32 1.5, %v1043
  %v1045 = vmul.f32 %v1040, %v1044
  %vm1046 = vweird.f32 %v751
  %vm1047 = vweird.f32 %v1040
  %vm1048 = vmor %vm1046, %vm1047
  %v1049 = vsel %vm1048, %v1040, %v1045
  %v1050 = vrsqrt.pop %v752
  %v1051 = vmul.f32 %v1050, %v752
  %v1052 = vmul.f32 %v1051, %v1050
  %v1053 = vmul.f32 0.5, %v1052
  %v1054 = vsub.f32 1.5, %v1053
  %v1055 = vmul.f32 %v1050, %v1054
  %vm1056 = vweird.f32 %v752
  %vm1057 = vweird.f32 %v1050
  %vm1058 = vmor %vm1056, %vm1057
  %v1059 = vsel %vm1058, %v1050, %v1055
  %v1060 = vrsqrt.pop %v753
  %v1061 = vmul.f32 %v1060, %v753
  %v1062 = vmul.f32 %v1061, %v1060
  %v1063 = vmul.f32 0.5, %v1062
  %v1064 = vsub.f32 1.5, %v1063
  %v1065 = vmul.f32 %v1060, %v1064
  %vm1066 = vweird.f32 %v753
  %vm1067 = vweird.f32 %v1060
  %vm1068 = vmor %vm1066, %vm1067
  %v1069 = vsel %vm1068, %v1060, %v1065
  %v1070 = vrsqrt.pop %v754
  %v1071 = vmul.f32 %v1070, %v754
  %v1072 = vmul.f32 %v1071, %v1070
  %v1073 = vmul.f32 0.5, %v1072
  %v1074 = vsub.f32 1.5, %v1073
  %v1075 = vmul.f32 %v1070, %v1074
  %vm1076 = vweird.f32 %v754
  %vm1077 = vweird.f32 %v1070
  %vm1078 = vmor %vm1076, %vm1077
  %v1079 = vsel %vm1078, %v1070, %v1075
  %v1080 = vrsqrt.pop %v755
  %v1081 = vmul.f32 %v1080, %v755
  %v1082 = vmul.f32 %v1081, %v1080
  %v1083 = vmul.f32 0.5, %v1082
  %v1084 = vsub.f32 1.5, %v1083
  %v1085 = vmul.f32 %v1080, %v1084
  %vm1086 = vweird.f32 %v755
  %vm1087 = vweird.f32 %v1080
  %vm1088 = vmor %vm1086, %vm1087
  %v1089 = vsel %vm1088, %v1080, %v1085
  %v1090 = vrsqrt.pop %v756
  %v1091 = vmul.f32 %v1090, %v756
  %v1092 = vmul.f32 %v1091, %v1090
  %v1093 = vmul.f32 0.5, %v1092
  %v1094 = vsub.f32 1.5, %v1093
  %v1095 = vmul.f32 %v1090, %v1094
  %vm1096 = vweird.f32 %v756
  %vm1097 = vweird.f32 %v1090
  %vm1098 = vmor %vm1096, %vm1097
  %v1099 = vsel %vm1098, %v1090, %v1095
  %v1100 = vrsqrt.pop %v757
  %v1101 = vmul.f32 %v1100, %v757
  %v1102 = vmul.f32 %v1101, %v1100
  %v1103 = vmul.f32 0.5, %v1102
  %v1104 = vsub.f32 1.5, %v1103
  %v1105 = vmul.f32 %v1100, %v1104
  %vm1106 = vweird.f32 %v757
  %vm1107 = vweird.f32 %v1100
  %vm1108 = vmor %vm1106, %vm1107
  %v1109 = vsel %vm1108, %v1100, %v1105
  %v1110 = vrsqrt.pop %v758
  %v1111 = vmul.f32 %v1110, %v758
  %v1112 = vmul.f32 %v1111, %v1110
  %v1113 = vmul.f32 0.5, %v1112
  %v1114 = vsub.f32 1.5, %v1113
  %v1115 = vmul.f32 %v1110, %v1114
  %vm1116 = vweird.f32 %v758
  %vm1117 = vweird.f32 %v1110
  %vm1118 = vmor %vm1116, %vm1117
  %v1119 = vsel %vm1118, %v1110, %v1115
  %v1120 = vrsqrt.pop %v759
  %v1121 = vmul.f32 %v1120, %v759
  %v1122 = vmul.f32 %v1121, %v1120
  %v1123 = vmul.f32 0.5, %v1122
  %v1124 = vsub.f32 1.5, %v1123
  %v1125 = vmul.f32 %v1120, %v1124
  %vm1126 = vweird.f32 %v759
  %vm1127 = vweird.f32 %v1120
  %vm1128 = vmor %vm1126, %vm1127
  %v1129 = vsel %vm1128, %v1120, %v1125
  %v1130 = vrsqrt.pop %v760
  %v1131 = vmul.f32 %v1130, %v760
  %v1132 = vmul.f32 %v1131, %v1130
  %v1133 = vmul.f32 0.5, %v1132
  %v1134 = vsub.f32 1.5, %v1133
  %v1135 = vmul.f32 %v1130, %v1134
  %vm1136 = vweird.f32 %v760
  %vm1137 = vweird.f32 %v1130
  %vm1138 = vmor %vm1136, %vm1137
  %v1139 = vsel %vm1138, %v1130, %v1135
  %v1140 = vrsqrt.pop %v761
  %v1141 = vmul.f32 %v1140, %v761
  %v1142 = vmul.f32 %v1141, %v1140
  %v1143 = vmul.f32 0.5, %v1142
  %v1144 = vsub.f32 1.5, %v1143
  %v1145 = vmul.f32 %v1140, %v1144
  %vm1146 = vweird.f32 %v761
  %vm1147 = vweird.f32 %v1140
  %vm1148 = vmor %vm1146, %vm1147
  %v1149 = vsel %vm1148, %v1140, %v1145
  %v1150 = vrsqrt.pop %v762
  %v1151 = vmul.f32 %v1150, %v762
  %v1152 = vmul.f32 %v1151, %v1150
  %v1153 = vmul.f32 0.5, %v1152
  %v1154 = vsub.f32 1.5, %v1153
  %v1155 = vmul.f32 %v1150, %v1154
  %vm1156 = vweird.f32 %v762
  %vm1157 = vweird.f32 %v1150
  %vm1158 = vmor %vm1156, %vm1157
  %v1159 = vsel %vm1158, %v1150, %v1155
  %v1160 = vrsqrt.pop %v763
  %v1161 = vmul.f32 %v1160, %v763
  %v1162 = vmul.f32 %v1161, %v1160
  %v1163 = vmul.f32 0.5, %v1162
  %v1164 = vsub.f32 1.5, %v1163
  %v1165 = vmul.f32 %v1160, %v1164
  %vm1166 = vweird.f32 %v763
  %vm1167 = vweird.f32 %v1160
  %vm1168 = vmor %vm1166, %vm1167
  %v1169 = vsel %vm1168, %v1160, %v1165
  %v1170 = vrsqrt.pop %v764
  %v1171 = vmul.f32 %v1170, %v764
  %v1172 = vmul.f32 %v1171, %v1170
  %v1173 = vmul.f32 0.5, %v1172
  %v1174 = vsub.f32 1.5, %v1173
  %v1175 = vmul.f32 %v1170, %v1174
  %vm1176 = vweird.f32 %v764
  %vm1177 = vweird.f32 %v1170
  %vm1178 = vmor %vm1176, %vm1177
  %v1179 = vsel %vm1178, %v1170, %v1175
  %v1180 = vrsqrt.pop %v765
  %v1181 = vmul.f32 %v1180, %v765
  %v1182 = vmul.f32 %v1181, %v1180
  %v1183 = vmul.f32 0.5, %v1182
  %v1184 = vsub.f32 1.5, %v1183
  %v1185 = vmul.f32 %v1180, %v1184
  %vm1186 = vweird.f32 %v765
  %vm1187 = vweird.f32 %v1180
  %vm1188 = vmor %vm1186, %vm1187
  %v1189 = vsel %vm1188, %v1180, %v1185
  %v1190 = vrsqrt.pop %v766
  %v1191 = vmul.f32 %v1190, %v766
  %v1192 = vmul.f32 %v1191, %v1190
  %v1193 = vmul.f32 0.5, %v1192
  %v1194 = vsub.f32 1.5, %v1193
  %v1195 = vmul.f32 %v1190, %v1194
  %vm1196 = vweird.f32 %v766
  %vm1197 = vweird.f32 %v1190
  %vm1198 = vmor %vm1196, %vm1197
  %v1199 = vsel %vm1198, %v1190, %v1195
  %v1200 = vrsqrt.pop %v767
  %v1201 = vmul.f32 %v1200, %v767
  %v1202 = vmul.f32 %v1201, %v1200
  %v1203 = vmul.f32 0.5, %v1202
  %v1204 = vsub.f32 1.5, %v1203
  %v1205 = vmul.f32 %v1200, %v1204
  %vm1206 = vweird.f32 %v767
  %vm1207 = vweird.f32 %v1200
  %vm1208 = vmor %vm1206, %vm1207
  %v1209 = vsel %vm1208, %v1200, %v1205
  %v1210 = vrsqrt.pop %v768
  %v1211 = vmul.f32 %v1210, %v768
  %v1212 = vmul.f32 %v1211, %v1210
  %v1213 = vmul.f32 0.5, %v1212
  %v1214 = vsub.f32 1.5, %v1213
  %v1215 = vmul.f32 %v1210, %v1214
  %vm1216 = vweird.f32 %v768
  %vm1217 = vweird.f32 %v1210
  %vm1218 = vmor %vm1216, %vm1217
  %v1219 = vsel %vm1218, %v1210, %v1215
  %v1220 = vrsqrt.pop %v769
  %v1221 = vmul.f32 %v1220, %v769
  %v1222 = vmul.f32 %v1221, %v1220
  %v1223 = vmul.f32 0.5, %v1222
  %v1224 = vsub.f32 1.5, %v1223
  %v1225 = vmul.f32 %v1220, %v1224
  %vm1226 = vweird.f32 %v769
  %vm1227 = vweird.f32 %v1220
  %vm1228 = vmor %vm1226, %vm1227
  %v1229 = vsel %vm1228, %v1220, %v1225
  %v1230 = vrsqrt.pop %v770
  %v1231 = vmul.f32 %v1230, %v770
  %v1232 = vmul.f32 %v1231, %v1230
  %v1233 = vmul.f32 0.5, %v1232
  %v1234 = vsub.f32 1.5, %v1233
  %v1235 = vmul.f32 %v1230, %v1234
  %vm1236 = vweird.f32 %v770
  %vm1237 = vweird.f32 %v1230
  %vm1238 = vmor %vm1236, %vm1237
  %v1239 = vsel %vm1238, %v1230, %v1235
  %v1240 = vrsqrt.pop %v771
  %v1241 = vmul.f32 %v1240, %v771
  %v1242 = vmul.f32 %v1241, %v1240
  %v1243 = vmul.f32 0.5, %v1242
  %v1244 = vsub.f32 1.5, %v1243
  %v1245 = vmul.f32 %v1240, %v1244
  %vm1246 = vweird.f32 %v771
  %vm1247 = vweird.f32 %v1240
  %vm1248 = vmor %vm1246, %vm1247
  %v1249 = vsel %vm1248, %v1240, %v1245
  %v1250 = vrsqrt.pop %v772
  %v1251 = vmul.f32 %v1250, %v772
  %v1252 = vmul.f32 %v1251, %v1250
  %v1253 = vmul.f32 0.5, %v1252
  %v1254 = vsub.f32 1.5, %v1253
  %v1255 = vmul.f32 %v1250, %v1254
  %vm1256 = vweird.f32 %v772
  %vm1257 = vweird.f32 %v1250
  %vm1258 = vmor %vm1256, %vm1257
  %v1259 = vsel %vm1258, %v1250, %v1255
  %v1260 = vrsqrt.pop %v773
  %v1261 = vmul.f32 %v1260, %v773
  %v1262 = vmul.f32 %v1261, %v1260
  %v1263 = vmul.f32 0.5, %v1262
  %v1264 = vsub.f32 1.5, %v1263
  %v1265 = vmul.f32 %v1260, %v1264
  %vm1266 = vweird.f32 %v773
  %vm1267 = vweird.f32 %v1260
  %vm1268 = vmor %vm1266, %vm1267
  %v1269 = vsel %vm1268, %v1260, %v1265
  %v1270 = vrsqrt.pop %v774
  %v1271 = vmul.f32 %v1270, %v774
  %v1272 = vmul.f32 %v1271, %v1270
  %v1273 = vmul.f32 0.5, %v1272
  %v1274 = vsub.f32 1.5, %v1273
  %v1275 = vmul.f32 %v1270, %v1274
  %vm1276 = vweird.f32 %v774
  %vm1277 = vweird.f32 %v1270
  %vm1278 = vmor %vm1276, %vm1277
  %v1279 = vsel %vm1278, %v1270, %v1275
  %v1280 = vrsqrt.pop %v775
  %v1281 = vmul.f32 %v1280, %v775
  %v1282 = vmul.f32 %v1281, %v1280
  %v1283 = vmul.f32 0.5, %v1282
  %v1284 = vsub.f32 1.5, %v1283
  %v1285 = vmul.f32 %v1280, %v1284
  %vm1286 = vweird.f32 %v775
  %vm1287 = vweird.f32 %v1280
  %vm1288 = vmor %vm1286, %vm1287
  %v1289 = vsel %vm1288, %v1280, %v1285
  %v1290 = vrsqrt.pop %v776
  %v1291 = vmul.f32 %v1290, %v776
  %v1292 = vmul.f32 %v1291, %v1290
  %v1293 = vmul.f32 0.5, %v1292
  %v1294 = vsub.f32 1.5, %v1293
  %v1295 = vmul.f32 %v1290, %v1294
  %vm1296 = vweird.f32 %v776
  %vm1297 = vweird.f32 %v1290
  %vm1298 = vmor %vm1296, %vm1297
  %v1299 = vsel %vm1298, %v1290, %v1295
  %v1300 = vrsqrt.pop %v777
  %v1301 = vmul.f32 %v1300, %v777
  %v1302 = vmul.f32 %v1301, %v1300
  %v1303 = vmul.f32 0.5, %v1302
  %v1304 = vsub.f32 1.5, %v1303
  %v1305 = vmul.f32 %v1300, %v1304
  %vm1306 = vweird.f32 %v777
  %vm1307 = vweird.f32 %v1300
  %vm1308 = vmor %vm1306, %vm1307
  %v1309 = vsel %vm1308, %v1300, %v1305
  %v1310 = vrsqrt.pop %v778
  %v1311 = vmul.f32 %v1310, %v778
  %v1312 = vmul.f32 %v1311, %v1310
  %v1313 = vmul.f32 0.5, %v1312
  %v1314 = vsub.f32 1.5, %v1313
  %v1315 = vmul.f32 %v1310, %v1314
  %vm1316 = vweird.f32 %v778
  %vm1317 = vweird.f32 %v1310
  %vm1318 = vmor %vm1316, %vm1317
  %v1319 = vsel %vm1318, %v1310, %v1315
  %v1320 = vrsqrt.pop %v779
  %v1321 = vmul.f32 %v1320, %v779
  %v1322 = vmul.f32 %v1321, %v1320
  %v1323 = vmul.f32 0.5, %v1322
  %v1324 = vsub.f32 1.5, %v1323
  %v1325 = vmul.f32 %v1320, %v1324
  %vm1326 = vweird.f32 %v779
  %vm1327 = vweird.f32 %v1320
  %vm1328 = vmor %vm1326, %vm1327
  %v1329 = vsel %vm1328, %v1320, %v1325
  %v1330 = vrsqrt.pop %v780
  %v1331 = vmul.f32 %v1330, %v780
  %v1332 = vmul.f32 %v1331, %v1330
  %v1333 = vmul.f32 0.5, %v1332
  %v1334 = vsub.f32 1.5, %v1333
  %v1335 = vmul.f32 %v1330, %v1334
  %vm1336 = vweird.f32 %v780
  %vm1337 = vweird.f32 %v1330
  %vm1338 = vmor %vm1336, %vm1337
  %v1339 = vsel %vm1338, %v1330, %v1335
  %v1340 = vrsqrt.pop %v781
  %v1341 = vmul.f32 %v1340, %v781
  %v1342 = vmul.f32 %v1341, %v1340
  %v1343 = vmul.f32 0.5, %v1342
  %v1344 = vsub.f32 1.5, %v1343
  %v1345 = vmul.f32 %v1340, %v1344
  %vm1346 = vweird.f32 %v781
  %vm1347 = vweird.f32 %v1340
  %vm1348 = vmor %vm1346, %vm1347
  %v1349 = vsel %vm1348, %v1340, %v1345
  %v1350 = vrsqrt.pop %v782
  %v1351 = vmul.f32 %v1350, %v782
  %v1352 = vmul.f32 %v1351, %v1350
  %v1353 = vmul.f32 0.5, %v1352
  %v1354 = vsub.f32 1.5, %v1353
  %v1355 = vmul.f32 %v1350, %v1354
  %vm1356 = vweird.f32 %v782
  %vm1357 = vweird.f32 %v1350
  %vm1358 = vmor %vm1356, %vm1357
  %v1359 = vsel %vm1358, %v1350, %v1355
  %v1360 = vrsqrt.pop %v783
  %v1361 = vmul.f32 %v1360, %v783
  %v1362 = vmul.f32 %v1361, %v1360
  %v1363 = vmul.f32 0.5, %v1362
  %v1364 = vsub.f32 1.5, %v1363
  %v1365 = vmul.f32 %v1360, %v1364
  %vm1366 = vweird.f32 %v783
  %vm1367 = vweird.f32 %v1360
  %vm1368 = vmor %vm1366, %vm1367
  %v1369 = vsel %vm1368, %v1360, %v1365
  %v1370 = vrsqrt.pop %v784
  %v1371 = vmul.f32 %v1370, %v784
  %v1372 = vmul.f32 %v1371, %v1370
  %v1373 = vmul.f32 0.5, %v1372
  %v1374 = vsub.f32 1.5, %v1373
  %v1375 = vmul.f32 %v1370, %v1374
  %vm1376 = vweird.f32 %v784
  %vm1377 = vweird.f32 %v1370
  %vm1378 = vmor %vm1376, %vm1377
  %v1379 = vsel %vm1378, %v1370, %v1375
  %v1380 = vrsqrt.pop %v785
  %v1381 = vmul.f32 %v1380, %v785
  %v1382 = vmul.f32 %v1381, %v1380
  %v1383 = vmul.f32 0.5, %v1382
  %v1384 = vsub.f32 1.5, %v1383
  %v1385 = vmul.f32 %v1380, %v1384
  %vm1386 = vweird.f32 %v785
  %vm1387 = vweird.f32 %v1380
  %vm1388 = vmor %vm1386, %vm1387
  %v1389 = vsel %vm1388, %v1380, %v1385
  %v1390 = vrsqrt.pop %v786
  %v1391 = vmul.f32 %v1390, %v786
  %v1392 = vmul.f32 %v1391, %v1390
  %v1393 = vmul.f32 0.5, %v1392
  %v1394 = vsub.f32 1.5, %v1393
  %v1395 = vmul.f32 %v1390, %v1394
  %vm1396 = vweird.f32 %v786
  %vm1397 = vweird.f32 %v1390
  %vm1398 = vmor %vm1396, %vm1397
  %v1399 = vsel %vm1398, %v1390, %v1395
  %v1400 = vrsqrt.pop %v787
  %v1401 = vmul.f32 %v1400, %v787
  %v1402 = vmul.f32 %v1401, %v1400
  %v1403 = vmul.f32 0.5, %v1402
  %v1404 = vsub.f32 1.5, %v1403
  %v1405 = vmul.f32 %v1400, %v1404
  %vm1406 = vweird.f32 %v787
  %vm1407 = vweird.f32 %v1400
  %vm1408 = vmor %vm1406, %vm1407
  %v1409 = vsel %vm1408, %v1400, %v1405
  %v1410 = vrsqrt.pop %v788
  %v1411 = vmul.f32 %v1410, %v788
  %v1412 = vmul.f32 %v1411, %v1410
  %v1413 = vmul.f32 0.5, %v1412
  %v1414 = vsub.f32 1.5, %v1413
  %v1415 = vmul.f32 %v1410, %v1414
  %vm1416 = vweird.f32 %v788
  %vm1417 = vweird.f32 %v1410
  %vm1418 = vmor %vm1416, %vm1417
  %v1419 = vsel %vm1418, %v1410, %v1415
  %v1420 = vrsqrt.pop %v789
  %v1421 = vmul.f32 %v1420, %v789
  %v1422 = vmul.f32 %v1421, %v1420
  %v1423 = vmul.f32 0.5, %v1422
  %v1424 = vsub.f32 1.5, %v1423
  %v1425 = vmul.f32 %v1420, %v1424
  %vm1426 = vweird.f32 %v789
  %vm1427 = vweird.f32 %v1420
  %vm1428 = vmor %vm1426, %vm1427
  %v1429 = vsel %vm1428, %v1420, %v1425
  %v1430 = vmul.f32 %v342, %v799
  %v1431 = vmul.f32 %v343, %v809
  %v1432 = vmul.f32 %v344, %v819
  %v1433 = vmul.f32 %v345, %v829
  %v1434 = vmul.f32 %v346, %v839
  %v1435 = vmul.f32 %v347, %v849
  %v1436 = vmul.f32 %v348, %v859
  %v1437 = vmul.f32 %v349, %v869
  %v1438 = vmul.f32 %v350, %v879
  %v1439 = vmul.f32 %v351, %v889
  %v1440 = vmul.f32 %v352, %v899
  %v1441 = vmul.f32 %v353, %v909
  %v1442 = vmul.f32 %v354, %v919
  %v1443 = vmul.f32 %v355, %v929
  %v1444 = vmul.f32 %v356, %v939
  %v1445 = vmul.f32 %v357, %v949
  %v1446 = vmul.f32 %v358, %v959
  %v1447 = vmul.f32 %v359, %v969
  %v1448 = vmul.f32 %v360, %v979
  %v1449 = vmul.f32 %v361, %v989
  %v1450 = vmul.f32 %v362, %v999
  %v1451 = vmul.f32 %v363, %v1009
  %v1452 = vmul.f32 %v364, %v1019
  %v1453 = vmul.f32 %v365, %v1029
  %v1454 = vmul.f32 %v366, %v1039
  %v1455 = vmul.f32 %v367, %v1049
  %v1456 = vmul.f32 %v368, %v1059
  %v1457 = vmul.f32 %v369, %v1069
  %v1458 = vmul.f32 %v370, %v1079
  %v1459 = vmul.f32 %v371, %v1089
  %v1460 = vmul.f32 %v372, %v1099
  %v1461 = vmul.f32 %v373, %v1109
  %v1462 = vmul.f32 %v374, %v1119
  %v1463 = vmul.f32 %v375, %v1129
  %v1464 = vmul.f32 %v376, %v1139
  %v1465 = vmul.f32 %v377, %v1149
  %v1466 = vmul.f32 %v378, %v1159
  %v1467 = vmul.f32 %v379, %v1169
  %v1468 = vmul.f32 %v380, %v1179
  %v1469 = vmul.f32 %v381, %v1189
  %v1470 = vmul.f32 %v382, %v1199
  %v1471 = vmul.f32 %v383, %v1209
  %v1472 = vmul.f32 %v384, %v1219
  %v1473 = vmul.f32 %v385, %v1229
  %v1474 = vmul.f32 %v386, %v1239
  %v1475 = vmul.f32 %v387, %v1249
  %v1476 = vmul.f32 %v388, %v1259
  %v1477 = vmul.f32 %v389, %v1269
  %v1478 = vmul.f32 %v390, %v1279
  %v1479 = vmul.f32 %v391, %v1289
  %v1480 = vmul.f32 %v392, %v1299
  %v1481 = vmul.f32 %v393, %v1309
  %v1482 = vmul.f32 %v394, %v1319
  %v1483 = vmul.f32 %v395, %v1329
  %v1484 = vmul.f32 %v396, %v1339
  %v1485 = vmul.f32 %v397, %v1349
  %v1486 = vmul.f32 %v398, %v1359
  %v1487 = vmul.f32 %v399, %v1369
  %v1488 = vmul.f32 %v400, %v1379
  %v1489 = vmul.f32 %v401, %v1389
  %v1490 = vmul.f32 %v402, %v1399
  %v1491 = vmul.f32 %v403, %v1409
  %v1492 = vmul.f32 %v404, %v1419
  %v1493 = vmul.f32 %v405, %v1429
  %v1494 = vld [vmem:[%s1] sm:$0x1]
  %v1496 = vperm.slane %v1494, 0
  %v1498 = vmul.f32 %v1430, %v1496
  %v1499 = vmul.f32 %v1431, %v1496
  %v1500 = vmul.f32 %v1432, %v1496
  %v1501 = vmul.f32 %v1433, %v1496
  %v1502 = vmul.f32 %v1434, %v1496
  %v1503 = vmul.f32 %v1435, %v1496
  %v1504 = vmul.f32 %v1436, %v1496
  %v1505 = vmul.f32 %v1437, %v1496
  %v1506 = vmul.f32 %v1438, %v1496
  %v1507 = vmul.f32 %v1439, %v1496
  %v1508 = vmul.f32 %v1440, %v1496
  %v1509 = vmul.f32 %v1441, %v1496
  %v1510 = vmul.f32 %v1442, %v1496
  %v1511 = vmul.f32 %v1443, %v1496
  %v1512 = vmul.f32 %v1444, %v1496
  %v1513 = vmul.f32 %v1445, %v1496
  %v1514 = vmul.f32 %v1446, %v1496
  %v1515 = vmul.f32 %v1447, %v1496
  %v1516 = vmul.f32 %v1448, %v1496
  %v1517 = vmul.f32 %v1449, %v1496
  %v1518 = vmul.f32 %v1450, %v1496
  %v1519 = vmul.f32 %v1451, %v1496
  %v1520 = vmul.f32 %v1452, %v1496
  %v1521 = vmul.f32 %v1453, %v1496
  %v1522 = vmul.f32 %v1454, %v1496
  %v1523 = vmul.f32 %v1455, %v1496
  %v1524 = vmul.f32 %v1456, %v1496
  %v1525 = vmul.f32 %v1457, %v1496
  %v1526 = vmul.f32 %v1458, %v1496
  %v1527 = vmul.f32 %v1459, %v1496
  %v1528 = vmul.f32 %v1460, %v1496
  %v1529 = vmul.f32 %v1461, %v1496
  %v1530 = vmul.f32 %v1462, %v1496
  %v1531 = vmul.f32 %v1463, %v1496
  %v1532 = vmul.f32 %v1464, %v1496
  %v1533 = vmul.f32 %v1465, %v1496
  %v1534 = vmul.f32 %v1466, %v1496
  %v1535 = vmul.f32 %v1467, %v1496
  %v1536 = vmul.f32 %v1468, %v1496
  %v1537 = vmul.f32 %v1469, %v1496
  %v1538 = vmul.f32 %v1470, %v1496
  %v1539 = vmul.f32 %v1471, %v1496
  %v1540 = vmul.f32 %v1472, %v1496
  %v1541 = vmul.f32 %v1473, %v1496
  %v1542 = vmul.f32 %v1474, %v1496
  %v1543 = vmul.f32 %v1475, %v1496
  %v1544 = vmul.f32 %v1476, %v1496
  %v1545 = vmul.f32 %v1477, %v1496
  %v1546 = vmul.f32 %v1478, %v1496
  %v1547 = vmul.f32 %v1479, %v1496
  %v1548 = vmul.f32 %v1480, %v1496
  %v1549 = vmul.f32 %v1481, %v1496
  %v1550 = vmul.f32 %v1482, %v1496
  %v1551 = vmul.f32 %v1483, %v1496
  %v1552 = vmul.f32 %v1484, %v1496
  %v1553 = vmul.f32 %v1485, %v1496
  %v1554 = vmul.f32 %v1486, %v1496
  %v1555 = vmul.f32 %v1487, %v1496
  %v1556 = vmul.f32 %v1488, %v1496
  %v1557 = vmul.f32 %v1489, %v1496
  %v1558 = vmul.f32 %v1490, %v1496
  %v1559 = vmul.f32 %v1491, %v1496
  %v1560 = vmul.f32 %v1492, %v1496
  %v1561 = vmul.f32 %v1493, %v1496
  %v1562 = vld [vmem:[%s2] sm:$0x1]
  %v1564 = vperm.slane %v1562, 0
  %v1566 = vadd.f32 %v1498, %v1564
  %v1567 = vadd.f32 %v1499, %v1564
  %v1568 = vadd.f32 %v1500, %v1564
  %v1569 = vadd.f32 %v1501, %v1564
  %v1570 = vadd.f32 %v1502, %v1564
  %v1571 = vadd.f32 %v1503, %v1564
  %v1572 = vadd.f32 %v1504, %v1564
  %v1573 = vadd.f32 %v1505, %v1564
  %v1574 = vadd.f32 %v1506, %v1564
  %v1575 = vadd.f32 %v1507, %v1564
  %v1576 = vadd.f32 %v1508, %v1564
  %v1577 = vadd.f32 %v1509, %v1564
  %v1578 = vadd.f32 %v1510, %v1564
  %v1579 = vadd.f32 %v1511, %v1564
  %v1580 = vadd.f32 %v1512, %v1564
  %v1581 = vadd.f32 %v1513, %v1564
  %v1582 = vadd.f32 %v1514, %v1564
  %v1583 = vadd.f32 %v1515, %v1564
  %v1584 = vadd.f32 %v1516, %v1564
  %v1585 = vadd.f32 %v1517, %v1564
  %v1586 = vadd.f32 %v1518, %v1564
  %v1587 = vadd.f32 %v1519, %v1564
  %v1588 = vadd.f32 %v1520, %v1564
  %v1589 = vadd.f32 %v1521, %v1564
  %v1590 = vadd.f32 %v1522, %v1564
  %v1591 = vadd.f32 %v1523, %v1564
  %v1592 = vadd.f32 %v1524, %v1564
  %v1593 = vadd.f32 %v1525, %v1564
  %v1594 = vadd.f32 %v1526, %v1564
  %v1595 = vadd.f32 %v1527, %v1564
  %v1596 = vadd.f32 %v1528, %v1564
  %v1597 = vadd.f32 %v1529, %v1564
  %v1598 = vadd.f32 %v1530, %v1564
  %v1599 = vadd.f32 %v1531, %v1564
  %v1600 = vadd.f32 %v1532, %v1564
  %v1601 = vadd.f32 %v1533, %v1564
  %v1602 = vadd.f32 %v1534, %v1564
  %v1603 = vadd.f32 %v1535, %v1564
  %v1604 = vadd.f32 %v1536, %v1564
  %v1605 = vadd.f32 %v1537, %v1564
  %v1606 = vadd.f32 %v1538, %v1564
  %v1607 = vadd.f32 %v1539, %v1564
  %v1608 = vadd.f32 %v1540, %v1564
  %v1609 = vadd.f32 %v1541, %v1564
  %v1610 = vadd.f32 %v1542, %v1564
  %v1611 = vadd.f32 %v1543, %v1564
  %v1612 = vadd.f32 %v1544, %v1564
  %v1613 = vadd.f32 %v1545, %v1564
  %v1614 = vadd.f32 %v1546, %v1564
  %v1615 = vadd.f32 %v1547, %v1564
  %v1616 = vadd.f32 %v1548, %v1564
  %v1617 = vadd.f32 %v1549, %v1564
  %v1618 = vadd.f32 %v1550, %v1564
  %v1619 = vadd.f32 %v1551, %v1564
  %v1620 = vadd.f32 %v1552, %v1564
  %v1621 = vadd.f32 %v1553, %v1564
  %v1622 = vadd.f32 %v1554, %v1564
  %v1623 = vadd.f32 %v1555, %v1564
  %v1624 = vadd.f32 %v1556, %v1564
  %v1625 = vadd.f32 %v1557, %v1564
  %v1626 = vadd.f32 %v1558, %v1564
  %v1627 = vadd.f32 %v1559, %v1564
  %v1628 = vadd.f32 %v1560, %v1564
  %v1629 = vadd.f32 %v1561, %v1564
  %v1630 = vmax.f32 %v1566, 0.0
  %v1631 = vmax.f32 %v1567, 0.0
  %v1632 = vmax.f32 %v1568, 0.0
  %v1633 = vmax.f32 %v1569, 0.0
  %v1634 = vmax.f32 %v1570, 0.0
  %v1635 = vmax.f32 %v1571, 0.0
  %v1636 = vmax.f32 %v1572, 0.0
  %v1637 = vmax.f32 %v1573, 0.0
  %v1638 = vmax.f32 %v1574, 0.0
  %v1639 = vmax.f32 %v1575, 0.0
  %v1640 = vmax.f32 %v1576, 0.0
  %v1641 = vmax.f32 %v1577, 0.0
  %v1642 = vmax.f32 %v1578, 0.0
  %v1643 = vmax.f32 %v1579, 0.0
  %v1644 = vmax.f32 %v1580, 0.0
  %v1645 = vmax.f32 %v1581, 0.0
  %v1646 = vmax.f32 %v1582, 0.0
  %v1647 = vmax.f32 %v1583, 0.0
  %v1648 = vmax.f32 %v1584, 0.0
  %v1649 = vmax.f32 %v1585, 0.0
  %v1650 = vmax.f32 %v1586, 0.0
  %v1651 = vmax.f32 %v1587, 0.0
  %v1652 = vmax.f32 %v1588, 0.0
  %v1653 = vmax.f32 %v1589, 0.0
  %v1654 = vmax.f32 %v1590, 0.0
  %v1655 = vmax.f32 %v1591, 0.0
  %v1656 = vmax.f32 %v1592, 0.0
  %v1657 = vmax.f32 %v1593, 0.0
  %v1658 = vmax.f32 %v1594, 0.0
  %v1659 = vmax.f32 %v1595, 0.0
  %v1660 = vmax.f32 %v1596, 0.0
  %v1661 = vmax.f32 %v1597, 0.0
  %v1662 = vmax.f32 %v1598, 0.0
  %v1663 = vmax.f32 %v1599, 0.0
  %v1664 = vmax.f32 %v1600, 0.0
  %v1665 = vmax.f32 %v1601, 0.0
  %v1666 = vmax.f32 %v1602, 0.0
  %v1667 = vmax.f32 %v1603, 0.0
  %v1668 = vmax.f32 %v1604, 0.0
  %v1669 = vmax.f32 %v1605, 0.0
  %v1670 = vmax.f32 %v1606, 0.0
  %v1671 = vmax.f32 %v1607, 0.0
  %v1672 = vmax.f32 %v1608, 0.0
  %v1673 = vmax.f32 %v1609, 0.0
  %v1674 = vmax.f32 %v1610, 0.0
  %v1675 = vmax.f32 %v1611, 0.0
  %v1676 = vmax.f32 %v1612, 0.0
  %v1677 = vmax.f32 %v1613, 0.0
  %v1678 = vmax.f32 %v1614, 0.0
  %v1679 = vmax.f32 %v1615, 0.0
  %v1680 = vmax.f32 %v1616, 0.0
  %v1681 = vmax.f32 %v1617, 0.0
  %v1682 = vmax.f32 %v1618, 0.0
  %v1683 = vmax.f32 %v1619, 0.0
  %v1684 = vmax.f32 %v1620, 0.0
  %v1685 = vmax.f32 %v1621, 0.0
  %v1686 = vmax.f32 %v1622, 0.0
  %v1687 = vmax.f32 %v1623, 0.0
  %v1688 = vmax.f32 %v1624, 0.0
  %v1689 = vmax.f32 %v1625, 0.0
  %v1690 = vmax.f32 %v1626, 0.0
  %v1691 = vmax.f32 %v1627, 0.0
  %v1692 = vmax.f32 %v1628, 0.0
  %v1693 = vmax.f32 %v1629, 0.0
  %1694 = vst.msk [vmem:[%s3] sm:$0xff] %vm78, %v1630
  %1695 = vst.msk [vmem:[%s3 + $0x8] sm:$0xff] %vm78, %v1631
  %1696 = vst.msk [vmem:[%s3 + $0x10] sm:$0xff] %vm78, %v1632
  %1697 = vst.msk [vmem:[%s3 + $0x18] sm:$0xff] %vm78, %v1633
  %1698 = vst.msk [vmem:[%s3 + $0x20] sm:$0xff] %vm78, %v1634
  %1699 = vst.msk [vmem:[%s3 + $0x28] sm:$0xff] %vm78, %v1635
  %1700 = vst.msk [vmem:[%s3 + $0x30] sm:$0xff] %vm78, %v1636
  %1701 = vst.msk [vmem:[%s3 + $0x38] sm:$0xff] %vm78, %v1637
  %1702 = vst.msk [vmem:[%s3 + $0x40] sm:$0xff] %vm78, %v1638
  %1703 = vst.msk [vmem:[%s3 + $0x48] sm:$0xff] %vm78, %v1639
  %1704 = vst.msk [vmem:[%s3 + $0x50] sm:$0xff] %vm78, %v1640
  %1705 = vst.msk [vmem:[%s3 + $0x58] sm:$0xff] %vm78, %v1641
  %1706 = vst.msk [vmem:[%s3 + $0x60] sm:$0xff] %vm78, %v1642
  %1707 = vst.msk [vmem:[%s3 + $0x68] sm:$0xff] %vm78, %v1643
  %1708 = vst.msk [vmem:[%s3 + $0x70] sm:$0xff] %vm78, %v1644
  %1709 = vst.msk [vmem:[%s3 + $0x78] sm:$0xff] %vm78, %v1645
  %1710 = vst.msk [vmem:[%s3 + $0x80] sm:$0xff] %vm78, %v1646
  %1711 = vst.msk [vmem:[%s3 + $0x88] sm:$0xff] %vm78, %v1647
  %1712 = vst.msk [vmem:[%s3 + $0x90] sm:$0xff] %vm78, %v1648
  %1713 = vst.msk [vmem:[%s3 + $0x98] sm:$0xff] %vm78, %v1649
  %1714 = vst.msk [vmem:[%s3 + $0xa0] sm:$0xff] %vm78, %v1650
  %1715 = vst.msk [vmem:[%s3 + $0xa8] sm:$0xff] %vm78, %v1651
  %1716 = vst.msk [vmem:[%s3 + $0xb0] sm:$0xff] %vm78, %v1652
  %1717 = vst.msk [vmem:[%s3 + $0xb8] sm:$0xff] %vm78, %v1653
  %1718 = vst.msk [vmem:[%s3 + $0xc0] sm:$0xff] %vm78, %v1654
  %1719 = vst.msk [vmem:[%s3 + $0xc8] sm:$0xff] %vm78, %v1655
  %1720 = vst.msk [vmem:[%s3 + $0xd0] sm:$0xff] %vm78, %v1656
  %1721 = vst.msk [vmem:[%s3 + $0xd8] sm:$0xff] %vm78, %v1657
  %1722 = vst.msk [vmem:[%s3 + $0xe0] sm:$0xff] %vm78, %v1658
  %1723 = vst.msk [vmem:[%s3 + $0xe8] sm:$0xff] %vm78, %v1659
  %1724 = vst.msk [vmem:[%s3 + $0xf0] sm:$0xff] %vm78, %v1660
  %1725 = vst.msk [vmem:[%s3 + $0xf8] sm:$0xff] %vm78, %v1661
  %1726 = vst.msk [vmem:[%s3 + $0x100] sm:$0xff] %vm78, %v1662
  %1727 = vst.msk [vmem:[%s3 + $0x108] sm:$0xff] %vm78, %v1663
  %1728 = vst.msk [vmem:[%s3 + $0x110] sm:$0xff] %vm78, %v1664
  %1729 = vst.msk [vmem:[%s3 + $0x118] sm:$0xff] %vm78, %v1665
  %1730 = vst.msk [vmem:[%s3 + $0x120] sm:$0xff] %vm78, %v1666
  %1731 = vst.msk [vmem:[%s3 + $0x128] sm:$0xff] %vm78, %v1667
  %1732 = vst.msk [vmem:[%s3 + $0x130] sm:$0xff] %vm78, %v1668
  %1733 = vst.msk [vmem:[%s3 + $0x138] sm:$0xff] %vm78, %v1669
  %1734 = vst.msk [vmem:[%s3 + $0x140] sm:$0xff] %vm78, %v1670
  %1735 = vst.msk [vmem:[%s3 + $0x148] sm:$0xff] %vm78, %v1671
  %1736 = vst.msk [vmem:[%s3 + $0x150] sm:$0xff] %vm78, %v1672
  %1737 = vst.msk [vmem:[%s3 + $0x158] sm:$0xff] %vm78, %v1673
  %1738 = vst.msk [vmem:[%s3 + $0x160] sm:$0xff] %vm78, %v1674
  %1739 = vst.msk [vmem:[%s3 + $0x168] sm:$0xff] %vm78, %v1675
  %1740 = vst.msk [vmem:[%s3 + $0x170] sm:$0xff] %vm78, %v1676
  %1741 = vst.msk [vmem:[%s3 + $0x178] sm:$0xff] %vm78, %v1677
  %1742 = vst.msk [vmem:[%s3 + $0x180] sm:$0xff] %vm78, %v1678
  %1743 = vst.msk [vmem:[%s3 + $0x188] sm:$0xff] %vm78, %v1679
  %1744 = vst.msk [vmem:[%s3 + $0x190] sm:$0xff] %vm78, %v1680
  %1745 = vst.msk [vmem:[%s3 + $0x198] sm:$0xff] %vm78, %v1681
  %1746 = vst.msk [vmem:[%s3 + $0x1a0] sm:$0xff] %vm78, %v1682
  %1747 = vst.msk [vmem:[%s3 + $0x1a8] sm:$0xff] %vm78, %v1683
  %1748 = vst.msk [vmem:[%s3 + $0x1b0] sm:$0xff] %vm78, %v1684
  %1749 = vst.msk [vmem:[%s3 + $0x1b8] sm:$0xff] %vm78, %v1685
  %1750 = vst.msk [vmem:[%s3 + $0x1c0] sm:$0xff] %vm78, %v1686
  %1751 = vst.msk [vmem:[%s3 + $0x1c8] sm:$0xff] %vm78, %v1687
  %1752 = vst.msk [vmem:[%s3 + $0x1d0] sm:$0xff] %vm78, %v1688
  %1753 = vst.msk [vmem:[%s3 + $0x1d8] sm:$0xff] %vm78, %v1689
  %1754 = vst.msk [vmem:[%s3 + $0x1e0] sm:$0xff] %vm78, %v1690
  %1755 = vst.msk [vmem:[%s3 + $0x1e8] sm:$0xff] %vm78, %v1691
  %1756 = vst.msk [vmem:[%s3 + $0x1f0] sm:$0xff] %vm78, %v1692
  %1757 = vst.msk [vmem:[%s3 + $0x1f8] sm:$0xff] %vm78, %v1693
  // Predicated region
  $region14: #{stt_forward.15} parent=0 // pred_check
    _
  $region15: #{stt_forward.15} parent=0 // pred_check_branch
    %1759 = sbr.rel (0) target = $region17
  $region16: #{stt_forward.15} parent=0 // pred_region
    _
  $region17: #{stt_forward.15} parent=0 // pred_fallthru
    _
  // Predicated region
  $region18: #{stt_forward.15} parent=0 // pred_check
    _
  $region19: #{stt_forward.15} parent=0 // pred_check_branch
    %1761 = sbr.rel (0) target = $region21
  $region20: #{stt_forward.15} parent=0 // pred_region
    _
  $region21: #{stt_forward.15} parent=0 // pred_fallthru
    _

// kernel: stt_forward.17
$region0: #{stt_forward.17}
  #allocation0 [shape = 'u32[]', space=smem, size = 0x4, offset = 0x4, fixed_abs, tag = 'smem constant byte address 0x4 - core index']
  #allocation1 [shape = 'u32[72,128]{1,0:T(1,128)}', space=vmem, size = 0x9000, scoped, tag = 'internal scratch']
  %s0 = inlined_call_operand.vmem [shape: f32[512,8], index: 0, kind: input, shape index: {}]
  %s1 = inlined_call_operand.vmem [shape: f32[512,8], index: 1, kind: input, shape index: {}]
  %s2 = inlined_call_operand.vmem [shape: f32[1,8], index: 2, kind: input, shape index: {}]
  %s3 = inlined_call_operand.vmem [shape: f32[1,8], index: 3, kind: input, shape index: {}]
  %s4 = inlined_call_operand.vmem [shape: f32[512,8], index: 4, kind: output, shape index: {}]
  %s5 = sld [smem:[#allocation0]]
  $region26: #{stt_forward.17} parent=0
    _
  %s7 = ssub.s32 1, %s5
  %s8 = scalar_select 0, %s7, %s5
  // Predicated region
  $region2: #{stt_forward.17} parent=0 // pred_check
    _
  $region3: #{stt_forward.17} parent=0 // pred_check_branch
    %10 = sbr.rel (0) target = $region5
  $region4: #{stt_forward.17} parent=0 // pred_region
    _
  $region5: #{stt_forward.17} parent=0 // pred_fallthru
    _
  // Predicated region
  $region6: #{stt_forward.17} parent=0 // pred_check
    _
  $region7: #{stt_forward.17} parent=0 // pred_check_branch
    %12 = sbr.rel (0) target = $region9
  $region8: #{stt_forward.17} parent=0 // pred_region
    _
  $region9: #{stt_forward.17} parent=0 // pred_fallthru
    _
  // Predicated region
  $region10: #{stt_forward.17} parent=0 // pred_check
    _
  $region11: #{stt_forward.17} parent=0 // pred_check_branch
    %14 = sbr.rel (0) target = $region13
  $region12: #{stt_forward.17} parent=0 // pred_region
    _
  $region13: #{stt_forward.17} parent=0 // pred_fallthru
    _
  // Predicated region
  $region14: #{stt_forward.17} parent=0 // pred_check
    _
  $region15: #{stt_forward.17} parent=0 // pred_check_branch
    %16 = sbr.rel (0) target = $region17
  $region16: #{stt_forward.17} parent=0 // pred_region
    _
  $region17: #{stt_forward.17} parent=0 // pred_fallthru
    _
  %v17 = vld [vmem:[%s0] sm:$0xff]
  %v18 = vld [vmem:[%s0 + $0x8] sm:$0xff]
  %v19 = vld [vmem:[%s0 + $0x10] sm:$0xff]
  %v20 = vld [vmem:[%s0 + $0x18] sm:$0xff]
  %v21 = vld [vmem:[%s0 + $0x20] sm:$0xff]
  %v22 = vld [vmem:[%s0 + $0x28] sm:$0xff]
  %v23 = vld [vmem:[%s0 + $0x30] sm:$0xff]
  %v24 = vld [vmem:[%s0 + $0x38] sm:$0xff]
  %v25 = vld [vmem:[%s0 + $0x40] sm:$0xff]
  %v26 = vld [vmem:[%s0 + $0x48] sm:$0xff]
  %v27 = vld [vmem:[%s0 + $0x50] sm:$0xff]
  %v28 = vld [vmem:[%s0 + $0x58] sm:$0xff]
  %v29 = vld [vmem:[%s0 + $0x60] sm:$0xff]
  %v30 = vld [vmem:[%s0 + $0x68] sm:$0xff]
  %v31 = vld [vmem:[%s0 + $0x70] sm:$0xff]
  %v32 = vld [vmem:[%s0 + $0x78] sm:$0xff]
  %v33 = vld [vmem:[%s0 + $0x80] sm:$0xff]
  %v34 = vld [vmem:[%s0 + $0x88] sm:$0xff]
  %v35 = vld [vmem:[%s0 + $0x90] sm:$0xff]
  %v36 = vld [vmem:[%s0 + $0x98] sm:$0xff]
  %v37 = vld [vmem:[%s0 + $0xa0] sm:$0xff]
  %v38 = vld [vmem:[%s0 + $0xa8] sm:$0xff]
  %v39 = vld [vmem:[%s0 + $0xb0] sm:$0xff]
  %v40 = vld [vmem:[%s0 + $0xb8] sm:$0xff]
  %v41 = vld [vmem:[%s0 + $0xc0] sm:$0xff]
  %v42 = vld [vmem:[%s0 + $0xc8] sm:$0xff]
  %v43 = vld [vmem:[%s0 + $0xd0] sm:$0xff]
  %v44 = vld [vmem:[%s0 + $0xd8] sm:$0xff]
  %v45 = vld [vmem:[%s0 + $0xe0] sm:$0xff]
  %v46 = vld [vmem:[%s0 + $0xe8] sm:$0xff]
  %v47 = vld [vmem:[%s0 + $0xf0] sm:$0xff]
  %v48 = vld [vmem:[%s0 + $0xf8] sm:$0xff]
  %v49 = vld [vmem:[%s0 + $0x100] sm:$0xff]
  %v50 = vld [vmem:[%s0 + $0x108] sm:$0xff]
  %v51 = vld [vmem:[%s0 + $0x110] sm:$0xff]
  %v52 = vld [vmem:[%s0 + $0x118] sm:$0xff]
  %v53 = vld [vmem:[%s0 + $0x120] sm:$0xff]
  %v54 = vld [vmem:[%s0 + $0x128] sm:$0xff]
  %v55 = vld [vmem:[%s0 + $0x130] sm:$0xff]
  %v56 = vld [vmem:[%s0 + $0x138] sm:$0xff]
  %v57 = vld [vmem:[%s0 + $0x140] sm:$0xff]
  %v58 = vld [vmem:[%s0 + $0x148] sm:$0xff]
  %v59 = vld [vmem:[%s0 + $0x150] sm:$0xff]
  %v60 = vld [vmem:[%s0 + $0x158] sm:$0xff]
  %v61 = vld [vmem:[%s0 + $0x160] sm:$0xff]
  %v62 = vld [vmem:[%s0 + $0x168] sm:$0xff]
  %v63 = vld [vmem:[%s0 + $0x170] sm:$0xff]
  %v64 = vld [vmem:[%s0 + $0x178] sm:$0xff]
  %v65 = vld [vmem:[%s0 + $0x180] sm:$0xff]
  %v66 = vld [vmem:[%s0 + $0x188] sm:$0xff]
  %v67 = vld [vmem:[%s0 + $0x190] sm:$0xff]
  %v68 = vld [vmem:[%s0 + $0x198] sm:$0xff]
  %v69 = vld [vmem:[%s0 + $0x1a0] sm:$0xff]
  %v70 = vld [vmem:[%s0 + $0x1a8] sm:$0xff]
  %v71 = vld [vmem:[%s0 + $0x1b0] sm:$0xff]
  %v72 = vld [vmem:[%s0 + $0x1b8] sm:$0xff]
  %v73 = vld [vmem:[%s0 + $0x1c0] sm:$0xff]
  %v74 = vld [vmem:[%s0 + $0x1c8] sm:$0xff]
  %v75 = vld [vmem:[%s0 + $0x1d0] sm:$0xff]
  %v76 = vld [vmem:[%s0 + $0x1d8] sm:$0xff]
  %v77 = vld [vmem:[%s0 + $0x1e0] sm:$0xff]
  %v78 = vld [vmem:[%s0 + $0x1e8] sm:$0xff]
  %v79 = vld [vmem:[%s0 + $0x1f0] sm:$0xff]
  %v80 = vld [vmem:[%s0 + $0x1f8] sm:$0xff]
  %vm81 = vcmask 64512
  %v82 = vsel %vm81, %v17, 0.0
  %83 = vadd.xlane.f32.xlu0 %v82
  %v84 = vpop.xlane.xlu0 %83
  %v85 = vsel %vm81, %v18, 0.0
  %86 = vadd.xlane.f32.xlu0 %v85
  %v87 = vpop.xlane.xlu0 %86
  %v88 = vsel %vm81, %v19, 0.0
  %89 = vadd.xlane.f32.xlu0 %v88
  %v90 = vpop.xlane.xlu0 %89
  %v91 = vsel %vm81, %v20, 0.0
  %92 = vadd.xlane.f32.xlu0 %v91
  %v93 = vpop.xlane.xlu0 %92
  %v94 = vsel %vm81, %v21, 0.0
  %95 = vadd.xlane.f32.xlu0 %v94
  %v96 = vpop.xlane.xlu0 %95
  %v97 = vsel %vm81, %v22, 0.0
  %98 = vadd.xlane.f32.xlu0 %v97
  %v99 = vpop.xlane.xlu0 %98
  %v100 = vsel %vm81, %v23, 0.0
  %101 = vadd.xlane.f32.xlu0 %v100
  %v102 = vpop.xlane.xlu0 %101
  %v103 = vsel %vm81, %v24, 0.0
  %104 = vadd.xlane.f32.xlu0 %v103
  %v105 = vpop.xlane.xlu0 %104
  %v106 = vsel %vm81, %v25, 0.0
  %107 = vadd.xlane.f32.xlu0 %v106
  %v108 = vpop.xlane.xlu0 %107
  %v109 = vsel %vm81, %v26, 0.0
  %110 = vadd.xlane.f32.xlu0 %v109
  %v111 = vpop.xlane.xlu0 %110
  %v112 = vsel %vm81, %v27, 0.0
  %113 = vadd.xlane.f32.xlu0 %v112
  %v114 = vpop.xlane.xlu0 %113
  %v115 = vsel %vm81, %v28, 0.0
  %116 = vadd.xlane.f32.xlu0 %v115
  %v117 = vpop.xlane.xlu0 %116
  %v118 = vsel %vm81, %v29, 0.0
  %119 = vadd.xlane.f32.xlu0 %v118
  %v120 = vpop.xlane.xlu0 %119
  %v121 = vsel %vm81, %v30, 0.0
  %122 = vadd.xlane.f32.xlu0 %v121
  %v123 = vpop.xlane.xlu0 %122
  %v124 = vsel %vm81, %v31, 0.0
  %125 = vadd.xlane.f32.xlu0 %v124
  %v126 = vpop.xlane.xlu0 %125
  %v127 = vsel %vm81, %v32, 0.0
  %128 = vadd.xlane.f32.xlu0 %v127
  %v129 = vpop.xlane.xlu0 %128
  %v130 = vsel %vm81, %v33, 0.0
  %131 = vadd.xlane.f32.xlu0 %v130
  %v132 = vpop.xlane.xlu0 %131
  %v133 = vsel %vm81, %v34, 0.0
  %134 = vadd.xlane.f32.xlu0 %v133
  %v135 = vpop.xlane.xlu0 %134
  %v136 = vsel %vm81, %v35, 0.0
  %137 = vadd.xlane.f32.xlu0 %v136
  %v138 = vpop.xlane.xlu0 %137
  %v139 = vsel %vm81, %v36, 0.0
  %140 = vadd.xlane.f32.xlu0 %v139
  %v141 = vpop.xlane.xlu0 %140
  %v142 = vsel %vm81, %v37, 0.0
  %143 = vadd.xlane.f32.xlu0 %v142
  %v144 = vpop.xlane.xlu0 %143
  %v145 = vsel %vm81, %v38, 0.0
  %146 = vadd.xlane.f32.xlu0 %v145
  %v147 = vpop.xlane.xlu0 %146
  %v148 = vsel %vm81, %v39, 0.0
  %149 = vadd.xlane.f32.xlu0 %v148
  %v150 = vpop.xlane.xlu0 %149
  %v151 = vsel %vm81, %v40, 0.0
  %152 = vadd.xlane.f32.xlu0 %v151
  %v153 = vpop.xlane.xlu0 %152
  %v154 = vsel %vm81, %v41, 0.0
  %155 = vadd.xlane.f32.xlu0 %v154
  %v156 = vpop.xlane.xlu0 %155
  %v157 = vsel %vm81, %v42, 0.0
  %158 = vadd.xlane.f32.xlu0 %v157
  %v159 = vpop.xlane.xlu0 %158
  %v160 = vsel %vm81, %v43, 0.0
  %161 = vadd.xlane.f32.xlu0 %v160
  %v162 = vpop.xlane.xlu0 %161
  %v163 = vsel %vm81, %v44, 0.0
  %164 = vadd.xlane.f32.xlu0 %v163
  %v165 = vpop.xlane.xlu0 %164
  %v166 = vsel %vm81, %v45, 0.0
  %167 = vadd.xlane.f32.xlu0 %v166
  %v168 = vpop.xlane.xlu0 %167
  %v169 = vsel %vm81, %v46, 0.0
  %170 = vadd.xlane.f32.xlu0 %v169
  %v171 = vpop.xlane.xlu0 %170
  %v172 = vsel %vm81, %v47, 0.0
  %173 = vadd.xlane.f32.xlu0 %v172
  %v174 = vpop.xlane.xlu0 %173
  %v175 = vsel %vm81, %v48, 0.0
  %176 = vadd.xlane.f32.xlu0 %v175
  %v177 = vpop.xlane.xlu0 %176
  %v178 = vsel %vm81, %v49, 0.0
  %179 = vadd.xlane.f32.xlu0 %v178
  %v180 = vpop.xlane.xlu0 %179
  %v181 = vsel %vm81, %v50, 0.0
  %182 = vadd.xlane.f32.xlu0 %v181
  %v183 = vpop.xlane.xlu0 %182
  %v184 = vsel %vm81, %v51, 0.0
  %185 = vadd.xlane.f32.xlu0 %v184
  %v186 = vpop.xlane.xlu0 %185
  %v187 = vsel %vm81, %v52, 0.0
  %188 = vadd.xlane.f32.xlu0 %v187
  %v189 = vpop.xlane.xlu0 %188
  %v190 = vsel %vm81, %v53, 0.0
  %191 = vadd.xlane.f32.xlu0 %v190
  %v192 = vpop.xlane.xlu0 %191
  %v193 = vsel %vm81, %v54, 0.0
  %194 = vadd.xlane.f32.xlu0 %v193
  %v195 = vpop.xlane.xlu0 %194
  %v196 = vsel %vm81, %v55, 0.0
  %197 = vadd.xlane.f32.xlu0 %v196
  %v198 = vpop.xlane.xlu0 %197
  %v199 = vsel %vm81, %v56, 0.0
  %200 = vadd.xlane.f32.xlu0 %v199
  %v201 = vpop.xlane.xlu0 %200
  %v202 = vsel %vm81, %v57, 0.0
  %203 = vadd.xlane.f32.xlu0 %v202
  %v204 = vpop.xlane.xlu0 %203
  %v205 = vsel %vm81, %v58, 0.0
  %206 = vadd.xlane.f32.xlu0 %v205
  %v207 = vpop.xlane.xlu0 %206
  %v208 = vsel %vm81, %v59, 0.0
  %209 = vadd.xlane.f32.xlu0 %v208
  %v210 = vpop.xlane.xlu0 %209
  %v211 = vsel %vm81, %v60, 0.0
  %212 = vadd.xlane.f32.xlu0 %v211
  %v213 = vpop.xlane.xlu0 %212
  %v214 = vsel %vm81, %v61, 0.0
  %215 = vadd.xlane.f32.xlu0 %v214
  %v216 = vpop.xlane.xlu0 %215
  %v217 = vsel %vm81, %v62, 0.0
  %218 = vadd.xlane.f32.xlu0 %v217
  %v219 = vpop.xlane.xlu0 %218
  %v220 = vsel %vm81, %v63, 0.0
  %221 = vadd.xlane.f32.xlu0 %v220
  %v222 = vpop.xlane.xlu0 %221
  %v223 = vsel %vm81, %v64, 0.0
  %224 = vadd.xlane.f32.xlu0 %v223
  %v225 = vpop.xlane.xlu0 %224
  %v226 = vsel %vm81, %v65, 0.0
  %227 = vadd.xlane.f32.xlu0 %v226
  %v228 = vpop.xlane.xlu0 %227
  %v229 = vsel %vm81, %v66, 0.0
  %230 = vadd.xlane.f32.xlu0 %v229
  %v231 = vpop.xlane.xlu0 %230
  %v232 = vsel %vm81, %v67, 0.0
  %233 = vadd.xlane.f32.xlu0 %v232
  %v234 = vpop.xlane.xlu0 %233
  %v235 = vsel %vm81, %v68, 0.0
  %236 = vadd.xlane.f32.xlu0 %v235
  %v237 = vpop.xlane.xlu0 %236
  %v238 = vsel %vm81, %v69, 0.0
  %239 = vadd.xlane.f32.xlu0 %v238
  %v240 = vpop.xlane.xlu0 %239
  %v241 = vsel %vm81, %v70, 0.0
  %242 = vadd.xlane.f32.xlu0 %v241
  %v243 = vpop.xlane.xlu0 %242
  %v244 = vsel %vm81, %v71, 0.0
  %245 = vadd.xlane.f32.xlu0 %v244
  %v246 = vpop.xlane.xlu0 %245
  %v247 = vsel %vm81, %v72, 0.0
  %248 = vadd.xlane.f32.xlu0 %v247
  %v249 = vpop.xlane.xlu0 %248
  %v250 = vsel %vm81, %v73, 0.0
  %251 = vadd.xlane.f32.xlu0 %v250
  %v252 = vpop.xlane.xlu0 %251
  %v253 = vsel %vm81, %v74, 0.0
  %254 = vadd.xlane.f32.xlu0 %v253
  %v255 = vpop.xlane.xlu0 %254
  %v256 = vsel %vm81, %v75, 0.0
  %257 = vadd.xlane.f32.xlu0 %v256
  %v258 = vpop.xlane.xlu0 %257
  %v259 = vsel %vm81, %v76, 0.0
  %260 = vadd.xlane.f32.xlu0 %v259
  %v261 = vpop.xlane.xlu0 %260
  %v262 = vsel %vm81, %v77, 0.0
  %263 = vadd.xlane.f32.xlu0 %v262
  %v264 = vpop.xlane.xlu0 %263
  %v265 = vsel %vm81, %v78, 0.0
  %266 = vadd.xlane.f32.xlu0 %v265
  %v267 = vpop.xlane.xlu0 %266
  %v268 = vsel %vm81, %v79, 0.0
  %269 = vadd.xlane.f32.xlu0 %v268
  %v270 = vpop.xlane.xlu0 %269
  %v271 = vsel %vm81, %v80, 0.0
  %272 = vadd.xlane.f32.xlu0 %v271
  %v273 = vpop.xlane.xlu0 %272
  %v274 = vrcp.pop 8.0
  %v275 = vmul.f32 8.0, %v274
  %v276 = vsub.f32 1.0, %v275
  %v277 = vmul.f32 %v274, %v276
  %v278 = vadd.f32 %v274, %v277
  %vm279 = vweird.f32 %v274
  %v280 = vsel %vm279, %v274, %v278
  %v281 = vmul.f32 %v84, %v280
  %v282 = vmul.f32 %v87, %v280
  %v283 = vmul.f32 %v90, %v280
  %v284 = vmul.f32 %v93, %v280
  %v285 = vmul.f32 %v96, %v280
  %v286 = vmul.f32 %v99, %v280
  %v287 = vmul.f32 %v102, %v280
  %v288 = vmul.f32 %v105, %v280
  %v289 = vmul.f32 %v108, %v280
  %v290 = vmul.f32 %v111, %v280
  %v291 = vmul.f32 %v114, %v280
  %v292 = vmul.f32 %v117, %v280
  %v293 = vmul.f32 %v120, %v280
  %v294 = vmul.f32 %v123, %v280
  %v295 = vmul.f32 %v126, %v280
  %v296 = vmul.f32 %v129, %v280
  %v297 = vmul.f32 %v132, %v280
  %v298 = vmul.f32 %v135, %v280
  %v299 = vmul.f32 %v138, %v280
  %v300 = vmul.f32 %v141, %v280
  %v301 = vmul.f32 %v144, %v280
  %v302 = vmul.f32 %v147, %v280
  %v303 = vmul.f32 %v150, %v280
  %v304 = vmul.f32 %v153, %v280
  %v305 = vmul.f32 %v156, %v280
  %v306 = vmul.f32 %v159, %v280
  %v307 = vmul.f32 %v162, %v280
  %v308 = vmul.f32 %v165, %v280
  %v309 = vmul.f32 %v168, %v280
  %v310 = vmul.f32 %v171, %v280
  %v311 = vmul.f32 %v174, %v280
  %v312 = vmul.f32 %v177, %v280
  %v313 = vmul.f32 %v180, %v280
  %v314 = vmul.f32 %v183, %v280
  %v315 = vmul.f32 %v186, %v280
  %v316 = vmul.f32 %v189, %v280
  %v317 = vmul.f32 %v192, %v280
  %v318 = vmul.f32 %v195, %v280
  %v319 = vmul.f32 %v198, %v280
  %v320 = vmul.f32 %v201, %v280
  %v321 = vmul.f32 %v204, %v280
  %v322 = vmul.f32 %v207, %v280
  %v323 = vmul.f32 %v210, %v280
  %v324 = vmul.f32 %v213, %v280
  %v325 = vmul.f32 %v216, %v280
  %v326 = vmul.f32 %v219, %v280
  %v327 = vmul.f32 %v222, %v280
  %v328 = vmul.f32 %v225, %v280
  %v329 = vmul.f32 %v228, %v280
  %v330 = vmul.f32 %v231, %v280
  %v331 = vmul.f32 %v234, %v280
  %v332 = vmul.f32 %v237, %v280
  %v333 = vmul.f32 %v240, %v280
  %v334 = vmul.f32 %v243, %v280
  %v335 = vmul.f32 %v246, %v280
  %v336 = vmul.f32 %v249, %v280
  %v337 = vmul.f32 %v252, %v280
  %v338 = vmul.f32 %v255, %v280
  %v339 = vmul.f32 %v258, %v280
  %v340 = vmul.f32 %v261, %v280
  %v341 = vmul.f32 %v264, %v280
  %v342 = vmul.f32 %v267, %v280
  %v343 = vmul.f32 %v270, %v280
  %v344 = vmul.f32 %v273, %v280
  %v345 = vsub.f32 %v17, %v281
  %v346 = vsub.f32 %v18, %v282
  %v347 = vsub.f32 %v19, %v283
  %v348 = vsub.f32 %v20, %v284
  %v349 = vsub.f32 %v21, %v285
  %v350 = vsub.f32 %v22, %v286
  %v351 = vsub.f32 %v23, %v287
  %v352 = vsub.f32 %v24, %v288
  %v353 = vsub.f32 %v25, %v289
  %v354 = vsub.f32 %v26, %v290
  %v355 = vsub.f32 %v27, %v291
  %v356 = vsub.f32 %v28, %v292
  %v357 = vsub.f32 %v29, %v293
  %v358 = vsub.f32 %v30, %v294
  %v359 = vsub.f32 %v31, %v295
  %v360 = vsub.f32 %v32, %v296
  %v361 = vsub.f32 %v33, %v297
  %v362 = vsub.f32 %v34, %v298
  %v363 = vsub.f32 %v35, %v299
  %v364 = vsub.f32 %v36, %v300
  %v365 = vsub.f32 %v37, %v301
  %v366 = vsub.f32 %v38, %v302
  %v367 = vsub.f32 %v39, %v303
  %v368 = vsub.f32 %v40, %v304
  %v369 = vsub.f32 %v41, %v305
  %v370 = vsub.f32 %v42, %v306
  %v371 = vsub.f32 %v43, %v307
  %v372 = vsub.f32 %v44, %v308
  %v373 = vsub.f32 %v45, %v309
  %v374 = vsub.f32 %v46, %v310
  %v375 = vsub.f32 %v47, %v311
  %v376 = vsub.f32 %v48, %v312
  %v377 = vsub.f32 %v49, %v313
  %v378 = vsub.f32 %v50, %v314
  %v379 = vsub.f32 %v51, %v315
  %v380 = vsub.f32 %v52, %v316
  %v381 = vsub.f32 %v53, %v317
  %v382 = vsub.f32 %v54, %v318
  %v383 = vsub.f32 %v55, %v319
  %v384 = vsub.f32 %v56, %v320
  %v385 = vsub.f32 %v57, %v321
  %v386 = vsub.f32 %v58, %v322
  %v387 = vsub.f32 %v59, %v323
  %v388 = vsub.f32 %v60, %v324
  %v389 = vsub.f32 %v61, %v325
  %v390 = vsub.f32 %v62, %v326
  %v391 = vsub.f32 %v63, %v327
  %v392 = vsub.f32 %v64, %v328
  %v393 = vsub.f32 %v65, %v329
  %v394 = vsub.f32 %v66, %v330
  %v395 = vsub.f32 %v67, %v331
  %v396 = vsub.f32 %v68, %v332
  %v397 = vsub.f32 %v69, %v333
  %v398 = vsub.f32 %v70, %v334
  %v399 = vsub.f32 %v71, %v335
  %v400 = vsub.f32 %v72, %v336
  %v401 = vsub.f32 %v73, %v337
  %v402 = vsub.f32 %v74, %v338
  %v403 = vsub.f32 %v75, %v339
  %v404 = vsub.f32 %v76, %v340
  %v405 = vsub.f32 %v77, %v341
  %v406 = vsub.f32 %v78, %v342
  %v407 = vsub.f32 %v79, %v343
  %v408 = vsub.f32 %v80, %v344
  %v409 = vmul.f32 %v345, %v345
  %v410 = vmul.f32 %v346, %v346
  %v411 = vmul.f32 %v347, %v347
  %v412 = vmul.f32 %v348, %v348
  %v413 = vmul.f32 %v349, %v349
  %v414 = vmul.f32 %v350, %v350
  %v415 = vmul.f32 %v351, %v351
  %v416 = vmul.f32 %v352, %v352
  %v417 = vmul.f32 %v353, %v353
  %v418 = vmul.f32 %v354, %v354
  %v419 = vmul.f32 %v355, %v355
  %v420 = vmul.f32 %v356, %v356
  %v421 = vmul.f32 %v357, %v357
  %v422 = vmul.f32 %v358, %v358
  %v423 = vmul.f32 %v359, %v359
  %v424 = vmul.f32 %v360, %v360
  %v425 = vmul.f32 %v361, %v361
  %v426 = vmul.f32 %v362, %v362
  %v427 = vmul.f32 %v363, %v363
  %v428 = vmul.f32 %v364, %v364
  %v429 = vmul.f32 %v365, %v365
  %v430 = vmul.f32 %v366, %v366
  %v431 = vmul.f32 %v367, %v367
  %v432 = vmul.f32 %v368, %v368
  %v433 = vmul.f32 %v369, %v369
  %v434 = vmul.f32 %v370, %v370
  %v435 = vmul.f32 %v371, %v371
  %v436 = vmul.f32 %v372, %v372
  %v437 = vmul.f32 %v373, %v373
  %v438 = vmul.f32 %v374, %v374
  %v439 = vmul.f32 %v375, %v375
  %v440 = vmul.f32 %v376, %v376
  %v441 = vmul.f32 %v377, %v377
  %v442 = vmul.f32 %v378, %v378
  %v443 = vmul.f32 %v379, %v379
  %v444 = vmul.f32 %v380, %v380
  %v445 = vmul.f32 %v381, %v381
  %v446 = vmul.f32 %v382, %v382
  %v447 = vmul.f32 %v383, %v383
  %v448 = vmul.f32 %v384, %v384
  %v449 = vmul.f32 %v385, %v385
  %v450 = vmul.f32 %v386, %v386
  %v451 = vmul.f32 %v387, %v387
  %v452 = vmul.f32 %v388, %v388
  %v453 = vmul.f32 %v389, %v389
  %v454 = vmul.f32 %v390, %v390
  %v455 = vmul.f32 %v391, %v391
  %v456 = vmul.f32 %v392, %v392
  %v457 = vmul.f32 %v393, %v393
  %v458 = vmul.f32 %v394, %v394
  %v459 = vmul.f32 %v395, %v395
  %v460 = vmul.f32 %v396, %v396
  %v461 = vmul.f32 %v397, %v397
  %v462 = vmul.f32 %v398, %v398
  %v463 = vmul.f32 %v399, %v399
  %v464 = vmul.f32 %v400, %v400
  %v465 = vmul.f32 %v401, %v401
  %v466 = vmul.f32 %v402, %v402
  %v467 = vmul.f32 %v403, %v403
  %v468 = vmul.f32 %v404, %v404
  %v469 = vmul.f32 %v405, %v405
  %v470 = vmul.f32 %v406, %v406
  %v471 = vmul.f32 %v407, %v407
  %v472 = vmul.f32 %v408, %v408
  %v473 = vsel %vm81, %v409, 0.0
  %474 = vadd.xlane.f32.xlu0 %v473
  %v475 = vpop.xlane.xlu0 %474
  %v476 = vsel %vm81, %v410, 0.0
  %477 = vadd.xlane.f32.xlu0 %v476
  %v478 = vpop.xlane.xlu0 %477
  %v479 = vsel %vm81, %v411, 0.0
  %480 = vadd.xlane.f32.xlu0 %v479
  %v481 = vpop.xlane.xlu0 %480
  %v482 = vsel %vm81, %v412, 0.0
  %483 = vadd.xlane.f32.xlu0 %v482
  %v484 = vpop.xlane.xlu0 %483
  %v485 = vsel %vm81, %v413, 0.0
  %486 = vadd.xlane.f32.xlu0 %v485
  %v487 = vpop.xlane.xlu0 %486
  %v488 = vsel %vm81, %v414, 0.0
  %489 = vadd.xlane.f32.xlu0 %v488
  %v490 = vpop.xlane.xlu0 %489
  %v491 = vsel %vm81, %v415, 0.0
  %492 = vadd.xlane.f32.xlu0 %v491
  %v493 = vpop.xlane.xlu0 %492
  %v494 = vsel %vm81, %v416, 0.0
  %495 = vadd.xlane.f32.xlu0 %v494
  %v496 = vpop.xlane.xlu0 %495
  %v497 = vsel %vm81, %v417, 0.0
  %498 = vadd.xlane.f32.xlu0 %v497
  %v499 = vpop.xlane.xlu0 %498
  %v500 = vsel %vm81, %v418, 0.0
  %501 = vadd.xlane.f32.xlu0 %v500
  %v502 = vpop.xlane.xlu0 %501
  %v503 = vsel %vm81, %v419, 0.0
  %504 = vadd.xlane.f32.xlu0 %v503
  %v505 = vpop.xlane.xlu0 %504
  %v506 = vsel %vm81, %v420, 0.0
  %507 = vadd.xlane.f32.xlu0 %v506
  %v508 = vpop.xlane.xlu0 %507
  %v509 = vsel %vm81, %v421, 0.0
  %510 = vadd.xlane.f32.xlu0 %v509
  %v511 = vpop.xlane.xlu0 %510
  %v512 = vsel %vm81, %v422, 0.0
  %513 = vadd.xlane.f32.xlu0 %v512
  %v514 = vpop.xlane.xlu0 %513
  %v515 = vsel %vm81, %v423, 0.0
  %516 = vadd.xlane.f32.xlu0 %v515
  %v517 = vpop.xlane.xlu0 %516
  %v518 = vsel %vm81, %v424, 0.0
  %519 = vadd.xlane.f32.xlu0 %v518
  %v520 = vpop.xlane.xlu0 %519
  %v521 = vsel %vm81, %v425, 0.0
  %522 = vadd.xlane.f32.xlu0 %v521
  %v523 = vpop.xlane.xlu0 %522
  %v524 = vsel %vm81, %v426, 0.0
  %525 = vadd.xlane.f32.xlu0 %v524
  %v526 = vpop.xlane.xlu0 %525
  %v527 = vsel %vm81, %v427, 0.0
  %528 = vadd.xlane.f32.xlu0 %v527
  %v529 = vpop.xlane.xlu0 %528
  %v530 = vsel %vm81, %v428, 0.0
  %531 = vadd.xlane.f32.xlu0 %v530
  %v532 = vpop.xlane.xlu0 %531
  %v533 = vsel %vm81, %v429, 0.0
  %534 = vadd.xlane.f32.xlu0 %v533
  %v535 = vpop.xlane.xlu0 %534
  %v536 = vsel %vm81, %v430, 0.0
  %537 = vadd.xlane.f32.xlu0 %v536
  %v538 = vpop.xlane.xlu0 %537
  %v539 = vsel %vm81, %v431, 0.0
  %540 = vadd.xlane.f32.xlu0 %v539
  %v541 = vpop.xlane.xlu0 %540
  %v542 = vsel %vm81, %v432, 0.0
  %543 = vadd.xlane.f32.xlu0 %v542
  %v544 = vpop.xlane.xlu0 %543
  %v545 = vsel %vm81, %v433, 0.0
  %546 = vadd.xlane.f32.xlu0 %v545
  %v547 = vpop.xlane.xlu0 %546
  %v548 = vsel %vm81, %v434, 0.0
  %549 = vadd.xlane.f32.xlu0 %v548
  %v550 = vpop.xlane.xlu0 %549
  %v551 = vsel %vm81, %v435, 0.0
  %552 = vadd.xlane.f32.xlu0 %v551
  %v553 = vpop.xlane.xlu0 %552
  %v554 = vsel %vm81, %v436, 0.0
  %555 = vadd.xlane.f32.xlu0 %v554
  %v556 = vpop.xlane.xlu0 %555
  %v557 = vsel %vm81, %v437, 0.0
  %558 = vadd.xlane.f32.xlu0 %v557
  %v559 = vpop.xlane.xlu0 %558
  %v560 = vsel %vm81, %v438, 0.0
  %561 = vadd.xlane.f32.xlu0 %v560
  %v562 = vpop.xlane.xlu0 %561
  %v563 = vsel %vm81, %v439, 0.0
  %564 = vadd.xlane.f32.xlu0 %v563
  %v565 = vpop.xlane.xlu0 %564
  %v566 = vsel %vm81, %v440, 0.0
  %567 = vadd.xlane.f32.xlu0 %v566
  %v568 = vpop.xlane.xlu0 %567
  %v569 = vsel %vm81, %v441, 0.0
  %570 = vadd.xlane.f32.xlu0 %v569
  %v571 = vpop.xlane.xlu0 %570
  %v572 = vsel %vm81, %v442, 0.0
  %573 = vadd.xlane.f32.xlu0 %v572
  %v574 = vpop.xlane.xlu0 %573
  %v575 = vsel %vm81, %v443, 0.0
  %576 = vadd.xlane.f32.xlu0 %v575
  %v577 = vpop.xlane.xlu0 %576
  %v578 = vsel %vm81, %v444, 0.0
  %579 = vadd.xlane.f32.xlu0 %v578
  %v580 = vpop.xlane.xlu0 %579
  %v581 = vsel %vm81, %v445, 0.0
  %582 = vadd.xlane.f32.xlu0 %v581
  %v583 = vpop.xlane.xlu0 %582
  %v584 = vsel %vm81, %v446, 0.0
  %585 = vadd.xlane.f32.xlu0 %v584
  %v586 = vpop.xlane.xlu0 %585
  %v587 = vsel %vm81, %v447, 0.0
  %588 = vadd.xlane.f32.xlu0 %v587
  %v589 = vpop.xlane.xlu0 %588
  %v590 = vsel %vm81, %v448, 0.0
  %591 = vadd.xlane.f32.xlu0 %v590
  %v592 = vpop.xlane.xlu0 %591
  %v593 = vsel %vm81, %v449, 0.0
  %594 = vadd.xlane.f32.xlu0 %v593
  %v595 = vpop.xlane.xlu0 %594
  %v596 = vsel %vm81, %v450, 0.0
  %597 = vadd.xlane.f32.xlu0 %v596
  %v598 = vpop.xlane.xlu0 %597
  %v599 = vsel %vm81, %v451, 0.0
  %600 = vadd.xlane.f32.xlu0 %v599
  %v601 = vpop.xlane.xlu0 %600
  %v602 = vsel %vm81, %v452, 0.0
  %603 = vadd.xlane.f32.xlu0 %v602
  %v604 = vpop.xlane.xlu0 %603
  %v605 = vsel %vm81, %v453, 0.0
  %606 = vadd.xlane.f32.xlu0 %v605
  %v607 = vpop.xlane.xlu0 %606
  %v608 = vsel %vm81, %v454, 0.0
  %609 = vadd.xlane.f32.xlu0 %v608
  %v610 = vpop.xlane.xlu0 %609
  %v611 = vsel %vm81, %v455, 0.0
  %612 = vadd.xlane.f32.xlu0 %v611
  %v613 = vpop.xlane.xlu0 %612
  %v614 = vsel %vm81, %v456, 0.0
  %615 = vadd.xlane.f32.xlu0 %v614
  %v616 = vpop.xlane.xlu0 %615
  %v617 = vsel %vm81, %v457, 0.0
  %618 = vadd.xlane.f32.xlu0 %v617
  %v619 = vpop.xlane.xlu0 %618
  %v620 = vsel %vm81, %v458, 0.0
  %621 = vadd.xlane.f32.xlu0 %v620
  %v622 = vpop.xlane.xlu0 %621
  %v623 = vsel %vm81, %v459, 0.0
  %624 = vadd.xlane.f32.xlu0 %v623
  %v625 = vpop.xlane.xlu0 %624
  %v626 = vsel %vm81, %v460, 0.0
  %627 = vadd.xlane.f32.xlu0 %v626
  %v628 = vpop.xlane.xlu0 %627
  %v629 = vsel %vm81, %v461, 0.0
  %630 = vadd.xlane.f32.xlu0 %v629
  %v631 = vpop.xlane.xlu0 %630
  %v632 = vsel %vm81, %v462, 0.0
  %633 = vadd.xlane.f32.xlu0 %v632
  %v634 = vpop.xlane.xlu0 %633
  %v635 = vsel %vm81, %v463, 0.0
  %636 = vadd.xlane.f32.xlu0 %v635
  %v637 = vpop.xlane.xlu0 %636
  %v638 = vsel %vm81, %v464, 0.0
  %639 = vadd.xlane.f32.xlu0 %v638
  %v640 = vpop.xlane.xlu0 %639
  %v641 = vsel %vm81, %v465, 0.0
  %642 = vadd.xlane.f32.xlu0 %v641
  %v643 = vpop.xlane.xlu0 %642
  %v644 = vsel %vm81, %v466, 0.0
  %645 = vadd.xlane.f32.xlu0 %v644
  %v646 = vpop.xlane.xlu0 %645
  %v647 = vsel %vm81, %v467, 0.0
  %648 = vadd.xlane.f32.xlu0 %v647
  %v649 = vpop.xlane.xlu0 %648
  %v650 = vsel %vm81, %v468, 0.0
  %651 = vadd.xlane.f32.xlu0 %v650
  %v652 = vpop.xlane.xlu0 %651
  %v653 = vsel %vm81, %v469, 0.0
  %654 = vadd.xlane.f32.xlu0 %v653
  %v655 = vpop.xlane.xlu0 %654
  %v656 = vsel %vm81, %v470, 0.0
  %657 = vadd.xlane.f32.xlu0 %v656
  %v658 = vpop.xlane.xlu0 %657
  %v659 = vsel %vm81, %v471, 0.0
  %660 = vadd.xlane.f32.xlu0 %v659
  %v661 = vpop.xlane.xlu0 %660
  %v662 = vsel %vm81, %v472, 0.0
  %663 = vadd.xlane.f32.xlu0 %v662
  %v664 = vpop.xlane.xlu0 %663
  %v665 = vmul.f32 %v475, %v280
  %v666 = vmul.f32 %v478, %v280
  %v667 = vmul.f32 %v481, %v280
  %v668 = vmul.f32 %v484, %v280
  %v669 = vmul.f32 %v487, %v280
  %v670 = vmul.f32 %v490, %v280
  %v671 = vmul.f32 %v493, %v280
  %v672 = vmul.f32 %v496, %v280
  %v673 = vmul.f32 %v499, %v280
  %v674 = vmul.f32 %v502, %v280
  %v675 = vmul.f32 %v505, %v280
  %v676 = vmul.f32 %v508, %v280
  %v677 = vmul.f32 %v511, %v280
  %v678 = vmul.f32 %v514, %v280
  %v679 = vmul.f32 %v517, %v280
  %v680 = vmul.f32 %v520, %v280
  %v681 = vmul.f32 %v523, %v280
  %v682 = vmul.f32 %v526, %v280
  %v683 = vmul.f32 %v529, %v280
  %v684 = vmul.f32 %v532, %v280
  %v685 = vmul.f32 %v535, %v280
  %v686 = vmul.f32 %v538, %v280
  %v687 = vmul.f32 %v541, %v280
  %v688 = vmul.f32 %v544, %v280
  %v689 = vmul.f32 %v547, %v280
  %v690 = vmul.f32 %v550, %v280
  %v691 = vmul.f32 %v553, %v280
  %v692 = vmul.f32 %v556, %v280
  %v693 = vmul.f32 %v559, %v280
  %v694 = vmul.f32 %v562, %v280
  %v695 = vmul.f32 %v565, %v280
  %v696 = vmul.f32 %v568, %v280
  %v697 = vmul.f32 %v571, %v280
  %v698 = vmul.f32 %v574, %v280
  %v699 = vmul.f32 %v577, %v280
  %v700 = vmul.f32 %v580, %v280
  %v701 = vmul.f32 %v583, %v280
  %v702 = vmul.f32 %v586, %v280
  %v703 = vmul.f32 %v589, %v280
  %v704 = vmul.f32 %v592, %v280
  %v705 = vmul.f32 %v595, %v280
  %v706 = vmul.f32 %v598, %v280
  %v707 = vmul.f32 %v601, %v280
  %v708 = vmul.f32 %v604, %v280
  %v709 = vmul.f32 %v607, %v280
  %v710 = vmul.f32 %v610, %v280
  %v711 = vmul.f32 %v613, %v280
  %v712 = vmul.f32 %v616, %v280
  %v713 = vmul.f32 %v619, %v280
  %v714 = vmul.f32 %v622, %v280
  %v715 = vmul.f32 %v625, %v280
  %v716 = vmul.f32 %v628, %v280
  %v717 = vmul.f32 %v631, %v280
  %v718 = vmul.f32 %v634, %v280
  %v719 = vmul.f32 %v637, %v280
  %v720 = vmul.f32 %v640, %v280
  %v721 = vmul.f32 %v643, %v280
  %v722 = vmul.f32 %v646, %v280
  %v723 = vmul.f32 %v649, %v280
  %v724 = vmul.f32 %v652, %v280
  %v725 = vmul.f32 %v655, %v280
  %v726 = vmul.f32 %v658, %v280
  %v727 = vmul.f32 %v661, %v280
  %v728 = vmul.f32 %v664, %v280
  %v729 = vadd.f32 %v665, 1e-05
  %v730 = vadd.f32 %v666, 1e-05
  %v731 = vadd.f32 %v667, 1e-05
  %v732 = vadd.f32 %v668, 1e-05
  %v733 = vadd.f32 %v669, 1e-05
  %v734 = vadd.f32 %v670, 1e-05
  %v735 = vadd.f32 %v671, 1e-05
  %v736 = vadd.f32 %v672, 1e-05
  %v737 = vadd.f32 %v673, 1e-05
  %v738 = vadd.f32 %v674, 1e-05
  %v739 = vadd.f32 %v675, 1e-05
  %v740 = vadd.f32 %v676, 1e-05
  %v741 = vadd.f32 %v677, 1e-05
  %v742 = vadd.f32 %v678, 1e-05
  %v743 = vadd.f32 %v679, 1e-05
  %v744 = vadd.f32 %v680, 1e-05
  %v745 = vadd.f32 %v681, 1e-05
  %v746 = vadd.f32 %v682, 1e-05
  %v747 = vadd.f32 %v683, 1e-05
  %v748 = vadd.f32 %v684, 1e-05
  %v749 = vadd.f32 %v685, 1e-05
  %v750 = vadd.f32 %v686, 1e-05
  %v751 = vadd.f32 %v687, 1e-05
  %v752 = vadd.f32 %v688, 1e-05
  %v753 = vadd.f32 %v689, 1e-05
  %v754 = vadd.f32 %v690, 1e-05
  %v755 = vadd.f32 %v691, 1e-05
  %v756 = vadd.f32 %v692, 1e-05
  %v757 = vadd.f32 %v693, 1e-05
  %v758 = vadd.f32 %v694, 1e-05
  %v759 = vadd.f32 %v695, 1e-05
  %v760 = vadd.f32 %v696, 1e-05
  %v761 = vadd.f32 %v697, 1e-05
  %v762 = vadd.f32 %v698, 1e-05
  %v763 = vadd.f32 %v699, 1e-05
  %v764 = vadd.f32 %v700, 1e-05
  %v765 = vadd.f32 %v701, 1e-05
  %v766 = vadd.f32 %v702, 1e-05
  %v767 = vadd.f32 %v703, 1e-05
  %v768 = vadd.f32 %v704, 1e-05
  %v769 = vadd.f32 %v705, 1e-05
  %v770 = vadd.f32 %v706, 1e-05
  %v771 = vadd.f32 %v707, 1e-05
  %v772 = vadd.f32 %v708, 1e-05
  %v773 = vadd.f32 %v709, 1e-05
  %v774 = vadd.f32 %v710, 1e-05
  %v775 = vadd.f32 %v711, 1e-05
  %v776 = vadd.f32 %v712, 1e-05
  %v777 = vadd.f32 %v713, 1e-05
  %v778 = vadd.f32 %v714, 1e-05
  %v779 = vadd.f32 %v715, 1e-05
  %v780 = vadd.f32 %v716, 1e-05
  %v781 = vadd.f32 %v717, 1e-05
  %v782 = vadd.f32 %v718, 1e-05
  %v783 = vadd.f32 %v719, 1e-05
  %v784 = vadd.f32 %v720, 1e-05
  %v785 = vadd.f32 %v721, 1e-05
  %v786 = vadd.f32 %v722, 1e-05
  %v787 = vadd.f32 %v723, 1e-05
  %v788 = vadd.f32 %v724, 1e-05
  %v789 = vadd.f32 %v725, 1e-05
  %v790 = vadd.f32 %v726, 1e-05
  %v791 = vadd.f32 %v727, 1e-05
  %v792 = vadd.f32 %v728, 1e-05
  %v793 = vrsqrt.pop %v729
  %v794 = vmul.f32 %v793, %v729
  %v795 = vmul.f32 %v794, %v793
  %v796 = vmul.f32 0.5, %v795
  %v797 = vsub.f32 1.5, %v796
  %v798 = vmul.f32 %v793, %v797
  %vm799 = vweird.f32 %v729
  %vm800 = vweird.f32 %v793
  %vm801 = vmor %vm799, %vm800
  %v802 = vsel %vm801, %v793, %v798
  %v803 = vrsqrt.pop %v730
  %v804 = vmul.f32 %v803, %v730
  %v805 = vmul.f32 %v804, %v803
  %v806 = vmul.f32 0.5, %v805
  %v807 = vsub.f32 1.5, %v806
  %v808 = vmul.f32 %v803, %v807
  %vm809 = vweird.f32 %v730
  %vm810 = vweird.f32 %v803
  %vm811 = vmor %vm809, %vm810
  %v812 = vsel %vm811, %v803, %v808
  %v813 = vrsqrt.pop %v731
  %v814 = vmul.f32 %v813, %v731
  %v815 = vmul.f32 %v814, %v813
  %v816 = vmul.f32 0.5, %v815
  %v817 = vsub.f32 1.5, %v816
  %v818 = vmul.f32 %v813, %v817
  %vm819 = vweird.f32 %v731
  %vm820 = vweird.f32 %v813
  %vm821 = vmor %vm819, %vm820
  %v822 = vsel %vm821, %v813, %v818
  %v823 = vrsqrt.pop %v732
  %v824 = vmul.f32 %v823, %v732
  %v825 = vmul.f32 %v824, %v823
  %v826 = vmul.f32 0.5, %v825
  %v827 = vsub.f32 1.5, %v826
  %v828 = vmul.f32 %v823, %v827
  %vm829 = vweird.f32 %v732
  %vm830 = vweird.f32 %v823
  %vm831 = vmor %vm829, %vm830
  %v832 = vsel %vm831, %v823, %v828
  %v833 = vrsqrt.pop %v733
  %v834 = vmul.f32 %v833, %v733
  %v835 = vmul.f32 %v834, %v833
  %v836 = vmul.f32 0.5, %v835
  %v837 = vsub.f32 1.5, %v836
  %v838 = vmul.f32 %v833, %v837
  %vm839 = vweird.f32 %v733
  %vm840 = vweird.f32 %v833
  %vm841 = vmor %vm839, %vm840
  %v842 = vsel %vm841, %v833, %v838
  %v843 = vrsqrt.pop %v734
  %v844 = vmul.f32 %v843, %v734
  %v845 = vmul.f32 %v844, %v843
  %v846 = vmul.f32 0.5, %v845
  %v847 = vsub.f32 1.5, %v846
  %v848 = vmul.f32 %v843, %v847
  %vm849 = vweird.f32 %v734
  %vm850 = vweird.f32 %v843
  %vm851 = vmor %vm849, %vm850
  %v852 = vsel %vm851, %v843, %v848
  %v853 = vrsqrt.pop %v735
  %v854 = vmul.f32 %v853, %v735
  %v855 = vmul.f32 %v854, %v853
  %v856 = vmul.f32 0.5, %v855
  %v857 = vsub.f32 1.5, %v856
  %v858 = vmul.f32 %v853, %v857
  %vm859 = vweird.f32 %v735
  %vm860 = vweird.f32 %v853
  %vm861 = vmor %vm859, %vm860
  %v862 = vsel %vm861, %v853, %v858
  %v863 = vrsqrt.pop %v736
  %v864 = vmul.f32 %v863, %v736
  %v865 = vmul.f32 %v864, %v863
  %v866 = vmul.f32 0.5, %v865
  %v867 = vsub.f32 1.5, %v866
  %v868 = vmul.f32 %v863, %v867
  %vm869 = vweird.f32 %v736
  %vm870 = vweird.f32 %v863
  %vm871 = vmor %vm869, %vm870
  %v872 = vsel %vm871, %v863, %v868
  %v873 = vrsqrt.pop %v737
  %v874 = vmul.f32 %v873, %v737
  %v875 = vmul.f32 %v874, %v873
  %v876 = vmul.f32 0.5, %v875
  %v877 = vsub.f32 1.5, %v876
  %v878 = vmul.f32 %v873, %v877
  %vm879 = vweird.f32 %v737
  %vm880 = vweird.f32 %v873
  %vm881 = vmor %vm879, %vm880
  %v882 = vsel %vm881, %v873, %v878
  %v883 = vrsqrt.pop %v738
  %v884 = vmul.f32 %v883, %v738
  %v885 = vmul.f32 %v884, %v883
  %v886 = vmul.f32 0.5, %v885
  %v887 = vsub.f32 1.5, %v886
  %v888 = vmul.f32 %v883, %v887
  %vm889 = vweird.f32 %v738
  %vm890 = vweird.f32 %v883
  %vm891 = vmor %vm889, %vm890
  %v892 = vsel %vm891, %v883, %v888
  %v893 = vrsqrt.pop %v739
  %v894 = vmul.f32 %v893, %v739
  %v895 = vmul.f32 %v894, %v893
  %v896 = vmul.f32 0.5, %v895
  %v897 = vsub.f32 1.5, %v896
  %v898 = vmul.f32 %v893, %v897
  %vm899 = vweird.f32 %v739
  %vm900 = vweird.f32 %v893
  %vm901 = vmor %vm899, %vm900
  %v902 = vsel %vm901, %v893, %v898
  %v903 = vrsqrt.pop %v740
  %v904 = vmul.f32 %v903, %v740
  %v905 = vmul.f32 %v904, %v903
  %v906 = vmul.f32 0.5, %v905
  %v907 = vsub.f32 1.5, %v906
  %v908 = vmul.f32 %v903, %v907
  %vm909 = vweird.f32 %v740
  %vm910 = vweird.f32 %v903
  %vm911 = vmor %vm909, %vm910
  %v912 = vsel %vm911, %v903, %v908
  %v913 = vrsqrt.pop %v741
  %v914 = vmul.f32 %v913, %v741
  %v915 = vmul.f32 %v914, %v913
  %v916 = vmul.f32 0.5, %v915
  %v917 = vsub.f32 1.5, %v916
  %v918 = vmul.f32 %v913, %v917
  %vm919 = vweird.f32 %v741
  %vm920 = vweird.f32 %v913
  %vm921 = vmor %vm919, %vm920
  %v922 = vsel %vm921, %v913, %v918
  %v923 = vrsqrt.pop %v742
  %v924 = vmul.f32 %v923, %v742
  %v925 = vmul.f32 %v924, %v923
  %v926 = vmul.f32 0.5, %v925
  %v927 = vsub.f32 1.5, %v926
  %v928 = vmul.f32 %v923, %v927
  %vm929 = vweird.f32 %v742
  %vm930 = vweird.f32 %v923
  %vm931 = vmor %vm929, %vm930
  %v932 = vsel %vm931, %v923, %v928
  %v933 = vrsqrt.pop %v743
  %v934 = vmul.f32 %v933, %v743
  %v935 = vmul.f32 %v934, %v933
  %v936 = vmul.f32 0.5, %v935
  %v937 = vsub.f32 1.5, %v936
  %v938 = vmul.f32 %v933, %v937
  %vm939 = vweird.f32 %v743
  %vm940 = vweird.f32 %v933
  %vm941 = vmor %vm939, %vm940
  %v942 = vsel %vm941, %v933, %v938
  %v943 = vrsqrt.pop %v744
  %v944 = vmul.f32 %v943, %v744
  %v945 = vmul.f32 %v944, %v943
  %v946 = vmul.f32 0.5, %v945
  %v947 = vsub.f32 1.5, %v946
  %v948 = vmul.f32 %v943, %v947
  %vm949 = vweird.f32 %v744
  %vm950 = vweird.f32 %v943
  %vm951 = vmor %vm949, %vm950
  %v952 = vsel %vm951, %v943, %v948
  %v953 = vrsqrt.pop %v745
  %v954 = vmul.f32 %v953, %v745
  %v955 = vmul.f32 %v954, %v953
  %v956 = vmul.f32 0.5, %v955
  %v957 = vsub.f32 1.5, %v956
  %v958 = vmul.f32 %v953, %v957
  %vm959 = vweird.f32 %v745
  %vm960 = vweird.f32 %v953
  %vm961 = vmor %vm959, %vm960
  %v962 = vsel %vm961, %v953, %v958
  %v963 = vrsqrt.pop %v746
  %v964 = vmul.f32 %v963, %v746
  %v965 = vmul.f32 %v964, %v963
  %v966 = vmul.f32 0.5, %v965
  %v967 = vsub.f32 1.5, %v966
  %v968 = vmul.f32 %v963, %v967
  %vm969 = vweird.f32 %v746
  %vm970 = vweird.f32 %v963
  %vm971 = vmor %vm969, %vm970
  %v972 = vsel %vm971, %v963, %v968
  %v973 = vrsqrt.pop %v747
  %v974 = vmul.f32 %v973, %v747
  %v975 = vmul.f32 %v974, %v973
  %v976 = vmul.f32 0.5, %v975
  %v977 = vsub.f32 1.5, %v976
  %v978 = vmul.f32 %v973, %v977
  %vm979 = vweird.f32 %v747
  %vm980 = vweird.f32 %v973
  %vm981 = vmor %vm979, %vm980
  %v982 = vsel %vm981, %v973, %v978
  %v983 = vrsqrt.pop %v748
  %v984 = vmul.f32 %v983, %v748
  %v985 = vmul.f32 %v984, %v983
  %v986 = vmul.f32 0.5, %v985
  %v987 = vsub.f32 1.5, %v986
  %v988 = vmul.f32 %v983, %v987
  %vm989 = vweird.f32 %v748
  %vm990 = vweird.f32 %v983
  %vm991 = vmor %vm989, %vm990
  %v992 = vsel %vm991, %v983, %v988
  %v993 = vrsqrt.pop %v749
  %v994 = vmul.f32 %v993, %v749
  %v995 = vmul.f32 %v994, %v993
  %v996 = vmul.f32 0.5, %v995
  %v997 = vsub.f32 1.5, %v996
  %v998 = vmul.f32 %v993, %v997
  %vm999 = vweird.f32 %v749
  %vm1000 = vweird.f32 %v993
  %vm1001 = vmor %vm999, %vm1000
  %v1002 = vsel %vm1001, %v993, %v998
  %v1003 = vrsqrt.pop %v750
  %v1004 = vmul.f32 %v1003, %v750
  %v1005 = vmul.f32 %v1004, %v1003
  %v1006 = vmul.f32 0.5, %v1005
  %v1007 = vsub.f32 1.5, %v1006
  %v1008 = vmul.f32 %v1003, %v1007
  %vm1009 = vweird.f32 %v750
  %vm1010 = vweird.f32 %v1003
  %vm1011 = vmor %vm1009, %vm1010
  %v1012 = vsel %vm1011, %v1003, %v1008
  %v1013 = vrsqrt.pop %v751
  %v1014 = vmul.f32 %v1013, %v751
  %v1015 = vmul.f32 %v1014, %v1013
  %v1016 = vmul.f32 0.5, %v1015
  %v1017 = vsub.f32 1.5, %v1016
  %v1018 = vmul.f32 %v1013, %v1017
  %vm1019 = vweird.f32 %v751
  %vm1020 = vweird.f32 %v1013
  %vm1021 = vmor %vm1019, %vm1020
  %v1022 = vsel %vm1021, %v1013, %v1018
  %v1023 = vrsqrt.pop %v752
  %v1024 = vmul.f32 %v1023, %v752
  %v1025 = vmul.f32 %v1024, %v1023
  %v1026 = vmul.f32 0.5, %v1025
  %v1027 = vsub.f32 1.5, %v1026
  %v1028 = vmul.f32 %v1023, %v1027
  %vm1029 = vweird.f32 %v752
  %vm1030 = vweird.f32 %v1023
  %vm1031 = vmor %vm1029, %vm1030
  %v1032 = vsel %vm1031, %v1023, %v1028
  %v1033 = vrsqrt.pop %v753
  %v1034 = vmul.f32 %v1033, %v753
  %v1035 = vmul.f32 %v1034, %v1033
  %v1036 = vmul.f32 0.5, %v1035
  %v1037 = vsub.f32 1.5, %v1036
  %v1038 = vmul.f32 %v1033, %v1037
  %vm1039 = vweird.f32 %v753
  %vm1040 = vweird.f32 %v1033
  %vm1041 = vmor %vm1039, %vm1040
  %v1042 = vsel %vm1041, %v1033, %v1038
  %v1043 = vrsqrt.pop %v754
  %v1044 = vmul.f32 %v1043, %v754
  %v1045 = vmul.f32 %v1044, %v1043
  %v1046 = vmul.f32 0.5, %v1045
  %v1047 = vsub.f32 1.5, %v1046
  %v1048 = vmul.f32 %v1043, %v1047
  %vm1049 = vweird.f32 %v754
  %vm1050 = vweird.f32 %v1043
  %vm1051 = vmor %vm1049, %vm1050
  %v1052 = vsel %vm1051, %v1043, %v1048
  %v1053 = vrsqrt.pop %v755
  %v1054 = vmul.f32 %v1053, %v755
  %v1055 = vmul.f32 %v1054, %v1053
  %v1056 = vmul.f32 0.5, %v1055
  %v1057 = vsub.f32 1.5, %v1056
  %v1058 = vmul.f32 %v1053, %v1057
  %vm1059 = vweird.f32 %v755
  %vm1060 = vweird.f32 %v1053
  %vm1061 = vmor %vm1059, %vm1060
  %v1062 = vsel %vm1061, %v1053, %v1058
  %v1063 = vrsqrt.pop %v756
  %v1064 = vmul.f32 %v1063, %v756
  %v1065 = vmul.f32 %v1064, %v1063
  %v1066 = vmul.f32 0.5, %v1065
  %v1067 = vsub.f32 1.5, %v1066
  %v1068 = vmul.f32 %v1063, %v1067
  %vm1069 = vweird.f32 %v756
  %vm1070 = vweird.f32 %v1063
  %vm1071 = vmor %vm1069, %vm1070
  %v1072 = vsel %vm1071, %v1063, %v1068
  %v1073 = vrsqrt.pop %v757
  %v1074 = vmul.f32 %v1073, %v757
  %v1075 = vmul.f32 %v1074, %v1073
  %v1076 = vmul.f32 0.5, %v1075
  %v1077 = vsub.f32 1.5, %v1076
  %v1078 = vmul.f32 %v1073, %v1077
  %vm1079 = vweird.f32 %v757
  %vm1080 = vweird.f32 %v1073
  %vm1081 = vmor %vm1079, %vm1080
  %v1082 = vsel %vm1081, %v1073, %v1078
  %v1083 = vrsqrt.pop %v758
  %v1084 = vmul.f32 %v1083, %v758
  %v1085 = vmul.f32 %v1084, %v1083
  %v1086 = vmul.f32 0.5, %v1085
  %v1087 = vsub.f32 1.5, %v1086
  %v1088 = vmul.f32 %v1083, %v1087
  %vm1089 = vweird.f32 %v758
  %vm1090 = vweird.f32 %v1083
  %vm1091 = vmor %vm1089, %vm1090
  %v1092 = vsel %vm1091, %v1083, %v1088
  %v1093 = vrsqrt.pop %v759
  %v1094 = vmul.f32 %v1093, %v759
  %v1095 = vmul.f32 %v1094, %v1093
  %v1096 = vmul.f32 0.5, %v1095
  %v1097 = vsub.f32 1.5, %v1096
  %v1098 = vmul.f32 %v1093, %v1097
  %vm1099 = vweird.f32 %v759
  %vm1100 = vweird.f32 %v1093
  %vm1101 = vmor %vm1099, %vm1100
  %v1102 = vsel %vm1101, %v1093, %v1098
  %v1103 = vrsqrt.pop %v760
  %v1104 = vmul.f32 %v1103, %v760
  %v1105 = vmul.f32 %v1104, %v1103
  %v1106 = vmul.f32 0.5, %v1105
  %v1107 = vsub.f32 1.5, %v1106
  %v1108 = vmul.f32 %v1103, %v1107
  %vm1109 = vweird.f32 %v760
  %vm1110 = vweird.f32 %v1103
  %vm1111 = vmor %vm1109, %vm1110
  %v1112 = vsel %vm1111, %v1103, %v1108
  %v1113 = vrsqrt.pop %v761
  %v1114 = vmul.f32 %v1113, %v761
  %v1115 = vmul.f32 %v1114, %v1113
  %v1116 = vmul.f32 0.5, %v1115
  %v1117 = vsub.f32 1.5, %v1116
  %v1118 = vmul.f32 %v1113, %v1117
  %vm1119 = vweird.f32 %v761
  %vm1120 = vweird.f32 %v1113
  %vm1121 = vmor %vm1119, %vm1120
  %v1122 = vsel %vm1121, %v1113, %v1118
  %v1123 = vrsqrt.pop %v762
  %v1124 = vmul.f32 %v1123, %v762
  %v1125 = vmul.f32 %v1124, %v1123
  %v1126 = vmul.f32 0.5, %v1125
  %v1127 = vsub.f32 1.5, %v1126
  %v1128 = vmul.f32 %v1123, %v1127
  %vm1129 = vweird.f32 %v762
  %vm1130 = vweird.f32 %v1123
  %vm1131 = vmor %vm1129, %vm1130
  %v1132 = vsel %vm1131, %v1123, %v1128
  %v1133 = vrsqrt.pop %v763
  %v1134 = vmul.f32 %v1133, %v763
  %v1135 = vmul.f32 %v1134, %v1133
  %v1136 = vmul.f32 0.5, %v1135
  %v1137 = vsub.f32 1.5, %v1136
  %v1138 = vmul.f32 %v1133, %v1137
  %vm1139 = vweird.f32 %v763
  %vm1140 = vweird.f32 %v1133
  %vm1141 = vmor %vm1139, %vm1140
  %v1142 = vsel %vm1141, %v1133, %v1138
  %v1143 = vrsqrt.pop %v764
  %v1144 = vmul.f32 %v1143, %v764
  %v1145 = vmul.f32 %v1144, %v1143
  %v1146 = vmul.f32 0.5, %v1145
  %v1147 = vsub.f32 1.5, %v1146
  %v1148 = vmul.f32 %v1143, %v1147
  %vm1149 = vweird.f32 %v764
  %vm1150 = vweird.f32 %v1143
  %vm1151 = vmor %vm1149, %vm1150
  %v1152 = vsel %vm1151, %v1143, %v1148
  %v1153 = vrsqrt.pop %v765
  %v1154 = vmul.f32 %v1153, %v765
  %v1155 = vmul.f32 %v1154, %v1153
  %v1156 = vmul.f32 0.5, %v1155
  %v1157 = vsub.f32 1.5, %v1156
  %v1158 = vmul.f32 %v1153, %v1157
  %vm1159 = vweird.f32 %v765
  %vm1160 = vweird.f32 %v1153
  %vm1161 = vmor %vm1159, %vm1160
  %v1162 = vsel %vm1161, %v1153, %v1158
  %v1163 = vrsqrt.pop %v766
  %v1164 = vmul.f32 %v1163, %v766
  %v1165 = vmul.f32 %v1164, %v1163
  %v1166 = vmul.f32 0.5, %v1165
  %v1167 = vsub.f32 1.5, %v1166
  %v1168 = vmul.f32 %v1163, %v1167
  %vm1169 = vweird.f32 %v766
  %vm1170 = vweird.f32 %v1163
  %vm1171 = vmor %vm1169, %vm1170
  %v1172 = vsel %vm1171, %v1163, %v1168
  %v1173 = vrsqrt.pop %v767
  %v1174 = vmul.f32 %v1173, %v767
  %v1175 = vmul.f32 %v1174, %v1173
  %v1176 = vmul.f32 0.5, %v1175
  %v1177 = vsub.f32 1.5, %v1176
  %v1178 = vmul.f32 %v1173, %v1177
  %vm1179 = vweird.f32 %v767
  %vm1180 = vweird.f32 %v1173
  %vm1181 = vmor %vm1179, %vm1180
  %v1182 = vsel %vm1181, %v1173, %v1178
  %v1183 = vrsqrt.pop %v768
  %v1184 = vmul.f32 %v1183, %v768
  %v1185 = vmul.f32 %v1184, %v1183
  %v1186 = vmul.f32 0.5, %v1185
  %v1187 = vsub.f32 1.5, %v1186
  %v1188 = vmul.f32 %v1183, %v1187
  %vm1189 = vweird.f32 %v768
  %vm1190 = vweird.f32 %v1183
  %vm1191 = vmor %vm1189, %vm1190
  %v1192 = vsel %vm1191, %v1183, %v1188
  %v1193 = vrsqrt.pop %v769
  %v1194 = vmul.f32 %v1193, %v769
  %v1195 = vmul.f32 %v1194, %v1193
  %v1196 = vmul.f32 0.5, %v1195
  %v1197 = vsub.f32 1.5, %v1196
  %v1198 = vmul.f32 %v1193, %v1197
  %vm1199 = vweird.f32 %v769
  %vm1200 = vweird.f32 %v1193
  %vm1201 = vmor %vm1199, %vm1200
  %v1202 = vsel %vm1201, %v1193, %v1198
  %v1203 = vrsqrt.pop %v770
  %v1204 = vmul.f32 %v1203, %v770
  %v1205 = vmul.f32 %v1204, %v1203
  %v1206 = vmul.f32 0.5, %v1205
  %v1207 = vsub.f32 1.5, %v1206
  %v1208 = vmul.f32 %v1203, %v1207
  %vm1209 = vweird.f32 %v770
  %vm1210 = vweird.f32 %v1203
  %vm1211 = vmor %vm1209, %vm1210
  %v1212 = vsel %vm1211, %v1203, %v1208
  %v1213 = vrsqrt.pop %v771
  %v1214 = vmul.f32 %v1213, %v771
  %v1215 = vmul.f32 %v1214, %v1213
  %v1216 = vmul.f32 0.5, %v1215
  %v1217 = vsub.f32 1.5, %v1216
  %v1218 = vmul.f32 %v1213, %v1217
  %vm1219 = vweird.f32 %v771
  %vm1220 = vweird.f32 %v1213
  %vm1221 = vmor %vm1219, %vm1220
  %v1222 = vsel %vm1221, %v1213, %v1218
  %v1223 = vrsqrt.pop %v772
  %v1224 = vmul.f32 %v1223, %v772
  %v1225 = vmul.f32 %v1224, %v1223
  %v1226 = vmul.f32 0.5, %v1225
  %v1227 = vsub.f32 1.5, %v1226
  %v1228 = vmul.f32 %v1223, %v1227
  %vm1229 = vweird.f32 %v772
  %vm1230 = vweird.f32 %v1223
  %vm1231 = vmor %vm1229, %vm1230
  %v1232 = vsel %vm1231, %v1223, %v1228
  %v1233 = vrsqrt.pop %v773
  %v1234 = vmul.f32 %v1233, %v773
  %v1235 = vmul.f32 %v1234, %v1233
  %v1236 = vmul.f32 0.5, %v1235
  %v1237 = vsub.f32 1.5, %v1236
  %v1238 = vmul.f32 %v1233, %v1237
  %vm1239 = vweird.f32 %v773
  %vm1240 = vweird.f32 %v1233
  %vm1241 = vmor %vm1239, %vm1240
  %v1242 = vsel %vm1241, %v1233, %v1238
  %v1243 = vrsqrt.pop %v774
  %v1244 = vmul.f32 %v1243, %v774
  %v1245 = vmul.f32 %v1244, %v1243
  %v1246 = vmul.f32 0.5, %v1245
  %v1247 = vsub.f32 1.5, %v1246
  %v1248 = vmul.f32 %v1243, %v1247
  %vm1249 = vweird.f32 %v774
  %vm1250 = vweird.f32 %v1243
  %vm1251 = vmor %vm1249, %vm1250
  %v1252 = vsel %vm1251, %v1243, %v1248
  %v1253 = vrsqrt.pop %v775
  %v1254 = vmul.f32 %v1253, %v775
  %v1255 = vmul.f32 %v1254, %v1253
  %v1256 = vmul.f32 0.5, %v1255
  %v1257 = vsub.f32 1.5, %v1256
  %v1258 = vmul.f32 %v1253, %v1257
  %vm1259 = vweird.f32 %v775
  %vm1260 = vweird.f32 %v1253
  %vm1261 = vmor %vm1259, %vm1260
  %v1262 = vsel %vm1261, %v1253, %v1258
  %v1263 = vrsqrt.pop %v776
  %v1264 = vmul.f32 %v1263, %v776
  %v1265 = vmul.f32 %v1264, %v1263
  %v1266 = vmul.f32 0.5, %v1265
  %v1267 = vsub.f32 1.5, %v1266
  %v1268 = vmul.f32 %v1263, %v1267
  %vm1269 = vweird.f32 %v776
  %vm1270 = vweird.f32 %v1263
  %vm1271 = vmor %vm1269, %vm1270
  %v1272 = vsel %vm1271, %v1263, %v1268
  %v1273 = vrsqrt.pop %v777
  %v1274 = vmul.f32 %v1273, %v777
  %v1275 = vmul.f32 %v1274, %v1273
  %v1276 = vmul.f32 0.5, %v1275
  %v1277 = vsub.f32 1.5, %v1276
  %v1278 = vmul.f32 %v1273, %v1277
  %vm1279 = vweird.f32 %v777
  %vm1280 = vweird.f32 %v1273
  %vm1281 = vmor %vm1279, %vm1280
  %v1282 = vsel %vm1281, %v1273, %v1278
  %v1283 = vrsqrt.pop %v778
  %v1284 = vmul.f32 %v1283, %v778
  %v1285 = vmul.f32 %v1284, %v1283
  %v1286 = vmul.f32 0.5, %v1285
  %v1287 = vsub.f32 1.5, %v1286
  %v1288 = vmul.f32 %v1283, %v1287
  %vm1289 = vweird.f32 %v778
  %vm1290 = vweird.f32 %v1283
  %vm1291 = vmor %vm1289, %vm1290
  %v1292 = vsel %vm1291, %v1283, %v1288
  %v1293 = vrsqrt.pop %v779
  %v1294 = vmul.f32 %v1293, %v779
  %v1295 = vmul.f32 %v1294, %v1293
  %v1296 = vmul.f32 0.5, %v1295
  %v1297 = vsub.f32 1.5, %v1296
  %v1298 = vmul.f32 %v1293, %v1297
  %vm1299 = vweird.f32 %v779
  %vm1300 = vweird.f32 %v1293
  %vm1301 = vmor %vm1299, %vm1300
  %v1302 = vsel %vm1301, %v1293, %v1298
  %v1303 = vrsqrt.pop %v780
  %v1304 = vmul.f32 %v1303, %v780
  %v1305 = vmul.f32 %v1304, %v1303
  %v1306 = vmul.f32 0.5, %v1305
  %v1307 = vsub.f32 1.5, %v1306
  %v1308 = vmul.f32 %v1303, %v1307
  %vm1309 = vweird.f32 %v780
  %vm1310 = vweird.f32 %v1303
  %vm1311 = vmor %vm1309, %vm1310
  %v1312 = vsel %vm1311, %v1303, %v1308
  %v1313 = vrsqrt.pop %v781
  %v1314 = vmul.f32 %v1313, %v781
  %v1315 = vmul.f32 %v1314, %v1313
  %v1316 = vmul.f32 0.5, %v1315
  %v1317 = vsub.f32 1.5, %v1316
  %v1318 = vmul.f32 %v1313, %v1317
  %vm1319 = vweird.f32 %v781
  %vm1320 = vweird.f32 %v1313
  %vm1321 = vmor %vm1319, %vm1320
  %v1322 = vsel %vm1321, %v1313, %v1318
  %v1323 = vrsqrt.pop %v782
  %v1324 = vmul.f32 %v1323, %v782
  %v1325 = vmul.f32 %v1324, %v1323
  %v1326 = vmul.f32 0.5, %v1325
  %v1327 = vsub.f32 1.5, %v1326
  %v1328 = vmul.f32 %v1323, %v1327
  %vm1329 = vweird.f32 %v782
  %vm1330 = vweird.f32 %v1323
  %vm1331 = vmor %vm1329, %vm1330
  %v1332 = vsel %vm1331, %v1323, %v1328
  %v1333 = vrsqrt.pop %v783
  %v1334 = vmul.f32 %v1333, %v783
  %v1335 = vmul.f32 %v1334, %v1333
  %v1336 = vmul.f32 0.5, %v1335
  %v1337 = vsub.f32 1.5, %v1336
  %v1338 = vmul.f32 %v1333, %v1337
  %vm1339 = vweird.f32 %v783
  %vm1340 = vweird.f32 %v1333
  %vm1341 = vmor %vm1339, %vm1340
  %v1342 = vsel %vm1341, %v1333, %v1338
  %v1343 = vrsqrt.pop %v784
  %v1344 = vmul.f32 %v1343, %v784
  %v1345 = vmul.f32 %v1344, %v1343
  %v1346 = vmul.f32 0.5, %v1345
  %v1347 = vsub.f32 1.5, %v1346
  %v1348 = vmul.f32 %v1343, %v1347
  %vm1349 = vweird.f32 %v784
  %vm1350 = vweird.f32 %v1343
  %vm1351 = vmor %vm1349, %vm1350
  %v1352 = vsel %vm1351, %v1343, %v1348
  %v1353 = vrsqrt.pop %v785
  %v1354 = vmul.f32 %v1353, %v785
  %v1355 = vmul.f32 %v1354, %v1353
  %v1356 = vmul.f32 0.5, %v1355
  %v1357 = vsub.f32 1.5, %v1356
  %v1358 = vmul.f32 %v1353, %v1357
  %vm1359 = vweird.f32 %v785
  %vm1360 = vweird.f32 %v1353
  %vm1361 = vmor %vm1359, %vm1360
  %v1362 = vsel %vm1361, %v1353, %v1358
  %v1363 = vrsqrt.pop %v786
  %v1364 = vmul.f32 %v1363, %v786
  %v1365 = vmul.f32 %v1364, %v1363
  %v1366 = vmul.f32 0.5, %v1365
  %v1367 = vsub.f32 1.5, %v1366
  %v1368 = vmul.f32 %v1363, %v1367
  %vm1369 = vweird.f32 %v786
  %vm1370 = vweird.f32 %v1363
  %vm1371 = vmor %vm1369, %vm1370
  %v1372 = vsel %vm1371, %v1363, %v1368
  %v1373 = vrsqrt.pop %v787
  %v1374 = vmul.f32 %v1373, %v787
  %v1375 = vmul.f32 %v1374, %v1373
  %v1376 = vmul.f32 0.5, %v1375
  %v1377 = vsub.f32 1.5, %v1376
  %v1378 = vmul.f32 %v1373, %v1377
  %vm1379 = vweird.f32 %v787
  %vm1380 = vweird.f32 %v1373
  %vm1381 = vmor %vm1379, %vm1380
  %v1382 = vsel %vm1381, %v1373, %v1378
  %v1383 = vrsqrt.pop %v788
  %v1384 = vmul.f32 %v1383, %v788
  %v1385 = vmul.f32 %v1384, %v1383
  %v1386 = vmul.f32 0.5, %v1385
  %v1387 = vsub.f32 1.5, %v1386
  %v1388 = vmul.f32 %v1383, %v1387
  %vm1389 = vweird.f32 %v788
  %vm1390 = vweird.f32 %v1383
  %vm1391 = vmor %vm1389, %vm1390
  %v1392 = vsel %vm1391, %v1383, %v1388
  %v1393 = vrsqrt.pop %v789
  %v1394 = vmul.f32 %v1393, %v789
  %v1395 = vmul.f32 %v1394, %v1393
  %v1396 = vmul.f32 0.5, %v1395
  %v1397 = vsub.f32 1.5, %v1396
  %v1398 = vmul.f32 %v1393, %v1397
  %vm1399 = vweird.f32 %v789
  %vm1400 = vweird.f32 %v1393
  %vm1401 = vmor %vm1399, %vm1400
  %v1402 = vsel %vm1401, %v1393, %v1398
  %v1403 = vrsqrt.pop %v790
  %v1404 = vmul.f32 %v1403, %v790
  %v1405 = vmul.f32 %v1404, %v1403
  %v1406 = vmul.f32 0.5, %v1405
  %v1407 = vsub.f32 1.5, %v1406
  %v1408 = vmul.f32 %v1403, %v1407
  %vm1409 = vweird.f32 %v790
  %vm1410 = vweird.f32 %v1403
  %vm1411 = vmor %vm1409, %vm1410
  %v1412 = vsel %vm1411, %v1403, %v1408
  %v1413 = vrsqrt.pop %v791
  %v1414 = vmul.f32 %v1413, %v791
  %v1415 = vmul.f32 %v1414, %v1413
  %v1416 = vmul.f32 0.5, %v1415
  %v1417 = vsub.f32 1.5, %v1416
  %v1418 = vmul.f32 %v1413, %v1417
  %vm1419 = vweird.f32 %v791
  %vm1420 = vweird.f32 %v1413
  %vm1421 = vmor %vm1419, %vm1420
  %v1422 = vsel %vm1421, %v1413, %v1418
  %v1423 = vrsqrt.pop %v792
  %v1424 = vmul.f32 %v1423, %v792
  %v1425 = vmul.f32 %v1424, %v1423
  %v1426 = vmul.f32 0.5, %v1425
  %v1427 = vsub.f32 1.5, %v1426
  %v1428 = vmul.f32 %v1423, %v1427
  %vm1429 = vweird.f32 %v792
  %vm1430 = vweird.f32 %v1423
  %vm1431 = vmor %vm1429, %vm1430
  %v1432 = vsel %vm1431, %v1423, %v1428
  %v1433 = vmul.f32 %v345, %v802
  %v1434 = vmul.f32 %v346, %v812
  %v1435 = vmul.f32 %v347, %v822
  %v1436 = vmul.f32 %v348, %v832
  %v1437 = vmul.f32 %v349, %v842
  %v1438 = vmul.f32 %v350, %v852
  %v1439 = vmul.f32 %v351, %v862
  %v1440 = vmul.f32 %v352, %v872
  %v1441 = vmul.f32 %v353, %v882
  %v1442 = vmul.f32 %v354, %v892
  %v1443 = vmul.f32 %v355, %v902
  %v1444 = vmul.f32 %v356, %v912
  %v1445 = vmul.f32 %v357, %v922
  %v1446 = vmul.f32 %v358, %v932
  %v1447 = vmul.f32 %v359, %v942
  %v1448 = vmul.f32 %v360, %v952
  %v1449 = vmul.f32 %v361, %v962
  %v1450 = vmul.f32 %v362, %v972
  %v1451 = vmul.f32 %v363, %v982
  %v1452 = vmul.f32 %v364, %v992
  %v1453 = vmul.f32 %v365, %v1002
  %v1454 = vmul.f32 %v366, %v1012
  %v1455 = vmul.f32 %v367, %v1022
  %v1456 = vmul.f32 %v368, %v1032
  %v1457 = vmul.f32 %v369, %v1042
  %v1458 = vmul.f32 %v370, %v1052
  %v1459 = vmul.f32 %v371, %v1062
  %v1460 = vmul.f32 %v372, %v1072
  %v1461 = vmul.f32 %v373, %v1082
  %v1462 = vmul.f32 %v374, %v1092
  %v1463 = vmul.f32 %v375, %v1102
  %v1464 = vmul.f32 %v376, %v1112
  %v1465 = vmul.f32 %v377, %v1122
  %v1466 = vmul.f32 %v378, %v1132
  %v1467 = vmul.f32 %v379, %v1142
  %v1468 = vmul.f32 %v380, %v1152
  %v1469 = vmul.f32 %v381, %v1162
  %v1470 = vmul.f32 %v382, %v1172
  %v1471 = vmul.f32 %v383, %v1182
  %v1472 = vmul.f32 %v384, %v1192
  %v1473 = vmul.f32 %v385, %v1202
  %v1474 = vmul.f32 %v386, %v1212
  %v1475 = vmul.f32 %v387, %v1222
  %v1476 = vmul.f32 %v388, %v1232
  %v1477 = vmul.f32 %v389, %v1242
  %v1478 = vmul.f32 %v390, %v1252
  %v1479 = vmul.f32 %v391, %v1262
  %v1480 = vmul.f32 %v392, %v1272
  %v1481 = vmul.f32 %v393, %v1282
  %v1482 = vmul.f32 %v394, %v1292
  %v1483 = vmul.f32 %v395, %v1302
  %v1484 = vmul.f32 %v396, %v1312
  %v1485 = vmul.f32 %v397, %v1322
  %v1486 = vmul.f32 %v398, %v1332
  %v1487 = vmul.f32 %v399, %v1342
  %v1488 = vmul.f32 %v400, %v1352
  %v1489 = vmul.f32 %v401, %v1362
  %v1490 = vmul.f32 %v402, %v1372
  %v1491 = vmul.f32 %v403, %v1382
  %v1492 = vmul.f32 %v404, %v1392
  %v1493 = vmul.f32 %v405, %v1402
  %v1494 = vmul.f32 %v406, %v1412
  %v1495 = vmul.f32 %v407, %v1422
  %v1496 = vmul.f32 %v408, %v1432
  %v1497 = vld [vmem:[%s2] sm:$0x1]
  %v1499 = vperm.slane %v1497, 0
  %v1501 = vmul.f32 %v1433, %v1499
  %v1502 = vmul.f32 %v1434, %v1499
  %v1503 = vmul.f32 %v1435, %v1499
  %v1504 = vmul.f32 %v1436, %v1499
  %v1505 = vmul.f32 %v1437, %v1499
  %v1506 = vmul.f32 %v1438, %v1499
  %v1507 = vmul.f32 %v1439, %v1499
  %v1508 = vmul.f32 %v1440, %v1499
  %v1509 = vmul.f32 %v1441, %v1499
  %v1510 = vmul.f32 %v1442, %v1499
  %v1511 = vmul.f32 %v1443, %v1499
  %v1512 = vmul.f32 %v1444, %v1499
  %v1513 = vmul.f32 %v1445, %v1499
  %v1514 = vmul.f32 %v1446, %v1499
  %v1515 = vmul.f32 %v1447, %v1499
  %v1516 = vmul.f32 %v1448, %v1499
  %v1517 = vmul.f32 %v1449, %v1499
  %v1518 = vmul.f32 %v1450, %v1499
  %v1519 = vmul.f32 %v1451, %v1499
  %v1520 = vmul.f32 %v1452, %v1499
  %v1521 = vmul.f32 %v1453, %v1499
  %v1522 = vmul.f32 %v1454, %v1499
  %v1523 = vmul.f32 %v1455, %v1499
  %v1524 = vmul.f32 %v1456, %v1499
  %v1525 = vmul.f32 %v1457, %v1499
  %v1526 = vmul.f32 %v1458, %v1499
  %v1527 = vmul.f32 %v1459, %v1499
  %v1528 = vmul.f32 %v1460, %v1499
  %v1529 = vmul.f32 %v1461, %v1499
  %v1530 = vmul.f32 %v1462, %v1499
  %v1531 = vmul.f32 %v1463, %v1499
  %v1532 = vmul.f32 %v1464, %v1499
  %v1533 = vmul.f32 %v1465, %v1499
  %v1534 = vmul.f32 %v1466, %v1499
  %v1535 = vmul.f32 %v1467, %v1499
  %v1536 = vmul.f32 %v1468, %v1499
  %v1537 = vmul.f32 %v1469, %v1499
  %v1538 = vmul.f32 %v1470, %v1499
  %v1539 = vmul.f32 %v1471, %v1499
  %v1540 = vmul.f32 %v1472, %v1499
  %v1541 = vmul.f32 %v1473, %v1499
  %v1542 = vmul.f32 %v1474, %v1499
  %v1543 = vmul.f32 %v1475, %v1499
  %v1544 = vmul.f32 %v1476, %v1499
  %v1545 = vmul.f32 %v1477, %v1499
  %v1546 = vmul.f32 %v1478, %v1499
  %v1547 = vmul.f32 %v1479, %v1499
  %v1548 = vmul.f32 %v1480, %v1499
  %v1549 = vmul.f32 %v1481, %v1499
  %v1550 = vmul.f32 %v1482, %v1499
  %v1551 = vmul.f32 %v1483, %v1499
  %v1552 = vmul.f32 %v1484, %v1499
  %v1553 = vmul.f32 %v1485, %v1499
  %v1554 = vmul.f32 %v1486, %v1499
  %v1555 = vmul.f32 %v1487, %v1499
  %v1556 = vmul.f32 %v1488, %v1499
  %v1557 = vmul.f32 %v1489, %v1499
  %v1558 = vmul.f32 %v1490, %v1499
  %v1559 = vmul.f32 %v1491, %v1499
  %v1560 = vmul.f32 %v1492, %v1499
  %v1561 = vmul.f32 %v1493, %v1499
  %v1562 = vmul.f32 %v1494, %v1499
  %v1563 = vmul.f32 %v1495, %v1499
  %v1564 = vmul.f32 %v1496, %v1499
  %v1565 = vld [vmem:[%s3] sm:$0x1]
  %v1567 = vperm.slane %v1565, 0
  %v1569 = vadd.f32 %v1501, %v1567
  %v1570 = vadd.f32 %v1502, %v1567
  %v1571 = vadd.f32 %v1503, %v1567
  %v1572 = vadd.f32 %v1504, %v1567
  %v1573 = vadd.f32 %v1505, %v1567
  %v1574 = vadd.f32 %v1506, %v1567
  %v1575 = vadd.f32 %v1507, %v1567
  %v1576 = vadd.f32 %v1508, %v1567
  %v1577 = vadd.f32 %v1509, %v1567
  %v1578 = vadd.f32 %v1510, %v1567
  %v1579 = vadd.f32 %v1511, %v1567
  %v1580 = vadd.f32 %v1512, %v1567
  %v1581 = vadd.f32 %v1513, %v1567
  %v1582 = vadd.f32 %v1514, %v1567
  %v1583 = vadd.f32 %v1515, %v1567
  %v1584 = vadd.f32 %v1516, %v1567
  %v1585 = vadd.f32 %v1517, %v1567
  %v1586 = vadd.f32 %v1518, %v1567
  %v1587 = vadd.f32 %v1519, %v1567
  %v1588 = vadd.f32 %v1520, %v1567
  %v1589 = vadd.f32 %v1521, %v1567
  %v1590 = vadd.f32 %v1522, %v1567
  %v1591 = vadd.f32 %v1523, %v1567
  %v1592 = vadd.f32 %v1524, %v1567
  %v1593 = vadd.f32 %v1525, %v1567
  %v1594 = vadd.f32 %v1526, %v1567
  %v1595 = vadd.f32 %v1527, %v1567
  %v1596 = vadd.f32 %v1528, %v1567
  %v1597 = vadd.f32 %v1529, %v1567
  %v1598 = vadd.f32 %v1530, %v1567
  %v1599 = vadd.f32 %v1531, %v1567
  %v1600 = vadd.f32 %v1532, %v1567
  %v1601 = vadd.f32 %v1533, %v1567
  %v1602 = vadd.f32 %v1534, %v1567
  %v1603 = vadd.f32 %v1535, %v1567
  %v1604 = vadd.f32 %v1536, %v1567
  %v1605 = vadd.f32 %v1537, %v1567
  %v1606 = vadd.f32 %v1538, %v1567
  %v1607 = vadd.f32 %v1539, %v1567
  %v1608 = vadd.f32 %v1540, %v1567
  %v1609 = vadd.f32 %v1541, %v1567
  %v1610 = vadd.f32 %v1542, %v1567
  %v1611 = vadd.f32 %v1543, %v1567
  %v1612 = vadd.f32 %v1544, %v1567
  %v1613 = vadd.f32 %v1545, %v1567
  %v1614 = vadd.f32 %v1546, %v1567
  %v1615 = vadd.f32 %v1547, %v1567
  %v1616 = vadd.f32 %v1548, %v1567
  %v1617 = vadd.f32 %v1549, %v1567
  %v1618 = vadd.f32 %v1550, %v1567
  %v1619 = vadd.f32 %v1551, %v1567
  %v1620 = vadd.f32 %v1552, %v1567
  %v1621 = vadd.f32 %v1553, %v1567
  %v1622 = vadd.f32 %v1554, %v1567
  %v1623 = vadd.f32 %v1555, %v1567
  %v1624 = vadd.f32 %v1556, %v1567
  %v1625 = vadd.f32 %v1557, %v1567
  %v1626 = vadd.f32 %v1558, %v1567
  %v1627 = vadd.f32 %v1559, %v1567
  %v1628 = vadd.f32 %v1560, %v1567
  %v1629 = vadd.f32 %v1561, %v1567
  %v1630 = vadd.f32 %v1562, %v1567
  %v1631 = vadd.f32 %v1563, %v1567
  %v1632 = vadd.f32 %v1564, %v1567
  %v1633 = vld [vmem:[%s1] sm:$0xff]
  %v1634 = vld [vmem:[%s1 + $0x8] sm:$0xff]
  %v1635 = vld [vmem:[%s1 + $0x10] sm:$0xff]
  %v1636 = vld [vmem:[%s1 + $0x18] sm:$0xff]
  %v1637 = vld [vmem:[%s1 + $0x20] sm:$0xff]
  %v1638 = vld [vmem:[%s1 + $0x28] sm:$0xff]
  %v1639 = vld [vmem:[%s1 + $0x30] sm:$0xff]
  %v1640 = vld [vmem:[%s1 + $0x38] sm:$0xff]
  %v1641 = vld [vmem:[%s1 + $0x40] sm:$0xff]
  %v1642 = vld [vmem:[%s1 + $0x48] sm:$0xff]
  %v1643 = vld [vmem:[%s1 + $0x50] sm:$0xff]
  %v1644 = vld [vmem:[%s1 + $0x58] sm:$0xff]
  %v1645 = vld [vmem:[%s1 + $0x60] sm:$0xff]
  %v1646 = vld [vmem:[%s1 + $0x68] sm:$0xff]
  %v1647 = vld [vmem:[%s1 + $0x70] sm:$0xff]
  %v1648 = vld [vmem:[%s1 + $0x78] sm:$0xff]
  %v1649 = vld [vmem:[%s1 + $0x80] sm:$0xff]
  %v1650 = vld [vmem:[%s1 + $0x88] sm:$0xff]
  %v1651 = vld [vmem:[%s1 + $0x90] sm:$0xff]
  %v1652 = vld [vmem:[%s1 + $0x98] sm:$0xff]
  %v1653 = vld [vmem:[%s1 + $0xa0] sm:$0xff]
  %v1654 = vld [vmem:[%s1 + $0xa8] sm:$0xff]
  %v1655 = vld [vmem:[%s1 + $0xb0] sm:$0xff]
  %v1656 = vld [vmem:[%s1 + $0xb8] sm:$0xff]
  %v1657 = vld [vmem:[%s1 + $0xc0] sm:$0xff]
  %v1658 = vld [vmem:[%s1 + $0xc8] sm:$0xff]
  %v1659 = vld [vmem:[%s1 + $0xd0] sm:$0xff]
  %v1660 = vld [vmem:[%s1 + $0xd8] sm:$0xff]
  %v1661 = vld [vmem:[%s1 + $0xe0] sm:$0xff]
  %v1662 = vld [vmem:[%s1 + $0xe8] sm:$0xff]
  %v1663 = vld [vmem:[%s1 + $0xf0] sm:$0xff]
  %v1664 = vld [vmem:[%s1 + $0xf8] sm:$0xff]
  %v1665 = vld [vmem:[%s1 + $0x100] sm:$0xff]
  %v1666 = vld [vmem:[%s1 + $0x108] sm:$0xff]
  %v1667 = vld [vmem:[%s1 + $0x110] sm:$0xff]
  %v1668 = vld [vmem:[%s1 + $0x118] sm:$0xff]
  %v1669 = vld [vmem:[%s1 + $0x120] sm:$0xff]
  %v1670 = vld [vmem:[%s1 + $0x128] sm:$0xff]
  %v1671 = vld [vmem:[%s1 + $0x130] sm:$0xff]
  %v1672 = vld [vmem:[%s1 + $0x138] sm:$0xff]
  %v1673 = vld [vmem:[%s1 + $0x140] sm:$0xff]
  %v1674 = vld [vmem:[%s1 + $0x148] sm:$0xff]
  %v1675 = vld [vmem:[%s1 + $0x150] sm:$0xff]
  %v1676 = vld [vmem:[%s1 + $0x158] sm:$0xff]
  %v1677 = vld [vmem:[%s1 + $0x160] sm:$0xff]
  %v1678 = vld [vmem:[%s1 + $0x168] sm:$0xff]
  %v1679 = vld [vmem:[%s1 + $0x170] sm:$0xff]
  %v1680 = vld [vmem:[%s1 + $0x178] sm:$0xff]
  %v1681 = vld [vmem:[%s1 + $0x180] sm:$0xff]
  %v1682 = vld [vmem:[%s1 + $0x188] sm:$0xff]
  %v1683 = vld [vmem:[%s1 + $0x190] sm:$0xff]
  %v1684 = vld [vmem:[%s1 + $0x198] sm:$0xff]
  %v1685 = vld [vmem:[%s1 + $0x1a0] sm:$0xff]
  %v1686 = vld [vmem:[%s1 + $0x1a8] sm:$0xff]
  %v1687 = vld [vmem:[%s1 + $0x1b0] sm:$0xff]
  %v1688 = vld [vmem:[%s1 + $0x1b8] sm:$0xff]
  %v1689 = vld [vmem:[%s1 + $0x1c0] sm:$0xff]
  %v1690 = vld [vmem:[%s1 + $0x1c8] sm:$0xff]
  %v1691 = vld [vmem:[%s1 + $0x1d0] sm:$0xff]
  %v1692 = vld [vmem:[%s1 + $0x1d8] sm:$0xff]
  %v1693 = vld [vmem:[%s1 + $0x1e0] sm:$0xff]
  %v1694 = vld [vmem:[%s1 + $0x1e8] sm:$0xff]
  %v1695 = vld [vmem:[%s1 + $0x1f0] sm:$0xff]
  %v1696 = vld [vmem:[%s1 + $0x1f8] sm:$0xff]
  %v1697 = vadd.f32 %v1569, %v1633
  %v1698 = vadd.f32 %v1570, %v1634
  %v1699 = vadd.f32 %v1571, %v1635
  %v1700 = vadd.f32 %v1572, %v1636
  %v1701 = vadd.f32 %v1573, %v1637
  %v1702 = vadd.f32 %v1574, %v1638
  %v1703 = vadd.f32 %v1575, %v1639
  %v1704 = vadd.f32 %v1576, %v1640
  %v1705 = vadd.f32 %v1577, %v1641
  %v1706 = vadd.f32 %v1578, %v1642
  %v1707 = vadd.f32 %v1579, %v1643
  %v1708 = vadd.f32 %v1580, %v1644
  %v1709 = vadd.f32 %v1581, %v1645
  %v1710 = vadd.f32 %v1582, %v1646
  %v1711 = vadd.f32 %v1583, %v1647
  %v1712 = vadd.f32 %v1584, %v1648
  %v1713 = vadd.f32 %v1585, %v1649
  %v1714 = vadd.f32 %v1586, %v1650
  %v1715 = vadd.f32 %v1587, %v1651
  %v1716 = vadd.f32 %v1588, %v1652
  %v1717 = vadd.f32 %v1589, %v1653
  %v1718 = vadd.f32 %v1590, %v1654
  %v1719 = vadd.f32 %v1591, %v1655
  %v1720 = vadd.f32 %v1592, %v1656
  %v1721 = vadd.f32 %v1593, %v1657
  %v1722 = vadd.f32 %v1594, %v1658
  %v1723 = vadd.f32 %v1595, %v1659
  %v1724 = vadd.f32 %v1596, %v1660
  %v1725 = vadd.f32 %v1597, %v1661
  %v1726 = vadd.f32 %v1598, %v1662
  %v1727 = vadd.f32 %v1599, %v1663
  %v1728 = vadd.f32 %v1600, %v1664
  %v1729 = vadd.f32 %v1601, %v1665
  %v1730 = vadd.f32 %v1602, %v1666
  %v1731 = vadd.f32 %v1603, %v1667
  %v1732 = vadd.f32 %v1604, %v1668
  %v1733 = vadd.f32 %v1605, %v1669
  %v1734 = vadd.f32 %v1606, %v1670
  %v1735 = vadd.f32 %v1607, %v1671
  %v1736 = vadd.f32 %v1608, %v1672
  %v1737 = vadd.f32 %v1609, %v1673
  %v1738 = vadd.f32 %v1610, %v1674
  %v1739 = vadd.f32 %v1611, %v1675
  %v1740 = vadd.f32 %v1612, %v1676
  %v1741 = vadd.f32 %v1613, %v1677
  %v1742 = vadd.f32 %v1614, %v1678
  %v1743 = vadd.f32 %v1615, %v1679
  %v1744 = vadd.f32 %v1616, %v1680
  %v1745 = vadd.f32 %v1617, %v1681
  %v1746 = vadd.f32 %v1618, %v1682
  %v1747 = vadd.f32 %v1619, %v1683
  %v1748 = vadd.f32 %v1620, %v1684
  %v1749 = vadd.f32 %v1621, %v1685
  %v1750 = vadd.f32 %v1622, %v1686
  %v1751 = vadd.f32 %v1623, %v1687
  %v1752 = vadd.f32 %v1624, %v1688
  %v1753 = vadd.f32 %v1625, %v1689
  %v1754 = vadd.f32 %v1626, %v1690
  %v1755 = vadd.f32 %v1627, %v1691
  %v1756 = vadd.f32 %v1628, %v1692
  %v1757 = vadd.f32 %v1629, %v1693
  %v1758 = vadd.f32 %v1630, %v1694
  %v1759 = vadd.f32 %v1631, %v1695
  %v1760 = vadd.f32 %v1632, %v1696
  %v1761 = vmax.f32 %v1697, 0.0
  %v1762 = vmax.f32 %v1698, 0.0
  %v1763 = vmax.f32 %v1699, 0.0
  %v1764 = vmax.f32 %v1700, 0.0
  %v1765 = vmax.f32 %v1701, 0.0
  %v1766 = vmax.f32 %v1702, 0.0
  %v1767 = vmax.f32 %v1703, 0.0
  %v1768 = vmax.f32 %v1704, 0.0
  %v1769 = vmax.f32 %v1705, 0.0
  %v1770 = vmax.f32 %v1706, 0.0
  %v1771 = vmax.f32 %v1707, 0.0
  %v1772 = vmax.f32 %v1708, 0.0
  %v1773 = vmax.f32 %v1709, 0.0
  %v1774 = vmax.f32 %v1710, 0.0
  %v1775 = vmax.f32 %v1711, 0.0
  %v1776 = vmax.f32 %v1712, 0.0
  %v1777 = vmax.f32 %v1713, 0.0
  %v1778 = vmax.f32 %v1714, 0.0
  %v1779 = vmax.f32 %v1715, 0.0
  %v1780 = vmax.f32 %v1716, 0.0
  %v1781 = vmax.f32 %v1717, 0.0
  %v1782 = vmax.f32 %v1718, 0.0
  %v1783 = vmax.f32 %v1719, 0.0
  %v1784 = vmax.f32 %v1720, 0.0
  %v1785 = vmax.f32 %v1721, 0.0
  %v1786 = vmax.f32 %v1722, 0.0
  %v1787 = vmax.f32 %v1723, 0.0
  %v1788 = vmax.f32 %v1724, 0.0
  %v1789 = vmax.f32 %v1725, 0.0
  %v1790 = vmax.f32 %v1726, 0.0
  %v1791 = vmax.f32 %v1727, 0.0
  %v1792 = vmax.f32 %v1728, 0.0
  %v1793 = vmax.f32 %v1729, 0.0
  %v1794 = vmax.f32 %v1730, 0.0
  %v1795 = vmax.f32 %v1731, 0.0
  %v1796 = vmax.f32 %v1732, 0.0
  %v1797 = vmax.f32 %v1733, 0.0
  %v1798 = vmax.f32 %v1734, 0.0
  %v1799 = vmax.f32 %v1735, 0.0
  %v1800 = vmax.f32 %v1736, 0.0
  %v1801 = vmax.f32 %v1737, 0.0
  %v1802 = vmax.f32 %v1738, 0.0
  %v1803 = vmax.f32 %v1739, 0.0
  %v1804 = vmax.f32 %v1740, 0.0
  %v1805 = vmax.f32 %v1741, 0.0
  %v1806 = vmax.f32 %v1742, 0.0
  %v1807 = vmax.f32 %v1743, 0.0
  %v1808 = vmax.f32 %v1744, 0.0
  %v1809 = vmax.f32 %v1745, 0.0
  %v1810 = vmax.f32 %v1746, 0.0
  %v1811 = vmax.f32 %v1747, 0.0
  %v1812 = vmax.f32 %v1748, 0.0
  %v1813 = vmax.f32 %v1749, 0.0
  %v1814 = vmax.f32 %v1750, 0.0
  %v1815 = vmax.f32 %v1751, 0.0
  %v1816 = vmax.f32 %v1752, 0.0
  %v1817 = vmax.f32 %v1753, 0.0
  %v1818 = vmax.f32 %v1754, 0.0
  %v1819 = vmax.f32 %v1755, 0.0
  %v1820 = vmax.f32 %v1756, 0.0
  %v1821 = vmax.f32 %v1757, 0.0
  %v1822 = vmax.f32 %v1758, 0.0
  %v1823 = vmax.f32 %v1759, 0.0
  %v1824 = vmax.f32 %v1760, 0.0
  %1825 = vst.msk [vmem:[%s4] sm:$0xff] %vm81, %v1761
  %1826 = vst.msk [vmem:[%s4 + $0x8] sm:$0xff] %vm81, %v1762
  %1827 = vst.msk [vmem:[%s4 + $0x10] sm:$0xff] %vm81, %v1763
  %1828 = vst.msk [vmem:[%s4 + $0x18] sm:$0xff] %vm81, %v1764
  %1829 = vst.msk [vmem:[%s4 + $0x20] sm:$0xff] %vm81, %v1765
  %1830 = vst.msk [vmem:[%s4 + $0x28] sm:$0xff] %vm81, %v1766
  %1831 = vst.msk [vmem:[%s4 + $0x30] sm:$0xff] %vm81, %v1767
  %1832 = vst.msk [vmem:[%s4 + $0x38] sm:$0xff] %vm81, %v1768
  %1833 = vst.msk [vmem:[%s4 + $0x40] sm:$0xff] %vm81, %v1769
  %1834 = vst.msk [vmem:[%s4 + $0x48] sm:$0xff] %vm81, %v1770
  %1835 = vst.msk [vmem:[%s4 + $0x50] sm:$0xff] %vm81, %v1771
  %1836 = vst.msk [vmem:[%s4 + $0x58] sm:$0xff] %vm81, %v1772
  %1837 = vst.msk [vmem:[%s4 + $0x60] sm:$0xff] %vm81, %v1773
  %1838 = vst.msk [vmem:[%s4 + $0x68] sm:$0xff] %vm81, %v1774
  %1839 = vst.msk [vmem:[%s4 + $0x70] sm:$0xff] %vm81, %v1775
  %1840 = vst.msk [vmem:[%s4 + $0x78] sm:$0xff] %vm81, %v1776
  %1841 = vst.msk [vmem:[%s4 + $0x80] sm:$0xff] %vm81, %v1777
  %1842 = vst.msk [vmem:[%s4 + $0x88] sm:$0xff] %vm81, %v1778
  %1843 = vst.msk [vmem:[%s4 + $0x90] sm:$0xff] %vm81, %v1779
  %1844 = vst.msk [vmem:[%s4 + $0x98] sm:$0xff] %vm81, %v1780
  %1845 = vst.msk [vmem:[%s4 + $0xa0] sm:$0xff] %vm81, %v1781
  %1846 = vst.msk [vmem:[%s4 + $0xa8] sm:$0xff] %vm81, %v1782
  %1847 = vst.msk [vmem:[%s4 + $0xb0] sm:$0xff] %vm81, %v1783
  %1848 = vst.msk [vmem:[%s4 + $0xb8] sm:$0xff] %vm81, %v1784
  %1849 = vst.msk [vmem:[%s4 + $0xc0] sm:$0xff] %vm81, %v1785
  %1850 = vst.msk [vmem:[%s4 + $0xc8] sm:$0xff] %vm81, %v1786
  %1851 = vst.msk [vmem:[%s4 + $0xd0] sm:$0xff] %vm81, %v1787
  %1852 = vst.msk [vmem:[%s4 + $0xd8] sm:$0xff] %vm81, %v1788
  %1853 = vst.msk [vmem:[%s4 + $0xe0] sm:$0xff] %vm81, %v1789
  %1854 = vst.msk [vmem:[%s4 + $0xe8] sm:$0xff] %vm81, %v1790
  %1855 = vst.msk [vmem:[%s4 + $0xf0] sm:$0xff] %vm81, %v1791
  %1856 = vst.msk [vmem:[%s4 + $0xf8] sm:$0xff] %vm81, %v1792
  %1857 = vst.msk [vmem:[%s4 + $0x100] sm:$0xff] %vm81, %v1793
  %1858 = vst.msk [vmem:[%s4 + $0x108] sm:$0xff] %vm81, %v1794
  %1859 = vst.msk [vmem:[%s4 + $0x110] sm:$0xff] %vm81, %v1795
  %1860 = vst.msk [vmem:[%s4 + $0x118] sm:$0xff] %vm81, %v1796
  %1861 = vst.msk [vmem:[%s4 + $0x120] sm:$0xff] %vm81, %v1797
  %1862 = vst.msk [vmem:[%s4 + $0x128] sm:$0xff] %vm81, %v1798
  %1863 = vst.msk [vmem:[%s4 + $0x130] sm:$0xff] %vm81, %v1799
  %1864 = vst.msk [vmem:[%s4 + $0x138] sm:$0xff] %vm81, %v1800
  %1865 = vst.msk [vmem:[%s4 + $0x140] sm:$0xff] %vm81, %v1801
  %1866 = vst.msk [vmem:[%s4 + $0x148] sm:$0xff] %vm81, %v1802
  %1867 = vst.msk [vmem:[%s4 + $0x150] sm:$0xff] %vm81, %v1803
  %1868 = vst.msk [vmem:[%s4 + $0x158] sm:$0xff] %vm81, %v1804
  %1869 = vst.msk [vmem:[%s4 + $0x160] sm:$0xff] %vm81, %v1805
  %1870 = vst.msk [vmem:[%s4 + $0x168] sm:$0xff] %vm81, %v1806
  %1871 = vst.msk [vmem:[%s4 + $0x170] sm:$0xff] %vm81, %v1807
  %1872 = vst.msk [vmem:[%s4 + $0x178] sm:$0xff] %vm81, %v1808
  %1873 = vst.msk [vmem:[%s4 + $0x180] sm:$0xff] %vm81, %v1809
  %1874 = vst.msk [vmem:[%s4 + $0x188] sm:$0xff] %vm81, %v1810
  %1875 = vst.msk [vmem:[%s4 + $0x190] sm:$0xff] %vm81, %v1811
  %1876 = vst.msk [vmem:[%s4 + $0x198] sm:$0xff] %vm81, %v1812
  %1877 = vst.msk [vmem:[%s4 + $0x1a0] sm:$0xff] %vm81, %v1813
  %1878 = vst.msk [vmem:[%s4 + $0x1a8] sm:$0xff] %vm81, %v1814
  %1879 = vst.msk [vmem:[%s4 + $0x1b0] sm:$0xff] %vm81, %v1815
  %1880 = vst.msk [vmem:[%s4 + $0x1b8] sm:$0xff] %vm81, %v1816
  %1881 = vst.msk [vmem:[%s4 + $0x1c0] sm:$0xff] %vm81, %v1817
  %1882 = vst.msk [vmem:[%s4 + $0x1c8] sm:$0xff] %vm81, %v1818
  %1883 = vst.msk [vmem:[%s4 + $0x1d0] sm:$0xff] %vm81, %v1819
  %1884 = vst.msk [vmem:[%s4 + $0x1d8] sm:$0xff] %vm81, %v1820
  %1885 = vst.msk [vmem:[%s4 + $0x1e0] sm:$0xff] %vm81, %v1821
  %1886 = vst.msk [vmem:[%s4 + $0x1e8] sm:$0xff] %vm81, %v1822
  %1887 = vst.msk [vmem:[%s4 + $0x1f0] sm:$0xff] %vm81, %v1823
  %1888 = vst.msk [vmem:[%s4 + $0x1f8] sm:$0xff] %vm81, %v1824
  // Predicated region
  $region18: #{stt_forward.17} parent=0 // pred_check
    _
  $region19: #{stt_forward.17} parent=0 // pred_check_branch
    %1890 = sbr.rel (0) target = $region21
  $region20: #{stt_forward.17} parent=0 // pred_region
    _
  $region21: #{stt_forward.17} parent=0 // pred_fallthru
    _
  // Predicated region
  $region22: #{stt_forward.17} parent=0 // pred_check
    _
  $region23: #{stt_forward.17} parent=0 // pred_check_branch
    %1892 = sbr.rel (0) target = $region25
  $region24: #{stt_forward.17} parent=0 // pred_region
    _
  $region25: #{stt_forward.17} parent=0 // pred_fallthru
    _

// kernel: stt_forward.18
$region0: #{stt_forward.18}
  #allocation0 [shape = 'u32[]', space=smem, size = 0x4, offset = 0x4, fixed_abs, tag = 'smem constant byte address 0x4 - core index']
  #allocation1 [shape = 'u32[72,128]{1,0:T(1,128)}', space=vmem, size = 0x9000, scoped, tag = 'internal scratch']
  #allocation2 [shape = 'f32[16,128]{1,0:T(8,128)}', space=vmem, size = 0x2000, scoped, tag = 'scratch operand']
  %s0 = inlined_call_operand.vmem [shape: bf16[16,256], index: 0, kind: input, shape index: {}]
  %s1 = inlined_call_operand.vmem [shape: bf16[256,128], index: 1, kind: input, shape index: {}]
  %s2 = inlined_call_operand.vmem [shape: f32[1,128], index: 2, kind: input, shape index: {}]
  %s3 = inlined_call_operand.vmem [shape: f32[16,128], index: 3, kind: output, shape index: {}]
  %s4 = sld [smem:[#allocation0]]
  $region30: #{stt_forward.18} parent=0
    _
  %s6 = ssub.s32 1, %s4
  %s7 = scalar_select 0, %s6, %s4
  // Predicated region
  $region2: #{stt_forward.18} parent=0 // pred_check
    _
  $region3: #{stt_forward.18} parent=0 // pred_check_branch
    %9 = sbr.rel (0) target = $region5
  $region4: #{stt_forward.18} parent=0 // pred_region
    _
  $region5: #{stt_forward.18} parent=0 // pred_fallthru
    _
  // Predicated region
  $region6: #{stt_forward.18} parent=0 // pred_check
    _
  $region7: #{stt_forward.18} parent=0 // pred_check_branch
    %11 = sbr.rel (0) target = $region9
  $region8: #{stt_forward.18} parent=0 // pred_region
    _
  $region9: #{stt_forward.18} parent=0 // pred_fallthru
    _
  // Predicated region
  $region10: #{stt_forward.18} parent=0 // pred_check
    _
  $region11: #{stt_forward.18} parent=0 // pred_check_branch
    %13 = sbr.rel (0) target = $region13
  $region12: #{stt_forward.18} parent=0 // pred_region
    _
  $region13: #{stt_forward.18} parent=0 // pred_fallthru
    _
  %p14 = scmp.eq.s32.totalorder 0, 0
  // Predicated region
  $region14: #{stt_forward.18} parent=0 // pred_check
    %p15 = pneg %p14
  $region15: #{stt_forward.18} parent=0 // pred_check_branch
    %17 = sbr.rel (%p15) target = $region17
  $region16: #{stt_forward.18} parent=0 // pred_region
    %18 = vst [vmem:[#allocation2] sm:$0xff] 0.0
    %19 = vst [vmem:[#allocation2 + $0x8] sm:$0xff] 0.0
  $region17: #{stt_forward.18} parent=0 // pred_fallthru
    _
  %v20 = vld [vmem:[#allocation2] sm:$0xff]
  %v21 = vld [vmem:[#allocation2 + $0x8] sm:$0xff]
  %v22 = vld [vmem:[%s0] sm:$0xff]
  %v23 = vld [vmem:[%s0 + $0x8] sm:$0xff]
  %v24 = vld [vmem:[%s1] sm:$0xf]
  %v25 = vld [vmem:[%s1 + $0x4] sm:$0xf]
  %v26 = vld [vmem:[%s1 + $0x8] sm:$0xf]
  %v27 = vld [vmem:[%s1 + $0xc] sm:$0xf]
  %v28 = vld [vmem:[%s1 + $0x10] sm:$0xf]
  %v29 = vld [vmem:[%s1 + $0x14] sm:$0xf]
  %v30 = vld [vmem:[%s1 + $0x18] sm:$0xf]
  %v31 = vld [vmem:[%s1 + $0x1c] sm:$0xf]
  %v32 = vld [vmem:[%s1 + $0x20] sm:$0xf]
  %v33 = vld [vmem:[%s1 + $0x24] sm:$0xf]
  %v34 = vld [vmem:[%s1 + $0x28] sm:$0xf]
  %v35 = vld [vmem:[%s1 + $0x2c] sm:$0xf]
  %v36 = vld [vmem:[%s1 + $0x30] sm:$0xf]
  %v37 = vld [vmem:[%s1 + $0x34] sm:$0xf]
  %v38 = vld [vmem:[%s1 + $0x38] sm:$0xf]
  %v39 = vld [vmem:[%s1 + $0x3c] sm:$0xf]
  %v40 = vld [vmem:[%s1 + $0x40] sm:$0xf]
  %v41 = vld [vmem:[%s1 + $0x44] sm:$0xf]
  %v42 = vld [vmem:[%s1 + $0x48] sm:$0xf]
  %v43 = vld [vmem:[%s1 + $0x4c] sm:$0xf]
  %v44 = vld [vmem:[%s1 + $0x50] sm:$0xf]
  %v45 = vld [vmem:[%s1 + $0x54] sm:$0xf]
  %v46 = vld [vmem:[%s1 + $0x58] sm:$0xf]
  %v47 = vld [vmem:[%s1 + $0x5c] sm:$0xf]
  %v48 = vld [vmem:[%s1 + $0x60] sm:$0xf]
  %v49 = vld [vmem:[%s1 + $0x64] sm:$0xf]
  %v50 = vld [vmem:[%s1 + $0x68] sm:$0xf]
  %v51 = vld [vmem:[%s1 + $0x6c] sm:$0xf]
  %v52 = vld [vmem:[%s1 + $0x70] sm:$0xf]
  %v53 = vld [vmem:[%s1 + $0x74] sm:$0xf]
  %v54 = vld [vmem:[%s1 + $0x78] sm:$0xf]
  %v55 = vld [vmem:[%s1 + $0x7c] sm:$0xf]
  %v58 = vunpack.c.l.b16 %v22
  %v59 = vunpack.c.h.b16 %v22
  %v60 = vunpack.c.l.b16 %v23
  %v61 = vunpack.c.h.b16 %v23
  %v62 = vpack.c.b16 %v60, %v58
  %v63 = vpack.c.b16 %v61, %v59
  %v98 = vunpack.c.l.b16 %v24
  %v99 = vunpack.c.l.b16 %v25
  %v100 = vunpack.c.l.b16 %v26
  %v101 = vunpack.c.l.b16 %v27
  %v102 = vunpack.c.l.b16 %v28
  %v103 = vunpack.c.l.b16 %v29
  %v104 = vunpack.c.l.b16 %v30
  %v105 = vunpack.c.l.b16 %v31
  %v106 = vunpack.c.l.b16 %v32
  %v107 = vunpack.c.l.b16 %v33
  %v108 = vunpack.c.l.b16 %v34
  %v109 = vunpack.c.l.b16 %v35
  %v110 = vunpack.c.l.b16 %v36
  %v111 = vunpack.c.l.b16 %v37
  %v112 = vunpack.c.l.b16 %v38
  %v113 = vunpack.c.l.b16 %v39
  %v114 = vunpack.c.l.b16 %v40
  %v115 = vunpack.c.l.b16 %v41
  %v116 = vunpack.c.l.b16 %v42
  %v117 = vunpack.c.l.b16 %v43
  %v118 = vunpack.c.l.b16 %v44
  %v119 = vunpack.c.l.b16 %v45
  %v120 = vunpack.c.l.b16 %v46
  %v121 = vunpack.c.l.b16 %v47
  %v122 = vunpack.c.l.b16 %v48
  %v123 = vunpack.c.l.b16 %v49
  %v124 = vunpack.c.l.b16 %v50
  %v125 = vunpack.c.l.b16 %v51
  %v126 = vunpack.c.l.b16 %v52
  %v127 = vunpack.c.l.b16 %v53
  %v128 = vunpack.c.l.b16 %v54
  %v129 = vunpack.c.l.b16 %v55
  %v130 = vpack.c.b16 %v99, %v98
  %v131 = vpack.c.b16 %v101, %v100
  %v132 = vpack.c.b16 %v103, %v102
  %v133 = vpack.c.b16 %v105, %v104
  %v134 = vpack.c.b16 %v107, %v106
  %v135 = vpack.c.b16 %v109, %v108
  %v136 = vpack.c.b16 %v111, %v110
  %v137 = vpack.c.b16 %v113, %v112
  %v138 = vpack.c.b16 %v115, %v114
  %v139 = vpack.c.b16 %v117, %v116
  %v140 = vpack.c.b16 %v119, %v118
  %v141 = vpack.c.b16 %v121, %v120
  %v142 = vpack.c.b16 %v123, %v122
  %v143 = vpack.c.b16 %v125, %v124
  %v144 = vpack.c.b16 %v127, %v126
  %v145 = vpack.c.b16 %v129, %v128
  %162 = vmatpush.bf16.msra.mxu0 %v137
  %163 = vmatpush.bf16.msra.mxu0 %v136
  %164 = vmatpush.bf16.msra.mxu0 %v135
  %165 = vmatpush.bf16.msra.mxu0 %v134
  %166 = vmatpush.bf16.msra.mxu0 %v133
  %167 = vmatpush.bf16.msra.mxu0 %v132
  %168 = vmatpush.bf16.msra.mxu0 %v131
  %169 = vmatpush.bf16.msra.mxu0 %v130
  %170 = vmatmul.bf16.gmra.mxu0 %v62
  %v171 = vpop.f32.mrf.mxu0
  %v172 = vadd.f32 0.0, %v171
  %v173 = vpop.f32.mrf.mxu0
  %v174 = vadd.f32 0.0, %v173
  %175 = vdwg.mxu0
  %176 = vmatpush.bf16.msra.mxu0 %v145
  %177 = vmatpush.bf16.msra.mxu0 %v144
  %178 = vmatpush.bf16.msra.mxu0 %v143
  %179 = vmatpush.bf16.msra.mxu0 %v142
  %180 = vmatpush.bf16.msra.mxu0 %v141
  %181 = vmatpush.bf16.msra.mxu0 %v140
  %182 = vmatpush.bf16.msra.mxu0 %v139
  %183 = vmatpush.bf16.msra.mxu0 %v138
  %184 = vmatmul.bf16.gmra.mxu0 %v63
  %v185 = vpop.f32.mrf.mxu0
  %v186 = vadd.f32 %v172, %v185
  %v187 = vpop.f32.mrf.mxu0
  %v188 = vadd.f32 %v174, %v187
  %189 = vdwg.mxu0
  %v190 = vadd.f32 %v20, %v186
  %v191 = vadd.f32 %v21, %v188
  %192 = vst [vmem:[#allocation2] sm:$0xff] %v190
  %193 = vst [vmem:[#allocation2 + $0x8] sm:$0xff] %v191
  // Predicated region
  $region18: #{stt_forward.18} parent=0 // pred_check
    %p194 = pneg %p14
  $region19: #{stt_forward.18} parent=0 // pred_check_branch
    %196 = sbr.rel (%p194) target = $region21
  $region20: #{stt_forward.18} parent=0 // pred_region
    %v197 = vld [vmem:[#allocation2] sm:$0xff]
    %v198 = vld [vmem:[#allocation2 + $0x8] sm:$0xff]
    %v199 = vld [vmem:[%s2] sm:$0x1]
    %v201 = vperm.slane %v199, 0
    %v203 = vadd.f32 %v197, %v201
    %v204 = vadd.f32 %v198, %v201
    %205 = vst [vmem:[%s3] sm:$0xff] %v203
    %206 = vst [vmem:[%s3 + $0x8] sm:$0xff] %v204
  $region21: #{stt_forward.18} parent=0 // pred_fallthru
    _
  // Predicated region
  $region22: #{stt_forward.18} parent=0 // pred_check
    _
  $region23: #{stt_forward.18} parent=0 // pred_check_branch
    %208 = sbr.rel (0) target = $region25
  $region24: #{stt_forward.18} parent=0 // pred_region
    _
  $region25: #{stt_forward.18} parent=0 // pred_fallthru
    _
  // Predicated region
  $region26: #{stt_forward.18} parent=0 // pred_check
    _
  $region27: #{stt_forward.18} parent=0 // pred_check_branch
    %210 = sbr.rel (0) target = $region29
  $region28: #{stt_forward.18} parent=0 // pred_region
    _
  $region29: #{stt_forward.18} parent=0 // pred_fallthru
    _

// kernel: stt_forward.19
$region0: #{stt_forward.19}
  #allocation0 [shape = 'u32[]', space=smem, size = 0x4, offset = 0x4, fixed_abs, tag = 'smem constant byte address 0x4 - core index']
  #allocation1 [shape = 'u32[72,128]{1,0:T(1,128)}', space=vmem, size = 0x9000, scoped, tag = 'internal scratch']
  %s0 = inlined_call_operand.vmem [shape: f32[16,32], index: 0, kind: input, shape index: {}]
  %s1 = inlined_call_operand.vmem [shape: f32[1,32], index: 1, kind: input, shape index: {}]
  %s2 = inlined_call_operand.vmem [shape: f32[1,32], index: 2, kind: input, shape index: {}]
  %s3 = inlined_call_operand.vmem [shape: f32[16,32], index: 3, kind: output, shape index: {}]
  %s4 = sld [smem:[#allocation0]]
  $region22: #{stt_forward.19} parent=0
    _
  %s6 = ssub.s32 1, %s4
  %s7 = scalar_select 0, %s6, %s4
  // Predicated region
  $region2: #{stt_forward.19} parent=0 // pred_check
    _
  $region3: #{stt_forward.19} parent=0 // pred_check_branch
    %9 = sbr.rel (0) target = $region5
  $region4: #{stt_forward.19} parent=0 // pred_region
    _
  $region5: #{stt_forward.19} parent=0 // pred_fallthru
    _
  // Predicated region
  $region6: #{stt_forward.19} parent=0 // pred_check
    _
  $region7: #{stt_forward.19} parent=0 // pred_check_branch
    %11 = sbr.rel (0) target = $region9
  $region8: #{stt_forward.19} parent=0 // pred_region
    _
  $region9: #{stt_forward.19} parent=0 // pred_fallthru
    _
  // Predicated region
  $region10: #{stt_forward.19} parent=0 // pred_check
    _
  $region11: #{stt_forward.19} parent=0 // pred_check_branch
    %13 = sbr.rel (0) target = $region13
  $region12: #{stt_forward.19} parent=0 // pred_region
    _
  $region13: #{stt_forward.19} parent=0 // pred_fallthru
    _
  %v14 = vld [vmem:[%s0] sm:$0xff]
  %v15 = vld [vmem:[%s0 + $0x8] sm:$0xff]
  %vm16 = vcmask 261120
  %v17 = vsel %vm16, %v14, 0.0
  %18 = vadd.xlane.f32.xlu0 %v17
  %v19 = vpop.xlane.xlu0 %18
  %v20 = vsel %vm16, %v15, 0.0
  %21 = vadd.xlane.f32.xlu0 %v20
  %v22 = vpop.xlane.xlu0 %21
  %v23 = vrcp.pop 32.0
  %v24 = vmul.f32 32.0, %v23
  %v25 = vsub.f32 1.0, %v24
  %v26 = vmul.f32 %v23, %v25
  %v27 = vadd.f32 %v23, %v26
  %vm28 = vweird.f32 %v23
  %v29 = vsel %vm28, %v23, %v27
  %v30 = vmul.f32 %v19, %v29
  %v31 = vmul.f32 %v22, %v29
  %v32 = vsub.f32 %v14, %v30
  %v33 = vsub.f32 %v15, %v31
  %v34 = vmul.f32 %v32, %v32
  %v35 = vmul.f32 %v33, %v33
  %v36 = vsel %vm16, %v34, 0.0
  %37 = vadd.xlane.f32.xlu0 %v36
  %v38 = vpop.xlane.xlu0 %37
  %v39 = vsel %vm16, %v35, 0.0
  %40 = vadd.xlane.f32.xlu0 %v39
  %v41 = vpop.xlane.xlu0 %40
  %v42 = vmul.f32 %v38, %v29
  %v43 = vmul.f32 %v41, %v29
  %v44 = vadd.f32 %v42, 1e-05
  %v45 = vadd.f32 %v43, 1e-05
  %v46 = vrsqrt.pop %v44
  %v47 = vmul.f32 %v46, %v44
  %v48 = vmul.f32 %v47, %v46
  %v49 = vmul.f32 0.5, %v48
  %v50 = vsub.f32 1.5, %v49
  %v51 = vmul.f32 %v46, %v50
  %vm52 = vweird.f32 %v44
  %vm53 = vweird.f32 %v46
  %vm54 = vmor %vm52, %vm53
  %v55 = vsel %vm54, %v46, %v51
  %v56 = vrsqrt.pop %v45
  %v57 = vmul.f32 %v56, %v45
  %v58 = vmul.f32 %v57, %v56
  %v59 = vmul.f32 0.5, %v58
  %v60 = vsub.f32 1.5, %v59
  %v61 = vmul.f32 %v56, %v60
  %vm62 = vweird.f32 %v45
  %vm63 = vweird.f32 %v56
  %vm64 = vmor %vm62, %vm63
  %v65 = vsel %vm64, %v56, %v61
  %v66 = vmul.f32 %v32, %v55
  %v67 = vmul.f32 %v33, %v65
  %v68 = vld [vmem:[%s1] sm:$0x1]
  %v70 = vperm.slane %v68, 0
  %v72 = vmul.f32 %v66, %v70
  %v73 = vmul.f32 %v67, %v70
  %v74 = vld [vmem:[%s2] sm:$0x1]
  %v76 = vperm.slane %v74, 0
  %v78 = vadd.f32 %v72, %v76
  %v79 = vadd.f32 %v73, %v76
  %v80 = vmax.f32 %v78, 0.0
  %v81 = vmax.f32 %v79, 0.0
  %82 = vst.msk [vmem:[%s3] sm:$0xff] %vm16, %v80
  %83 = vst.msk [vmem:[%s3 + $0x8] sm:$0xff] %vm16, %v81
  // Predicated region
  $region14: #{stt_forward.19} parent=0 // pred_check
    _
  $region15: #{stt_forward.19} parent=0 // pred_check_branch
    %85 = sbr.rel (0) target = $region17
  $region16: #{stt_forward.19} parent=0 // pred_region
    _
  $region17: #{stt_forward.19} parent=0 // pred_fallthru
    _
  // Predicated region
  $region18: #{stt_forward.19} parent=0 // pred_check
    _
  $region19: #{stt_forward.19} parent=0 // pred_check_branch
    %87 = sbr.rel (0) target = $region21
  $region20: #{stt_forward.19} parent=0 // pred_region
    _
  $region21: #{stt_forward.19} parent=0 // pred_fallthru
    _

// kernel: stt_forward.21
$region0: #{stt_forward.21}
  #allocation0 [shape = 'u32[]', space=smem, size = 0x4, offset = 0x4, fixed_abs, tag = 'smem constant byte address 0x4 - core index']
  #allocation1 [shape = 'u32[72,128]{1,0:T(1,128)}', space=vmem, size = 0x9000, scoped, tag = 'internal scratch']
  #allocation2 [shape = 'f32[16,64]{1,0:T(8,128)}', space=vmem, size = 0x2000, scoped, tag = 'scratch operand']
  #allocation3 [shape = 'f32[16,32]{1,0:T(8,128)}', space=vmem, size = 0x2000, scoped, tag = 'scratch operand']
  %s0 = inlined_call_operand.vmem [shape: f32[8,8,256], index: 0, kind: input, shape index: {}]
  %s1 = inlined_call_operand.vmem [shape: f32[64,128], index: 1, kind: input, shape index: {}]
  %s2 = inlined_call_operand.vmem [shape: f32[8,8,32], index: 2, kind: output, shape index: {0}]
  %s3 = inlined_call_operand.vmem [shape: f32[8,8,32], index: 3, kind: output, shape index: {1}]
  %4 = xla_tuple %s2, %s3
  %s5 = sld [smem:[#allocation0]]
  $region33: #{stt_forward.21} parent=0
    _
  %s7 = ssub.s32 1, %s5
  %s8 = scalar_select 0, %s7, %s5
  // Predicated region
  $region2: #{stt_forward.21} parent=0 // pred_check
    _
  $region3: #{stt_forward.21} parent=0 // pred_check_branch
    %10 = sbr.rel (0) target = $region5
  $region4: #{stt_forward.21} parent=0 // pred_region
    _
  $region5: #{stt_forward.21} parent=0 // pred_fallthru
    _
  // Predicated region
  $region6: #{stt_forward.21} parent=0 // pred_check
    _
  $region7: #{stt_forward.21} parent=0 // pred_check_branch
    %12 = sbr.rel (0) target = $region9
  $region8: #{stt_forward.21} parent=0 // pred_region
    _
  $region9: #{stt_forward.21} parent=0 // pred_fallthru
    _
  %vm13 = vcmask 523264
  %14 = vst.msk [vmem:[#allocation2] sm:$0xff] %vm13, 0.0
  %15 = vst.msk [vmem:[#allocation2 + $0x8] sm:$0xff] %vm13, 0.0
  %vm16 = vcmask 261120
  %17 = vst.msk [vmem:[#allocation3] sm:$0xff] %vm16, 0.0
  %18 = vst.msk [vmem:[#allocation3 + $0x8] sm:$0xff] %vm16, 0.0
  loop: start=0, step=1, limit=8
  $region10: #{stt_forward.21} parent=0 // loop_pre_header
    _
  $region11: #{stt_forward.21} parent=0 // loop_header
    %s20 = sphi 0, %s24
    %p21 = scmp.ge.s32.totalorder %s20, 8
  $region12: #{stt_forward.21} parent=0 // loop_header_branch
    %23 = sbr.rel (%p21) target = $region16
  $region13: #{stt_forward.21} parent=0 // loop_body
    %s25 = smul.u32 %s20, 2
    %s26 = smul.addr %s25, 8
    %s27 = scalar_lea.vmem %s0, %s26
    %v28 = vld [vmem:[%s27] sm:$0xff]
    %s29 = ssub.s32 7, %s20
    %s30 = smul.u32 %s29, 2
    %s31 = smul.addr %s30, 8
    %s32 = scalar_lea.vmem %s0, %s31
    %v33 = vld [vmem:[%s32 + $0x8] sm:$0xff]
    %v34 = vld [vmem:[#allocation2] sm:$0xff]
    %v35 = vld [vmem:[#allocation2 + $0x8] sm:$0xff]
    %v36 = vld [vmem:[%s1] sm:$0xff]
    %v37 = vld [vmem:[%s1 + $0x8] sm:$0xff]
    %v38 = vld [vmem:[%s1 + $0x10] sm:$0xff]
    %v39 = vld [vmem:[%s1 + $0x18] sm:$0xff]
    %v40 = vld [vmem:[%s1 + $0x20] sm:$0xff]
    %v41 = vld [vmem:[%s1 + $0x28] sm:$0xff]
    %v42 = vld [vmem:[%s1 + $0x30] sm:$0xff]
    %v43 = vld [vmem:[%s1 + $0x38] sm:$0xff]
    %v45 = vsel %vm13, %v34, 0
    %v48 = vsel %vm13, %v35, 0
    %50 = vmatpush.msra.mxu0 0.0
    %51 = vmatpush.msra.mxu0 0.0
    %52 = vmatpush.msra.mxu0 0.0
    %53 = vmatpush.msra.mxu0 0.0
    %54 = vmatpush.msra.mxu0 0.0
    %55 = vmatpush.msra.mxu0 0.0
    %56 = vmatpush.msra.mxu0 0.0
    %57 = vmatpush.msra.mxu0 0.0
    %58 = vmatpush.msra.mxu0 %v43
    %59 = vmatpush.msra.mxu0 %v42
    %60 = vmatpush.msra.mxu0 %v41
    %61 = vmatpush.msra.mxu0 %v40
    %62 = vmatpush.msra.mxu0 %v39
    %63 = vmatpush.msra.mxu0 %v38
    %64 = vmatpush.msra.mxu0 %v37
    %65 = vmatpush.msra.mxu0 %v36
    %66 = vmatmul.f32.gmra.mxu0 %v45
    %v67 = vpop.f32.mrf.mxu0
    %v68 = vadd.f32 0.0, %v67
    %69 = vmatmul.f32.gmra.mxu0 %v48
    %v70 = vpop.f32.mrf.mxu0
    %v71 = vadd.f32 0.0, %v70
    %72 = vdwg.mxu0
    %v73 = vadd.f32 %v28, %v68
    %v74 = vadd.f32 %v33, %v71
    %v75 = vsub.f32 0.0, %v73
    %v76 = vsub.f32 0.0, %v74
    %v77 = vmul.f32 %v75, 1.442695
    %v78 = vpow.pop %v77
    %v79 = vmul.f32 %v76, 1.442695
    %v80 = vpow.pop %v79
    %v81 = vadd.f32 %v78, 1.0
    %v82 = vadd.f32 %v80, 1.0
    %v83 = vrcp.pop %v81
    %v84 = vmul.f32 %v81, %v83
    %v85 = vsub.f32 1.0, %v84
    %v86 = vmul.f32 %v83, %v85
    %v87 = vadd.f32 %v83, %v86
    %vm88 = vweird.f32 %v81
    %vm89 = vweird.f32 %v83
    %vm90 = vmor %vm88, %vm89
    %v91 = vsel %vm90, %v83, %v87
    %v92 = vand.u32 2147483647, %v81
    %vm93 = vcmp.eq.f32.partialorder %v92, 8.507059e+37
    %v94 = vand.u32 %v81, 2147483648
    %v95 = vor.u32 1.1754944e-38, %v94
    %v96 = vsel %vm93, %v95, %v91
    %v97 = vmul.f32 1.0, %v96
    %v98 = vrcp.pop %v82
    %v99 = vmul.f32 %v82, %v98
    %v100 = vsub.f32 1.0, %v99
    %v101 = vmul.f32 %v98, %v100
    %v102 = vadd.f32 %v98, %v101
    %vm103 = vweird.f32 %v82
    %vm104 = vweird.f32 %v98
    %vm105 = vmor %vm103, %vm104
    %v106 = vsel %vm105, %v98, %v102
    %v107 = vand.u32 2147483647, %v82
    %vm108 = vcmp.eq.f32.partialorder %v107, 8.507059e+37
    %v109 = vand.u32 %v82, 2147483648
    %v110 = vor.u32 1.1754944e-38, %v109
    %v111 = vsel %vm108, %v110, %v106
    %v112 = vmul.f32 1.0, %v111
    %v113 = vtanh.pop %v73
    %v114 = vtanh.pop %v74
    %v115 = vld [vmem:[#allocation3] sm:$0xff]
    %v116 = vld [vmem:[#allocation3 + $0x8] sm:$0xff]
    %119 = vrot.lane.b32.xlu0 %v115, 32
    %v120 = vpop.permute.xlu0 %119
    %121 = vrot.lane.b32.xlu0 %v116, 32
    %v122 = vpop.permute.xlu0 %121
    %v125 = vmul.f32 %v97, %v120
    %v126 = vmul.f32 %v112, %v122
    %129 = vrot.lane.b32.xlu0 %v113, 64
    %v130 = vpop.permute.xlu0 %129
    %131 = vrot.lane.b32.xlu0 %v114, 64
    %v132 = vpop.permute.xlu0 %131
    %v135 = vmul.f32 %v97, %v130
    %v136 = vmul.f32 %v112, %v132
    %139 = vrot.lane.b32.xlu0 %v135, 32
    %v140 = vpop.permute.xlu0 %139
    %141 = vrot.lane.b32.xlu0 %v136, 32
    %v142 = vpop.permute.xlu0 %141
    %v145 = vadd.f32 %v125, %v140
    %v146 = vadd.f32 %v126, %v142
    %v147 = vtanh.pop %v145
    %v148 = vtanh.pop %v146
    %151 = vrot.lane.b32.xlu0 %v147, 64
    %v152 = vpop.permute.xlu0 %151
    %153 = vrot.lane.b32.xlu0 %v148, 64
    %v154 = vpop.permute.xlu0 %153
    %v157 = vmul.f32 %v97, %v152
    %v158 = vmul.f32 %v112, %v154
    %161 = vrot.lane.b32.xlu0 %v145, 96
    %v162 = vpop.permute.xlu0 %161
    %163 = vrot.lane.b32.xlu0 %v146, 96
    %v164 = vpop.permute.xlu0 %163
    %167 = vst.msk [vmem:[#allocation3] sm:$0xff] %vm16, %v162
    %168 = vst.msk [vmem:[#allocation3 + $0x8] sm:$0xff] %vm16, %v164
    %170 = vrot.lane.b32.xlu0 %v157, 32
    %v171 = vpop.permute.xlu0 %170
    %v173 = vsel %vm16, %v171, 0.0
    %175 = vrot.lane.b32.xlu0 %v158, 64
    %v176 = vpop.permute.xlu0 %175
    %v178 = vsel %vm16, 0.0, %v176
    %179 = vst.msk [vmem:[#allocation2] sm:$0xff] %vm13, %v173
    %180 = vst.msk [vmem:[#allocation2 + $0x8] sm:$0xff] %vm13, %v178
    %s181 = smul.u32 %s20, 8
    %s182 = scalar_lea.vmem %s2, %s181
    %183 = vst.msk [vmem:[%s182] sm:$0xff] %vm16, %v171
    %184 = vrot.lane.b32.xlu0 %v158, 32
    %v185 = vpop.permute.xlu0 %184
    %s187 = smul.u32 %s29, 8
    %s188 = scalar_lea.vmem %s3, %s187
    %189 = vst.msk [vmem:[%s188] sm:$0xff] %vm16, %v185
  $region14: #{stt_forward.21} parent=0 // loop_footer
    %s24 = sadd.s32 1, %s20
  $region15: #{stt_forward.21} parent=0 // loop_footer_branch
    %19 = sbr.rel target = $region11
  $region16: #{stt_forward.21} parent=0 // loop_exit
    _
  // Predicated region
  $region17: #{stt_forward.21} parent=0 // pred_check
    _
  $region18: #{stt_forward.21} parent=0 // pred_check_branch
    %191 = sbr.rel (0) target = $region20
  $region19: #{stt_forward.21} parent=0 // pred_region
    _
  $region20: #{stt_forward.21} parent=0 // pred_fallthru
    _
  // Predicated region
  $region21: #{stt_forward.21} parent=0 // pred_check
    _
  $region22: #{stt_forward.21} parent=0 // pred_check_branch
    %193 = sbr.rel (0) target = $region24
  $region23: #{stt_forward.21} parent=0 // pred_region
    _
  $region24: #{stt_forward.21} parent=0 // pred_fallthru
    _
  // Predicated region
  $region25: #{stt_forward.21} parent=0 // pred_check
    _
  $region26: #{stt_forward.21} parent=0 // pred_check_branch
    %195 = sbr.rel (0) target = $region28
  $region27: #{stt_forward.21} parent=0 // pred_region
    _
  $region28: #{stt_forward.21} parent=0 // pred_fallthru
    _
  // Predicated region
  $region29: #{stt_forward.21} parent=0 // pred_check
    _
  $region30: #{stt_forward.21} parent=0 // pred_check_branch
    %197 = sbr.rel (0) target = $region32
  $region31: #{stt_forward.21} parent=0 // pred_region
    _
  $region32: #{stt_forward.21} parent=0 // pred_fallthru
    _

// kernel: stt_forward.20
$region0: #{stt_forward.20}
  #allocation0 [shape = 'u32[]', space=smem, size = 0x4, offset = 0x4, fixed_abs, tag = 'smem constant byte address 0x4 - core index']
  #allocation1 [shape = 'u32[72,128]{1,0:T(1,128)}', space=vmem, size = 0x9000, scoped, tag = 'internal scratch']
  #allocation2 [shape = 'f32[64,256]{1,0:T(8,128)}', space=vmem, size = 0x10000, scoped, tag = 'scratch operand']
  %s0 = inlined_call_operand.vmem [shape: bf16[64,128], index: 0, kind: input, shape index: {}]
  %s1 = inlined_call_operand.vmem [shape: bf16[128,256], index: 1, kind: input, shape index: {}]
  %s2 = inlined_call_operand.vmem [shape: f32[1,256], index: 2, kind: input, shape index: {}]
  %s3 = inlined_call_operand.vmem [shape: f32[64,256], index: 3, kind: output, shape index: {}]
  %s4 = sld [smem:[#allocation0]]
  $region30: #{stt_forward.20} parent=0
    _
  %s6 = ssub.s32 1, %s4
  %s7 = scalar_select 0, %s6, %s4
  // Predicated region
  $region2: #{stt_forward.20} parent=0 // pred_check
    _
  $region3: #{stt_forward.20} parent=0 // pred_check_branch
    %9 = sbr.rel (0) target = $region5
  $region4: #{stt_forward.20} parent=0 // pred_region
    _
  $region5: #{stt_forward.20} parent=0 // pred_fallthru
    _
  // Predicated region
  $region6: #{stt_forward.20} parent=0 // pred_check
    _
  $region7: #{stt_forward.20} parent=0 // pred_check_branch
    %11 = sbr.rel (0) target = $region9
  $region8: #{stt_forward.20} parent=0 // pred_region
    _
  $region9: #{stt_forward.20} parent=0 // pred_fallthru
    _
  // Predicated region
  $region10: #{stt_forward.20} parent=0 // pred_check
    _
  $region11: #{stt_forward.20} parent=0 // pred_check_branch
    %13 = sbr.rel (0) target = $region13
  $region12: #{stt_forward.20} parent=0 // pred_region
    _
  $region13: #{stt_forward.20} parent=0 // pred_fallthru
    _
  %p14 = scmp.eq.s32.totalorder 0, 0
  // Predicated region
  $region14: #{stt_forward.20} parent=0 // pred_check
    %p15 = pneg %p14
  $region15: #{stt_forward.20} parent=0 // pred_check_branch
    %17 = sbr.rel (%p15) target = $region17
  $region16: #{stt_forward.20} parent=0 // pred_region
    %18 = vst [vmem:[#allocation2] sm:$0xff] 0.0
    %19 = vst [vmem:[#allocation2 + $0x8] sm:$0xff] 0.0
    %20 = vst [vmem:[#allocation2 + $0x10] sm:$0xff] 0.0
    %21 = vst [vmem:[#allocation2 + $0x18] sm:$0xff] 0.0
    %22 = vst [vmem:[#allocation2 + $0x20] sm:$0xff] 0.0
    %23 = vst [vmem:[#allocation2 + $0x28] sm:$0xff] 0.0
    %24 = vst [vmem:[#allocation2 + $0x30] sm:$0xff] 0.0
    %25 = vst [vmem:[#allocation2 + $0x38] sm:$0xff] 0.0
    %26 = vst [vmem:[#allocation2 + $0x40] sm:$0xff] 0.0
    %27 = vst [vmem:[#allocation2 + $0x48] sm:$0xff] 0.0
    %28 = vst [vmem:[#allocation2 + $0x50] sm:$0xff] 0.0
    %29 = vst [vmem:[#allocation2 + $0x58] sm:$0xff] 0.0
    %30 = vst [vmem:[#allocation2 + $0x60] sm:$0xff] 0.0
    %31 = vst [vmem:[#allocation2 + $0x68] sm:$0xff] 0.0
    %32 = vst [vmem:[#allocation2 + $0x70] sm:$0xff] 0.0
    %33 = vst [vmem:[#allocation2 + $0x78] sm:$0xff] 0.0
  $region17: #{stt_forward.20} parent=0 // pred_fallthru
    _
  %v34 = vld [vmem:[#allocation2] sm:$0xff]
  %v35 = vld [vmem:[#allocation2 + $0x8] sm:$0xff]
  %v36 = vld [vmem:[#allocation2 + $0x10] sm:$0xff]
  %v37 = vld [vmem:[#allocation2 + $0x18] sm:$0xff]
  %v38 = vld [vmem:[#allocation2 + $0x20] sm:$0xff]
  %v39 = vld [vmem:[#allocation2 + $0x28] sm:$0xff]
  %v40 = vld [vmem:[#allocation2 + $0x30] sm:$0xff]
  %v41 = vld [vmem:[#allocation2 + $0x38] sm:$0xff]
  %v42 = vld [vmem:[#allocation2 + $0x40] sm:$0xff]
  %v43 = vld [vmem:[#allocation2 + $0x48] sm:$0xff]
  %v44 = vld [vmem:[#allocation2 + $0x50] sm:$0xff]
  %v45 = vld [vmem:[#allocation2 + $0x58] sm:$0xff]
  %v46 = vld [vmem:[#allocation2 + $0x60] sm:$0xff]
  %v47 = vld [vmem:[#allocation2 + $0x68] sm:$0xff]
  %v48 = vld [vmem:[#allocation2 + $0x70] sm:$0xff]
  %v49 = vld [vmem:[#allocation2 + $0x78] sm:$0xff]
  %v50 = vld [vmem:[%s0] sm:$0xf]
  %v51 = vld [vmem:[%s0 + $0x4] sm:$0xf]
  %v52 = vld [vmem:[%s0 + $0x8] sm:$0xf]
  %v53 = vld [vmem:[%s0 + $0xc] sm:$0xf]
  %v54 = vld [vmem:[%s0 + $0x10] sm:$0xf]
  %v55 = vld [vmem:[%s0 + $0x14] sm:$0xf]
  %v56 = vld [vmem:[%s0 + $0x18] sm:$0xf]
  %v57 = vld [vmem:[%s0 + $0x1c] sm:$0xf]
  %v58 = vld [vmem:[%s1] sm:$0xff]
  %v59 = vld [vmem:[%s1 + $0x8] sm:$0xff]
  %v60 = vld [vmem:[%s1 + $0x10] sm:$0xff]
  %v61 = vld [vmem:[%s1 + $0x18] sm:$0xff]
  %v62 = vld [vmem:[%s1 + $0x20] sm:$0xff]
  %v63 = vld [vmem:[%s1 + $0x28] sm:$0xff]
  %v64 = vld [vmem:[%s1 + $0x30] sm:$0xff]
  %v65 = vld [vmem:[%s1 + $0x38] sm:$0xff]
  %v66 = vld [vmem:[%s1 + $0x40] sm:$0xff]
  %v67 = vld [vmem:[%s1 + $0x48] sm:$0xff]
  %v68 = vld [vmem:[%s1 + $0x50] sm:$0xff]
  %v69 = vld [vmem:[%s1 + $0x58] sm:$0xff]
  %v70 = vld [vmem:[%s1 + $0x60] sm:$0xff]
  %v71 = vld [vmem:[%s1 + $0x68] sm:$0xff]
  %v72 = vld [vmem:[%s1 + $0x70] sm:$0xff]
  %v73 = vld [vmem:[%s1 + $0x78] sm:$0xff]
  %v82 = vunpack.c.l.b16 %v50
  %v83 = vunpack.c.l.b16 %v51
  %v84 = vunpack.c.l.b16 %v52
  %v85 = vunpack.c.l.b16 %v53
  %v86 = vunpack.c.l.b16 %v54
  %v87 = vunpack.c.l.b16 %v55
  %v88 = vunpack.c.l.b16 %v56
  %v89 = vunpack.c.l.b16 %v57
  %v90 = vpack.c.b16 %v83, %v82
  %v91 = vpack.c.b16 %v85, %v84
  %v92 = vpack.c.b16 %v87, %v86
  %v93 = vpack.c.b16 %v89, %v88
  %v114 = vunpack.c.l.b16 %v58
  %v115 = vunpack.c.h.b16 %v58
  %v116 = vunpack.c.l.b16 %v59
  %v117 = vunpack.c.h.b16 %v59
  %v118 = vunpack.c.l.b16 %v60
  %v119 = vunpack.c.h.b16 %v60
  %v120 = vunpack.c.l.b16 %v61
  %v121 = vunpack.c.h.b16 %v61
  %v122 = vunpack.c.l.b16 %v62
  %v123 = vunpack.c.h.b16 %v62
  %v124 = vunpack.c.l.b16 %v63
  %v125 = vunpack.c.h.b16 %v63
  %v126 = vunpack.c.l.b16 %v64
  %v127 = vunpack.c.h.b16 %v64
  %v128 = vunpack.c.l.b16 %v65
  %v129 = vunpack.c.h.b16 %v65
  %v130 = vunpack.c.l.b16 %v66
  %v131 = vunpack.c.h.b16 %v66
  %v132 = vunpack.c.l.b16 %v67
  %v133 = vunpack.c.h.b16 %v67
  %v134 = vunpack.c.l.b16 %v68
  %v135 = vunpack.c.h.b16 %v68
  %v136 = vunpack.c.l.b16 %v69
  %v137 = vunpack.c.h.b16 %v69
  %v138 = vunpack.c.l.b16 %v70
  %v139 = vunpack.c.h.b16 %v70
  %v140 = vunpack.c.l.b16 %v71
  %v141 = vunpack.c.h.b16 %v71
  %v142 = vunpack.c.l.b16 %v72
  %v143 = vunpack.c.h.b16 %v72
  %v144 = vunpack.c.l.b16 %v73
  %v145 = vunpack.c.h.b16 %v73
  %v146 = vpack.c.b16 %v116, %v114
  %v147 = vpack.c.b16 %v117, %v115
  %v148 = vpack.c.b16 %v120, %v118
  %v149 = vpack.c.b16 %v121, %v119
  %v150 = vpack.c.b16 %v124, %v122
  %v151 = vpack.c.b16 %v125, %v123
  %v152 = vpack.c.b16 %v128, %v126
  %v153 = vpack.c.b16 %v129, %v127
  %v154 = vpack.c.b16 %v132, %v130
  %v155 = vpack.c.b16 %v133, %v131
  %v156 = vpack.c.b16 %v136, %v134
  %v157 = vpack.c.b16 %v137, %v135
  %v158 = vpack.c.b16 %v140, %v138
  %v159 = vpack.c.b16 %v141, %v139
  %v160 = vpack.c.b16 %v144, %v142
  %v161 = vpack.c.b16 %v145, %v143
  %178 = vmatpush.bf16.msra.mxu0 %v160
  %179 = vmatpush.bf16.msra.mxu0 %v158
  %180 = vmatpush.bf16.msra.mxu0 %v156
  %181 = vmatpush.bf16.msra.mxu0 %v154
  %182 = vmatpush.bf16.msra.mxu0 %v152
  %183 = vmatpush.bf16.msra.mxu0 %v150
  %184 = vmatpush.bf16.msra.mxu0 %v148
  %185 = vmatpush.bf16.msra.mxu0 %v146
  %186 = vmatmul.bf16.gmra.mxu0 %v90
  %v187 = vpop.f32.mrf.mxu0
  %v188 = vadd.f32 0.0, %v187
  %v189 = vpop.f32.mrf.mxu0
  %v190 = vadd.f32 0.0, %v189
  %191 = vmatmul.bf16.gmra.mxu0 %v91
  %v192 = vpop.f32.mrf.mxu0
  %v193 = vadd.f32 0.0, %v192
  %v194 = vpop.f32.mrf.mxu0
  %v195 = vadd.f32 0.0, %v194
  %196 = vmatmul.bf16.gmra.mxu0 %v92
  %v197 = vpop.f32.mrf.mxu0
  %v198 = vadd.f32 0.0, %v197
  %v199 = vpop.f32.mrf.mxu0
  %v200 = vadd.f32 0.0, %v199
  %201 = vmatmul.bf16.gmra.mxu0 %v93
  %v202 = vpop.f32.mrf.mxu0
  %v203 = vadd.f32 0.0, %v202
  %v204 = vpop.f32.mrf.mxu0
  %v205 = vadd.f32 0.0, %v204
  %206 = vdwg.mxu0
  %207 = vmatpush.bf16.msra.mxu0 %v161
  %208 = vmatpush.bf16.msra.mxu0 %v159
  %209 = vmatpush.bf16.msra.mxu0 %v157
  %210 = vmatpush.bf16.msra.mxu0 %v155
  %211 = vmatpush.bf16.msra.mxu0 %v153
  %212 = vmatpush.bf16.msra.mxu0 %v151
  %213 = vmatpush.bf16.msra.mxu0 %v149
  %214 = vmatpush.bf16.msra.mxu0 %v147
  %215 = vmatmul.bf16.gmra.mxu0 %v90
  %v216 = vpop.f32.mrf.mxu0
  %v217 = vadd.f32 0.0, %v216
  %v218 = vpop.f32.mrf.mxu0
  %v219 = vadd.f32 0.0, %v218
  %220 = vmatmul.bf16.gmra.mxu0 %v91
  %v221 = vpop.f32.mrf.mxu0
  %v222 = vadd.f32 0.0, %v221
  %v223 = vpop.f32.mrf.mxu0
  %v224 = vadd.f32 0.0, %v223
  %225 = vmatmul.bf16.gmra.mxu0 %v92
  %v226 = vpop.f32.mrf.mxu0
  %v227 = vadd.f32 0.0, %v226
  %v228 = vpop.f32.mrf.mxu0
  %v229 = vadd.f32 0.0, %v228
  %230 = vmatmul.bf16.gmra.mxu0 %v93
  %v231 = vpop.f32.mrf.mxu0
  %v232 = vadd.f32 0.0, %v231
  %v233 = vpop.f32.mrf.mxu0
  %v234 = vadd.f32 0.0, %v233
  %235 = vdwg.mxu0
  %v236 = vadd.f32 %v34, %v188
  %v237 = vadd.f32 %v35, %v217
  %v238 = vadd.f32 %v36, %v190
  %v239 = vadd.f32 %v37, %v219
  %v240 = vadd.f32 %v38, %v193
  %v241 = vadd.f32 %v39, %v222
  %v242 = vadd.f32 %v40, %v195
  %v243 = vadd.f32 %v41, %v224
  %v244 = vadd.f32 %v42, %v198
  %v245 = vadd.f32 %v43, %v227
  %v246 = vadd.f32 %v44, %v200
  %v247 = vadd.f32 %v45, %v229
  %v248 = vadd.f32 %v46, %v203
  %v249 = vadd.f32 %v47, %v232
  %v250 = vadd.f32 %v48, %v205
  %v251 = vadd.f32 %v49, %v234
  %252 = vst [vmem:[#allocation2] sm:$0xff] %v236
  %253 = vst [vmem:[#allocation2 + $0x8] sm:$0xff] %v237
  %254 = vst [vmem:[#allocation2 + $0x10] sm:$0xff] %v238
  %255 = vst [vmem:[#allocation2 + $0x18] sm:$0xff] %v239
  %256 = vst [vmem:[#allocation2 + $0x20] sm:$0xff] %v240
  %257 = vst [vmem:[#allocation2 + $0x28] sm:$0xff] %v241
  %258 = vst [vmem:[#allocation2 + $0x30] sm:$0xff] %v242
  %259 = vst [vmem:[#allocation2 + $0x38] sm:$0xff] %v243
  %260 = vst [vmem:[#allocation2 + $0x40] sm:$0xff] %v244
  %261 = vst [vmem:[#allocation2 + $0x48] sm:$0xff] %v245
  %262 = vst [vmem:[#allocation2 + $0x50] sm:$0xff] %v246
  %263 = vst [vmem:[#allocation2 + $0x58] sm:$0xff] %v247
  %264 = vst [vmem:[#allocation2 + $0x60] sm:$0xff] %v248
  %265 = vst [vmem:[#allocation2 + $0x68] sm:$0xff] %v249
  %266 = vst [vmem:[#allocation2 + $0x70] sm:$0xff] %v250
  %267 = vst [vmem:[#allocation2 + $0x78] sm:$0xff] %v251
  // Predicated region
  $region18: #{stt_forward.20} parent=0 // pred_check
    %p268 = pneg %p14
  $region19: #{stt_forward.20} parent=0 // pred_check_branch
    %270 = sbr.rel (%p268) target = $region21
  $region20: #{stt_forward.20} parent=0 // pred_region
    %v271 = vld [vmem:[#allocation2] sm:$0xff]
    %v272 = vld [vmem:[#allocation2 + $0x8] sm:$0xff]
    %v273 = vld [vmem:[#allocation2 + $0x10] sm:$0xff]
    %v274 = vld [vmem:[#allocation2 + $0x18] sm:$0xff]
    %v275 = vld [vmem:[#allocation2 + $0x20] sm:$0xff]
    %v276 = vld [vmem:[#allocation2 + $0x28] sm:$0xff]
    %v277 = vld [vmem:[#allocation2 + $0x30] sm:$0xff]
    %v278 = vld [vmem:[#allocation2 + $0x38] sm:$0xff]
    %v279 = vld [vmem:[#allocation2 + $0x40] sm:$0xff]
    %v280 = vld [vmem:[#allocation2 + $0x48] sm:$0xff]
    %v281 = vld [vmem:[#allocation2 + $0x50] sm:$0xff]
    %v282 = vld [vmem:[#allocation2 + $0x58] sm:$0xff]
    %v283 = vld [vmem:[#allocation2 + $0x60] sm:$0xff]
    %v284 = vld [vmem:[#allocation2 + $0x68] sm:$0xff]
    %v285 = vld [vmem:[#allocation2 + $0x70] sm:$0xff]
    %v286 = vld [vmem:[#allocation2 + $0x78] sm:$0xff]
    %v287 = vld [vmem:[%s2] sm:$0x3]
    %v289 = vperm.slane %v287, 0
    %v290 = vperm.slane %v287, 1
    %v293 = vadd.f32 %v271, %v289
    %v294 = vadd.f32 %v272, %v290
    %v295 = vadd.f32 %v273, %v289
    %v296 = vadd.f32 %v274, %v290
    %v297 = vadd.f32 %v275, %v289
    %v298 = vadd.f32 %v276, %v290
    %v299 = vadd.f32 %v277, %v289
    %v300 = vadd.f32 %v278, %v290
    %v301 = vadd.f32 %v279, %v289
    %v302 = vadd.f32 %v280, %v290
    %v303 = vadd.f32 %v281, %v289
    %v304 = vadd.f32 %v282, %v290
    %v305 = vadd.f32 %v283, %v289
    %v306 = vadd.f32 %v284, %v290
    %v307 = vadd.f32 %v285, %v289
    %v308 = vadd.f32 %v286, %v290
    %309 = vst [vmem:[%s3] sm:$0xff] %v293
    %310 = vst [vmem:[%s3 + $0x8] sm:$0xff] %v294
    %311 = vst [vmem:[%s3 + $0x10] sm:$0xff] %v295
    %312 = vst [vmem:[%s3 + $0x18] sm:$0xff] %v296
    %313 = vst [vmem:[%s3 + $0x20] sm:$0xff] %v297
    %314 = vst [vmem:[%s3 + $0x28] sm:$0xff] %v298
    %315 = vst [vmem:[%s3 + $0x30] sm:$0xff] %v299
    %316 = vst [vmem:[%s3 + $0x38] sm:$0xff] %v300
    %317 = vst [vmem:[%s3 + $0x40] sm:$0xff] %v301
    %318 = vst [vmem:[%s3 + $0x48] sm:$0xff] %v302
    %319 = vst [vmem:[%s3 + $0x50] sm:$0xff] %v303
    %320 = vst [vmem:[%s3 + $0x58] sm:$0xff] %v304
    %321 = vst [vmem:[%s3 + $0x60] sm:$0xff] %v305
    %322 = vst [vmem:[%s3 + $0x68] sm:$0xff] %v306
    %323 = vst [vmem:[%s3 + $0x70] sm:$0xff] %v307
    %324 = vst [vmem:[%s3 + $0x78] sm:$0xff] %v308
  $region21: #{stt_forward.20} parent=0 // pred_fallthru
    _
  // Predicated region
  $region22: #{stt_forward.20} parent=0 // pred_check
    _
  $region23: #{stt_forward.20} parent=0 // pred_check_branch
    %326 = sbr.rel (0) target = $region25
  $region24: #{stt_forward.20} parent=0 // pred_region
    _
  $region25: #{stt_forward.20} parent=0 // pred_fallthru
    _
  // Predicated region
  $region26: #{stt_forward.20} parent=0 // pred_check
    _
  $region27: #{stt_forward.20} parent=0 // pred_check_branch
    %328 = sbr.rel (0) target = $region29
  $region28: #{stt_forward.20} parent=0 // pred_region
    _
  $region29: #{stt_forward.20} parent=0 // pred_fallthru
    _

// kernel: stt_forward.22
$region0: #{stt_forward.22}
  #allocation0 [shape = 'u32[]', space=smem, size = 0x4, offset = 0x4, fixed_abs, tag = 'smem constant byte address 0x4 - core index']
  #allocation1 [shape = 'u32[72,128]{1,0:T(1,128)}', space=vmem, size = 0x9000, scoped, tag = 'internal scratch']
  %s0 = inlined_call_operand.vmem [shape: f32[16,64], index: 0, kind: input, shape index: {}]
  %s1 = inlined_call_operand.vmem [shape: f32[1,64], index: 1, kind: input, shape index: {}]
  %s2 = inlined_call_operand.vmem [shape: f32[1,64], index: 2, kind: input, shape index: {}]
  %s3 = inlined_call_operand.vmem [shape: f32[16,64], index: 3, kind: output, shape index: {}]
  %s4 = sld [smem:[#allocation0]]
  $region22: #{stt_forward.22} parent=0
    _
  %s6 = ssub.s32 1, %s4
  %s7 = scalar_select 0, %s6, %s4
  // Predicated region
  $region2: #{stt_forward.22} parent=0 // pred_check
    _
  $region3: #{stt_forward.22} parent=0 // pred_check_branch
    %9 = sbr.rel (0) target = $region5
  $region4: #{stt_forward.22} parent=0 // pred_region
    _
  $region5: #{stt_forward.22} parent=0 // pred_fallthru
    _
  // Predicated region
  $region6: #{stt_forward.22} parent=0 // pred_check
    _
  $region7: #{stt_forward.22} parent=0 // pred_check_branch
    %11 = sbr.rel (0) target = $region9
  $region8: #{stt_forward.22} parent=0 // pred_region
    _
  $region9: #{stt_forward.22} parent=0 // pred_fallthru
    _
  // Predicated region
  $region10: #{stt_forward.22} parent=0 // pred_check
    _
  $region11: #{stt_forward.22} parent=0 // pred_check_branch
    %13 = sbr.rel (0) target = $region13
  $region12: #{stt_forward.22} parent=0 // pred_region
    _
  $region13: #{stt_forward.22} parent=0 // pred_fallthru
    _
  %v14 = vld [vmem:[%s0] sm:$0xff]
  %v15 = vld [vmem:[%s0 + $0x8] sm:$0xff]
  %vm16 = vcmask 523264
  %v17 = vsel %vm16, %v14, 0.0
  %18 = vadd.xlane.f32.xlu0 %v17
  %v19 = vpop.xlane.xlu0 %18
  %v20 = vsel %vm16, %v15, 0.0
  %21 = vadd.xlane.f32.xlu0 %v20
  %v22 = vpop.xlane.xlu0 %21
  %v23 = vrcp.pop 64.0
  %v24 = vmul.f32 64.0, %v23
  %v25 = vsub.f32 1.0, %v24
  %v26 = vmul.f32 %v23, %v25
  %v27 = vadd.f32 %v23, %v26
  %vm28 = vweird.f32 %v23
  %v29 = vsel %vm28, %v23, %v27
  %v30 = vmul.f32 %v19, %v29
  %v31 = vmul.f32 %v22, %v29
  %v32 = vsub.f32 %v14, %v30
  %v33 = vsub.f32 %v15, %v31
  %v34 = vmul.f32 %v32, %v32
  %v35 = vmul.f32 %v33, %v33
  %v36 = vsel %vm16, %v34, 0.0
  %37 = vadd.xlane.f32.xlu0 %v36
  %v38 = vpop.xlane.xlu0 %37
  %v39 = vsel %vm16, %v35, 0.0
  %40 = vadd.xlane.f32.xlu0 %v39
  %v41 = vpop.xlane.xlu0 %40
  %v42 = vmul.f32 %v38, %v29
  %v43 = vmul.f32 %v41, %v29
  %v44 = vadd.f32 %v42, 1e-05
  %v45 = vadd.f32 %v43, 1e-05
  %v46 = vrsqrt.pop %v44
  %v47 = vmul.f32 %v46, %v44
  %v48 = vmul.f32 %v47, %v46
  %v49 = vmul.f32 0.5, %v48
  %v50 = vsub.f32 1.5, %v49
  %v51 = vmul.f32 %v46, %v50
  %vm52 = vweird.f32 %v44
  %vm53 = vweird.f32 %v46
  %vm54 = vmor %vm52, %vm53
  %v55 = vsel %vm54, %v46, %v51
  %v56 = vrsqrt.pop %v45
  %v57 = vmul.f32 %v56, %v45
  %v58 = vmul.f32 %v57, %v56
  %v59 = vmul.f32 0.5, %v58
  %v60 = vsub.f32 1.5, %v59
  %v61 = vmul.f32 %v56, %v60
  %vm62 = vweird.f32 %v45
  %vm63 = vweird.f32 %v56
  %vm64 = vmor %vm62, %vm63
  %v65 = vsel %vm64, %v56, %v61
  %v66 = vmul.f32 %v32, %v55
  %v67 = vmul.f32 %v33, %v65
  %v68 = vld [vmem:[%s1] sm:$0x1]
  %v70 = vperm.slane %v68, 0
  %v72 = vmul.f32 %v66, %v70
  %v73 = vmul.f32 %v67, %v70
  %v74 = vld [vmem:[%s2] sm:$0x1]
  %v76 = vperm.slane %v74, 0
  %v78 = vadd.f32 %v72, %v76
  %v79 = vadd.f32 %v73, %v76
  %v80 = vmax.f32 %v78, 0.0
  %v81 = vmax.f32 %v79, 0.0
  %82 = vst.msk [vmem:[%s3] sm:$0xff] %vm16, %v80
  %83 = vst.msk [vmem:[%s3 + $0x8] sm:$0xff] %vm16, %v81
  // Predicated region
  $region14: #{stt_forward.22} parent=0 // pred_check
    _
  $region15: #{stt_forward.22} parent=0 // pred_check_branch
    %85 = sbr.rel (0) target = $region17
  $region16: #{stt_forward.22} parent=0 // pred_region
    _
  $region17: #{stt_forward.22} parent=0 // pred_fallthru
    _
  // Predicated region
  $region18: #{stt_forward.22} parent=0 // pred_check
    _
  $region19: #{stt_forward.22} parent=0 // pred_check_branch
    %87 = sbr.rel (0) target = $region21
  $region20: #{stt_forward.22} parent=0 // pred_region
    _
  $region21: #{stt_forward.22} parent=0 // pred_fallthru
    _

// kernel: stt_forward.23
$region0: #{stt_forward.23}
  #allocation0 [shape = 'u32[]', space=smem, size = 0x4, offset = 0x4, fixed_abs, tag = 'smem constant byte address 0x4 - core index']
  #allocation1 [shape = 'u32[72,128]{1,0:T(1,128)}', space=vmem, size = 0x9000, scoped, tag = 'internal scratch']
  #allocation2 [shape = 'f32[16,256]{1,0:T(8,128)}', space=vmem, size = 0x4000, scoped, tag = 'scratch operand']
  %s0 = inlined_call_operand.vmem [shape: bf16[16,128], index: 0, kind: input, shape index: {}]
  %s1 = inlined_call_operand.vmem [shape: bf16[128,256], index: 1, kind: input, shape index: {}]
  %s2 = inlined_call_operand.vmem [shape: f32[1,256], index: 2, kind: input, shape index: {}]
  %s3 = inlined_call_operand.vmem [shape: f32[16,256], index: 3, kind: output, shape index: {}]
  %s4 = sld [smem:[#allocation0]]
  $region30: #{stt_forward.23} parent=0
    _
  %s6 = ssub.s32 1, %s4
  %s7 = scalar_select 0, %s6, %s4
  // Predicated region
  $region2: #{stt_forward.23} parent=0 // pred_check
    _
  $region3: #{stt_forward.23} parent=0 // pred_check_branch
    %9 = sbr.rel (0) target = $region5
  $region4: #{stt_forward.23} parent=0 // pred_region
    _
  $region5: #{stt_forward.23} parent=0 // pred_fallthru
    _
  // Predicated region
  $region6: #{stt_forward.23} parent=0 // pred_check
    _
  $region7: #{stt_forward.23} parent=0 // pred_check_branch
    %11 = sbr.rel (0) target = $region9
  $region8: #{stt_forward.23} parent=0 // pred_region
    _
  $region9: #{stt_forward.23} parent=0 // pred_fallthru
    _
  // Predicated region
  $region10: #{stt_forward.23} parent=0 // pred_check
    _
  $region11: #{stt_forward.23} parent=0 // pred_check_branch
    %13 = sbr.rel (0) target = $region13
  $region12: #{stt_forward.23} parent=0 // pred_region
    _
  $region13: #{stt_forward.23} parent=0 // pred_fallthru
    _
  %p14 = scmp.eq.s32.totalorder 0, 0
  // Predicated region
  $region14: #{stt_forward.23} parent=0 // pred_check
    %p15 = pneg %p14
  $region15: #{stt_forward.23} parent=0 // pred_check_branch
    %17 = sbr.rel (%p15) target = $region17
  $region16: #{stt_forward.23} parent=0 // pred_region
    %18 = vst [vmem:[#allocation2] sm:$0xff] 0.0
    %19 = vst [vmem:[#allocation2 + $0x8] sm:$0xff] 0.0
    %20 = vst [vmem:[#allocation2 + $0x10] sm:$0xff] 0.0
    %21 = vst [vmem:[#allocation2 + $0x18] sm:$0xff] 0.0
  $region17: #{stt_forward.23} parent=0 // pred_fallthru
    _
  %v22 = vld [vmem:[#allocation2] sm:$0xff]
  %v23 = vld [vmem:[#allocation2 + $0x8] sm:$0xff]
  %v24 = vld [vmem:[#allocation2 + $0x10] sm:$0xff]
  %v25 = vld [vmem:[#allocation2 + $0x18] sm:$0xff]
  %v26 = vld [vmem:[%s0] sm:$0xf]
  %v27 = vld [vmem:[%s0 + $0x4] sm:$0xf]
  %v28 = vld [vmem:[%s1] sm:$0xff]
  %v29 = vld [vmem:[%s1 + $0x8] sm:$0xff]
  %v30 = vld [vmem:[%s1 + $0x10] sm:$0xff]
  %v31 = vld [vmem:[%s1 + $0x18] sm:$0xff]
  %v32 = vld [vmem:[%s1 + $0x20] sm:$0xff]
  %v33 = vld [vmem:[%s1 + $0x28] sm:$0xff]
  %v34 = vld [vmem:[%s1 + $0x30] sm:$0xff]
  %v35 = vld [vmem:[%s1 + $0x38] sm:$0xff]
  %v36 = vld [vmem:[%s1 + $0x40] sm:$0xff]
  %v37 = vld [vmem:[%s1 + $0x48] sm:$0xff]
  %v38 = vld [vmem:[%s1 + $0x50] sm:$0xff]
  %v39 = vld [vmem:[%s1 + $0x58] sm:$0xff]
  %v40 = vld [vmem:[%s1 + $0x60] sm:$0xff]
  %v41 = vld [vmem:[%s1 + $0x68] sm:$0xff]
  %v42 = vld [vmem:[%s1 + $0x70] sm:$0xff]
  %v43 = vld [vmem:[%s1 + $0x78] sm:$0xff]
  %v46 = vunpack.c.l.b16 %v26
  %v47 = vunpack.c.l.b16 %v27
  %v48 = vpack.c.b16 %v47, %v46
  %v66 = vunpack.c.l.b16 %v28
  %v67 = vunpack.c.h.b16 %v28
  %v68 = vunpack.c.l.b16 %v29
  %v69 = vunpack.c.h.b16 %v29
  %v70 = vunpack.c.l.b16 %v30
  %v71 = vunpack.c.h.b16 %v30
  %v72 = vunpack.c.l.b16 %v31
  %v73 = vunpack.c.h.b16 %v31
  %v74 = vunpack.c.l.b16 %v32
  %v75 = vunpack.c.h.b16 %v32
  %v76 = vunpack.c.l.b16 %v33
  %v77 = vunpack.c.h.b16 %v33
  %v78 = vunpack.c.l.b16 %v34
  %v79 = vunpack.c.h.b16 %v34
  %v80 = vunpack.c.l.b16 %v35
  %v81 = vunpack.c.h.b16 %v35
  %v82 = vunpack.c.l.b16 %v36
  %v83 = vunpack.c.h.b16 %v36
  %v84 = vunpack.c.l.b16 %v37
  %v85 = vunpack.c.h.b16 %v37
  %v86 = vunpack.c.l.b16 %v38
  %v87 = vunpack.c.h.b16 %v38
  %v88 = vunpack.c.l.b16 %v39
  %v89 = vunpack.c.h.b16 %v39
  %v90 = vunpack.c.l.b16 %v40
  %v91 = vunpack.c.h.b16 %v40
  %v92 = vunpack.c.l.b16 %v41
  %v93 = vunpack.c.h.b16 %v41
  %v94 = vunpack.c.l.b16 %v42
  %v95 = vunpack.c.h.b16 %v42
  %v96 = vunpack.c.l.b16 %v43
  %v97 = vunpack.c.h.b16 %v43
  %v98 = vpack.c.b16 %v68, %v66
  %v99 = vpack.c.b16 %v69, %v67
  %v100 = vpack.c.b16 %v72, %v70
  %v101 = vpack.c.b16 %v73, %v71
  %v102 = vpack.c.b16 %v76, %v74
  %v103 = vpack.c.b16 %v77, %v75
  %v104 = vpack.c.b16 %v80, %v78
  %v105 = vpack.c.b16 %v81, %v79
  %v106 = vpack.c.b16 %v84, %v82
  %v107 = vpack.c.b16 %v85, %v83
  %v108 = vpack.c.b16 %v88, %v86
  %v109 = vpack.c.b16 %v89, %v87
  %v110 = vpack.c.b16 %v92, %v90
  %v111 = vpack.c.b16 %v93, %v91
  %v112 = vpack.c.b16 %v96, %v94
  %v113 = vpack.c.b16 %v97, %v95
  %130 = vmatpush.bf16.msra.mxu0 %v112
  %131 = vmatpush.bf16.msra.mxu0 %v110
  %132 = vmatpush.bf16.msra.mxu0 %v108
  %133 = vmatpush.bf16.msra.mxu0 %v106
  %134 = vmatpush.bf16.msra.mxu0 %v104
  %135 = vmatpush.bf16.msra.mxu0 %v102
  %136 = vmatpush.bf16.msra.mxu0 %v100
  %137 = vmatpush.bf16.msra.mxu0 %v98
  %138 = vmatmul.bf16.gmra.mxu0 %v48
  %v139 = vpop.f32.mrf.mxu0
  %v140 = vadd.f32 0.0, %v139
  %v141 = vpop.f32.mrf.mxu0
  %v142 = vadd.f32 0.0, %v141
  %143 = vdwg.mxu0
  %144 = vmatpush.bf16.msra.mxu0 %v113
  %145 = vmatpush.bf16.msra.mxu0 %v111
  %146 = vmatpush.bf16.msra.mxu0 %v109
  %147 = vmatpush.bf16.msra.mxu0 %v107
  %148 = vmatpush.bf16.msra.mxu0 %v105
  %149 = vmatpush.bf16.msra.mxu0 %v103
  %150 = vmatpush.bf16.msra.mxu0 %v101
  %151 = vmatpush.bf16.msra.mxu0 %v99
  %152 = vmatmul.bf16.gmra.mxu0 %v48
  %v153 = vpop.f32.mrf.mxu0
  %v154 = vadd.f32 0.0, %v153
  %v155 = vpop.f32.mrf.mxu0
  %v156 = vadd.f32 0.0, %v155
  %157 = vdwg.mxu0
  %v158 = vadd.f32 %v22, %v140
  %v159 = vadd.f32 %v23, %v154
  %v160 = vadd.f32 %v24, %v142
  %v161 = vadd.f32 %v25, %v156
  %162 = vst [vmem:[#allocation2] sm:$0xff] %v158
  %163 = vst [vmem:[#allocation2 + $0x8] sm:$0xff] %v159
  %164 = vst [vmem:[#allocation2 + $0x10] sm:$0xff] %v160
  %165 = vst [vmem:[#allocation2 + $0x18] sm:$0xff] %v161
  // Predicated region
  $region18: #{stt_forward.23} parent=0 // pred_check
    %p166 = pneg %p14
  $region19: #{stt_forward.23} parent=0 // pred_check_branch
    %168 = sbr.rel (%p166) target = $region21
  $region20: #{stt_forward.23} parent=0 // pred_region
    %v169 = vld [vmem:[#allocation2] sm:$0xff]
    %v170 = vld [vmem:[#allocation2 + $0x8] sm:$0xff]
    %v171 = vld [vmem:[#allocation2 + $0x10] sm:$0xff]
    %v172 = vld [vmem:[#allocation2 + $0x18] sm:$0xff]
    %v173 = vld [vmem:[%s2] sm:$0x3]
    %v175 = vperm.slane %v173, 0
    %v176 = vperm.slane %v173, 1
    %v179 = vadd.f32 %v169, %v175
    %v180 = vadd.f32 %v170, %v176
    %v181 = vadd.f32 %v171, %v175
    %v182 = vadd.f32 %v172, %v176
    %183 = vst [vmem:[%s3] sm:$0xff] %v179
    %184 = vst [vmem:[%s3 + $0x8] sm:$0xff] %v180
    %185 = vst [vmem:[%s3 + $0x10] sm:$0xff] %v181
    %186 = vst [vmem:[%s3 + $0x18] sm:$0xff] %v182
  $region21: #{stt_forward.23} parent=0 // pred_fallthru
    _
  // Predicated region
  $region22: #{stt_forward.23} parent=0 // pred_check
    _
  $region23: #{stt_forward.23} parent=0 // pred_check_branch
    %188 = sbr.rel (0) target = $region25
  $region24: #{stt_forward.23} parent=0 // pred_region
    _
  $region25: #{stt_forward.23} parent=0 // pred_fallthru
    _
  // Predicated region
  $region26: #{stt_forward.23} parent=0 // pred_check
    _
  $region27: #{stt_forward.23} parent=0 // pred_check_branch
    %190 = sbr.rel (0) target = $region29
  $region28: #{stt_forward.23} parent=0 // pred_region
    _
  $region29: #{stt_forward.23} parent=0 // pred_fallthru
    _

// kernel: stt_forward.24
$region0: #{stt_forward.24}
  #allocation0 [shape = 'u32[]', space=smem, size = 0x4, offset = 0x4, fixed_abs, tag = 'smem constant byte address 0x4 - core index']
  #allocation1 [shape = 'u32[72,128]{1,0:T(1,128)}', space=vmem, size = 0x9000, scoped, tag = 'internal scratch']
  #allocation2 [shape = 'f32[16,64]{1,0:T(8,128)}', space=vmem, size = 0x2000, scoped, tag = 'scratch operand']
  #allocation3 [shape = 'f32[16,32]{1,0:T(8,128)}', space=vmem, size = 0x2000, scoped, tag = 'scratch operand']
  %s0 = inlined_call_operand.vmem [shape: f32[2,8,256], index: 0, kind: input, shape index: {}]
  %s1 = inlined_call_operand.vmem [shape: f32[64,128], index: 1, kind: input, shape index: {}]
  %s2 = inlined_call_operand.vmem [shape: f32[2,8,32], index: 2, kind: output, shape index: {0}]
  %s3 = inlined_call_operand.vmem [shape: f32[2,8,32], index: 3, kind: output, shape index: {1}]
  %4 = xla_tuple %s2, %s3
  %s5 = sld [smem:[#allocation0]]
  $region33: #{stt_forward.24} parent=0
    _
  %s7 = ssub.s32 1, %s5
  %s8 = scalar_select 0, %s7, %s5
  // Predicated region
  $region2: #{stt_forward.24} parent=0 // pred_check
    _
  $region3: #{stt_forward.24} parent=0 // pred_check_branch
    %10 = sbr.rel (0) target = $region5
  $region4: #{stt_forward.24} parent=0 // pred_region
    _
  $region5: #{stt_forward.24} parent=0 // pred_fallthru
    _
  // Predicated region
  $region6: #{stt_forward.24} parent=0 // pred_check
    _
  $region7: #{stt_forward.24} parent=0 // pred_check_branch
    %12 = sbr.rel (0) target = $region9
  $region8: #{stt_forward.24} parent=0 // pred_region
    _
  $region9: #{stt_forward.24} parent=0 // pred_fallthru
    _
  %vm13 = vcmask 523264
  %14 = vst.msk [vmem:[#allocation2] sm:$0xff] %vm13, 0.0
  %15 = vst.msk [vmem:[#allocation2 + $0x8] sm:$0xff] %vm13, 0.0
  %vm16 = vcmask 261120
  %17 = vst.msk [vmem:[#allocation3] sm:$0xff] %vm16, 0.0
  %18 = vst.msk [vmem:[#allocation3 + $0x8] sm:$0xff] %vm16, 0.0
  loop: start=0, step=1, limit=2
  $region10: #{stt_forward.24} parent=0 // loop_pre_header
    _
  $region11: #{stt_forward.24} parent=0 // loop_header
    %s20 = sphi 0, %s24
    %p21 = scmp.ge.s32.totalorder %s20, 2
  $region12: #{stt_forward.24} parent=0 // loop_header_branch
    %23 = sbr.rel (%p21) target = $region16
  $region13: #{stt_forward.24} parent=0 // loop_body
    %s25 = smul.u32 %s20, 2
    %s26 = smul.addr %s25, 8
    %s27 = scalar_lea.vmem %s0, %s26
    %v28 = vld [vmem:[%s27] sm:$0xff]
    %s29 = ssub.s32 1, %s20
    %s30 = smul.u32 %s29, 2
    %s31 = smul.addr %s30, 8
    %s32 = scalar_lea.vmem %s0, %s31
    %v33 = vld [vmem:[%s32 + $0x8] sm:$0xff]
    %v34 = vld [vmem:[#allocation2] sm:$0xff]
    %v35 = vld [vmem:[#allocation2 + $0x8] sm:$0xff]
    %v36 = vld [vmem:[%s1] sm:$0xff]
    %v37 = vld [vmem:[%s1 + $0x8] sm:$0xff]
    %v38 = vld [vmem:[%s1 + $0x10] sm:$0xff]
    %v39 = vld [vmem:[%s1 + $0x18] sm:$0xff]
    %v40 = vld [vmem:[%s1 + $0x20] sm:$0xff]
    %v41 = vld [vmem:[%s1 + $0x28] sm:$0xff]
    %v42 = vld [vmem:[%s1 + $0x30] sm:$0xff]
    %v43 = vld [vmem:[%s1 + $0x38] sm:$0xff]
    %v45 = vsel %vm13, %v34, 0
    %v48 = vsel %vm13, %v35, 0
    %50 = vmatpush.msra.mxu0 0.0
    %51 = vmatpush.msra.mxu0 0.0
    %52 = vmatpush.msra.mxu0 0.0
    %53 = vmatpush.msra.mxu0 0.0
    %54 = vmatpush.msra.mxu0 0.0
    %55 = vmatpush.msra.mxu0 0.0
    %56 = vmatpush.msra.mxu0 0.0
    %57 = vmatpush.msra.mxu0 0.0
    %58 = vmatpush.msra.mxu0 %v43
    %59 = vmatpush.msra.mxu0 %v42
    %60 = vmatpush.msra.mxu0 %v41
    %61 = vmatpush.msra.mxu0 %v40
    %62 = vmatpush.msra.mxu0 %v39
    %63 = vmatpush.msra.mxu0 %v38
    %64 = vmatpush.msra.mxu0 %v37
    %65 = vmatpush.msra.mxu0 %v36
    %66 = vmatmul.f32.gmra.mxu0 %v45
    %v67 = vpop.f32.mrf.mxu0
    %v68 = vadd.f32 0.0, %v67
    %69 = vmatmul.f32.gmra.mxu0 %v48
    %v70 = vpop.f32.mrf.mxu0
    %v71 = vadd.f32 0.0, %v70
    %72 = vdwg.mxu0
    %v73 = vadd.f32 %v28, %v68
    %v74 = vadd.f32 %v33, %v71
    %v75 = vsub.f32 0.0, %v73
    %v76 = vsub.f32 0.0, %v74
    %v77 = vmul.f32 %v75, 1.442695
    %v78 = vpow.pop %v77
    %v79 = vmul.f32 %v76, 1.442695
    %v80 = vpow.pop %v79
    %v81 = vadd.f32 %v78, 1.0
    %v82 = vadd.f32 %v80, 1.0
    %v83 = vrcp.pop %v81
    %v84 = vmul.f32 %v81, %v83
    %v85 = vsub.f32 1.0, %v84
    %v86 = vmul.f32 %v83, %v85
    %v87 = vadd.f32 %v83, %v86
    %vm88 = vweird.f32 %v81
    %vm89 = vweird.f32 %v83
    %vm90 = vmor %vm88, %vm89
    %v91 = vsel %vm90, %v83, %v87
    %v92 = vand.u32 2147483647, %v81
    %vm93 = vcmp.eq.f32.partialorder %v92, 8.507059e+37
    %v94 = vand.u32 %v81, 2147483648
    %v95 = vor.u32 1.1754944e-38, %v94
    %v96 = vsel %vm93, %v95, %v91
    %v97 = vmul.f32 1.0, %v96
    %v98 = vrcp.pop %v82
    %v99 = vmul.f32 %v82, %v98
    %v100 = vsub.f32 1.0, %v99
    %v101 = vmul.f32 %v98, %v100
    %v102 = vadd.f32 %v98, %v101
    %vm103 = vweird.f32 %v82
    %vm104 = vweird.f32 %v98
    %vm105 = vmor %vm103, %vm104
    %v106 = vsel %vm105, %v98, %v102
    %v107 = vand.u32 2147483647, %v82
    %vm108 = vcmp.eq.f32.partialorder %v107, 8.507059e+37
    %v109 = vand.u32 %v82, 2147483648
    %v110 = vor.u32 1.1754944e-38, %v109
    %v111 = vsel %vm108, %v110, %v106
    %v112 = vmul.f32 1.0, %v111
    %v113 = vtanh.pop %v73
    %v114 = vtanh.pop %v74
    %v115 = vld [vmem:[#allocation3] sm:$0xff]
    %v116 = vld [vmem:[#allocation3 + $0x8] sm:$0xff]
    %119 = vrot.lane.b32.xlu0 %v115, 32
    %v120 = vpop.permute.xlu0 %119
    %121 = vrot.lane.b32.xlu0 %v116, 32
    %v122 = vpop.permute.xlu0 %121
    %v125 = vmul.f32 %v97, %v120
    %v126 = vmul.f32 %v112, %v122
    %129 = vrot.lane.b32.xlu0 %v113, 64
    %v130 = vpop.permute.xlu0 %129
    %131 = vrot.lane.b32.xlu0 %v114, 64
    %v132 = vpop.permute.xlu0 %131
    %v135 = vmul.f32 %v97, %v130
    %v136 = vmul.f32 %v112, %v132
    %139 = vrot.lane.b32.xlu0 %v135, 32
    %v140 = vpop.permute.xlu0 %139
    %141 = vrot.lane.b32.xlu0 %v136, 32
    %v142 = vpop.permute.xlu0 %141
    %v145 = vadd.f32 %v125, %v140
    %v146 = vadd.f32 %v126, %v142
    %v147 = vtanh.pop %v145
    %v148 = vtanh.pop %v146
    %151 = vrot.lane.b32.xlu0 %v147, 64
    %v152 = vpop.permute.xlu0 %151
    %153 = vrot.lane.b32.xlu0 %v148, 64
    %v154 = vpop.permute.xlu0 %153
    %v157 = vmul.f32 %v97, %v152
    %v158 = vmul.f32 %v112, %v154
    %161 = vrot.lane.b32.xlu0 %v145, 96
    %v162 = vpop.permute.xlu0 %161
    %163 = vrot.lane.b32.xlu0 %v146, 96
    %v164 = vpop.permute.xlu0 %163
    %167 = vst.msk [vmem:[#allocation3] sm:$0xff] %vm16, %v162
    %168 = vst.msk [vmem:[#allocation3 + $0x8] sm:$0xff] %vm16, %v164
    %170 = vrot.lane.b32.xlu0 %v157, 32
    %v171 = vpop.permute.xlu0 %170
    %v173 = vsel %vm16, %v171, 0.0
    %175 = vrot.lane.b32.xlu0 %v158, 64
    %v176 = vpop.permute.xlu0 %175
    %v178 = vsel %vm16, 0.0, %v176
    %179 = vst.msk [vmem:[#allocation2] sm:$0xff] %vm13, %v173
    %180 = vst.msk [vmem:[#allocation2 + $0x8] sm:$0xff] %vm13, %v178
    %s181 = smul.u32 %s20, 8
    %s182 = scalar_lea.vmem %s2, %s181
    %183 = vst.msk [vmem:[%s182] sm:$0xff] %vm16, %v171
    %184 = vrot.lane.b32.xlu0 %v158, 32
    %v185 = vpop.permute.xlu0 %184
    %s187 = smul.u32 %s29, 8
    %s188 = scalar_lea.vmem %s3, %s187
    %189 = vst.msk [vmem:[%s188] sm:$0xff] %vm16, %v185
  $region14: #{stt_forward.24} parent=0 // loop_footer
    %s24 = sadd.s32 1, %s20
  $region15: #{stt_forward.24} parent=0 // loop_footer_branch
    %19 = sbr.rel target = $region11
  $region16: #{stt_forward.24} parent=0 // loop_exit
    _
  // Predicated region
  $region17: #{stt_forward.24} parent=0 // pred_check
    _
  $region18: #{stt_forward.24} parent=0 // pred_check_branch
    %191 = sbr.rel (0) target = $region20
  $region19: #{stt_forward.24} parent=0 // pred_region
    _
  $region20: #{stt_forward.24} parent=0 // pred_fallthru
    _
  // Predicated region
  $region21: #{stt_forward.24} parent=0 // pred_check
    _
  $region22: #{stt_forward.24} parent=0 // pred_check_branch
    %193 = sbr.rel (0) target = $region24
  $region23: #{stt_forward.24} parent=0 // pred_region
    _
  $region24: #{stt_forward.24} parent=0 // pred_fallthru
    _
  // Predicated region
  $region25: #{stt_forward.24} parent=0 // pred_check
    _
  $region26: #{stt_forward.24} parent=0 // pred_check_branch
    %195 = sbr.rel (0) target = $region28
  $region27: #{stt_forward.24} parent=0 // pred_region
    _
  $region28: #{stt_forward.24} parent=0 // pred_fallthru
    _
  // Predicated region
  $region29: #{stt_forward.24} parent=0 // pred_check
    _
  $region30: #{stt_forward.24} parent=0 // pred_check_branch
    %197 = sbr.rel (0) target = $region32
  $region31: #{stt_forward.24} parent=0 // pred_region
    _
  $region32: #{stt_forward.24} parent=0 // pred_fallthru
    _

// kernel: stt_forward.25
$region0: #{stt_forward.25}
  #allocation0 [shape = 'u32[]', space=smem, size = 0x4, offset = 0x4, fixed_abs, tag = 'smem constant byte address 0x4 - core index']
  #allocation1 [shape = 'u32[72,128]{1,0:T(1,128)}', space=vmem, size = 0x9000, scoped, tag = 'internal scratch']
  %s0 = inlined_call_operand.vmem [shape: bf16[16,128], index: 0, kind: input, shape index: {}]
  %s1 = inlined_call_operand.vmem [shape: bf16[128,128], index: 1, kind: input, shape index: {}]
  %s2 = inlined_call_operand.vmem [shape: f32[1,128], index: 2, kind: input, shape index: {}]
  %s3 = inlined_call_operand.vmem [shape: bf16[128,128], index: 3, kind: input, shape index: {}]
  %s4 = inlined_call_operand.vmem [shape: f32[1,128], index: 4, kind: input, shape index: {}]
  %s5 = inlined_call_operand.vmem [shape: f32[16,128], index: 5, kind: output, shape index: {}]
  %s6 = sld [smem:[#allocation0]]
  $region30: #{stt_forward.25} parent=0
    _
  %s8 = ssub.s32 1, %s6
  %s9 = scalar_select 0, %s8, %s6
  // Predicated region
  $region2: #{stt_forward.25} parent=0 // pred_check
    _
  $region3: #{stt_forward.25} parent=0 // pred_check_branch
    %11 = sbr.rel (0) target = $region5
  $region4: #{stt_forward.25} parent=0 // pred_region
    _
  $region5: #{stt_forward.25} parent=0 // pred_fallthru
    _
  // Predicated region
  $region6: #{stt_forward.25} parent=0 // pred_check
    _
  $region7: #{stt_forward.25} parent=0 // pred_check_branch
    %13 = sbr.rel (0) target = $region9
  $region8: #{stt_forward.25} parent=0 // pred_region
    _
  $region9: #{stt_forward.25} parent=0 // pred_fallthru
    _
  // Predicated region
  $region10: #{stt_forward.25} parent=0 // pred_check
    _
  $region11: #{stt_forward.25} parent=0 // pred_check_branch
    %15 = sbr.rel (0) target = $region13
  $region12: #{stt_forward.25} parent=0 // pred_region
    _
  $region13: #{stt_forward.25} parent=0 // pred_fallthru
    _
  // Predicated region
  $region14: #{stt_forward.25} parent=0 // pred_check
    _
  $region15: #{stt_forward.25} parent=0 // pred_check_branch
    %17 = sbr.rel (0) target = $region17
  $region16: #{stt_forward.25} parent=0 // pred_region
    _
  $region17: #{stt_forward.25} parent=0 // pred_fallthru
    _
  // Predicated region
  $region18: #{stt_forward.25} parent=0 // pred_check
    _
  $region19: #{stt_forward.25} parent=0 // pred_check_branch
    %19 = sbr.rel (0) target = $region21
  $region20: #{stt_forward.25} parent=0 // pred_region
    _
  $region21: #{stt_forward.25} parent=0 // pred_fallthru
    _
  %v20 = vld [vmem:[%s0] sm:$0xf]
  %v21 = vld [vmem:[%s0 + $0x4] sm:$0xf]
  %v22 = vld [vmem:[%s1] sm:$0xf]
  %v23 = vld [vmem:[%s1 + $0x4] sm:$0xf]
  %v24 = vld [vmem:[%s1 + $0x8] sm:$0xf]
  %v25 = vld [vmem:[%s1 + $0xc] sm:$0xf]
  %v26 = vld [vmem:[%s1 + $0x10] sm:$0xf]
  %v27 = vld [vmem:[%s1 + $0x14] sm:$0xf]
  %v28 = vld [vmem:[%s1 + $0x18] sm:$0xf]
  %v29 = vld [vmem:[%s1 + $0x1c] sm:$0xf]
  %v30 = vld [vmem:[%s1 + $0x20] sm:$0xf]
  %v31 = vld [vmem:[%s1 + $0x24] sm:$0xf]
  %v32 = vld [vmem:[%s1 + $0x28] sm:$0xf]
  %v33 = vld [vmem:[%s1 + $0x2c] sm:$0xf]
  %v34 = vld [vmem:[%s1 + $0x30] sm:$0xf]
  %v35 = vld [vmem:[%s1 + $0x34] sm:$0xf]
  %v36 = vld [vmem:[%s1 + $0x38] sm:$0xf]
  %v37 = vld [vmem:[%s1 + $0x3c] sm:$0xf]
  %v38 = vld [vmem:[%s2] sm:$0x1]
  %v40 = vperm.slane %v38, 0
  %v44 = vunpack.c.l.b16 %v20
  %v45 = vunpack.c.l.b16 %v21
  %v46 = vpack.c.b16 %v45, %v44
  %v64 = vunpack.c.l.b16 %v22
  %v65 = vunpack.c.l.b16 %v23
  %v66 = vunpack.c.l.b16 %v24
  %v67 = vunpack.c.l.b16 %v25
  %v68 = vunpack.c.l.b16 %v26
  %v69 = vunpack.c.l.b16 %v27
  %v70 = vunpack.c.l.b16 %v28
  %v71 = vunpack.c.l.b16 %v29
  %v72 = vunpack.c.l.b16 %v30
  %v73 = vunpack.c.l.b16 %v31
  %v74 = vunpack.c.l.b16 %v32
  %v75 = vunpack.c.l.b16 %v33
  %v76 = vunpack.c.l.b16 %v34
  %v77 = vunpack.c.l.b16 %v35
  %v78 = vunpack.c.l.b16 %v36
  %v79 = vunpack.c.l.b16 %v37
  %v80 = vpack.c.b16 %v65, %v64
  %v81 = vpack.c.b16 %v67, %v66
  %v82 = vpack.c.b16 %v69, %v68
  %v83 = vpack.c.b16 %v71, %v70
  %v84 = vpack.c.b16 %v73, %v72
  %v85 = vpack.c.b16 %v75, %v74
  %v86 = vpack.c.b16 %v77, %v76
  %v87 = vpack.c.b16 %v79, %v78
  %96 = vmatpush.bf16.msra.mxu0 %v87
  %97 = vmatpush.bf16.msra.mxu0 %v86
  %98 = vmatpush.bf16.msra.mxu0 %v85
  %99 = vmatpush.bf16.msra.mxu0 %v84
  %100 = vmatpush.bf16.msra.mxu0 %v83
  %101 = vmatpush.bf16.msra.mxu0 %v82
  %102 = vmatpush.bf16.msra.mxu0 %v81
  %103 = vmatpush.bf16.msra.mxu0 %v80
  %104 = vmatmul.bf16.gmra.mxu0 %v46
  %v105 = vpop.f32.mrf.mxu0
  %v106 = vadd.f32 %v40, %v105
  %v107 = vpop.f32.mrf.mxu0
  %v108 = vadd.f32 %v40, %v107
  %109 = vdwg.mxu0
  %v110 = vmax.f32 %v106, 0.0
  %v111 = vmax.f32 %v108, 0.0
  %v112 = vpack.c.bf16 %v111, %v110
  %v113 = vld [vmem:[%s3] sm:$0xf]
  %v114 = vld [vmem:[%s3 + $0x4] sm:$0xf]
  %v115 = vld [vmem:[%s3 + $0x8] sm:$0xf]
  %v116 = vld [vmem:[%s3 + $0xc] sm:$0xf]
  %v117 = vld [vmem:[%s3 + $0x10] sm:$0xf]
  %v118 = vld [vmem:[%s3 + $0x14] sm:$0xf]
  %v119 = vld [vmem:[%s3 + $0x18] sm:$0xf]
  %v120 = vld [vmem:[%s3 + $0x1c] sm:$0xf]
  %v121 = vld [vmem:[%s3 + $0x20] sm:$0xf]
  %v122 = vld [vmem:[%s3 + $0x24] sm:$0xf]
  %v123 = vld [vmem:[%s3 + $0x28] sm:$0xf]
  %v124 = vld [vmem:[%s3 + $0x2c] sm:$0xf]
  %v125 = vld [vmem:[%s3 + $0x30] sm:$0xf]
  %v126 = vld [vmem:[%s3 + $0x34] sm:$0xf]
  %v127 = vld [vmem:[%s3 + $0x38] sm:$0xf]
  %v128 = vld [vmem:[%s3 + $0x3c] sm:$0xf]
  %v129 = vld [vmem:[%s4] sm:$0x1]
  %v131 = vperm.slane %v129, 0
  %v149 = vunpack.c.l.b16 %v113
  %v150 = vunpack.c.l.b16 %v114
  %v151 = vunpack.c.l.b16 %v115
  %v152 = vunpack.c.l.b16 %v116
  %v153 = vunpack.c.l.b16 %v117
  %v154 = vunpack.c.l.b16 %v118
  %v155 = vunpack.c.l.b16 %v119
  %v156 = vunpack.c.l.b16 %v120
  %v157 = vunpack.c.l.b16 %v121
  %v158 = vunpack.c.l.b16 %v122
  %v159 = vunpack.c.l.b16 %v123
  %v160 = vunpack.c.l.b16 %v124
  %v161 = vunpack.c.l.b16 %v125
  %v162 = vunpack.c.l.b16 %v126
  %v163 = vunpack.c.l.b16 %v127
  %v164 = vunpack.c.l.b16 %v128
  %v165 = vpack.c.b16 %v150, %v149
  %v166 = vpack.c.b16 %v152, %v151
  %v167 = vpack.c.b16 %v154, %v153
  %v168 = vpack.c.b16 %v156, %v155
  %v169 = vpack.c.b16 %v158, %v157
  %v170 = vpack.c.b16 %v160, %v159
  %v171 = vpack.c.b16 %v162, %v161
  %v172 = vpack.c.b16 %v164, %v163
  %181 = vmatpush.bf16.msra.mxu0 %v172
  %182 = vmatpush.bf16.msra.mxu0 %v171
  %183 = vmatpush.bf16.msra.mxu0 %v170
  %184 = vmatpush.bf16.msra.mxu0 %v169
  %185 = vmatpush.bf16.msra.mxu0 %v168
  %186 = vmatpush.bf16.msra.mxu0 %v167
  %187 = vmatpush.bf16.msra.mxu0 %v166
  %188 = vmatpush.bf16.msra.mxu0 %v165
  %189 = vmatmul.bf16.gmra.mxu0 %v112
  %v190 = vpop.f32.mrf.mxu0
  %v191 = vadd.f32 %v131, %v190
  %v192 = vpop.f32.mrf.mxu0
  %v193 = vadd.f32 %v131, %v192
  %194 = vdwg.mxu0
  %195 = vst [vmem:[%s5] sm:$0xff] %v191
  %196 = vst [vmem:[%s5 + $0x8] sm:$0xff] %v193
  // Predicated region
  $region22: #{stt_forward.25} parent=0 // pred_check
    _
  $region23: #{stt_forward.25} parent=0 // pred_check_branch
    %198 = sbr.rel (0) target = $region25
  $region24: #{stt_forward.25} parent=0 // pred_region
    _
  $region25: #{stt_forward.25} parent=0 // pred_fallthru
    _
  // Predicated region
  $region26: #{stt_forward.25} parent=0 // pred_check
    _
  $region27: #{stt_forward.25} parent=0 // pred_check_branch
    %200 = sbr.rel (0) target = $region29
  $region28: #{stt_forward.25} parent=0 // pred_region
    _
  $region29: #{stt_forward.25} parent=0 // pred_fallthru
    _

</llo_original>
